<compile_context>
chip_gen: v7x
topology: tpu7x:2x2x1
jax: 0.10.0
libtpu: 0.0.40
codegen_flags: <defaults>
</compile_context>

<pallas_src>
import math

import jax
import jax.numpy as jnp
from jax import lax
from jax.experimental import pallas as pl
from jax.experimental.pallas import tpu as pltpu

# ---------------- model hyper-params (small, consistent with the module) ----
NUM_LAYERS = 2
D_MODEL    = 32
HIDDEN     = 64      # hidden_layers of the feed-forward module
NUM_HEADS  = 4
HEAD_DIM   = D_MODEL // NUM_HEADS
B          = 2       # batch
T_DEC      = 8       # decoder sequence length (y)
T_ENC      = 8       # encoder sequence length (x)
EPS        = 1e-5

N_DEC = B * T_DEC    # flattened decoder rows
N_ENC = B * T_ENC    # flattened encoder rows

# Row indices inside the packed (16, D_MODEL) per-layer vector slab.
_BQ_S, _BK_S, _BV_S, _BO_S = 0, 1, 2, 3
_BQ_C, _BK_C, _BV_C, _BO_C = 4, 5, 6, 7
_B2 = 8
_G1, _BE1, _G2, _BE2, _G3, _BE3 = 9, 10, 11, 12, 13, 14
N_VEC_ROWS = 16      # padded to a tidy sublane count

# Column offsets inside the packed (D_MODEL, 8*D_MODEL) per-layer weight slab.
_C_SQKV = 0                    # 3*D cols: Q(scaled) | K | V   (self-attention)
_C_SO   = 3 * D_MODEL          # D cols  : self-attention output proj
_C_CQ   = 4 * D_MODEL          # D cols  : cross-attention Q (scaled)
_C_CO   = 5 * D_MODEL          # D cols  : cross-attention output proj
_C_FF1  = 6 * D_MODEL          # HIDDEN (= 2*D) cols : feed-forward layer 1


# --------------------------- in-kernel helpers ------------------------------
def _layer_norm(v, gamma, beta):
    mu = jnp.mean(v, axis=-1, keepdims=True)
    var = jnp.mean((v - mu) ** 2, axis=-1, keepdims=True)
    return (v - mu) * lax.rsqrt(var + EPS) * gamma + beta


def _mha(q, k, v, add_mask, wo, bo):
    """Fused multi-head attention on flattened-batch rows.

    The 1/sqrt(HEAD_DIM) scale is already folded into the Q projection.
    `add_mask` is additive and block-diagonal over the flattened batch
    (0 = attend, -1e9 = blocked).  All heads are processed with two
    head-batched matmuls and one full-width output projection.
    """
    nq, nk = q.shape[0], k.shape[0]
    qh = jnp.transpose(q.reshape(nq, NUM_HEADS, HEAD_DIM), (1, 0, 2))  # (H,Nq,HD)
    kh = jnp.transpose(k.reshape(nk, NUM_HEADS, HEAD_DIM), (1, 0, 2))  # (H,Nk,HD)
    vh = jnp.transpose(v.reshape(nk, NUM_HEADS, HEAD_DIM), (1, 0, 2))  # (H,Nk,HD)

    sc = jnp.einsum("hqd,hkd->hqk", qh, kh,
                    preferred_element_type=jnp.float32)               # (H,Nq,Nk)
    sc = sc + add_mask[None, :, :]
    sc = sc - jnp.max(sc, axis=-1, keepdims=True)
    e = jnp.exp(sc)
    p = e * pl.reciprocal(jnp.sum(e, axis=-1, keepdims=True), approx=True)

    ctx = jnp.einsum("hqk,hkd->hqd", p, vh,
                     preferred_element_type=jnp.float32)               # (H,Nq,HD)
    ctx = jnp.transpose(ctx, (1, 0, 2)).reshape(nq, D_MODEL)           # (Nq, D)
    return jnp.dot(ctx, wo, preferred_element_type=jnp.float32) + bo


def _block_diag_additive(mask, n_batch, tq, tk):
    """(B, Tq, Tk) {0,1} mask -> (B*Tq, B*Tk) additive block-diagonal mask."""
    zero = jnp.zeros((tq, tk), jnp.float32)
    rows = []
    for bi in range(n_batch):
        cols = [mask[bi] if bj == bi else zero for bj in range(n_batch)]
        rows.append(jnp.concatenate(cols, axis=1))
    allowed = jnp.concatenate(rows, axis=0)
    return (allowed - 1.0) * 1e9


# ------------------------------ Pallas kernel -------------------------------
def decoder_kernel(
    x_ref, y_ref, ms_ref, mc_ref,
    w_main_ref, w_ckv_ref, w_ff2_ref, vecs_ref, b1_ref,
    out_ref,
):
    x = x_ref[...]          # (N_ENC, D)
    y = y_ref[...]          # (N_DEC, D)

    # Additive block-diagonal masks built in-kernel (VPU work hidden in slack).
    add_ms = _block_diag_additive(ms_ref[...], B, T_DEC, T_DEC)   # (N_DEC, N_DEC)
    add_mc = _block_diag_additive(mc_ref[...], B, T_DEC, T_ENC)   # (N_DEC, N_ENC)

    # Cross-attention K/V projection hoisted out of the layer loop:
    # x is layer-invariant -> one full-lane (N_ENC, D) @ (D, L*2D) matmul.
    kv_all = jnp.dot(x, w_ckv_ref[...], preferred_element_type=jnp.float32)

    for l in range(NUM_LAYERS):                 # static unroll, L = 2
        w = w_main_ref[l]                       # (D, 8D) packed weight slab
        vec = vecs_ref[l]                       # (16, D) packed biases / LN

        def vrow(i):
            return vec[i:i + 1, :]              # (1, D) — broadcasts over rows

        # --- masked self-attention + residual + layer norm ---
        qkv = jnp.dot(y, w[:, _C_SQKV:_C_SQKV + 3 * D_MODEL],
                      preferred_element_type=jnp.float32)
        q = qkv[:, 0:D_MODEL] + vrow(_BQ_S)
        k = qkv[:, D_MODEL:2 * D_MODEL] + vrow(_BK_S)
        v = qkv[:, 2 * D_MODEL:3 * D_MODEL] + vrow(_BV_S)
        attn = _mha(q, k, v, add_ms, w[:, _C_SO:_C_SO + D_MODEL], vrow(_BO_S))
        # TODO(synk): dropout layers are identity (eval mode).
        y = _layer_norm(y + attn, vrow(_G1), vrow(_BE1))

        # --- cross-attention (Q from decoder, K/V precomputed from encoder) ---
        q = jnp.dot(y, w[:, _C_CQ:_C_CQ + D_MODEL],
                    preferred_element_type=jnp.float32) + vrow(_BQ_C)
        kv = kv_all[:, l * 2 * D_MODEL:(l + 1) * 2 * D_MODEL]
        k = kv[:, 0:D_MODEL] + vrow(_BK_C)
        v = kv[:, D_MODEL:2 * D_MODEL] + vrow(_BV_C)
        attn = _mha(q, k, v, add_mc, w[:, _C_CO:_C_CO + D_MODEL], vrow(_BO_C))
        y = _layer_norm(y + attn, vrow(_G2), vrow(_BE2))

        # --- feed forward (ReLU) + residual + layer norm ---
        h = jnp.dot(y, w[:, _C_FF1:_C_FF1 + HIDDEN],
                    preferred_element_type=jnp.float32) + b1_ref[l]
        h = jnp.maximum(h, 0.0)
        ff = jnp.dot(h, w_ff2_ref[l], preferred_element_type=jnp.float32) + vrow(_B2)
        y = _layer_norm(y + ff, vrow(_G3), vrow(_BE3))

    out_ref[...] = y.astype(out_ref.dtype)


# ------------------------------ wrapper --------------------------------------
@jax.jit
def decoder_forward(x, y, mask_ds, mask_en_ds, params):
    """Full decoder stack in a single grid-less pallas_call."""
    Bb, T, D = y.shape
    S = x.shape[1]

    x_flat = x.reshape(Bb * S, D)
    y_flat = y.reshape(Bb * T, D)

    vmem = pl.BlockSpec(memory_space=pltpu.MemorySpace.VMEM)
    args = (x_flat, y_flat, mask_ds, mask_en_ds,
            params["w_main"], params["w_ckv_all"], params["w_ff2"],
            params["vecs"], params["b1"])

    out_flat = pl.pallas_call(
        decoder_kernel,
        out_shape=jax.ShapeDtypeStruct((Bb * T, D), jnp.float32),
        in_specs=[vmem] * len(args),
        out_specs=vmem,
    )(*args)

    return out_flat.reshape(Bb, T, D)


# --------------------------- parameter init ----------------------------------
def init_params(key):
    """Packed, layer-stacked parameters.

    NOTE: weights are applied as y @ W (PyTorch nn.Linear uses y @ W.T), so
    real torch weights must be transposed before packing.  The 1/sqrt(head_dim)
    softmax scale is folded into the Q projection columns (biases are zero at
    init; nonzero Q biases would need the same scale).
    """
    scale = 0.02
    attn_scale = 1.0 / math.sqrt(HEAD_DIM)

    def w(k, shape):
        return scale * jax.random.normal(k, shape, jnp.float32)

    w_main, w_ckv, w_ff2, vecs, b1 = [], [], [], [], []
    for lk in jax.random.split(key, NUM_LAYERS):
        ks = jax.random.split(lk, 10)
        wq_s, wk_s, wv_s, wo_s = (w(ks[i], (D_MODEL, D_MODEL)) for i in range(4))
        wq_c, wk_c, wv_c, wo_c = (w(ks[i], (D_MODEL, D_MODEL)) for i in range(4, 8))
        w1 = w(ks[8], (D_MODEL, HIDDEN))
        w2 = w(ks[9], (HIDDEN, D_MODEL))

        w_main.append(jnp.concatenate(
            [wq_s * attn_scale, wk_s, wv_s, wo_s, wq_c * attn_scale, wo_c, w1],
            axis=1))                                           # (D, 8D)
        w_ckv.append(jnp.concatenate([wk_c, wv_c], axis=1))    # (D, 2D)
        w_ff2.append(w2)                                       # (HIDDEN, D)

        # Packed vector slab: linear biases start at 0, LN gamma=1, beta=0.
        v = jnp.zeros((N_VEC_ROWS, D_MODEL), jnp.float32)
        v = v.at[_G1].set(1.0).at[_G2].set(1.0).at[_G3].set(1.0)
        vecs.append(v)
        b1.append(jnp.zeros((1, HIDDEN), jnp.float32))

    return {
        "w_main":    jnp.stack(w_main, axis=0),          # (L, D, 8D)
        "w_ckv_all": jnp.concatenate(w_ckv, axis=1),     # (D, L*2D)
        "w_ff2":     jnp.stack(w_ff2, axis=0),           # (L, HIDDEN, D)
        "vecs":      jnp.stack(vecs, axis=0),            # (L, 16, D)
        "b1":        jnp.stack(b1, axis=0),              # (L, 1, HIDDEN)
    }


# ----------------------------------- main -------------------------------------
if __name__ == "__main__":
    key = jax.random.PRNGKey(0)
    k_x, k_y, k_p = jax.random.split(key, 3)

    x = jax.random.normal(k_x, (B, T_ENC, D_MODEL), jnp.float32)   # encoder out
    y = jax.random.normal(k_y, (B, T_DEC, D_MODEL), jnp.float32)   # decoder in

    # causal mask for decoder self-attention, full mask for cross-attention
    causal = jnp.tril(jnp.ones((T_DEC, T_DEC), jnp.float32))
    mask_ds = jnp.tile(causal[None, :, :], (B, 1, 1))              # (B, T, T)
    mask_en_ds = jnp.ones((B, T_DEC, T_ENC), jnp.float32)          # (B, T, S)

    params = init_params(k_p)

    out = decoder_forward(x, y, mask_ds, mask_en_ds, params)
    jax.block_until_ready(out)

    assert out.shape == (B, T_DEC, D_MODEL)
    assert bool(jnp.all(jnp.isfinite(out)))
    print("KERNEL_OK")
</pallas_src>

<mosaic_0001>
module attributes {stable_mosaic.version = 11 : i64} {
  func.func @decoder_kernel(%arg0: memref<16x32xf32, #tpu.memory_space<vmem>>, %arg1: memref<16x32xf32, #tpu.memory_space<vmem>>, %arg2: memref<2x8x8xf32, #tpu.memory_space<vmem>>, %arg3: memref<2x8x8xf32, #tpu.memory_space<vmem>>, %arg4: memref<2x32x256xf32, #tpu.memory_space<vmem>>, %arg5: memref<32x128xf32, #tpu.memory_space<vmem>>, %arg6: memref<2x64x32xf32, #tpu.memory_space<vmem>>, %arg7: memref<2x16x32xf32, #tpu.memory_space<vmem>>, %arg8: memref<2x1x64xf32, #tpu.memory_space<vmem>>, %arg9: memref<16x32xf32, #tpu.memory_space<vmem>>) attributes {dimension_semantics = [], scalar_prefetch = 0 : i64, scratch_operands = 0 : i64, tpu.core_type = #tpu.core_type<tc>} {
    %c0 = arith.constant 0 : index
    %c0_0 = arith.constant 0 : index
    %0 = vector.load %arg0[%c0, %c0_0] : memref<16x32xf32, #tpu.memory_space<vmem>>, vector<16x32xf32>
    %c0_1 = arith.constant 0 : index
    %c0_2 = arith.constant 0 : index
    %1 = vector.load %arg1[%c0_1, %c0_2] : memref<16x32xf32, #tpu.memory_space<vmem>>, vector<16x32xf32>
    %c0_3 = arith.constant 0 : index
    %c0_4 = arith.constant 0 : index
    %c0_5 = arith.constant 0 : index
    %2 = vector.load %arg2[%c0_3, %c0_4, %c0_5] : memref<2x8x8xf32, #tpu.memory_space<vmem>>, vector<2x8x8xf32>
    %cst = arith.constant 0.000000e+00 : f32
    %3 = vector.broadcast %cst : f32 to vector<8x8xf32>
    %4 = vector.extract_strided_slice %2 {offsets = [0, 0, 0], sizes = [1, 8, 8], strides = [1, 1, 1]} : vector<2x8x8xf32> to vector<1x8x8xf32>
    %5 = vector.shape_cast %4 : vector<1x8x8xf32> to vector<8x8xf32>
    %6 = tpu.concatenate %5, %3 in 1 : vector<8x8xf32>, vector<8x8xf32> -> vector<8x16xf32>
    %7 = vector.extract_strided_slice %2 {offsets = [1, 0, 0], sizes = [1, 8, 8], strides = [1, 1, 1]} : vector<2x8x8xf32> to vector<1x8x8xf32>
    %8 = vector.shape_cast %7 : vector<1x8x8xf32> to vector<8x8xf32>
    %9 = tpu.concatenate %3, %8 in 1 : vector<8x8xf32>, vector<8x8xf32> -> vector<8x16xf32>
    %10 = tpu.concatenate %6, %9 in 0 : vector<8x16xf32>, vector<8x16xf32> -> vector<16x16xf32>
    %cst_6 = arith.constant 1.000000e+00 : f32
    %11 = vector.broadcast %cst_6 : f32 to vector<16x16xf32>
    %12 = arith.subf %10, %11 : vector<16x16xf32>
    %cst_7 = arith.constant 1.000000e+09 : f32
    %13 = vector.broadcast %cst_7 : f32 to vector<16x16xf32>
    %14 = arith.mulf %12, %13 : vector<16x16xf32>
    %c0_8 = arith.constant 0 : index
    %c0_9 = arith.constant 0 : index
    %c0_10 = arith.constant 0 : index
    %15 = vector.load %arg3[%c0_8, %c0_9, %c0_10] : memref<2x8x8xf32, #tpu.memory_space<vmem>>, vector<2x8x8xf32>
    %cst_11 = arith.constant 0.000000e+00 : f32
    %16 = vector.broadcast %cst_11 : f32 to vector<8x8xf32>
    %17 = vector.extract_strided_slice %15 {offsets = [0, 0, 0], sizes = [1, 8, 8], strides = [1, 1, 1]} : vector<2x8x8xf32> to vector<1x8x8xf32>
    %18 = vector.shape_cast %17 : vector<1x8x8xf32> to vector<8x8xf32>
    %19 = tpu.concatenate %18, %16 in 1 : vector<8x8xf32>, vector<8x8xf32> -> vector<8x16xf32>
    %20 = vector.extract_strided_slice %15 {offsets = [1, 0, 0], sizes = [1, 8, 8], strides = [1, 1, 1]} : vector<2x8x8xf32> to vector<1x8x8xf32>
    %21 = vector.shape_cast %20 : vector<1x8x8xf32> to vector<8x8xf32>
    %22 = tpu.concatenate %16, %21 in 1 : vector<8x8xf32>, vector<8x8xf32> -> vector<8x16xf32>
    %23 = tpu.concatenate %19, %22 in 0 : vector<8x16xf32>, vector<8x16xf32> -> vector<16x16xf32>
    %cst_12 = arith.constant 1.000000e+00 : f32
    %24 = vector.broadcast %cst_12 : f32 to vector<16x16xf32>
    %25 = arith.subf %23, %24 : vector<16x16xf32>
    %cst_13 = arith.constant 1.000000e+09 : f32
    %26 = vector.broadcast %cst_13 : f32 to vector<16x16xf32>
    %27 = arith.mulf %25, %26 : vector<16x16xf32>
    %c0_14 = arith.constant 0 : index
    %c0_15 = arith.constant 0 : index
    %28 = vector.load %arg5[%c0_14, %c0_15] : memref<32x128xf32, #tpu.memory_space<vmem>>, vector<32x128xf32>
    %cst_16 = arith.constant dense<0.000000e+00> : vector<16x128xf32>
    %29 = tpu.matmul %0, %28, %cst_16 {dimension_numbers = #tpu.dot_dimension_numbers<[1], [0], [0], [1], [0, 0, 1, 1], [], []>} : vector<16x32xf32>, vector<32x128xf32>, vector<16x128xf32> -> vector<16x128xf32>
    %c0_17 = arith.constant 0 : index
    %c0_18 = arith.constant 0 : index
    %c0_19 = arith.constant 0 : index
    %30 = vector.load %arg4[%c0_17, %c0_18, %c0_19] : memref<2x32x256xf32, #tpu.memory_space<vmem>>, vector<1x32x256xf32>
    %31 = vector.shape_cast %30 : vector<1x32x256xf32> to vector<32x256xf32>
    %c0_20 = arith.constant 0 : index
    %c0_21 = arith.constant 0 : index
    %c0_22 = arith.constant 0 : index
    %32 = vector.load %arg7[%c0_20, %c0_21, %c0_22] : memref<2x16x32xf32, #tpu.memory_space<vmem>>, vector<1x16x32xf32>
    %33 = vector.shape_cast %32 : vector<1x16x32xf32> to vector<16x32xf32>
    %34 = vector.extract_strided_slice %31 {offsets = [0, 0], sizes = [32, 96], strides = [1, 1]} : vector<32x256xf32> to vector<32x96xf32>
    %cst_23 = arith.constant dense<0.000000e+00> : vector<16x96xf32>
    %35 = tpu.matmul %1, %34, %cst_23 {dimension_numbers = #tpu.dot_dimension_numbers<[1], [0], [0], [1], [0, 0, 1, 1], [], []>} : vector<16x32xf32>, vector<32x96xf32>, vector<16x96xf32> -> vector<16x96xf32>
    %36 = vector.extract_strided_slice %35 {offsets = [0, 0], sizes = [16, 32], strides = [1, 1]} : vector<16x96xf32> to vector<16x32xf32>
    %37 = vector.extract_strided_slice %33 {offsets = [0, 0], sizes = [1, 32], strides = [1, 1]} : vector<16x32xf32> to vector<1x32xf32>
    %38 = vector.broadcast %37 : vector<1x32xf32> to vector<16x32xf32>
    %39 = arith.addf %36, %38 : vector<16x32xf32>
    %40 = vector.extract_strided_slice %35 {offsets = [0, 32], sizes = [16, 32], strides = [1, 1]} : vector<16x96xf32> to vector<16x32xf32>
    %41 = vector.extract_strided_slice %33 {offsets = [1, 0], sizes = [1, 32], strides = [1, 1]} : vector<16x32xf32> to vector<1x32xf32>
    %42 = vector.broadcast %41 : vector<1x32xf32> to vector<16x32xf32>
    %43 = arith.addf %40, %42 : vector<16x32xf32>
    %44 = vector.extract_strided_slice %35 {offsets = [0, 64], sizes = [16, 32], strides = [1, 1]} : vector<16x96xf32> to vector<16x32xf32>
    %45 = vector.extract_strided_slice %33 {offsets = [2, 0], sizes = [1, 32], strides = [1, 1]} : vector<16x32xf32> to vector<1x32xf32>
    %46 = vector.broadcast %45 : vector<1x32xf32> to vector<16x32xf32>
    %47 = arith.addf %44, %46 : vector<16x32xf32>
    %48 = vector.extract_strided_slice %31 {offsets = [0, 96], sizes = [32, 32], strides = [1, 1]} : vector<32x256xf32> to vector<32x32xf32>
    %49 = vector.extract_strided_slice %33 {offsets = [3, 0], sizes = [1, 32], strides = [1, 1]} : vector<16x32xf32> to vector<1x32xf32>
    %50 = vector.shape_cast %39 : vector<16x32xf32> to vector<16x4x8xf32>
    %51 = tpu.transpose %50, [1, 0, 2] : vector<16x4x8xf32> -> vector<4x16x8xf32>
    %52 = vector.shape_cast %43 : vector<16x32xf32> to vector<16x4x8xf32>
    %53 = tpu.transpose %52, [1, 0, 2] : vector<16x4x8xf32> -> vector<4x16x8xf32>
    %54 = vector.shape_cast %47 : vector<16x32xf32> to vector<16x4x8xf32>
    %55 = tpu.transpose %54, [1, 0, 2] : vector<16x4x8xf32> -> vector<4x16x8xf32>
    "tpu.trace_start"() <{level = 10 : i32, message = "hqd,hkd->hqk"}> : () -> ()
    %cst_24 = arith.constant dense<0.000000e+00> : vector<4x16x16xf32>
    %56 = tpu.matmul %51, %53, %cst_24 {dimension_numbers = #tpu.dot_dimension_numbers<[2], [2], [1], [1], [0, 0, 0, 1, 1, 1], [0], [0]>} : vector<4x16x8xf32>, vector<4x16x8xf32>, vector<4x16x16xf32> -> vector<4x16x16xf32>
    "tpu.trace_stop"() : () -> ()
    %57 = vector.shape_cast %14 : vector<16x16xf32> to vector<1x16x16xf32>
    %58 = vector.broadcast %57 : vector<1x16x16xf32> to vector<4x16x16xf32>
    %59 = arith.addf %56, %58 : vector<4x16x16xf32>
    %cst_25 = arith.constant dense<0xFF800000> : vector<4x16xf32>
    %60 = vector.multi_reduction <maximumf>, %59, %cst_25 [2] : vector<4x16x16xf32> to vector<4x16xf32>
    %61 = vector.shape_cast %60 : vector<4x16xf32> to vector<4x16x1xf32>
    %62 = vector.broadcast %61 : vector<4x16x1xf32> to vector<4x16x16xf32>
    %63 = arith.subf %59, %62 : vector<4x16x16xf32>
    %64 = math.exp %63 : vector<4x16x16xf32>
    %cst_26 = arith.constant dense<0.000000e+00> : vector<4x16xf32>
    %65 = vector.multi_reduction <add>, %64, %cst_26 [2] : vector<4x16x16xf32> to vector<4x16xf32>
    %66 = vector.shape_cast %65 : vector<4x16xf32> to vector<4x16x1xf32>
    %67 = tpu.reciprocal %66 {approx = true} : vector<4x16x1xf32> -> vector<4x16x1xf32>
    %68 = vector.broadcast %67 : vector<4x16x1xf32> to vector<4x16x16xf32>
    %69 = arith.mulf %64, %68 : vector<4x16x16xf32>
    "tpu.trace_start"() <{level = 10 : i32, message = "hqk,hkd->hqd"}> : () -> ()
    %cst_27 = arith.constant dense<0.000000e+00> : vector<4x16x8xf32>
    %70 = tpu.matmul %69, %55, %cst_27 {dimension_numbers = #tpu.dot_dimension_numbers<[2], [1], [1], [2], [0, 0, 0, 1, 1, 2], [0], [0]>} : vector<4x16x16xf32>, vector<4x16x8xf32>, vector<4x16x8xf32> -> vector<4x16x8xf32>
    "tpu.trace_stop"() : () -> ()
    %71 = tpu.transpose %70, [1, 0, 2] : vector<4x16x8xf32> -> vector<16x4x8xf32>
    %72 = vector.shape_cast %71 : vector<16x4x8xf32> to vector<16x32xf32>
    %cst_28 = arith.constant dense<0.000000e+00> : vector<16x32xf32>
    %73 = tpu.matmul %72, %48, %cst_28 {dimension_numbers = #tpu.dot_dimension_numbers<[1], [0], [0], [1], [0, 0, 1, 1], [], []>} : vector<16x32xf32>, vector<32x32xf32>, vector<16x32xf32> -> vector<16x32xf32>
    %74 = vector.broadcast %49 : vector<1x32xf32> to vector<16x32xf32>
    %75 = arith.addf %73, %74 : vector<16x32xf32>
    %76 = arith.addf %1, %75 : vector<16x32xf32>
    %77 = vector.extract_strided_slice %33 {offsets = [9, 0], sizes = [1, 32], strides = [1, 1]} : vector<16x32xf32> to vector<1x32xf32>
    %78 = vector.extract_strided_slice %33 {offsets = [10, 0], sizes = [1, 32], strides = [1, 1]} : vector<16x32xf32> to vector<1x32xf32>
    %cst_29 = arith.constant dense<0.000000e+00> : vector<16xf32>
    %79 = vector.multi_reduction <add>, %76, %cst_29 [1] : vector<16x32xf32> to vector<16xf32>
    %80 = vector.shape_cast %79 : vector<16xf32> to vector<16x1xf32>
    %cst_30 = arith.constant 3.200000e+01 : f32
    %81 = vector.broadcast %cst_30 : f32 to vector<16x1xf32>
    %82 = arith.divf %80, %81 : vector<16x1xf32>
    %83 = vector.broadcast %82 : vector<16x1xf32> to vector<16x32xf32>
    %84 = arith.subf %76, %83 : vector<16x32xf32>
    %85 = arith.mulf %84, %84 : vector<16x32xf32>
    %cst_31 = arith.constant dense<0.000000e+00> : vector<16xf32>
    %86 = vector.multi_reduction <add>, %85, %cst_31 [1] : vector<16x32xf32> to vector<16xf32>
    %87 = vector.shape_cast %86 : vector<16xf32> to vector<16x1xf32>
    %cst_32 = arith.constant 3.200000e+01 : f32
    %88 = vector.broadcast %cst_32 : f32 to vector<16x1xf32>
    %89 = arith.divf %87, %88 : vector<16x1xf32>
    %90 = vector.broadcast %82 : vector<16x1xf32> to vector<16x32xf32>
    %91 = arith.subf %76, %90 : vector<16x32xf32>
    %cst_33 = arith.constant 9.99999974E-6 : f32
    %92 = vector.broadcast %cst_33 : f32 to vector<16x1xf32>
    %93 = arith.addf %89, %92 : vector<16x1xf32>
    %94 = math.rsqrt %93 : vector<16x1xf32>
    %95 = vector.broadcast %94 : vector<16x1xf32> to vector<16x32xf32>
    %96 = arith.mulf %91, %95 : vector<16x32xf32>
    %97 = vector.broadcast %77 : vector<1x32xf32> to vector<16x32xf32>
    %98 = arith.mulf %96, %97 : vector<16x32xf32>
    %99 = vector.broadcast %78 : vector<1x32xf32> to vector<16x32xf32>
    %100 = arith.addf %98, %99 : vector<16x32xf32>
    %101 = vector.extract_strided_slice %31 {offsets = [0, 128], sizes = [32, 32], strides = [1, 1]} : vector<32x256xf32> to vector<32x32xf32>
    %cst_34 = arith.constant dense<0.000000e+00> : vector<16x32xf32>
    %102 = tpu.matmul %100, %101, %cst_34 {dimension_numbers = #tpu.dot_dimension_numbers<[1], [0], [0], [1], [0, 0, 1, 1], [], []>} : vector<16x32xf32>, vector<32x32xf32>, vector<16x32xf32> -> vector<16x32xf32>
    %103 = vector.extract_strided_slice %33 {offsets = [4, 0], sizes = [1, 32], strides = [1, 1]} : vector<16x32xf32> to vector<1x32xf32>
    %104 = vector.broadcast %103 : vector<1x32xf32> to vector<16x32xf32>
    %105 = arith.addf %102, %104 : vector<16x32xf32>
    %106 = vector.extract_strided_slice %29 {offsets = [0, 0], sizes = [16, 64], strides = [1, 1]} : vector<16x128xf32> to vector<16x64xf32>
    %107 = vector.extract_strided_slice %106 {offsets = [0, 0], sizes = [16, 32], strides = [1, 1]} : vector<16x64xf32> to vector<16x32xf32>
    %108 = vector.extract_strided_slice %33 {offsets = [5, 0], sizes = [1, 32], strides = [1, 1]} : vector<16x32xf32> to vector<1x32xf32>
    %109 = vector.broadcast %108 : vector<1x32xf32> to vector<16x32xf32>
    %110 = arith.addf %107, %109 : vector<16x32xf32>
    %111 = vector.extract_strided_slice %106 {offsets = [0, 32], sizes = [16, 32], strides = [1, 1]} : vector<16x64xf32> to vector<16x32xf32>
    %112 = vector.extract_strided_slice %33 {offsets = [6, 0], sizes = [1, 32], strides = [1, 1]} : vector<16x32xf32> to vector<1x32xf32>
    %113 = vector.broadcast %112 : vector<1x32xf32> to vector<16x32xf32>
    %114 = arith.addf %111, %113 : vector<16x32xf32>
    %115 = vector.extract_strided_slice %31 {offsets = [0, 160], sizes = [32, 32], strides = [1, 1]} : vector<32x256xf32> to vector<32x32xf32>
    %116 = vector.extract_strided_slice %33 {offsets = [7, 0], sizes = [1, 32], strides = [1, 1]} : vector<16x32xf32> to vector<1x32xf32>
    %117 = vector.shape_cast %105 : vector<16x32xf32> to vector<16x4x8xf32>
    %118 = tpu.transpose %117, [1, 0, 2] : vector<16x4x8xf32> -> vector<4x16x8xf32>
    %119 = vector.shape_cast %110 : vector<16x32xf32> to vector<16x4x8xf32>
    %120 = tpu.transpose %119, [1, 0, 2] : vector<16x4x8xf32> -> vector<4x16x8xf32>
    %121 = vector.shape_cast %114 : vector<16x32xf32> to vector<16x4x8xf32>
    %122 = tpu.transpose %121, [1, 0, 2] : vector<16x4x8xf32> -> vector<4x16x8xf32>
    "tpu.trace_start"() <{level = 10 : i32, message = "hqd,hkd->hqk"}> : () -> ()
    %cst_35 = arith.constant dense<0.000000e+00> : vector<4x16x16xf32>
    %123 = tpu.matmul %118, %120, %cst_35 {dimension_numbers = #tpu.dot_dimension_numbers<[2], [2], [1], [1], [0, 0, 0, 1, 1, 1], [0], [0]>} : vector<4x16x8xf32>, vector<4x16x8xf32>, vector<4x16x16xf32> -> vector<4x16x16xf32>
    "tpu.trace_stop"() : () -> ()
    %124 = vector.shape_cast %27 : vector<16x16xf32> to vector<1x16x16xf32>
    %125 = vector.broadcast %124 : vector<1x16x16xf32> to vector<4x16x16xf32>
    %126 = arith.addf %123, %125 : vector<4x16x16xf32>
    %cst_36 = arith.constant dense<0xFF800000> : vector<4x16xf32>
    %127 = vector.multi_reduction <maximumf>, %126, %cst_36 [2] : vector<4x16x16xf32> to vector<4x16xf32>
    %128 = vector.shape_cast %127 : vector<4x16xf32> to vector<4x16x1xf32>
    %129 = vector.broadcast %128 : vector<4x16x1xf32> to vector<4x16x16xf32>
    %130 = arith.subf %126, %129 : vector<4x16x16xf32>
    %131 = math.exp %130 : vector<4x16x16xf32>
    %cst_37 = arith.constant dense<0.000000e+00> : vector<4x16xf32>
    %132 = vector.multi_reduction <add>, %131, %cst_37 [2] : vector<4x16x16xf32> to vector<4x16xf32>
    %133 = vector.shape_cast %132 : vector<4x16xf32> to vector<4x16x1xf32>
    %134 = tpu.reciprocal %133 {approx = true} : vector<4x16x1xf32> -> vector<4x16x1xf32>
    %135 = vector.broadcast %134 : vector<4x16x1xf32> to vector<4x16x16xf32>
    %136 = arith.mulf %131, %135 : vector<4x16x16xf32>
    "tpu.trace_start"() <{level = 10 : i32, message = "hqk,hkd->hqd"}> : () -> ()
    %cst_38 = arith.constant dense<0.000000e+00> : vector<4x16x8xf32>
    %137 = tpu.matmul %136, %122, %cst_38 {dimension_numbers = #tpu.dot_dimension_numbers<[2], [1], [1], [2], [0, 0, 0, 1, 1, 2], [0], [0]>} : vector<4x16x16xf32>, vector<4x16x8xf32>, vector<4x16x8xf32> -> vector<4x16x8xf32>
    "tpu.trace_stop"() : () -> ()
    %138 = tpu.transpose %137, [1, 0, 2] : vector<4x16x8xf32> -> vector<16x4x8xf32>
    %139 = vector.shape_cast %138 : vector<16x4x8xf32> to vector<16x32xf32>
    %cst_39 = arith.constant dense<0.000000e+00> : vector<16x32xf32>
    %140 = tpu.matmul %139, %115, %cst_39 {dimension_numbers = #tpu.dot_dimension_numbers<[1], [0], [0], [1], [0, 0, 1, 1], [], []>} : vector<16x32xf32>, vector<32x32xf32>, vector<16x32xf32> -> vector<16x32xf32>
    %141 = vector.broadcast %116 : vector<1x32xf32> to vector<16x32xf32>
    %142 = arith.addf %140, %141 : vector<16x32xf32>
    %143 = arith.addf %100, %142 : vector<16x32xf32>
    %144 = vector.extract_strided_slice %33 {offsets = [11, 0], sizes = [1, 32], strides = [1, 1]} : vector<16x32xf32> to vector<1x32xf32>
    %145 = vector.extract_strided_slice %33 {offsets = [12, 0], sizes = [1, 32], strides = [1, 1]} : vector<16x32xf32> to vector<1x32xf32>
    %cst_40 = arith.constant dense<0.000000e+00> : vector<16xf32>
    %146 = vector.multi_reduction <add>, %143, %cst_40 [1] : vector<16x32xf32> to vector<16xf32>
    %147 = vector.shape_cast %146 : vector<16xf32> to vector<16x1xf32>
    %cst_41 = arith.constant 3.200000e+01 : f32
    %148 = vector.broadcast %cst_41 : f32 to vector<16x1xf32>
    %149 = arith.divf %147, %148 : vector<16x1xf32>
    %150 = vector.broadcast %149 : vector<16x1xf32> to vector<16x32xf32>
    %151 = arith.subf %143, %150 : vector<16x32xf32>
    %152 = arith.mulf %151, %151 : vector<16x32xf32>
    %cst_42 = arith.constant dense<0.000000e+00> : vector<16xf32>
    %153 = vector.multi_reduction <add>, %152, %cst_42 [1] : vector<16x32xf32> to vector<16xf32>
    %154 = vector.shape_cast %153 : vector<16xf32> to vector<16x1xf32>
    %cst_43 = arith.constant 3.200000e+01 : f32
    %155 = vector.broadcast %cst_43 : f32 to vector<16x1xf32>
    %156 = arith.divf %154, %155 : vector<16x1xf32>
    %157 = vector.broadcast %149 : vector<16x1xf32> to vector<16x32xf32>
    %158 = arith.subf %143, %157 : vector<16x32xf32>
    %cst_44 = arith.constant 9.99999974E-6 : f32
    %159 = vector.broadcast %cst_44 : f32 to vector<16x1xf32>
    %160 = arith.addf %156, %159 : vector<16x1xf32>
    %161 = math.rsqrt %160 : vector<16x1xf32>
    %162 = vector.broadcast %161 : vector<16x1xf32> to vector<16x32xf32>
    %163 = arith.mulf %158, %162 : vector<16x32xf32>
    %164 = vector.broadcast %144 : vector<1x32xf32> to vector<16x32xf32>
    %165 = arith.mulf %163, %164 : vector<16x32xf32>
    %166 = vector.broadcast %145 : vector<1x32xf32> to vector<16x32xf32>
    %167 = arith.addf %165, %166 : vector<16x32xf32>
    %168 = vector.extract_strided_slice %31 {offsets = [0, 192], sizes = [32, 64], strides = [1, 1]} : vector<32x256xf32> to vector<32x64xf32>
    %cst_45 = arith.constant dense<0.000000e+00> : vector<16x64xf32>
    %169 = tpu.matmul %167, %168, %cst_45 {dimension_numbers = #tpu.dot_dimension_numbers<[1], [0], [0], [1], [0, 0, 1, 1], [], []>} : vector<16x32xf32>, vector<32x64xf32>, vector<16x64xf32> -> vector<16x64xf32>
    %c0_46 = arith.constant 0 : index
    %c0_47 = arith.constant 0 : index
    %c0_48 = arith.constant 0 : index
    %170 = vector.load %arg8[%c0_46, %c0_47, %c0_48] : memref<2x1x64xf32, #tpu.memory_space<vmem>>, vector<1x1x64xf32>
    %171 = vector.shape_cast %170 : vector<1x1x64xf32> to vector<1x64xf32>
    %172 = vector.broadcast %171 : vector<1x64xf32> to vector<16x64xf32>
    %173 = arith.addf %169, %172 : vector<16x64xf32>
    %cst_49 = arith.constant 0.000000e+00 : f32
    %174 = vector.broadcast %cst_49 : f32 to vector<16x64xf32>
    %175 = arith.maximumf %173, %174 : vector<16x64xf32>
    %c0_50 = arith.constant 0 : index
    %c0_51 = arith.constant 0 : index
    %c0_52 = arith.constant 0 : index
    %176 = vector.load %arg6[%c0_50, %c0_51, %c0_52] : memref<2x64x32xf32, #tpu.memory_space<vmem>>, vector<1x64x32xf32>
    %177 = vector.shape_cast %176 : vector<1x64x32xf32> to vector<64x32xf32>
    %cst_53 = arith.constant dense<0.000000e+00> : vector<16x32xf32>
    %178 = tpu.matmul %175, %177, %cst_53 {dimension_numbers = #tpu.dot_dimension_numbers<[1], [0], [0], [1], [0, 0, 1, 1], [], []>} : vector<16x64xf32>, vector<64x32xf32>, vector<16x32xf32> -> vector<16x32xf32>
    %179 = vector.extract_strided_slice %33 {offsets = [8, 0], sizes = [1, 32], strides = [1, 1]} : vector<16x32xf32> to vector<1x32xf32>
    %180 = vector.broadcast %179 : vector<1x32xf32> to vector<16x32xf32>
    %181 = arith.addf %178, %180 : vector<16x32xf32>
    %182 = arith.addf %167, %181 : vector<16x32xf32>
    %183 = vector.extract_strided_slice %33 {offsets = [13, 0], sizes = [1, 32], strides = [1, 1]} : vector<16x32xf32> to vector<1x32xf32>
    %184 = vector.extract_strided_slice %33 {offsets = [14, 0], sizes = [1, 32], strides = [1, 1]} : vector<16x32xf32> to vector<1x32xf32>
    %cst_54 = arith.constant dense<0.000000e+00> : vector<16xf32>
    %185 = vector.multi_reduction <add>, %182, %cst_54 [1] : vector<16x32xf32> to vector<16xf32>
    %186 = vector.shape_cast %185 : vector<16xf32> to vector<16x1xf32>
    %cst_55 = arith.constant 3.200000e+01 : f32
    %187 = vector.broadcast %cst_55 : f32 to vector<16x1xf32>
    %188 = arith.divf %186, %187 : vector<16x1xf32>
    %189 = vector.broadcast %188 : vector<16x1xf32> to vector<16x32xf32>
    %190 = arith.subf %182, %189 : vector<16x32xf32>
    %191 = arith.mulf %190, %190 : vector<16x32xf32>
    %cst_56 = arith.constant dense<0.000000e+00> : vector<16xf32>
    %192 = vector.multi_reduction <add>, %191, %cst_56 [1] : vector<16x32xf32> to vector<16xf32>
    %193 = vector.shape_cast %192 : vector<16xf32> to vector<16x1xf32>
    %cst_57 = arith.constant 3.200000e+01 : f32
    %194 = vector.broadcast %cst_57 : f32 to vector<16x1xf32>
    %195 = arith.divf %193, %194 : vector<16x1xf32>
    %196 = vector.broadcast %188 : vector<16x1xf32> to vector<16x32xf32>
    %197 = arith.subf %182, %196 : vector<16x32xf32>
    %cst_58 = arith.constant 9.99999974E-6 : f32
    %198 = vector.broadcast %cst_58 : f32 to vector<16x1xf32>
    %199 = arith.addf %195, %198 : vector<16x1xf32>
    %200 = math.rsqrt %199 : vector<16x1xf32>
    %201 = vector.broadcast %200 : vector<16x1xf32> to vector<16x32xf32>
    %202 = arith.mulf %197, %201 : vector<16x32xf32>
    %203 = vector.broadcast %183 : vector<1x32xf32> to vector<16x32xf32>
    %204 = arith.mulf %202, %203 : vector<16x32xf32>
    %205 = vector.broadcast %184 : vector<1x32xf32> to vector<16x32xf32>
    %206 = arith.addf %204, %205 : vector<16x32xf32>
    %c1 = arith.constant 1 : index
    %c0_59 = arith.constant 0 : index
    %c0_60 = arith.constant 0 : index
    %207 = vector.load %arg4[%c1, %c0_59, %c0_60] : memref<2x32x256xf32, #tpu.memory_space<vmem>>, vector<1x32x256xf32>
    %208 = vector.shape_cast %207 : vector<1x32x256xf32> to vector<32x256xf32>
    %c1_61 = arith.constant 1 : index
    %c0_62 = arith.constant 0 : index
    %c0_63 = arith.constant 0 : index
    %209 = vector.load %arg7[%c1_61, %c0_62, %c0_63] : memref<2x16x32xf32, #tpu.memory_space<vmem>>, vector<1x16x32xf32>
    %210 = vector.shape_cast %209 : vector<1x16x32xf32> to vector<16x32xf32>
    %211 = vector.extract_strided_slice %208 {offsets = [0, 0], sizes = [32, 96], strides = [1, 1]} : vector<32x256xf32> to vector<32x96xf32>
    %cst_64 = arith.constant dense<0.000000e+00> : vector<16x96xf32>
    %212 = tpu.matmul %206, %211, %cst_64 {dimension_numbers = #tpu.dot_dimension_numbers<[1], [0], [0], [1], [0, 0, 1, 1], [], []>} : vector<16x32xf32>, vector<32x96xf32>, vector<16x96xf32> -> vector<16x96xf32>
    %213 = vector.extract_strided_slice %212 {offsets = [0, 0], sizes = [16, 32], strides = [1, 1]} : vector<16x96xf32> to vector<16x32xf32>
    %214 = vector.extract_strided_slice %210 {offsets = [0, 0], sizes = [1, 32], strides = [1, 1]} : vector<16x32xf32> to vector<1x32xf32>
    %215 = vector.broadcast %214 : vector<1x32xf32> to vector<16x32xf32>
    %216 = arith.addf %213, %215 : vector<16x32xf32>
    %217 = vector.extract_strided_slice %212 {offsets = [0, 32], sizes = [16, 32], strides = [1, 1]} : vector<16x96xf32> to vector<16x32xf32>
    %218 = vector.extract_strided_slice %210 {offsets = [1, 0], sizes = [1, 32], strides = [1, 1]} : vector<16x32xf32> to vector<1x32xf32>
    %219 = vector.broadcast %218 : vector<1x32xf32> to vector<16x32xf32>
    %220 = arith.addf %217, %219 : vector<16x32xf32>
    %221 = vector.extract_strided_slice %212 {offsets = [0, 64], sizes = [16, 32], strides = [1, 1]} : vector<16x96xf32> to vector<16x32xf32>
    %222 = vector.extract_strided_slice %210 {offsets = [2, 0], sizes = [1, 32], strides = [1, 1]} : vector<16x32xf32> to vector<1x32xf32>
    %223 = vector.broadcast %222 : vector<1x32xf32> to vector<16x32xf32>
    %224 = arith.addf %221, %223 : vector<16x32xf32>
    %225 = vector.extract_strided_slice %208 {offsets = [0, 96], sizes = [32, 32], strides = [1, 1]} : vector<32x256xf32> to vector<32x32xf32>
    %226 = vector.extract_strided_slice %210 {offsets = [3, 0], sizes = [1, 32], strides = [1, 1]} : vector<16x32xf32> to vector<1x32xf32>
    %227 = vector.shape_cast %216 : vector<16x32xf32> to vector<16x4x8xf32>
    %228 = tpu.transpose %227, [1, 0, 2] : vector<16x4x8xf32> -> vector<4x16x8xf32>
    %229 = vector.shape_cast %220 : vector<16x32xf32> to vector<16x4x8xf32>
    %230 = tpu.transpose %229, [1, 0, 2] : vector<16x4x8xf32> -> vector<4x16x8xf32>
    %231 = vector.shape_cast %224 : vector<16x32xf32> to vector<16x4x8xf32>
    %232 = tpu.transpose %231, [1, 0, 2] : vector<16x4x8xf32> -> vector<4x16x8xf32>
    "tpu.trace_start"() <{level = 10 : i32, message = "hqd,hkd->hqk"}> : () -> ()
    %cst_65 = arith.constant dense<0.000000e+00> : vector<4x16x16xf32>
    %233 = tpu.matmul %228, %230, %cst_65 {dimension_numbers = #tpu.dot_dimension_numbers<[2], [2], [1], [1], [0, 0, 0, 1, 1, 1], [0], [0]>} : vector<4x16x8xf32>, vector<4x16x8xf32>, vector<4x16x16xf32> -> vector<4x16x16xf32>
    "tpu.trace_stop"() : () -> ()
    %234 = vector.shape_cast %14 : vector<16x16xf32> to vector<1x16x16xf32>
    %235 = vector.broadcast %234 : vector<1x16x16xf32> to vector<4x16x16xf32>
    %236 = arith.addf %233, %235 : vector<4x16x16xf32>
    %cst_66 = arith.constant dense<0xFF800000> : vector<4x16xf32>
    %237 = vector.multi_reduction <maximumf>, %236, %cst_66 [2] : vector<4x16x16xf32> to vector<4x16xf32>
    %238 = vector.shape_cast %237 : vector<4x16xf32> to vector<4x16x1xf32>
    %239 = vector.broadcast %238 : vector<4x16x1xf32> to vector<4x16x16xf32>
    %240 = arith.subf %236, %239 : vector<4x16x16xf32>
    %241 = math.exp %240 : vector<4x16x16xf32>
    %cst_67 = arith.constant dense<0.000000e+00> : vector<4x16xf32>
    %242 = vector.multi_reduction <add>, %241, %cst_67 [2] : vector<4x16x16xf32> to vector<4x16xf32>
    %243 = vector.shape_cast %242 : vector<4x16xf32> to vector<4x16x1xf32>
    %244 = tpu.reciprocal %243 {approx = true} : vector<4x16x1xf32> -> vector<4x16x1xf32>
    %245 = vector.broadcast %244 : vector<4x16x1xf32> to vector<4x16x16xf32>
    %246 = arith.mulf %241, %245 : vector<4x16x16xf32>
    "tpu.trace_start"() <{level = 10 : i32, message = "hqk,hkd->hqd"}> : () -> ()
    %cst_68 = arith.constant dense<0.000000e+00> : vector<4x16x8xf32>
    %247 = tpu.matmul %246, %232, %cst_68 {dimension_numbers = #tpu.dot_dimension_numbers<[2], [1], [1], [2], [0, 0, 0, 1, 1, 2], [0], [0]>} : vector<4x16x16xf32>, vector<4x16x8xf32>, vector<4x16x8xf32> -> vector<4x16x8xf32>
    "tpu.trace_stop"() : () -> ()
    %248 = tpu.transpose %247, [1, 0, 2] : vector<4x16x8xf32> -> vector<16x4x8xf32>
    %249 = vector.shape_cast %248 : vector<16x4x8xf32> to vector<16x32xf32>
    %cst_69 = arith.constant dense<0.000000e+00> : vector<16x32xf32>
    %250 = tpu.matmul %249, %225, %cst_69 {dimension_numbers = #tpu.dot_dimension_numbers<[1], [0], [0], [1], [0, 0, 1, 1], [], []>} : vector<16x32xf32>, vector<32x32xf32>, vector<16x32xf32> -> vector<16x32xf32>
    %251 = vector.broadcast %226 : vector<1x32xf32> to vector<16x32xf32>
    %252 = arith.addf %250, %251 : vector<16x32xf32>
    %253 = arith.addf %206, %252 : vector<16x32xf32>
    %254 = vector.extract_strided_slice %210 {offsets = [9, 0], sizes = [1, 32], strides = [1, 1]} : vector<16x32xf32> to vector<1x32xf32>
    %255 = vector.extract_strided_slice %210 {offsets = [10, 0], sizes = [1, 32], strides = [1, 1]} : vector<16x32xf32> to vector<1x32xf32>
    %cst_70 = arith.constant dense<0.000000e+00> : vector<16xf32>
    %256 = vector.multi_reduction <add>, %253, %cst_70 [1] : vector<16x32xf32> to vector<16xf32>
    %257 = vector.shape_cast %256 : vector<16xf32> to vector<16x1xf32>
    %cst_71 = arith.constant 3.200000e+01 : f32
    %258 = vector.broadcast %cst_71 : f32 to vector<16x1xf32>
    %259 = arith.divf %257, %258 : vector<16x1xf32>
    %260 = vector.broadcast %259 : vector<16x1xf32> to vector<16x32xf32>
    %261 = arith.subf %253, %260 : vector<16x32xf32>
    %262 = arith.mulf %261, %261 : vector<16x32xf32>
    %cst_72 = arith.constant dense<0.000000e+00> : vector<16xf32>
    %263 = vector.multi_reduction <add>, %262, %cst_72 [1] : vector<16x32xf32> to vector<16xf32>
    %264 = vector.shape_cast %263 : vector<16xf32> to vector<16x1xf32>
    %cst_73 = arith.constant 3.200000e+01 : f32
    %265 = vector.broadcast %cst_73 : f32 to vector<16x1xf32>
    %266 = arith.divf %264, %265 : vector<16x1xf32>
    %267 = vector.broadcast %259 : vector<16x1xf32> to vector<16x32xf32>
    %268 = arith.subf %253, %267 : vector<16x32xf32>
    %cst_74 = arith.constant 9.99999974E-6 : f32
    %269 = vector.broadcast %cst_74 : f32 to vector<16x1xf32>
    %270 = arith.addf %266, %269 : vector<16x1xf32>
    %271 = math.rsqrt %270 : vector<16x1xf32>
    %272 = vector.broadcast %271 : vector<16x1xf32> to vector<16x32xf32>
    %273 = arith.mulf %268, %272 : vector<16x32xf32>
    %274 = vector.broadcast %254 : vector<1x32xf32> to vector<16x32xf32>
    %275 = arith.mulf %273, %274 : vector<16x32xf32>
    %276 = vector.broadcast %255 : vector<1x32xf32> to vector<16x32xf32>
    %277 = arith.addf %275, %276 : vector<16x32xf32>
    %278 = vector.extract_strided_slice %208 {offsets = [0, 128], sizes = [32, 32], strides = [1, 1]} : vector<32x256xf32> to vector<32x32xf32>
    %cst_75 = arith.constant dense<0.000000e+00> : vector<16x32xf32>
    %279 = tpu.matmul %277, %278, %cst_75 {dimension_numbers = #tpu.dot_dimension_numbers<[1], [0], [0], [1], [0, 0, 1, 1], [], []>} : vector<16x32xf32>, vector<32x32xf32>, vector<16x32xf32> -> vector<16x32xf32>
    %280 = vector.extract_strided_slice %210 {offsets = [4, 0], sizes = [1, 32], strides = [1, 1]} : vector<16x32xf32> to vector<1x32xf32>
    %281 = vector.broadcast %280 : vector<1x32xf32> to vector<16x32xf32>
    %282 = arith.addf %279, %281 : vector<16x32xf32>
    %283 = vector.extract_strided_slice %29 {offsets = [0, 64], sizes = [16, 64], strides = [1, 1]} : vector<16x128xf32> to vector<16x64xf32>
    %284 = vector.extract_strided_slice %283 {offsets = [0, 0], sizes = [16, 32], strides = [1, 1]} : vector<16x64xf32> to vector<16x32xf32>
    %285 = vector.extract_strided_slice %210 {offsets = [5, 0], sizes = [1, 32], strides = [1, 1]} : vector<16x32xf32> to vector<1x32xf32>
    %286 = vector.broadcast %285 : vector<1x32xf32> to vector<16x32xf32>
    %287 = arith.addf %284, %286 : vector<16x32xf32>
    %288 = vector.extract_strided_slice %283 {offsets = [0, 32], sizes = [16, 32], strides = [1, 1]} : vector<16x64xf32> to vector<16x32xf32>
    %289 = vector.extract_strided_slice %210 {offsets = [6, 0], sizes = [1, 32], strides = [1, 1]} : vector<16x32xf32> to vector<1x32xf32>
    %290 = vector.broadcast %289 : vector<1x32xf32> to vector<16x32xf32>
    %291 = arith.addf %288, %290 : vector<16x32xf32>
    %292 = vector.extract_strided_slice %208 {offsets = [0, 160], sizes = [32, 32], strides = [1, 1]} : vector<32x256xf32> to vector<32x32xf32>
    %293 = vector.extract_strided_slice %210 {offsets = [7, 0], sizes = [1, 32], strides = [1, 1]} : vector<16x32xf32> to vector<1x32xf32>
    %294 = vector.shape_cast %282 : vector<16x32xf32> to vector<16x4x8xf32>
    %295 = tpu.transpose %294, [1, 0, 2] : vector<16x4x8xf32> -> vector<4x16x8xf32>
    %296 = vector.shape_cast %287 : vector<16x32xf32> to vector<16x4x8xf32>
    %297 = tpu.transpose %296, [1, 0, 2] : vector<16x4x8xf32> -> vector<4x16x8xf32>
    %298 = vector.shape_cast %291 : vector<16x32xf32> to vector<16x4x8xf32>
    %299 = tpu.transpose %298, [1, 0, 2] : vector<16x4x8xf32> -> vector<4x16x8xf32>
    "tpu.trace_start"() <{level = 10 : i32, message = "hqd,hkd->hqk"}> : () -> ()
    %cst_76 = arith.constant dense<0.000000e+00> : vector<4x16x16xf32>
    %300 = tpu.matmul %295, %297, %cst_76 {dimension_numbers = #tpu.dot_dimension_numbers<[2], [2], [1], [1], [0, 0, 0, 1, 1, 1], [0], [0]>} : vector<4x16x8xf32>, vector<4x16x8xf32>, vector<4x16x16xf32> -> vector<4x16x16xf32>
    "tpu.trace_stop"() : () -> ()
    %301 = vector.shape_cast %27 : vector<16x16xf32> to vector<1x16x16xf32>
    %302 = vector.broadcast %301 : vector<1x16x16xf32> to vector<4x16x16xf32>
    %303 = arith.addf %300, %302 : vector<4x16x16xf32>
    %cst_77 = arith.constant dense<0xFF800000> : vector<4x16xf32>
    %304 = vector.multi_reduction <maximumf>, %303, %cst_77 [2] : vector<4x16x16xf32> to vector<4x16xf32>
    %305 = vector.shape_cast %304 : vector<4x16xf32> to vector<4x16x1xf32>
    %306 = vector.broadcast %305 : vector<4x16x1xf32> to vector<4x16x16xf32>
    %307 = arith.subf %303, %306 : vector<4x16x16xf32>
    %308 = math.exp %307 : vector<4x16x16xf32>
    %cst_78 = arith.constant dense<0.000000e+00> : vector<4x16xf32>
    %309 = vector.multi_reduction <add>, %308, %cst_78 [2] : vector<4x16x16xf32> to vector<4x16xf32>
    %310 = vector.shape_cast %309 : vector<4x16xf32> to vector<4x16x1xf32>
    %311 = tpu.reciprocal %310 {approx = true} : vector<4x16x1xf32> -> vector<4x16x1xf32>
    %312 = vector.broadcast %311 : vector<4x16x1xf32> to vector<4x16x16xf32>
    %313 = arith.mulf %308, %312 : vector<4x16x16xf32>
    "tpu.trace_start"() <{level = 10 : i32, message = "hqk,hkd->hqd"}> : () -> ()
    %cst_79 = arith.constant dense<0.000000e+00> : vector<4x16x8xf32>
    %314 = tpu.matmul %313, %299, %cst_79 {dimension_numbers = #tpu.dot_dimension_numbers<[2], [1], [1], [2], [0, 0, 0, 1, 1, 2], [0], [0]>} : vector<4x16x16xf32>, vector<4x16x8xf32>, vector<4x16x8xf32> -> vector<4x16x8xf32>
    "tpu.trace_stop"() : () -> ()
    %315 = tpu.transpose %314, [1, 0, 2] : vector<4x16x8xf32> -> vector<16x4x8xf32>
    %316 = vector.shape_cast %315 : vector<16x4x8xf32> to vector<16x32xf32>
    %cst_80 = arith.constant dense<0.000000e+00> : vector<16x32xf32>
    %317 = tpu.matmul %316, %292, %cst_80 {dimension_numbers = #tpu.dot_dimension_numbers<[1], [0], [0], [1], [0, 0, 1, 1], [], []>} : vector<16x32xf32>, vector<32x32xf32>, vector<16x32xf32> -> vector<16x32xf32>
    %318 = vector.broadcast %293 : vector<1x32xf32> to vector<16x32xf32>
    %319 = arith.addf %317, %318 : vector<16x32xf32>
    %320 = arith.addf %277, %319 : vector<16x32xf32>
    %321 = vector.extract_strided_slice %210 {offsets = [11, 0], sizes = [1, 32], strides = [1, 1]} : vector<16x32xf32> to vector<1x32xf32>
    %322 = vector.extract_strided_slice %210 {offsets = [12, 0], sizes = [1, 32], strides = [1, 1]} : vector<16x32xf32> to vector<1x32xf32>
    %cst_81 = arith.constant dense<0.000000e+00> : vector<16xf32>
    %323 = vector.multi_reduction <add>, %320, %cst_81 [1] : vector<16x32xf32> to vector<16xf32>
    %324 = vector.shape_cast %323 : vector<16xf32> to vector<16x1xf32>
    %cst_82 = arith.constant 3.200000e+01 : f32
    %325 = vector.broadcast %cst_82 : f32 to vector<16x1xf32>
    %326 = arith.divf %324, %325 : vector<16x1xf32>
    %327 = vector.broadcast %326 : vector<16x1xf32> to vector<16x32xf32>
    %328 = arith.subf %320, %327 : vector<16x32xf32>
    %329 = arith.mulf %328, %328 : vector<16x32xf32>
    %cst_83 = arith.constant dense<0.000000e+00> : vector<16xf32>
    %330 = vector.multi_reduction <add>, %329, %cst_83 [1] : vector<16x32xf32> to vector<16xf32>
    %331 = vector.shape_cast %330 : vector<16xf32> to vector<16x1xf32>
    %cst_84 = arith.constant 3.200000e+01 : f32
    %332 = vector.broadcast %cst_84 : f32 to vector<16x1xf32>
    %333 = arith.divf %331, %332 : vector<16x1xf32>
    %334 = vector.broadcast %326 : vector<16x1xf32> to vector<16x32xf32>
    %335 = arith.subf %320, %334 : vector<16x32xf32>
    %cst_85 = arith.constant 9.99999974E-6 : f32
    %336 = vector.broadcast %cst_85 : f32 to vector<16x1xf32>
    %337 = arith.addf %333, %336 : vector<16x1xf32>
    %338 = math.rsqrt %337 : vector<16x1xf32>
    %339 = vector.broadcast %338 : vector<16x1xf32> to vector<16x32xf32>
    %340 = arith.mulf %335, %339 : vector<16x32xf32>
    %341 = vector.broadcast %321 : vector<1x32xf32> to vector<16x32xf32>
    %342 = arith.mulf %340, %341 : vector<16x32xf32>
    %343 = vector.broadcast %322 : vector<1x32xf32> to vector<16x32xf32>
    %344 = arith.addf %342, %343 : vector<16x32xf32>
    %345 = vector.extract_strided_slice %208 {offsets = [0, 192], sizes = [32, 64], strides = [1, 1]} : vector<32x256xf32> to vector<32x64xf32>
    %cst_86 = arith.constant dense<0.000000e+00> : vector<16x64xf32>
    %346 = tpu.matmul %344, %345, %cst_86 {dimension_numbers = #tpu.dot_dimension_numbers<[1], [0], [0], [1], [0, 0, 1, 1], [], []>} : vector<16x32xf32>, vector<32x64xf32>, vector<16x64xf32> -> vector<16x64xf32>
    %c1_87 = arith.constant 1 : index
    %c0_88 = arith.constant 0 : index
    %c0_89 = arith.constant 0 : index
    %347 = vector.load %arg8[%c1_87, %c0_88, %c0_89] : memref<2x1x64xf32, #tpu.memory_space<vmem>>, vector<1x1x64xf32>
    %348 = vector.shape_cast %347 : vector<1x1x64xf32> to vector<1x64xf32>
    %349 = vector.broadcast %348 : vector<1x64xf32> to vector<16x64xf32>
    %350 = arith.addf %346, %349 : vector<16x64xf32>
    %cst_90 = arith.constant 0.000000e+00 : f32
    %351 = vector.broadcast %cst_90 : f32 to vector<16x64xf32>
    %352 = arith.maximumf %350, %351 : vector<16x64xf32>
    %c1_91 = arith.constant 1 : index
    %c0_92 = arith.constant 0 : index
    %c0_93 = arith.constant 0 : index
    %353 = vector.load %arg6[%c1_91, %c0_92, %c0_93] : memref<2x64x32xf32, #tpu.memory_space<vmem>>, vector<1x64x32xf32>
    %354 = vector.shape_cast %353 : vector<1x64x32xf32> to vector<64x32xf32>
    %cst_94 = arith.constant dense<0.000000e+00> : vector<16x32xf32>
    %355 = tpu.matmul %352, %354, %cst_94 {dimension_numbers = #tpu.dot_dimension_numbers<[1], [0], [0], [1], [0, 0, 1, 1], [], []>} : vector<16x64xf32>, vector<64x32xf32>, vector<16x32xf32> -> vector<16x32xf32>
    %356 = vector.extract_strided_slice %210 {offsets = [8, 0], sizes = [1, 32], strides = [1, 1]} : vector<16x32xf32> to vector<1x32xf32>
    %357 = vector.broadcast %356 : vector<1x32xf32> to vector<16x32xf32>
    %358 = arith.addf %355, %357 : vector<16x32xf32>
    %359 = arith.addf %344, %358 : vector<16x32xf32>
    %360 = vector.extract_strided_slice %210 {offsets = [13, 0], sizes = [1, 32], strides = [1, 1]} : vector<16x32xf32> to vector<1x32xf32>
    %361 = vector.extract_strided_slice %210 {offsets = [14, 0], sizes = [1, 32], strides = [1, 1]} : vector<16x32xf32> to vector<1x32xf32>
    %cst_95 = arith.constant dense<0.000000e+00> : vector<16xf32>
    %362 = vector.multi_reduction <add>, %359, %cst_95 [1] : vector<16x32xf32> to vector<16xf32>
    %363 = vector.shape_cast %362 : vector<16xf32> to vector<16x1xf32>
    %cst_96 = arith.constant 3.200000e+01 : f32
    %364 = vector.broadcast %cst_96 : f32 to vector<16x1xf32>
    %365 = arith.divf %363, %364 : vector<16x1xf32>
    %366 = vector.broadcast %365 : vector<16x1xf32> to vector<16x32xf32>
    %367 = arith.subf %359, %366 : vector<16x32xf32>
    %368 = arith.mulf %367, %367 : vector<16x32xf32>
    %cst_97 = arith.constant dense<0.000000e+00> : vector<16xf32>
    %369 = vector.multi_reduction <add>, %368, %cst_97 [1] : vector<16x32xf32> to vector<16xf32>
    %370 = vector.shape_cast %369 : vector<16xf32> to vector<16x1xf32>
    %cst_98 = arith.constant 3.200000e+01 : f32
    %371 = vector.broadcast %cst_98 : f32 to vector<16x1xf32>
    %372 = arith.divf %370, %371 : vector<16x1xf32>
    %373 = vector.broadcast %365 : vector<16x1xf32> to vector<16x32xf32>
    %374 = arith.subf %359, %373 : vector<16x32xf32>
    %cst_99 = arith.constant 9.99999974E-6 : f32
    %375 = vector.broadcast %cst_99 : f32 to vector<16x1xf32>
    %376 = arith.addf %372, %375 : vector<16x1xf32>
    %377 = math.rsqrt %376 : vector<16x1xf32>
    %378 = vector.broadcast %377 : vector<16x1xf32> to vector<16x32xf32>
    %379 = arith.mulf %374, %378 : vector<16x32xf32>
    %380 = vector.broadcast %360 : vector<1x32xf32> to vector<16x32xf32>
    %381 = arith.mulf %379, %380 : vector<16x32xf32>
    %382 = vector.broadcast %361 : vector<1x32xf32> to vector<16x32xf32>
    %383 = arith.addf %381, %382 : vector<16x32xf32>
    %c0_100 = arith.constant 0 : index
    %c0_101 = arith.constant 0 : index
    %384 = vector.load %arg9[%c0_100, %c0_101] : memref<16x32xf32, #tpu.memory_space<vmem>>, vector<16x32xf32>
    tpu.vector_store %arg9[%c0_100, %c0_101], %383 {strides = array<i32>} : memref<16x32xf32, #tpu.memory_space<vmem>>, vector<16x32xf32>,
    return
  }
}

</mosaic_0001>

<llo_original>
// kernel: decoder_forward.1
$region0: #{decoder_forward.1}
  #allocation0 [shape = 'u32[]', space=smem, size = 0x4, offset = 0x4, fixed_abs, tag = 'smem constant byte address 0x4 - core index']
  #allocation1 [shape = 'u32[144,128]{1,0:T(1,128)}', space=vmem, size = 0x12000, scoped, tag = 'internal scratch']
  %s0 = inlined_call_operand.vmem [shape: f32[16,32], index: 0, kind: input, shape index: {}]
  %s1 = inlined_call_operand.vmem [shape: f32[16,32], index: 1, kind: input, shape index: {}]
  %s2 = inlined_call_operand.hbm [shape: f32[2,8,8], index: 2, kind: input, shape index: {}]
  %s3 = inlined_call_operand.hbm [shape: f32[2,8,8], index: 3, kind: input, shape index: {}]
  %s4 = inlined_call_operand.vmem [shape: f32[2,32,256], index: 4, kind: input, shape index: {}]
  %s5 = inlined_call_operand.vmem [shape: f32[32,128], index: 5, kind: input, shape index: {}]
  %s6 = inlined_call_operand.vmem [shape: f32[2,64,32], index: 6, kind: input, shape index: {}]
  %s7 = inlined_call_operand.vmem [shape: f32[2,16,32], index: 7, kind: input, shape index: {}]
  %s8 = inlined_call_operand.vmem [shape: f32[2,1,64], index: 8, kind: input, shape index: {}]
  %s9 = inlined_call_operand.hbm [shape: f32[16,32], index: 9, kind: output, shape index: {}]
  %s10 = sld [smem:[#allocation0]]
  $region54: #{decoder_forward.1} parent=0
    _
  %s12 = ssub.s32 1, %s10
  %s13 = scalar_select 0, %s12, %s10
  $region1: #{decoder_forward.1} parent=0
    #allocation2 [shape = 'u8[8192]{0}', space=vmem, size = 0x2000, scoped, tag = 'input window, operand 2, single buffered']
    #allocation3 [shape = 's32[1]{0}', space=sflag, size = 0x4, scoped, tag = 'scoped memory for decoder_forward.1']
    #allocation4 [shape = 's32[1]{0}', space=sflag, size = 0x4, scoped, tag = 'scoped memory for decoder_forward.1']
    #allocation5 [shape = 'u8[8192]{0}', space=vmem, size = 0x2000, scoped, tag = 'input window, operand 3, single buffered']
    #allocation6 [shape = 's32[1]{0}', space=sflag, size = 0x4, scoped, tag = 'scoped memory for decoder_forward.1']
    #allocation7 [shape = 'u8[8192]{0}', space=vmem, size = 0x2000, scoped, tag = 'output window, operand 0, single buffered']
    %14 = vsyncpa [#allocation3], 0
    %15 = vsyncpa [#allocation6], 0
    %16 = vsyncpa [#allocation4], 0
    // Predicated region
    $region2: #{decoder_forward.1} parent=1 // pred_check
      _
    $region3: #{decoder_forward.1} parent=1 // pred_check_branch
      %18 = sbr.rel (0) target = $region5
    $region4: #{decoder_forward.1} parent=1 // pred_region
      _
    $region5: #{decoder_forward.1} parent=1 // pred_fallthru
      _
    // Predicated region
    $region6: #{decoder_forward.1} parent=1 // pred_check
      _
    $region7: #{decoder_forward.1} parent=1 // pred_check_branch
      %20 = sbr.rel (0) target = $region9
    $region8: #{decoder_forward.1} parent=1 // pred_region
      _
    $region9: #{decoder_forward.1} parent=1 // pred_fallthru
      _
    // Predicated region
    $region10: #{decoder_forward.1} parent=1 // pred_check
      _
    $region11: #{decoder_forward.1} parent=1 // pred_check_branch
      %22 = sbr.rel (0) target = $region13
    $region12: #{decoder_forward.1} parent=1 // pred_region
      %s24 = ssub.s32 256, 256
      %25 = vsyncadd [#allocation3], %s24
      %s26 = sshll.u32 [#allocation2], 4
      %s27 = int_to_ptr.vmem [resolvable:$true] %s26
      %32 = dma.hbm_to_vmem [thread:$0]  %s2, 256, %s27, [#allocation3], 128, 128, 8
    $region13: #{decoder_forward.1} parent=1 // pred_fallthru
      _
    // Predicated region
    $region14: #{decoder_forward.1} parent=1 // pred_check
      _
    $region15: #{decoder_forward.1} parent=1 // pred_check_branch
      %34 = sbr.rel (0) target = $region17
    $region16: #{decoder_forward.1} parent=1 // pred_region
      %s36 = ssub.s32 256, 256
      %37 = vsyncadd [#allocation6], %s36
      %s38 = sshll.u32 [#allocation5], 4
      %s39 = int_to_ptr.vmem [resolvable:$true] %s38
      %44 = dma.hbm_to_vmem [thread:$0]  %s3, 256, %s39, [#allocation6], 128, 128, 8
    $region17: #{decoder_forward.1} parent=1 // pred_fallthru
      _
    // Predicated region
    $region18: #{decoder_forward.1} parent=1 // pred_check
      _
    $region19: #{decoder_forward.1} parent=1 // pred_check_branch
      %46 = sbr.rel (0) target = $region21
    $region20: #{decoder_forward.1} parent=1 // pred_region
      _
    $region21: #{decoder_forward.1} parent=1 // pred_fallthru
      _
    // Predicated region
    $region22: #{decoder_forward.1} parent=1 // pred_check
      _
    $region23: #{decoder_forward.1} parent=1 // pred_check_branch
      %48 = sbr.rel (0) target = $region25
    $region24: #{decoder_forward.1} parent=1 // pred_region
      _
    $region25: #{decoder_forward.1} parent=1 // pred_fallthru
      _
    // Predicated region
    $region26: #{decoder_forward.1} parent=1 // pred_check
      _
    $region27: #{decoder_forward.1} parent=1 // pred_check_branch
      %50 = sbr.rel (0) target = $region29
    $region28: #{decoder_forward.1} parent=1 // pred_region
      _
    $region29: #{decoder_forward.1} parent=1 // pred_fallthru
      _
    // Predicated region
    $region30: #{decoder_forward.1} parent=1 // pred_check
      _
    $region31: #{decoder_forward.1} parent=1 // pred_check_branch
      %52 = sbr.rel (0) target = $region33
    $region32: #{decoder_forward.1} parent=1 // pred_region
      _
    $region33: #{decoder_forward.1} parent=1 // pred_fallthru
      _
    // Predicated region
    $region34: #{decoder_forward.1} parent=1 // pred_check
      _
    $region35: #{decoder_forward.1} parent=1 // pred_check_branch
      %54 = sbr.rel (0) target = $region37
    $region36: #{decoder_forward.1} parent=1 // pred_region
      _
    $region37: #{decoder_forward.1} parent=1 // pred_fallthru
      _
    // Predicated region
    $region38: #{decoder_forward.1} parent=1 // pred_check
      _
    $region39: #{decoder_forward.1} parent=1 // pred_check_branch
      %56 = sbr.rel (0) target = $region41
    $region40: #{decoder_forward.1} parent=1 // pred_region
      %57 = dma.done [#allocation3], 256
    $region41: #{decoder_forward.1} parent=1 // pred_fallthru
      _
    // Predicated region
    $region42: #{decoder_forward.1} parent=1 // pred_check
      _
    $region43: #{decoder_forward.1} parent=1 // pred_check_branch
      %59 = sbr.rel (0) target = $region45
    $region44: #{decoder_forward.1} parent=1 // pred_region
      %60 = dma.done [#allocation6], 256
    $region45: #{decoder_forward.1} parent=1 // pred_fallthru
      _
    %v61 = vld [vmem:[%s0] sm:$0xff]
    %v62 = vld [vmem:[%s0 + $0x8] sm:$0xff]
    %v63 = vld [vmem:[%s1] sm:$0xff]
    %v64 = vld [vmem:[%s1 + $0x8] sm:$0xff]
    %v65 = vld [vmem:[#allocation2] sm:$0xff]
    %v66 = vld [vmem:[#allocation2 + $0x8] sm:$0xff]
    %vm67 = vcmask 64512
    %v68 = vsel %vm67, %v65, 0.0
    %70 = vrot.lane.b32.xlu0 %v66, 8
    %v71 = vpop.permute.xlu0 %70
    %v73 = vsel %vm67, 0.0, %v71
    %v74 = vsub.f32 %v68, 1.0
    %v75 = vsub.f32 %v73, 1.0
    %v76 = vmul.f32 %v74, 1e+09
    %v77 = vmul.f32 %v75, 1e+09
    %v78 = vld [vmem:[#allocation5] sm:$0xff]
    %v79 = vld [vmem:[#allocation5 + $0x8] sm:$0xff]
    %v80 = vsel %vm67, %v78, 0.0
    %82 = vrot.lane.b32.xlu0 %v79, 8
    %v83 = vpop.permute.xlu0 %82
    %v85 = vsel %vm67, 0.0, %v83
    %v86 = vsub.f32 %v80, 1.0
    %v87 = vsub.f32 %v85, 1.0
    %v88 = vmul.f32 %v86, 1e+09
    %v89 = vmul.f32 %v87, 1e+09
    %v90 = vld [vmem:[%s5] sm:$0xff]
    %v91 = vld [vmem:[%s5 + $0x8] sm:$0xff]
    %v92 = vld [vmem:[%s5 + $0x10] sm:$0xff]
    %v93 = vld [vmem:[%s5 + $0x18] sm:$0xff]
    %vm94 = vcmask 261120
    %v96 = vsel %vm94, %v61, 0
    %v99 = vsel %vm94, %v62, 0
    %101 = vmatprep.subr.mxu0 0.0
    %102 = vmatpush1.msra.mxu0 %v90
    %103 = vmatprep.subr.mxu0 0.0
    %104 = vmatpush1.msra.mxu0 %v91
    %105 = vmatprep.subr.mxu0 0.0
    %106 = vmatpush1.msra.mxu0 %v92
    %107 = vmatprep.subr.mxu0 0.0
    %108 = vmatpush1.msra.mxu0 %v93
    %109 = vmatprep.subr.mxu0 0.0
    %110 = vmatpush1.msra.mxu0 0.0
    %111 = vmatprep.subr.mxu0 0.0
    %112 = vmatpush1.msra.mxu0 0.0
    %113 = vmatprep.subr.mxu0 0.0
    %114 = vmatpush1.msra.mxu0 0.0
    %115 = vmatprep.subr.mxu0 0.0
    %116 = vmatpush1.msra.mxu0 0.0
    %117 = vmatprep.subr.mxu0 0.0
    %118 = vmatpush1.msra.mxu0 0.0
    %119 = vmatprep.subr.mxu0 0.0
    %120 = vmatpush1.msra.mxu0 0.0
    %121 = vmatprep.subr.mxu0 0.0
    %122 = vmatpush1.msra.mxu0 0.0
    %123 = vmatprep.subr.mxu0 0.0
    %124 = vmatpush1.msra.mxu0 0.0
    %125 = vmatprep.subr.mxu0 0.0
    %126 = vmatpush1.msra.mxu0 0.0
    %127 = vmatprep.subr.mxu0 0.0
    %128 = vmatpush1.msra.mxu0 0.0
    %129 = vmatprep.subr.mxu0 0.0
    %130 = vmatpush1.msra.mxu0 0.0
    %131 = vmatprep.subr.mxu0 0.0
    %132 = vmatpush1.msra.mxu0 0.0
    %133 = vmatprep.subr.mxu0 0.0
    %134 = vmatpush1.msra.mxu0 0.0
    %135 = vmatprep.subr.mxu0 0.0
    %136 = vmatpush1.msra.mxu0 0.0
    %137 = vmatprep.subr.mxu0 0.0
    %138 = vmatpush1.msra.mxu0 0.0
    %139 = vmatprep.subr.mxu0 0.0
    %140 = vmatpush1.msra.mxu0 0.0
    %141 = vmatprep.subr.mxu0 0.0
    %142 = vmatpush1.msra.mxu0 0.0
    %143 = vmatprep.subr.mxu0 0.0
    %144 = vmatpush1.msra.mxu0 0.0
    %145 = vmatprep.subr.mxu0 0.0
    %146 = vmatpush1.msra.mxu0 0.0
    %147 = vmatprep.subr.mxu0 0.0
    %148 = vmatpush1.msra.mxu0 0.0
    %149 = vmatprep.subr.mxu0 0.0
    %150 = vmatpush1.msra.mxu0 0.0
    %151 = vmatprep.subr.mxu0 0.0
    %152 = vmatpush1.msra.mxu0 0.0
    %153 = vmatprep.subr.mxu0 0.0
    %154 = vmatpush1.msra.mxu0 0.0
    %155 = vmatprep.subr.mxu0 0.0
    %156 = vmatpush1.msra.mxu0 0.0
    %157 = vmatprep.subr.mxu0 0.0
    %158 = vmatpush1.msra.mxu0 0.0
    %159 = vmatprep.subr.mxu0 0.0
    %160 = vmatpush1.msra.mxu0 0.0
    %161 = vmatprep.subr.mxu0 0.0
    %162 = vmatpush1.msra.mxu0 0.0
    %163 = vmatprep.subr.mxu0 0.0
    %164 = vmatpush1.msra.mxu0 0.0
    %165 = vmatprep.mubr.f32.mxu0 0.0
    %166 = vmatmul.mubr.f32.gmra.mrb[0].mxu0 %v96
    %v167 = vpop.f32.mrb[0].mxu0
    %v168 = vadd.f32 0.0, %v167
    %v169 = vpop.f32.mrb[0].mxu0
    %170 = vmatprep.mubr.f32.mxu0 0.0
    %171 = vmatmul.mubr.f32.gmra.mrb[0].mxu0 %v99
    %v172 = vpop.f32.mrb[0].mxu0
    %v173 = vadd.f32 0.0, %v172
    %v174 = vpop.f32.mrb[0].mxu0
    %175 = vdwg.mxu0
    %v176 = vld [vmem:[%s4] sm:$0xff]
    %v177 = vld [vmem:[%s4 + $0x8] sm:$0xff]
    %v178 = vld [vmem:[%s4 + $0x10] sm:$0xff]
    %v179 = vld [vmem:[%s4 + $0x18] sm:$0xff]
    %v180 = vld [vmem:[%s4 + $0x20] sm:$0xff]
    %v181 = vld [vmem:[%s4 + $0x28] sm:$0xff]
    %v182 = vld [vmem:[%s4 + $0x30] sm:$0xff]
    %v183 = vld [vmem:[%s4 + $0x38] sm:$0xff]
    %v184 = vld [vmem:[%s7] sm:$0xff]
    %v185 = vld [vmem:[%s7 + $0x8] sm:$0xff]
    %v187 = vsel %vm94, %v63, 0
    %v190 = vsel %vm94, %v64, 0
    %192 = vmatprep.subr.mxu0 0.0
    %193 = vmatpush1.msra.mxu0 %v176
    %194 = vmatprep.subr.mxu0 0.0
    %195 = vmatpush1.msra.mxu0 %v178
    %196 = vmatprep.subr.mxu0 0.0
    %197 = vmatpush1.msra.mxu0 %v180
    %198 = vmatprep.subr.mxu0 0.0
    %199 = vmatpush1.msra.mxu0 %v182
    %200 = vmatprep.subr.mxu0 0.0
    %201 = vmatpush1.msra.mxu0 0.0
    %202 = vmatprep.subr.mxu0 0.0
    %203 = vmatpush1.msra.mxu0 0.0
    %204 = vmatprep.subr.mxu0 0.0
    %205 = vmatpush1.msra.mxu0 0.0
    %206 = vmatprep.subr.mxu0 0.0
    %207 = vmatpush1.msra.mxu0 0.0
    %208 = vmatprep.subr.mxu0 0.0
    %209 = vmatpush1.msra.mxu0 0.0
    %210 = vmatprep.subr.mxu0 0.0
    %211 = vmatpush1.msra.mxu0 0.0
    %212 = vmatprep.subr.mxu0 0.0
    %213 = vmatpush1.msra.mxu0 0.0
    %214 = vmatprep.subr.mxu0 0.0
    %215 = vmatpush1.msra.mxu0 0.0
    %216 = vmatprep.subr.mxu0 0.0
    %217 = vmatpush1.msra.mxu0 0.0
    %218 = vmatprep.subr.mxu0 0.0
    %219 = vmatpush1.msra.mxu0 0.0
    %220 = vmatprep.subr.mxu0 0.0
    %221 = vmatpush1.msra.mxu0 0.0
    %222 = vmatprep.subr.mxu0 0.0
    %223 = vmatpush1.msra.mxu0 0.0
    %224 = vmatprep.subr.mxu0 0.0
    %225 = vmatpush1.msra.mxu0 0.0
    %226 = vmatprep.subr.mxu0 0.0
    %227 = vmatpush1.msra.mxu0 0.0
    %228 = vmatprep.subr.mxu0 0.0
    %229 = vmatpush1.msra.mxu0 0.0
    %230 = vmatprep.subr.mxu0 0.0
    %231 = vmatpush1.msra.mxu0 0.0
    %232 = vmatprep.subr.mxu0 0.0
    %233 = vmatpush1.msra.mxu0 0.0
    %234 = vmatprep.subr.mxu0 0.0
    %235 = vmatpush1.msra.mxu0 0.0
    %236 = vmatprep.subr.mxu0 0.0
    %237 = vmatpush1.msra.mxu0 0.0
    %238 = vmatprep.subr.mxu0 0.0
    %239 = vmatpush1.msra.mxu0 0.0
    %240 = vmatprep.subr.mxu0 0.0
    %241 = vmatpush1.msra.mxu0 0.0
    %242 = vmatprep.subr.mxu0 0.0
    %243 = vmatpush1.msra.mxu0 0.0
    %244 = vmatprep.subr.mxu0 0.0
    %245 = vmatpush1.msra.mxu0 0.0
    %246 = vmatprep.subr.mxu0 0.0
    %247 = vmatpush1.msra.mxu0 0.0
    %248 = vmatprep.subr.mxu0 0.0
    %249 = vmatpush1.msra.mxu0 0.0
    %250 = vmatprep.subr.mxu0 0.0
    %251 = vmatpush1.msra.mxu0 0.0
    %252 = vmatprep.subr.mxu0 0.0
    %253 = vmatpush1.msra.mxu0 0.0
    %254 = vmatprep.subr.mxu0 0.0
    %255 = vmatpush1.msra.mxu0 0.0
    %256 = vmatprep.mubr.f32.mxu0 0.0
    %257 = vmatmul.mubr.f32.gmra.mrb[0].mxu0 %v187
    %v258 = vpop.f32.mrb[0].mxu0
    %v259 = vadd.f32 0.0, %v258
    %v260 = vpop.f32.mrb[0].mxu0
    %261 = vmatprep.mubr.f32.mxu0 0.0
    %262 = vmatmul.mubr.f32.gmra.mrb[0].mxu0 %v190
    %v263 = vpop.f32.mrb[0].mxu0
    %v264 = vadd.f32 0.0, %v263
    %v265 = vpop.f32.mrb[0].mxu0
    %266 = vdwg.mxu0
    %v267 = vlaneseq
    %v268 = vshrl.u32 %v267, 7
    %v269 = vsub.s32 0, %v268
    %v270 = vrot.slane %v184, %v269
    %v271 = vadd.f32 %v259, %v270
    %v272 = vadd.f32 %v264, %v270
    %v273 = vlaneseq
    %v274 = vshrl.u32 %v273, 7
    %v275 = vsub.s32 1, %v274
    %v276 = vrot.slane %v184, %v275
    %278 = vrot.lane.b32.xlu0 %v276, 32
    %v279 = vpop.permute.xlu0 %278
    %v281 = vadd.f32 %v259, %v279
    %v282 = vadd.f32 %v264, %v279
    %v283 = vlaneseq
    %v284 = vshrl.u32 %v283, 7
    %v285 = vsub.s32 2, %v284
    %v286 = vrot.slane %v184, %v285
    %288 = vrot.lane.b32.xlu0 %v286, 64
    %v289 = vpop.permute.xlu0 %288
    %v291 = vadd.f32 %v259, %v289
    %v292 = vadd.f32 %v264, %v289
    %295 = vrot.lane.b32.xlu0 %v271, 120
    %v296 = vpop.permute.xlu0 %295
    %297 = vrot.lane.b32.xlu0 %v272, 120
    %v298 = vpop.permute.xlu0 %297
    %301 = vrot.lane.b32.xlu0 %v271, 112
    %v302 = vpop.permute.xlu0 %301
    %303 = vrot.lane.b32.xlu0 %v272, 112
    %v304 = vpop.permute.xlu0 %303
    %307 = vrot.lane.b32.xlu0 %v271, 104
    %v308 = vpop.permute.xlu0 %307
    %309 = vrot.lane.b32.xlu0 %v272, 104
    %v310 = vpop.permute.xlu0 %309
    %v313 = vcombine.low %v271, %v302
    %v314 = vcombine.high %v271, %v302
    %v316 = vunpack.c.l.s4 1983009808
    %v317 = vunpack.c.0.s8 %v316
    %v318 = vlaneseq
    %v319 = vshrl.u32 %v318, 7
    %v320 = vsub.s32 %v317, %v319
    %v321 = vrot.slane %v313, %v320
    %v323 = vunpack.c.l.s4 1983009808
    %v324 = vunpack.c.0.s8 %v323
    %v325 = vlaneseq
    %v326 = vshrl.u32 %v325, 7
    %v327 = vsub.s32 %v324, %v326
    %v328 = vrot.slane %v314, %v327
    %v329 = vcombine.low %v296, %v308
    %v330 = vcombine.high %v296, %v308
    %v332 = vunpack.c.l.s4 1983009808
    %v333 = vunpack.c.0.s8 %v332
    %v334 = vlaneseq
    %v335 = vshrl.u32 %v334, 7
    %v336 = vsub.s32 %v333, %v335
    %v337 = vrot.slane %v329, %v336
    %v339 = vunpack.c.l.s4 1983009808
    %v340 = vunpack.c.0.s8 %v339
    %v341 = vlaneseq
    %v342 = vshrl.u32 %v341, 7
    %v343 = vsub.s32 %v340, %v342
    %v344 = vrot.slane %v330, %v343
    %v345 = vcombine.low %v321, %v337
    %v346 = vcombine.high %v321, %v337
    %v348 = vunpack.c.l.s4 1934713408
    %v349 = vunpack.c.0.s8 %v348
    %v350 = vlaneseq
    %v351 = vshrl.u32 %v350, 7
    %v352 = vsub.s32 %v349, %v351
    %v353 = vrot.slane %v345, %v352
    %v355 = vunpack.c.l.s4 1934713408
    %v356 = vunpack.c.0.s8 %v355
    %v357 = vlaneseq
    %v358 = vshrl.u32 %v357, 7
    %v359 = vsub.s32 %v356, %v358
    %v360 = vrot.slane %v346, %v359
    %v361 = vcombine.low %v328, %v344
    %v362 = vcombine.high %v328, %v344
    %v364 = vunpack.c.l.s4 1934713408
    %v365 = vunpack.c.0.s8 %v364
    %v366 = vlaneseq
    %v367 = vshrl.u32 %v366, 7
    %v368 = vsub.s32 %v365, %v367
    %v369 = vrot.slane %v361, %v368
    %v371 = vunpack.c.l.s4 1934713408
    %v372 = vunpack.c.0.s8 %v371
    %v373 = vlaneseq
    %v374 = vshrl.u32 %v373, 7
    %v375 = vsub.s32 %v372, %v374
    %v376 = vrot.slane %v362, %v375
    %v377 = vcombine.high %v353, 0.0
    %v378 = vcombine.high %v360, 0.0
    %v379 = vcombine.high %v369, 0.0
    %v380 = vcombine.high %v376, 0.0
    %v381 = vcombine.low %v272, %v304
    %v382 = vcombine.high %v272, %v304
    %v384 = vunpack.c.l.s4 1983009808
    %v385 = vunpack.c.0.s8 %v384
    %v386 = vlaneseq
    %v387 = vshrl.u32 %v386, 7
    %v388 = vsub.s32 %v385, %v387
    %v389 = vrot.slane %v381, %v388
    %v391 = vunpack.c.l.s4 1983009808
    %v392 = vunpack.c.0.s8 %v391
    %v393 = vlaneseq
    %v394 = vshrl.u32 %v393, 7
    %v395 = vsub.s32 %v392, %v394
    %v396 = vrot.slane %v382, %v395
    %v397 = vcombine.low %v298, %v310
    %v398 = vcombine.high %v298, %v310
    %v400 = vunpack.c.l.s4 1983009808
    %v401 = vunpack.c.0.s8 %v400
    %v402 = vlaneseq
    %v403 = vshrl.u32 %v402, 7
    %v404 = vsub.s32 %v401, %v403
    %v405 = vrot.slane %v397, %v404
    %v407 = vunpack.c.l.s4 1983009808
    %v408 = vunpack.c.0.s8 %v407
    %v409 = vlaneseq
    %v410 = vshrl.u32 %v409, 7
    %v411 = vsub.s32 %v408, %v410
    %v412 = vrot.slane %v398, %v411
    %v413 = vcombine.low %v389, %v405
    %v414 = vcombine.high %v389, %v405
    %v416 = vunpack.c.l.s4 1934713408
    %v417 = vunpack.c.0.s8 %v416
    %v418 = vlaneseq
    %v419 = vshrl.u32 %v418, 7
    %v420 = vsub.s32 %v417, %v419
    %v421 = vrot.slane %v413, %v420
    %v423 = vunpack.c.l.s4 1934713408
    %v424 = vunpack.c.0.s8 %v423
    %v425 = vlaneseq
    %v426 = vshrl.u32 %v425, 7
    %v427 = vsub.s32 %v424, %v426
    %v428 = vrot.slane %v414, %v427
    %v429 = vcombine.low %v396, %v412
    %v430 = vcombine.high %v396, %v412
    %v432 = vunpack.c.l.s4 1934713408
    %v433 = vunpack.c.0.s8 %v432
    %v434 = vlaneseq
    %v435 = vshrl.u32 %v434, 7
    %v436 = vsub.s32 %v433, %v435
    %v437 = vrot.slane %v429, %v436
    %v439 = vunpack.c.l.s4 1934713408
    %v440 = vunpack.c.0.s8 %v439
    %v441 = vlaneseq
    %v442 = vshrl.u32 %v441, 7
    %v443 = vsub.s32 %v440, %v442
    %v444 = vrot.slane %v430, %v443
    %v445 = vcombine.high %v421, 0.0
    %v446 = vcombine.high %v428, 0.0
    %v447 = vcombine.high %v437, 0.0
    %v448 = vcombine.high %v444, 0.0
    %v449 = vcombine.low %v353, %v360
    %v451 = vunpack.c.l.s4 1983009808
    %v452 = vunpack.c.0.s8 %v451
    %v453 = vlaneseq
    %v454 = vshrl.u32 %v453, 7
    %v455 = vsub.s32 %v452, %v454
    %v456 = vrot.slane %v449, %v455
    %v457 = vcombine.low %v377, %v378
    %v459 = vunpack.c.l.s4 1983009808
    %v460 = vunpack.c.0.s8 %v459
    %v461 = vlaneseq
    %v462 = vshrl.u32 %v461, 7
    %v463 = vsub.s32 %v460, %v462
    %v464 = vrot.slane %v457, %v463
    %v465 = vcombine.low %v369, %v376
    %v467 = vunpack.c.l.s4 1983009808
    %v468 = vunpack.c.0.s8 %v467
    %v469 = vlaneseq
    %v470 = vshrl.u32 %v469, 7
    %v471 = vsub.s32 %v468, %v470
    %v472 = vrot.slane %v465, %v471
    %v473 = vcombine.low %v379, %v380
    %v475 = vunpack.c.l.s4 1983009808
    %v476 = vunpack.c.0.s8 %v475
    %v477 = vlaneseq
    %v478 = vshrl.u32 %v477, 7
    %v479 = vsub.s32 %v476, %v478
    %v480 = vrot.slane %v473, %v479
    %v481 = vcombine.low %v456, %v464
    %v482 = vcombine.high %v456, %v464
    %v484 = vunpack.c.l.s4 1934713408
    %v485 = vunpack.c.0.s8 %v484
    %v486 = vlaneseq
    %v487 = vshrl.u32 %v486, 7
    %v488 = vsub.s32 %v485, %v487
    %v489 = vrot.slane %v481, %v488
    %v491 = vunpack.c.l.s4 1934713408
    %v492 = vunpack.c.0.s8 %v491
    %v493 = vlaneseq
    %v494 = vshrl.u32 %v493, 7
    %v495 = vsub.s32 %v492, %v494
    %v496 = vrot.slane %v482, %v495
    %v497 = vcombine.low %v472, %v480
    %v498 = vcombine.high %v472, %v480
    %v500 = vunpack.c.l.s4 1934713408
    %v501 = vunpack.c.0.s8 %v500
    %v502 = vlaneseq
    %v503 = vshrl.u32 %v502, 7
    %v504 = vsub.s32 %v501, %v503
    %v505 = vrot.slane %v497, %v504
    %v507 = vunpack.c.l.s4 1934713408
    %v508 = vunpack.c.0.s8 %v507
    %v509 = vlaneseq
    %v510 = vshrl.u32 %v509, 7
    %v511 = vsub.s32 %v508, %v510
    %v512 = vrot.slane %v498, %v511
    %v513 = vcombine.low %v489, %v505
    %v514 = vcombine.high %v489, %v505
    %v515 = vcombine.low %v496, %v512
    %v516 = vcombine.high %v496, %v512
    %v517 = vcombine.low %v421, %v428
    %v519 = vunpack.c.l.s4 1983009808
    %v520 = vunpack.c.0.s8 %v519
    %v521 = vlaneseq
    %v522 = vshrl.u32 %v521, 7
    %v523 = vsub.s32 %v520, %v522
    %v524 = vrot.slane %v517, %v523
    %v525 = vcombine.low %v445, %v446
    %v527 = vunpack.c.l.s4 1983009808
    %v528 = vunpack.c.0.s8 %v527
    %v529 = vlaneseq
    %v530 = vshrl.u32 %v529, 7
    %v531 = vsub.s32 %v528, %v530
    %v532 = vrot.slane %v525, %v531
    %v533 = vcombine.low %v437, %v444
    %v535 = vunpack.c.l.s4 1983009808
    %v536 = vunpack.c.0.s8 %v535
    %v537 = vlaneseq
    %v538 = vshrl.u32 %v537, 7
    %v539 = vsub.s32 %v536, %v538
    %v540 = vrot.slane %v533, %v539
    %v541 = vcombine.low %v447, %v448
    %v543 = vunpack.c.l.s4 1983009808
    %v544 = vunpack.c.0.s8 %v543
    %v545 = vlaneseq
    %v546 = vshrl.u32 %v545, 7
    %v547 = vsub.s32 %v544, %v546
    %v548 = vrot.slane %v541, %v547
    %v549 = vcombine.low %v524, %v532
    %v550 = vcombine.high %v524, %v532
    %v552 = vunpack.c.l.s4 1934713408
    %v553 = vunpack.c.0.s8 %v552
    %v554 = vlaneseq
    %v555 = vshrl.u32 %v554, 7
    %v556 = vsub.s32 %v553, %v555
    %v557 = vrot.slane %v549, %v556
    %v559 = vunpack.c.l.s4 1934713408
    %v560 = vunpack.c.0.s8 %v559
    %v561 = vlaneseq
    %v562 = vshrl.u32 %v561, 7
    %v563 = vsub.s32 %v560, %v562
    %v564 = vrot.slane %v550, %v563
    %v565 = vcombine.low %v540, %v548
    %v566 = vcombine.high %v540, %v548
    %v568 = vunpack.c.l.s4 1934713408
    %v569 = vunpack.c.0.s8 %v568
    %v570 = vlaneseq
    %v571 = vshrl.u32 %v570, 7
    %v572 = vsub.s32 %v569, %v571
    %v573 = vrot.slane %v565, %v572
    %v575 = vunpack.c.l.s4 1934713408
    %v576 = vunpack.c.0.s8 %v575
    %v577 = vlaneseq
    %v578 = vshrl.u32 %v577, 7
    %v579 = vsub.s32 %v576, %v578
    %v580 = vrot.slane %v566, %v579
    %v581 = vcombine.low %v557, %v573
    %v582 = vcombine.high %v557, %v573
    %v583 = vcombine.low %v564, %v580
    %v584 = vcombine.high %v564, %v580
    %587 = vrot.lane.b32.xlu0 %v281, 120
    %v588 = vpop.permute.xlu0 %587
    %589 = vrot.lane.b32.xlu0 %v282, 120
    %v590 = vpop.permute.xlu0 %589
    %591 = vrot.lane.b32.xlu0 %v281, 112
    %v592 = vpop.permute.xlu0 %591
    %593 = vrot.lane.b32.xlu0 %v282, 112
    %v594 = vpop.permute.xlu0 %593
    %595 = vrot.lane.b32.xlu0 %v281, 104
    %v596 = vpop.permute.xlu0 %595
    %597 = vrot.lane.b32.xlu0 %v282, 104
    %v598 = vpop.permute.xlu0 %597
    %599 = vrot.lane.b32.xlu0 %v281, 96
    %v600 = vpop.permute.xlu0 %599
    %601 = vrot.lane.b32.xlu0 %v282, 96
    %v602 = vpop.permute.xlu0 %601
    %603 = vrot.lane.b32.xlu0 %v588, 96
    %v604 = vpop.permute.xlu0 %603
    %605 = vrot.lane.b32.xlu0 %v590, 96
    %v606 = vpop.permute.xlu0 %605
    %607 = vrot.lane.b32.xlu0 %v592, 96
    %v608 = vpop.permute.xlu0 %607
    %609 = vrot.lane.b32.xlu0 %v594, 96
    %v610 = vpop.permute.xlu0 %609
    %611 = vrot.lane.b32.xlu0 %v596, 96
    %v612 = vpop.permute.xlu0 %611
    %613 = vrot.lane.b32.xlu0 %v598, 96
    %v614 = vpop.permute.xlu0 %613
    %v623 = vcombine.low %v600, %v608
    %v624 = vcombine.high %v600, %v608
    %v626 = vunpack.c.l.s4 1983009808
    %v627 = vunpack.c.0.s8 %v626
    %v628 = vlaneseq
    %v629 = vshrl.u32 %v628, 7
    %v630 = vsub.s32 %v627, %v629
    %v631 = vrot.slane %v623, %v630
    %v633 = vunpack.c.l.s4 1983009808
    %v634 = vunpack.c.0.s8 %v633
    %v635 = vlaneseq
    %v636 = vshrl.u32 %v635, 7
    %v637 = vsub.s32 %v634, %v636
    %v638 = vrot.slane %v624, %v637
    %v639 = vcombine.low %v604, %v612
    %v640 = vcombine.high %v604, %v612
    %v642 = vunpack.c.l.s4 1983009808
    %v643 = vunpack.c.0.s8 %v642
    %v644 = vlaneseq
    %v645 = vshrl.u32 %v644, 7
    %v646 = vsub.s32 %v643, %v645
    %v647 = vrot.slane %v639, %v646
    %v649 = vunpack.c.l.s4 1983009808
    %v650 = vunpack.c.0.s8 %v649
    %v651 = vlaneseq
    %v652 = vshrl.u32 %v651, 7
    %v653 = vsub.s32 %v650, %v652
    %v654 = vrot.slane %v640, %v653
    %v655 = vcombine.low %v631, %v647
    %v656 = vcombine.high %v631, %v647
    %v658 = vunpack.c.l.s4 1934713408
    %v659 = vunpack.c.0.s8 %v658
    %v660 = vlaneseq
    %v661 = vshrl.u32 %v660, 7
    %v662 = vsub.s32 %v659, %v661
    %v663 = vrot.slane %v655, %v662
    %v665 = vunpack.c.l.s4 1934713408
    %v666 = vunpack.c.0.s8 %v665
    %v667 = vlaneseq
    %v668 = vshrl.u32 %v667, 7
    %v669 = vsub.s32 %v666, %v668
    %v670 = vrot.slane %v656, %v669
    %v671 = vcombine.low %v638, %v654
    %v672 = vcombine.high %v638, %v654
    %v674 = vunpack.c.l.s4 1934713408
    %v675 = vunpack.c.0.s8 %v674
    %v676 = vlaneseq
    %v677 = vshrl.u32 %v676, 7
    %v678 = vsub.s32 %v675, %v677
    %v679 = vrot.slane %v671, %v678
    %v681 = vunpack.c.l.s4 1934713408
    %v682 = vunpack.c.0.s8 %v681
    %v683 = vlaneseq
    %v684 = vshrl.u32 %v683, 7
    %v685 = vsub.s32 %v682, %v684
    %v686 = vrot.slane %v672, %v685
    %v687 = vcombine.high %v663, 0.0
    %v688 = vcombine.high %v670, 0.0
    %v689 = vcombine.high %v679, 0.0
    %v690 = vcombine.high %v686, 0.0
    %v691 = vcombine.low %v602, %v610
    %v692 = vcombine.high %v602, %v610
    %v694 = vunpack.c.l.s4 1983009808
    %v695 = vunpack.c.0.s8 %v694
    %v696 = vlaneseq
    %v697 = vshrl.u32 %v696, 7
    %v698 = vsub.s32 %v695, %v697
    %v699 = vrot.slane %v691, %v698
    %v701 = vunpack.c.l.s4 1983009808
    %v702 = vunpack.c.0.s8 %v701
    %v703 = vlaneseq
    %v704 = vshrl.u32 %v703, 7
    %v705 = vsub.s32 %v702, %v704
    %v706 = vrot.slane %v692, %v705
    %v707 = vcombine.low %v606, %v614
    %v708 = vcombine.high %v606, %v614
    %v710 = vunpack.c.l.s4 1983009808
    %v711 = vunpack.c.0.s8 %v710
    %v712 = vlaneseq
    %v713 = vshrl.u32 %v712, 7
    %v714 = vsub.s32 %v711, %v713
    %v715 = vrot.slane %v707, %v714
    %v717 = vunpack.c.l.s4 1983009808
    %v718 = vunpack.c.0.s8 %v717
    %v719 = vlaneseq
    %v720 = vshrl.u32 %v719, 7
    %v721 = vsub.s32 %v718, %v720
    %v722 = vrot.slane %v708, %v721
    %v723 = vcombine.low %v699, %v715
    %v724 = vcombine.high %v699, %v715
    %v726 = vunpack.c.l.s4 1934713408
    %v727 = vunpack.c.0.s8 %v726
    %v728 = vlaneseq
    %v729 = vshrl.u32 %v728, 7
    %v730 = vsub.s32 %v727, %v729
    %v731 = vrot.slane %v723, %v730
    %v733 = vunpack.c.l.s4 1934713408
    %v734 = vunpack.c.0.s8 %v733
    %v735 = vlaneseq
    %v736 = vshrl.u32 %v735, 7
    %v737 = vsub.s32 %v734, %v736
    %v738 = vrot.slane %v724, %v737
    %v739 = vcombine.low %v706, %v722
    %v740 = vcombine.high %v706, %v722
    %v742 = vunpack.c.l.s4 1934713408
    %v743 = vunpack.c.0.s8 %v742
    %v744 = vlaneseq
    %v745 = vshrl.u32 %v744, 7
    %v746 = vsub.s32 %v743, %v745
    %v747 = vrot.slane %v739, %v746
    %v749 = vunpack.c.l.s4 1934713408
    %v750 = vunpack.c.0.s8 %v749
    %v751 = vlaneseq
    %v752 = vshrl.u32 %v751, 7
    %v753 = vsub.s32 %v750, %v752
    %v754 = vrot.slane %v740, %v753
    %v755 = vcombine.high %v731, 0.0
    %v756 = vcombine.high %v738, 0.0
    %v757 = vcombine.high %v747, 0.0
    %v758 = vcombine.high %v754, 0.0
    %v759 = vcombine.low %v663, %v670
    %v761 = vunpack.c.l.s4 1983009808
    %v762 = vunpack.c.0.s8 %v761
    %v763 = vlaneseq
    %v764 = vshrl.u32 %v763, 7
    %v765 = vsub.s32 %v762, %v764
    %v766 = vrot.slane %v759, %v765
    %v767 = vcombine.low %v687, %v688
    %v769 = vunpack.c.l.s4 1983009808
    %v770 = vunpack.c.0.s8 %v769
    %v771 = vlaneseq
    %v772 = vshrl.u32 %v771, 7
    %v773 = vsub.s32 %v770, %v772
    %v774 = vrot.slane %v767, %v773
    %v775 = vcombine.low %v679, %v686
    %v777 = vunpack.c.l.s4 1983009808
    %v778 = vunpack.c.0.s8 %v777
    %v779 = vlaneseq
    %v780 = vshrl.u32 %v779, 7
    %v781 = vsub.s32 %v778, %v780
    %v782 = vrot.slane %v775, %v781
    %v783 = vcombine.low %v689, %v690
    %v785 = vunpack.c.l.s4 1983009808
    %v786 = vunpack.c.0.s8 %v785
    %v787 = vlaneseq
    %v788 = vshrl.u32 %v787, 7
    %v789 = vsub.s32 %v786, %v788
    %v790 = vrot.slane %v783, %v789
    %v791 = vcombine.low %v766, %v774
    %v792 = vcombine.high %v766, %v774
    %v794 = vunpack.c.l.s4 1934713408
    %v795 = vunpack.c.0.s8 %v794
    %v796 = vlaneseq
    %v797 = vshrl.u32 %v796, 7
    %v798 = vsub.s32 %v795, %v797
    %v799 = vrot.slane %v791, %v798
    %v801 = vunpack.c.l.s4 1934713408
    %v802 = vunpack.c.0.s8 %v801
    %v803 = vlaneseq
    %v804 = vshrl.u32 %v803, 7
    %v805 = vsub.s32 %v802, %v804
    %v806 = vrot.slane %v792, %v805
    %v807 = vcombine.low %v782, %v790
    %v808 = vcombine.high %v782, %v790
    %v810 = vunpack.c.l.s4 1934713408
    %v811 = vunpack.c.0.s8 %v810
    %v812 = vlaneseq
    %v813 = vshrl.u32 %v812, 7
    %v814 = vsub.s32 %v811, %v813
    %v815 = vrot.slane %v807, %v814
    %v817 = vunpack.c.l.s4 1934713408
    %v818 = vunpack.c.0.s8 %v817
    %v819 = vlaneseq
    %v820 = vshrl.u32 %v819, 7
    %v821 = vsub.s32 %v818, %v820
    %v822 = vrot.slane %v808, %v821
    %v823 = vcombine.low %v799, %v815
    %v824 = vcombine.high %v799, %v815
    %v825 = vcombine.low %v806, %v822
    %v826 = vcombine.high %v806, %v822
    %v827 = vcombine.low %v731, %v738
    %v829 = vunpack.c.l.s4 1983009808
    %v830 = vunpack.c.0.s8 %v829
    %v831 = vlaneseq
    %v832 = vshrl.u32 %v831, 7
    %v833 = vsub.s32 %v830, %v832
    %v834 = vrot.slane %v827, %v833
    %v835 = vcombine.low %v755, %v756
    %v837 = vunpack.c.l.s4 1983009808
    %v838 = vunpack.c.0.s8 %v837
    %v839 = vlaneseq
    %v840 = vshrl.u32 %v839, 7
    %v841 = vsub.s32 %v838, %v840
    %v842 = vrot.slane %v835, %v841
    %v843 = vcombine.low %v747, %v754
    %v845 = vunpack.c.l.s4 1983009808
    %v846 = vunpack.c.0.s8 %v845
    %v847 = vlaneseq
    %v848 = vshrl.u32 %v847, 7
    %v849 = vsub.s32 %v846, %v848
    %v850 = vrot.slane %v843, %v849
    %v851 = vcombine.low %v757, %v758
    %v853 = vunpack.c.l.s4 1983009808
    %v854 = vunpack.c.0.s8 %v853
    %v855 = vlaneseq
    %v856 = vshrl.u32 %v855, 7
    %v857 = vsub.s32 %v854, %v856
    %v858 = vrot.slane %v851, %v857
    %v859 = vcombine.low %v834, %v842
    %v860 = vcombine.high %v834, %v842
    %v862 = vunpack.c.l.s4 1934713408
    %v863 = vunpack.c.0.s8 %v862
    %v864 = vlaneseq
    %v865 = vshrl.u32 %v864, 7
    %v866 = vsub.s32 %v863, %v865
    %v867 = vrot.slane %v859, %v866
    %v869 = vunpack.c.l.s4 1934713408
    %v870 = vunpack.c.0.s8 %v869
    %v871 = vlaneseq
    %v872 = vshrl.u32 %v871, 7
    %v873 = vsub.s32 %v870, %v872
    %v874 = vrot.slane %v860, %v873
    %v875 = vcombine.low %v850, %v858
    %v876 = vcombine.high %v850, %v858
    %v878 = vunpack.c.l.s4 1934713408
    %v879 = vunpack.c.0.s8 %v878
    %v880 = vlaneseq
    %v881 = vshrl.u32 %v880, 7
    %v882 = vsub.s32 %v879, %v881
    %v883 = vrot.slane %v875, %v882
    %v885 = vunpack.c.l.s4 1934713408
    %v886 = vunpack.c.0.s8 %v885
    %v887 = vlaneseq
    %v888 = vshrl.u32 %v887, 7
    %v889 = vsub.s32 %v886, %v888
    %v890 = vrot.slane %v876, %v889
    %v891 = vcombine.low %v867, %v883
    %v892 = vcombine.high %v867, %v883
    %v893 = vcombine.low %v874, %v890
    %v894 = vcombine.high %v874, %v890
    %897 = vrot.lane.b32.xlu0 %v291, 120
    %v898 = vpop.permute.xlu0 %897
    %899 = vrot.lane.b32.xlu0 %v292, 120
    %v900 = vpop.permute.xlu0 %899
    %901 = vrot.lane.b32.xlu0 %v291, 112
    %v902 = vpop.permute.xlu0 %901
    %903 = vrot.lane.b32.xlu0 %v292, 112
    %v904 = vpop.permute.xlu0 %903
    %905 = vrot.lane.b32.xlu0 %v291, 104
    %v906 = vpop.permute.xlu0 %905
    %907 = vrot.lane.b32.xlu0 %v292, 104
    %v908 = vpop.permute.xlu0 %907
    %909 = vrot.lane.b32.xlu0 %v291, 64
    %v910 = vpop.permute.xlu0 %909
    %911 = vrot.lane.b32.xlu0 %v292, 64
    %v912 = vpop.permute.xlu0 %911
    %913 = vrot.lane.b32.xlu0 %v898, 64
    %v914 = vpop.permute.xlu0 %913
    %915 = vrot.lane.b32.xlu0 %v900, 64
    %v916 = vpop.permute.xlu0 %915
    %917 = vrot.lane.b32.xlu0 %v902, 64
    %v918 = vpop.permute.xlu0 %917
    %919 = vrot.lane.b32.xlu0 %v904, 64
    %v920 = vpop.permute.xlu0 %919
    %921 = vrot.lane.b32.xlu0 %v906, 64
    %v922 = vpop.permute.xlu0 %921
    %923 = vrot.lane.b32.xlu0 %v908, 64
    %v924 = vpop.permute.xlu0 %923
    %v933 = vcombine.low %v910, %v918
    %v934 = vcombine.high %v910, %v918
    %v936 = vunpack.c.l.s4 1983009808
    %v937 = vunpack.c.0.s8 %v936
    %v938 = vlaneseq
    %v939 = vshrl.u32 %v938, 7
    %v940 = vsub.s32 %v937, %v939
    %v941 = vrot.slane %v933, %v940
    %v943 = vunpack.c.l.s4 1983009808
    %v944 = vunpack.c.0.s8 %v943
    %v945 = vlaneseq
    %v946 = vshrl.u32 %v945, 7
    %v947 = vsub.s32 %v944, %v946
    %v948 = vrot.slane %v934, %v947
    %v949 = vcombine.low %v914, %v922
    %v950 = vcombine.high %v914, %v922
    %v952 = vunpack.c.l.s4 1983009808
    %v953 = vunpack.c.0.s8 %v952
    %v954 = vlaneseq
    %v955 = vshrl.u32 %v954, 7
    %v956 = vsub.s32 %v953, %v955
    %v957 = vrot.slane %v949, %v956
    %v959 = vunpack.c.l.s4 1983009808
    %v960 = vunpack.c.0.s8 %v959
    %v961 = vlaneseq
    %v962 = vshrl.u32 %v961, 7
    %v963 = vsub.s32 %v960, %v962
    %v964 = vrot.slane %v950, %v963
    %v965 = vcombine.low %v941, %v957
    %v966 = vcombine.high %v941, %v957
    %v968 = vunpack.c.l.s4 1934713408
    %v969 = vunpack.c.0.s8 %v968
    %v970 = vlaneseq
    %v971 = vshrl.u32 %v970, 7
    %v972 = vsub.s32 %v969, %v971
    %v973 = vrot.slane %v965, %v972
    %v975 = vunpack.c.l.s4 1934713408
    %v976 = vunpack.c.0.s8 %v975
    %v977 = vlaneseq
    %v978 = vshrl.u32 %v977, 7
    %v979 = vsub.s32 %v976, %v978
    %v980 = vrot.slane %v966, %v979
    %v981 = vcombine.low %v948, %v964
    %v982 = vcombine.high %v948, %v964
    %v984 = vunpack.c.l.s4 1934713408
    %v985 = vunpack.c.0.s8 %v984
    %v986 = vlaneseq
    %v987 = vshrl.u32 %v986, 7
    %v988 = vsub.s32 %v985, %v987
    %v989 = vrot.slane %v981, %v988
    %v991 = vunpack.c.l.s4 1934713408
    %v992 = vunpack.c.0.s8 %v991
    %v993 = vlaneseq
    %v994 = vshrl.u32 %v993, 7
    %v995 = vsub.s32 %v992, %v994
    %v996 = vrot.slane %v982, %v995
    %v997 = vcombine.high %v973, 0.0
    %v998 = vcombine.high %v980, 0.0
    %v999 = vcombine.high %v989, 0.0
    %v1000 = vcombine.high %v996, 0.0
    %v1001 = vcombine.low %v912, %v920
    %v1002 = vcombine.high %v912, %v920
    %v1004 = vunpack.c.l.s4 1983009808
    %v1005 = vunpack.c.0.s8 %v1004
    %v1006 = vlaneseq
    %v1007 = vshrl.u32 %v1006, 7
    %v1008 = vsub.s32 %v1005, %v1007
    %v1009 = vrot.slane %v1001, %v1008
    %v1011 = vunpack.c.l.s4 1983009808
    %v1012 = vunpack.c.0.s8 %v1011
    %v1013 = vlaneseq
    %v1014 = vshrl.u32 %v1013, 7
    %v1015 = vsub.s32 %v1012, %v1014
    %v1016 = vrot.slane %v1002, %v1015
    %v1017 = vcombine.low %v916, %v924
    %v1018 = vcombine.high %v916, %v924
    %v1020 = vunpack.c.l.s4 1983009808
    %v1021 = vunpack.c.0.s8 %v1020
    %v1022 = vlaneseq
    %v1023 = vshrl.u32 %v1022, 7
    %v1024 = vsub.s32 %v1021, %v1023
    %v1025 = vrot.slane %v1017, %v1024
    %v1027 = vunpack.c.l.s4 1983009808
    %v1028 = vunpack.c.0.s8 %v1027
    %v1029 = vlaneseq
    %v1030 = vshrl.u32 %v1029, 7
    %v1031 = vsub.s32 %v1028, %v1030
    %v1032 = vrot.slane %v1018, %v1031
    %v1033 = vcombine.low %v1009, %v1025
    %v1034 = vcombine.high %v1009, %v1025
    %v1036 = vunpack.c.l.s4 1934713408
    %v1037 = vunpack.c.0.s8 %v1036
    %v1038 = vlaneseq
    %v1039 = vshrl.u32 %v1038, 7
    %v1040 = vsub.s32 %v1037, %v1039
    %v1041 = vrot.slane %v1033, %v1040
    %v1043 = vunpack.c.l.s4 1934713408
    %v1044 = vunpack.c.0.s8 %v1043
    %v1045 = vlaneseq
    %v1046 = vshrl.u32 %v1045, 7
    %v1047 = vsub.s32 %v1044, %v1046
    %v1048 = vrot.slane %v1034, %v1047
    %v1049 = vcombine.low %v1016, %v1032
    %v1050 = vcombine.high %v1016, %v1032
    %v1052 = vunpack.c.l.s4 1934713408
    %v1053 = vunpack.c.0.s8 %v1052
    %v1054 = vlaneseq
    %v1055 = vshrl.u32 %v1054, 7
    %v1056 = vsub.s32 %v1053, %v1055
    %v1057 = vrot.slane %v1049, %v1056
    %v1059 = vunpack.c.l.s4 1934713408
    %v1060 = vunpack.c.0.s8 %v1059
    %v1061 = vlaneseq
    %v1062 = vshrl.u32 %v1061, 7
    %v1063 = vsub.s32 %v1060, %v1062
    %v1064 = vrot.slane %v1050, %v1063
    %v1065 = vcombine.high %v1041, 0.0
    %v1066 = vcombine.high %v1048, 0.0
    %v1067 = vcombine.high %v1057, 0.0
    %v1068 = vcombine.high %v1064, 0.0
    %v1069 = vcombine.low %v973, %v980
    %v1071 = vunpack.c.l.s4 1983009808
    %v1072 = vunpack.c.0.s8 %v1071
    %v1073 = vlaneseq
    %v1074 = vshrl.u32 %v1073, 7
    %v1075 = vsub.s32 %v1072, %v1074
    %v1076 = vrot.slane %v1069, %v1075
    %v1077 = vcombine.low %v997, %v998
    %v1079 = vunpack.c.l.s4 1983009808
    %v1080 = vunpack.c.0.s8 %v1079
    %v1081 = vlaneseq
    %v1082 = vshrl.u32 %v1081, 7
    %v1083 = vsub.s32 %v1080, %v1082
    %v1084 = vrot.slane %v1077, %v1083
    %v1085 = vcombine.low %v989, %v996
    %v1087 = vunpack.c.l.s4 1983009808
    %v1088 = vunpack.c.0.s8 %v1087
    %v1089 = vlaneseq
    %v1090 = vshrl.u32 %v1089, 7
    %v1091 = vsub.s32 %v1088, %v1090
    %v1092 = vrot.slane %v1085, %v1091
    %v1093 = vcombine.low %v999, %v1000
    %v1095 = vunpack.c.l.s4 1983009808
    %v1096 = vunpack.c.0.s8 %v1095
    %v1097 = vlaneseq
    %v1098 = vshrl.u32 %v1097, 7
    %v1099 = vsub.s32 %v1096, %v1098
    %v1100 = vrot.slane %v1093, %v1099
    %v1101 = vcombine.low %v1076, %v1084
    %v1102 = vcombine.high %v1076, %v1084
    %v1104 = vunpack.c.l.s4 1934713408
    %v1105 = vunpack.c.0.s8 %v1104
    %v1106 = vlaneseq
    %v1107 = vshrl.u32 %v1106, 7
    %v1108 = vsub.s32 %v1105, %v1107
    %v1109 = vrot.slane %v1101, %v1108
    %v1111 = vunpack.c.l.s4 1934713408
    %v1112 = vunpack.c.0.s8 %v1111
    %v1113 = vlaneseq
    %v1114 = vshrl.u32 %v1113, 7
    %v1115 = vsub.s32 %v1112, %v1114
    %v1116 = vrot.slane %v1102, %v1115
    %v1117 = vcombine.low %v1092, %v1100
    %v1118 = vcombine.high %v1092, %v1100
    %v1120 = vunpack.c.l.s4 1934713408
    %v1121 = vunpack.c.0.s8 %v1120
    %v1122 = vlaneseq
    %v1123 = vshrl.u32 %v1122, 7
    %v1124 = vsub.s32 %v1121, %v1123
    %v1125 = vrot.slane %v1117, %v1124
    %v1127 = vunpack.c.l.s4 1934713408
    %v1128 = vunpack.c.0.s8 %v1127
    %v1129 = vlaneseq
    %v1130 = vshrl.u32 %v1129, 7
    %v1131 = vsub.s32 %v1128, %v1130
    %v1132 = vrot.slane %v1118, %v1131
    %v1133 = vcombine.low %v1109, %v1125
    %v1134 = vcombine.high %v1109, %v1125
    %v1135 = vcombine.low %v1116, %v1132
    %v1136 = vcombine.high %v1116, %v1132
    %v1137 = vcombine.low %v1041, %v1048
    %v1139 = vunpack.c.l.s4 1983009808
    %v1140 = vunpack.c.0.s8 %v1139
    %v1141 = vlaneseq
    %v1142 = vshrl.u32 %v1141, 7
    %v1143 = vsub.s32 %v1140, %v1142
    %v1144 = vrot.slane %v1137, %v1143
    %v1145 = vcombine.low %v1065, %v1066
    %v1147 = vunpack.c.l.s4 1983009808
    %v1148 = vunpack.c.0.s8 %v1147
    %v1149 = vlaneseq
    %v1150 = vshrl.u32 %v1149, 7
    %v1151 = vsub.s32 %v1148, %v1150
    %v1152 = vrot.slane %v1145, %v1151
    %v1153 = vcombine.low %v1057, %v1064
    %v1155 = vunpack.c.l.s4 1983009808
    %v1156 = vunpack.c.0.s8 %v1155
    %v1157 = vlaneseq
    %v1158 = vshrl.u32 %v1157, 7
    %v1159 = vsub.s32 %v1156, %v1158
    %v1160 = vrot.slane %v1153, %v1159
    %v1161 = vcombine.low %v1067, %v1068
    %v1163 = vunpack.c.l.s4 1983009808
    %v1164 = vunpack.c.0.s8 %v1163
    %v1165 = vlaneseq
    %v1166 = vshrl.u32 %v1165, 7
    %v1167 = vsub.s32 %v1164, %v1166
    %v1168 = vrot.slane %v1161, %v1167
    %v1169 = vcombine.low %v1144, %v1152
    %v1170 = vcombine.high %v1144, %v1152
    %v1172 = vunpack.c.l.s4 1934713408
    %v1173 = vunpack.c.0.s8 %v1172
    %v1174 = vlaneseq
    %v1175 = vshrl.u32 %v1174, 7
    %v1176 = vsub.s32 %v1173, %v1175
    %v1177 = vrot.slane %v1169, %v1176
    %v1179 = vunpack.c.l.s4 1934713408
    %v1180 = vunpack.c.0.s8 %v1179
    %v1181 = vlaneseq
    %v1182 = vshrl.u32 %v1181, 7
    %v1183 = vsub.s32 %v1180, %v1182
    %v1184 = vrot.slane %v1170, %v1183
    %v1185 = vcombine.low %v1160, %v1168
    %v1186 = vcombine.high %v1160, %v1168
    %v1188 = vunpack.c.l.s4 1934713408
    %v1189 = vunpack.c.0.s8 %v1188
    %v1190 = vlaneseq
    %v1191 = vshrl.u32 %v1190, 7
    %v1192 = vsub.s32 %v1189, %v1191
    %v1193 = vrot.slane %v1185, %v1192
    %v1195 = vunpack.c.l.s4 1934713408
    %v1196 = vunpack.c.0.s8 %v1195
    %v1197 = vlaneseq
    %v1198 = vshrl.u32 %v1197, 7
    %v1199 = vsub.s32 %v1196, %v1198
    %v1200 = vrot.slane %v1186, %v1199
    %v1201 = vcombine.low %v1177, %v1193
    %v1202 = vcombine.high %v1177, %v1193
    %v1203 = vcombine.low %v1184, %v1200
    %v1204 = vcombine.high %v1184, %v1200
    %v1206 = vsel %vm67, %v513, 0
    %v1209 = vsel %vm67, %v581, 0
    %v1212 = vsel %vm67, %v823, 0
    %v1215 = vsel %vm67, %v891, 0
    %1217 = vmatprep.subr.mxu0 0.0
    %1218 = vmatpush1.xpose.msra.mxu0 %v1212
    %1219 = vmatprep.subr.mxu0 0.0
    %1220 = vmatpush1.xpose.msra.mxu0 %v1215
    %1221 = vmatprep.subr.mxu0 0.0
    %1222 = vmatpush1.xpose.msra.mxu0 0.0
    %1223 = vmatprep.subr.mxu0 0.0
    %1224 = vmatpush1.xpose.msra.mxu0 0.0
    %1225 = vmatprep.subr.mxu0 0.0
    %1226 = vmatpush1.xpose.msra.mxu0 0.0
    %1227 = vmatprep.subr.mxu0 0.0
    %1228 = vmatpush1.xpose.msra.mxu0 0.0
    %1229 = vmatprep.subr.mxu0 0.0
    %1230 = vmatpush1.xpose.msra.mxu0 0.0
    %1231 = vmatprep.subr.mxu0 0.0
    %1232 = vmatpush1.xpose.msra.mxu0 0.0
    %1233 = vmatprep.subr.mxu0 0.0
    %1234 = vmatpush1.xpose.msra.mxu0 0.0
    %1235 = vmatprep.subr.mxu0 0.0
    %1236 = vmatpush1.xpose.msra.mxu0 0.0
    %1237 = vmatprep.subr.mxu0 0.0
    %1238 = vmatpush1.xpose.msra.mxu0 0.0
    %1239 = vmatprep.subr.mxu0 0.0
    %1240 = vmatpush1.xpose.msra.mxu0 0.0
    %1241 = vmatprep.subr.mxu0 0.0
    %1242 = vmatpush1.xpose.msra.mxu0 0.0
    %1243 = vmatprep.subr.mxu0 0.0
    %1244 = vmatpush1.xpose.msra.mxu0 0.0
    %1245 = vmatprep.subr.mxu0 0.0
    %1246 = vmatpush1.xpose.msra.mxu0 0.0
    %1247 = vmatprep.subr.mxu0 0.0
    %1248 = vmatpush1.xpose.msra.mxu0 0.0
    %1249 = vmatprep.subr.mxu0 0.0
    %1250 = vmatpush1.xpose.msra.mxu0 0.0
    %1251 = vmatprep.subr.mxu0 0.0
    %1252 = vmatpush1.xpose.msra.mxu0 0.0
    %1253 = vmatprep.subr.mxu0 0.0
    %1254 = vmatpush1.xpose.msra.mxu0 0.0
    %1255 = vmatprep.subr.mxu0 0.0
    %1256 = vmatpush1.xpose.msra.mxu0 0.0
    %1257 = vmatprep.subr.mxu0 0.0
    %1258 = vmatpush1.xpose.msra.mxu0 0.0
    %1259 = vmatprep.subr.mxu0 0.0
    %1260 = vmatpush1.xpose.msra.mxu0 0.0
    %1261 = vmatprep.subr.mxu0 0.0
    %1262 = vmatpush1.xpose.msra.mxu0 0.0
    %1263 = vmatprep.subr.mxu0 0.0
    %1264 = vmatpush1.xpose.msra.mxu0 0.0
    %1265 = vmatprep.subr.mxu0 0.0
    %1266 = vmatpush1.xpose.msra.mxu0 0.0
    %1267 = vmatprep.subr.mxu0 0.0
    %1268 = vmatpush1.xpose.msra.mxu0 0.0
    %1269 = vmatprep.subr.mxu0 0.0
    %1270 = vmatpush1.xpose.msra.mxu0 0.0
    %1271 = vmatprep.subr.mxu0 0.0
    %1272 = vmatpush1.xpose.msra.mxu0 0.0
    %1273 = vmatprep.subr.mxu0 0.0
    %1274 = vmatpush1.xpose.msra.mxu0 0.0
    %1275 = vmatprep.subr.mxu0 0.0
    %1276 = vmatpush1.xpose.msra.mxu0 0.0
    %1277 = vmatprep.subr.mxu0 0.0
    %1278 = vmatpush1.xpose.msra.mxu0 0.0
    %1279 = vmatprep.subr.mxu0 0.0
    %1280 = vmatpush1.xpose.msra.mxu0 0.0
    %1281 = vmatprep.mubr.f32.mxu0 0.0
    %1282 = vmatmul.mubr.f32.gmra.mrb[0].mxu0 %v1206
    %v1283 = vpop.f32.mrb[0].mxu0
    %v1284 = vadd.f32 %v76, %v1283
    %v1285 = vpop.f32.mrb[0].mxu0
    %1286 = vmatprep.mubr.f32.mxu0 0.0
    %1287 = vmatmul.mubr.f32.gmra.mrb[0].mxu0 %v1209
    %v1288 = vpop.f32.mrb[0].mxu0
    %v1289 = vadd.f32 %v77, %v1288
    %v1290 = vpop.f32.mrb[0].mxu0
    %1291 = vdwg.mxu0
    %v1293 = vsel %vm67, %v514, 0
    %v1296 = vsel %vm67, %v582, 0
    %v1299 = vsel %vm67, %v824, 0
    %v1302 = vsel %vm67, %v892, 0
    %1304 = vmatprep.subr.mxu0 0.0
    %1305 = vmatpush1.xpose.msra.mxu0 %v1299
    %1306 = vmatprep.subr.mxu0 0.0
    %1307 = vmatpush1.xpose.msra.mxu0 %v1302
    %1308 = vmatprep.subr.mxu0 0.0
    %1309 = vmatpush1.xpose.msra.mxu0 0.0
    %1310 = vmatprep.subr.mxu0 0.0
    %1311 = vmatpush1.xpose.msra.mxu0 0.0
    %1312 = vmatprep.subr.mxu0 0.0
    %1313 = vmatpush1.xpose.msra.mxu0 0.0
    %1314 = vmatprep.subr.mxu0 0.0
    %1315 = vmatpush1.xpose.msra.mxu0 0.0
    %1316 = vmatprep.subr.mxu0 0.0
    %1317 = vmatpush1.xpose.msra.mxu0 0.0
    %1318 = vmatprep.subr.mxu0 0.0
    %1319 = vmatpush1.xpose.msra.mxu0 0.0
    %1320 = vmatprep.subr.mxu0 0.0
    %1321 = vmatpush1.xpose.msra.mxu0 0.0
    %1322 = vmatprep.subr.mxu0 0.0
    %1323 = vmatpush1.xpose.msra.mxu0 0.0
    %1324 = vmatprep.subr.mxu0 0.0
    %1325 = vmatpush1.xpose.msra.mxu0 0.0
    %1326 = vmatprep.subr.mxu0 0.0
    %1327 = vmatpush1.xpose.msra.mxu0 0.0
    %1328 = vmatprep.subr.mxu0 0.0
    %1329 = vmatpush1.xpose.msra.mxu0 0.0
    %1330 = vmatprep.subr.mxu0 0.0
    %1331 = vmatpush1.xpose.msra.mxu0 0.0
    %1332 = vmatprep.subr.mxu0 0.0
    %1333 = vmatpush1.xpose.msra.mxu0 0.0
    %1334 = vmatprep.subr.mxu0 0.0
    %1335 = vmatpush1.xpose.msra.mxu0 0.0
    %1336 = vmatprep.subr.mxu0 0.0
    %1337 = vmatpush1.xpose.msra.mxu0 0.0
    %1338 = vmatprep.subr.mxu0 0.0
    %1339 = vmatpush1.xpose.msra.mxu0 0.0
    %1340 = vmatprep.subr.mxu0 0.0
    %1341 = vmatpush1.xpose.msra.mxu0 0.0
    %1342 = vmatprep.subr.mxu0 0.0
    %1343 = vmatpush1.xpose.msra.mxu0 0.0
    %1344 = vmatprep.subr.mxu0 0.0
    %1345 = vmatpush1.xpose.msra.mxu0 0.0
    %1346 = vmatprep.subr.mxu0 0.0
    %1347 = vmatpush1.xpose.msra.mxu0 0.0
    %1348 = vmatprep.subr.mxu0 0.0
    %1349 = vmatpush1.xpose.msra.mxu0 0.0
    %1350 = vmatprep.subr.mxu0 0.0
    %1351 = vmatpush1.xpose.msra.mxu0 0.0
    %1352 = vmatprep.subr.mxu0 0.0
    %1353 = vmatpush1.xpose.msra.mxu0 0.0
    %1354 = vmatprep.subr.mxu0 0.0
    %1355 = vmatpush1.xpose.msra.mxu0 0.0
    %1356 = vmatprep.subr.mxu0 0.0
    %1357 = vmatpush1.xpose.msra.mxu0 0.0
    %1358 = vmatprep.subr.mxu0 0.0
    %1359 = vmatpush1.xpose.msra.mxu0 0.0
    %1360 = vmatprep.subr.mxu0 0.0
    %1361 = vmatpush1.xpose.msra.mxu0 0.0
    %1362 = vmatprep.subr.mxu0 0.0
    %1363 = vmatpush1.xpose.msra.mxu0 0.0
    %1364 = vmatprep.subr.mxu0 0.0
    %1365 = vmatpush1.xpose.msra.mxu0 0.0
    %1366 = vmatprep.subr.mxu0 0.0
    %1367 = vmatpush1.xpose.msra.mxu0 0.0
    %1368 = vmatprep.mubr.f32.mxu0 0.0
    %1369 = vmatmul.mubr.f32.gmra.mrb[0].mxu0 %v1293
    %v1370 = vpop.f32.mrb[0].mxu0
    %v1371 = vadd.f32 %v76, %v1370
    %v1372 = vpop.f32.mrb[0].mxu0
    %1373 = vmatprep.mubr.f32.mxu0 0.0
    %1374 = vmatmul.mubr.f32.gmra.mrb[0].mxu0 %v1296
    %v1375 = vpop.f32.mrb[0].mxu0
    %v1376 = vadd.f32 %v77, %v1375
    %v1377 = vpop.f32.mrb[0].mxu0
    %1378 = vdwg.mxu0
    %v1380 = vsel %vm67, %v515, 0
    %v1383 = vsel %vm67, %v583, 0
    %v1386 = vsel %vm67, %v825, 0
    %v1389 = vsel %vm67, %v893, 0
    %1391 = vmatprep.subr.mxu0 0.0
    %1392 = vmatpush1.xpose.msra.mxu0 %v1386
    %1393 = vmatprep.subr.mxu0 0.0
    %1394 = vmatpush1.xpose.msra.mxu0 %v1389
    %1395 = vmatprep.subr.mxu0 0.0
    %1396 = vmatpush1.xpose.msra.mxu0 0.0
    %1397 = vmatprep.subr.mxu0 0.0
    %1398 = vmatpush1.xpose.msra.mxu0 0.0
    %1399 = vmatprep.subr.mxu0 0.0
    %1400 = vmatpush1.xpose.msra.mxu0 0.0
    %1401 = vmatprep.subr.mxu0 0.0
    %1402 = vmatpush1.xpose.msra.mxu0 0.0
    %1403 = vmatprep.subr.mxu0 0.0
    %1404 = vmatpush1.xpose.msra.mxu0 0.0
    %1405 = vmatprep.subr.mxu0 0.0
    %1406 = vmatpush1.xpose.msra.mxu0 0.0
    %1407 = vmatprep.subr.mxu0 0.0
    %1408 = vmatpush1.xpose.msra.mxu0 0.0
    %1409 = vmatprep.subr.mxu0 0.0
    %1410 = vmatpush1.xpose.msra.mxu0 0.0
    %1411 = vmatprep.subr.mxu0 0.0
    %1412 = vmatpush1.xpose.msra.mxu0 0.0
    %1413 = vmatprep.subr.mxu0 0.0
    %1414 = vmatpush1.xpose.msra.mxu0 0.0
    %1415 = vmatprep.subr.mxu0 0.0
    %1416 = vmatpush1.xpose.msra.mxu0 0.0
    %1417 = vmatprep.subr.mxu0 0.0
    %1418 = vmatpush1.xpose.msra.mxu0 0.0
    %1419 = vmatprep.subr.mxu0 0.0
    %1420 = vmatpush1.xpose.msra.mxu0 0.0
    %1421 = vmatprep.subr.mxu0 0.0
    %1422 = vmatpush1.xpose.msra.mxu0 0.0
    %1423 = vmatprep.subr.mxu0 0.0
    %1424 = vmatpush1.xpose.msra.mxu0 0.0
    %1425 = vmatprep.subr.mxu0 0.0
    %1426 = vmatpush1.xpose.msra.mxu0 0.0
    %1427 = vmatprep.subr.mxu0 0.0
    %1428 = vmatpush1.xpose.msra.mxu0 0.0
    %1429 = vmatprep.subr.mxu0 0.0
    %1430 = vmatpush1.xpose.msra.mxu0 0.0
    %1431 = vmatprep.subr.mxu0 0.0
    %1432 = vmatpush1.xpose.msra.mxu0 0.0
    %1433 = vmatprep.subr.mxu0 0.0
    %1434 = vmatpush1.xpose.msra.mxu0 0.0
    %1435 = vmatprep.subr.mxu0 0.0
    %1436 = vmatpush1.xpose.msra.mxu0 0.0
    %1437 = vmatprep.subr.mxu0 0.0
    %1438 = vmatpush1.xpose.msra.mxu0 0.0
    %1439 = vmatprep.subr.mxu0 0.0
    %1440 = vmatpush1.xpose.msra.mxu0 0.0
    %1441 = vmatprep.subr.mxu0 0.0
    %1442 = vmatpush1.xpose.msra.mxu0 0.0
    %1443 = vmatprep.subr.mxu0 0.0
    %1444 = vmatpush1.xpose.msra.mxu0 0.0
    %1445 = vmatprep.subr.mxu0 0.0
    %1446 = vmatpush1.xpose.msra.mxu0 0.0
    %1447 = vmatprep.subr.mxu0 0.0
    %1448 = vmatpush1.xpose.msra.mxu0 0.0
    %1449 = vmatprep.subr.mxu0 0.0
    %1450 = vmatpush1.xpose.msra.mxu0 0.0
    %1451 = vmatprep.subr.mxu0 0.0
    %1452 = vmatpush1.xpose.msra.mxu0 0.0
    %1453 = vmatprep.subr.mxu0 0.0
    %1454 = vmatpush1.xpose.msra.mxu0 0.0
    %1455 = vmatprep.mubr.f32.mxu0 0.0
    %1456 = vmatmul.mubr.f32.gmra.mrb[0].mxu0 %v1380
    %v1457 = vpop.f32.mrb[0].mxu0
    %v1458 = vadd.f32 %v76, %v1457
    %v1459 = vpop.f32.mrb[0].mxu0
    %1460 = vmatprep.mubr.f32.mxu0 0.0
    %1461 = vmatmul.mubr.f32.gmra.mrb[0].mxu0 %v1383
    %v1462 = vpop.f32.mrb[0].mxu0
    %v1463 = vadd.f32 %v77, %v1462
    %v1464 = vpop.f32.mrb[0].mxu0
    %1465 = vdwg.mxu0
    %v1467 = vsel %vm67, %v516, 0
    %v1470 = vsel %vm67, %v584, 0
    %v1473 = vsel %vm67, %v826, 0
    %v1476 = vsel %vm67, %v894, 0
    %1478 = vmatprep.subr.mxu0 0.0
    %1479 = vmatpush1.xpose.msra.mxu0 %v1473
    %1480 = vmatprep.subr.mxu0 0.0
    %1481 = vmatpush1.xpose.msra.mxu0 %v1476
    %1482 = vmatprep.subr.mxu0 0.0
    %1483 = vmatpush1.xpose.msra.mxu0 0.0
    %1484 = vmatprep.subr.mxu0 0.0
    %1485 = vmatpush1.xpose.msra.mxu0 0.0
    %1486 = vmatprep.subr.mxu0 0.0
    %1487 = vmatpush1.xpose.msra.mxu0 0.0
    %1488 = vmatprep.subr.mxu0 0.0
    %1489 = vmatpush1.xpose.msra.mxu0 0.0
    %1490 = vmatprep.subr.mxu0 0.0
    %1491 = vmatpush1.xpose.msra.mxu0 0.0
    %1492 = vmatprep.subr.mxu0 0.0
    %1493 = vmatpush1.xpose.msra.mxu0 0.0
    %1494 = vmatprep.subr.mxu0 0.0
    %1495 = vmatpush1.xpose.msra.mxu0 0.0
    %1496 = vmatprep.subr.mxu0 0.0
    %1497 = vmatpush1.xpose.msra.mxu0 0.0
    %1498 = vmatprep.subr.mxu0 0.0
    %1499 = vmatpush1.xpose.msra.mxu0 0.0
    %1500 = vmatprep.subr.mxu0 0.0
    %1501 = vmatpush1.xpose.msra.mxu0 0.0
    %1502 = vmatprep.subr.mxu0 0.0
    %1503 = vmatpush1.xpose.msra.mxu0 0.0
    %1504 = vmatprep.subr.mxu0 0.0
    %1505 = vmatpush1.xpose.msra.mxu0 0.0
    %1506 = vmatprep.subr.mxu0 0.0
    %1507 = vmatpush1.xpose.msra.mxu0 0.0
    %1508 = vmatprep.subr.mxu0 0.0
    %1509 = vmatpush1.xpose.msra.mxu0 0.0
    %1510 = vmatprep.subr.mxu0 0.0
    %1511 = vmatpush1.xpose.msra.mxu0 0.0
    %1512 = vmatprep.subr.mxu0 0.0
    %1513 = vmatpush1.xpose.msra.mxu0 0.0
    %1514 = vmatprep.subr.mxu0 0.0
    %1515 = vmatpush1.xpose.msra.mxu0 0.0
    %1516 = vmatprep.subr.mxu0 0.0
    %1517 = vmatpush1.xpose.msra.mxu0 0.0
    %1518 = vmatprep.subr.mxu0 0.0
    %1519 = vmatpush1.xpose.msra.mxu0 0.0
    %1520 = vmatprep.subr.mxu0 0.0
    %1521 = vmatpush1.xpose.msra.mxu0 0.0
    %1522 = vmatprep.subr.mxu0 0.0
    %1523 = vmatpush1.xpose.msra.mxu0 0.0
    %1524 = vmatprep.subr.mxu0 0.0
    %1525 = vmatpush1.xpose.msra.mxu0 0.0
    %1526 = vmatprep.subr.mxu0 0.0
    %1527 = vmatpush1.xpose.msra.mxu0 0.0
    %1528 = vmatprep.subr.mxu0 0.0
    %1529 = vmatpush1.xpose.msra.mxu0 0.0
    %1530 = vmatprep.subr.mxu0 0.0
    %1531 = vmatpush1.xpose.msra.mxu0 0.0
    %1532 = vmatprep.subr.mxu0 0.0
    %1533 = vmatpush1.xpose.msra.mxu0 0.0
    %1534 = vmatprep.subr.mxu0 0.0
    %1535 = vmatpush1.xpose.msra.mxu0 0.0
    %1536 = vmatprep.subr.mxu0 0.0
    %1537 = vmatpush1.xpose.msra.mxu0 0.0
    %1538 = vmatprep.subr.mxu0 0.0
    %1539 = vmatpush1.xpose.msra.mxu0 0.0
    %1540 = vmatprep.subr.mxu0 0.0
    %1541 = vmatpush1.xpose.msra.mxu0 0.0
    %1542 = vmatprep.mubr.f32.mxu0 0.0
    %1543 = vmatmul.mubr.f32.gmra.mrb[0].mxu0 %v1467
    %v1544 = vpop.f32.mrb[0].mxu0
    %v1545 = vadd.f32 %v76, %v1544
    %v1546 = vpop.f32.mrb[0].mxu0
    %1547 = vmatprep.mubr.f32.mxu0 0.0
    %1548 = vmatmul.mubr.f32.gmra.mrb[0].mxu0 %v1470
    %v1549 = vpop.f32.mrb[0].mxu0
    %v1550 = vadd.f32 %v77, %v1549
    %v1551 = vpop.f32.mrb[0].mxu0
    %1552 = vdwg.mxu0
    %vm1553 = vcmask 130048
    %v1554 = vsel %vm1553, %v1284, -inf
    %1555 = vmax.xlane.f32.xlu0 %v1554
    %v1556 = vpop.xlane.xlu0 %1555
    %v1557 = vsel %vm1553, %v1289, -inf
    %1558 = vmax.xlane.f32.xlu0 %v1557
    %v1559 = vpop.xlane.xlu0 %1558
    %v1560 = vsel %vm1553, %v1371, -inf
    %1561 = vmax.xlane.f32.xlu0 %v1560
    %v1562 = vpop.xlane.xlu0 %1561
    %v1563 = vsel %vm1553, %v1376, -inf
    %1564 = vmax.xlane.f32.xlu0 %v1563
    %v1565 = vpop.xlane.xlu0 %1564
    %v1566 = vsel %vm1553, %v1458, -inf
    %1567 = vmax.xlane.f32.xlu0 %v1566
    %v1568 = vpop.xlane.xlu0 %1567
    %v1569 = vsel %vm1553, %v1463, -inf
    %1570 = vmax.xlane.f32.xlu0 %v1569
    %v1571 = vpop.xlane.xlu0 %1570
    %v1572 = vsel %vm1553, %v1545, -inf
    %1573 = vmax.xlane.f32.xlu0 %v1572
    %v1574 = vpop.xlane.xlu0 %1573
    %v1575 = vsel %vm1553, %v1550, -inf
    %1576 = vmax.xlane.f32.xlu0 %v1575
    %v1577 = vpop.xlane.xlu0 %1576
    %v1578 = vsub.f32 %v1284, %v1556
    %v1579 = vsub.f32 %v1289, %v1559
    %v1580 = vsub.f32 %v1371, %v1562
    %v1581 = vsub.f32 %v1376, %v1565
    %v1582 = vsub.f32 %v1458, %v1568
    %v1583 = vsub.f32 %v1463, %v1571
    %v1584 = vsub.f32 %v1545, %v1574
    %v1585 = vsub.f32 %v1550, %v1577
    %v1586 = vmul.f32 %v1578, 1.442695
    %v1587 = vpow.pop %v1586
    %v1588 = vmul.f32 %v1579, 1.442695
    %v1589 = vpow.pop %v1588
    %v1590 = vmul.f32 %v1580, 1.442695
    %v1591 = vpow.pop %v1590
    %v1592 = vmul.f32 %v1581, 1.442695
    %v1593 = vpow.pop %v1592
    %v1594 = vmul.f32 %v1582, 1.442695
    %v1595 = vpow.pop %v1594
    %v1596 = vmul.f32 %v1583, 1.442695
    %v1597 = vpow.pop %v1596
    %v1598 = vmul.f32 %v1584, 1.442695
    %v1599 = vpow.pop %v1598
    %v1600 = vmul.f32 %v1585, 1.442695
    %v1601 = vpow.pop %v1600
    %v1602 = vsel %vm1553, %v1587, 0.0
    %1603 = vadd.xlane.f32.xlu0 %v1602
    %v1604 = vpop.xlane.xlu0 %1603
    %v1605 = vsel %vm1553, %v1589, 0.0
    %1606 = vadd.xlane.f32.xlu0 %v1605
    %v1607 = vpop.xlane.xlu0 %1606
    %v1608 = vsel %vm1553, %v1591, 0.0
    %1609 = vadd.xlane.f32.xlu0 %v1608
    %v1610 = vpop.xlane.xlu0 %1609
    %v1611 = vsel %vm1553, %v1593, 0.0
    %1612 = vadd.xlane.f32.xlu0 %v1611
    %v1613 = vpop.xlane.xlu0 %1612
    %v1614 = vsel %vm1553, %v1595, 0.0
    %1615 = vadd.xlane.f32.xlu0 %v1614
    %v1616 = vpop.xlane.xlu0 %1615
    %v1617 = vsel %vm1553, %v1597, 0.0
    %1618 = vadd.xlane.f32.xlu0 %v1617
    %v1619 = vpop.xlane.xlu0 %1618
    %v1620 = vsel %vm1553, %v1599, 0.0
    %1621 = vadd.xlane.f32.xlu0 %v1620
    %v1622 = vpop.xlane.xlu0 %1621
    %v1623 = vsel %vm1553, %v1601, 0.0
    %1624 = vadd.xlane.f32.xlu0 %v1623
    %v1625 = vpop.xlane.xlu0 %1624
    %v1626 = vrcp.pop %v1604
    %v1627 = vrcp.pop %v1607
    %v1628 = vrcp.pop %v1610
    %v1629 = vrcp.pop %v1613
    %v1630 = vrcp.pop %v1616
    %v1631 = vrcp.pop %v1619
    %v1632 = vrcp.pop %v1622
    %v1633 = vrcp.pop %v1625
    %v1634 = vmul.f32 %v1587, %v1626
    %v1635 = vmul.f32 %v1589, %v1627
    %v1636 = vmul.f32 %v1591, %v1628
    %v1637 = vmul.f32 %v1593, %v1629
    %v1638 = vmul.f32 %v1595, %v1630
    %v1639 = vmul.f32 %v1597, %v1631
    %v1640 = vmul.f32 %v1599, %v1632
    %v1641 = vmul.f32 %v1601, %v1633
    %v1643 = vsel %vm1553, %v1634, 0
    %v1646 = vsel %vm1553, %v1635, 0
    %1648 = vmatprep.subr.mxu0 0.0
    %1649 = vmatpush1.msra.mxu0 %v1133
    %1650 = vmatprep.subr.mxu0 0.0
    %1651 = vmatpush1.msra.mxu0 %v1201
    %1652 = vmatprep.subr.mxu0 0.0
    %1653 = vmatpush1.msra.mxu0 0.0
    %1654 = vmatprep.subr.mxu0 0.0
    %1655 = vmatpush1.msra.mxu0 0.0
    %1656 = vmatprep.subr.mxu0 0.0
    %1657 = vmatpush1.msra.mxu0 0.0
    %1658 = vmatprep.subr.mxu0 0.0
    %1659 = vmatpush1.msra.mxu0 0.0
    %1660 = vmatprep.subr.mxu0 0.0
    %1661 = vmatpush1.msra.mxu0 0.0
    %1662 = vmatprep.subr.mxu0 0.0
    %1663 = vmatpush1.msra.mxu0 0.0
    %1664 = vmatprep.subr.mxu0 0.0
    %1665 = vmatpush1.msra.mxu0 0.0
    %1666 = vmatprep.subr.mxu0 0.0
    %1667 = vmatpush1.msra.mxu0 0.0
    %1668 = vmatprep.subr.mxu0 0.0
    %1669 = vmatpush1.msra.mxu0 0.0
    %1670 = vmatprep.subr.mxu0 0.0
    %1671 = vmatpush1.msra.mxu0 0.0
    %1672 = vmatprep.subr.mxu0 0.0
    %1673 = vmatpush1.msra.mxu0 0.0
    %1674 = vmatprep.subr.mxu0 0.0
    %1675 = vmatpush1.msra.mxu0 0.0
    %1676 = vmatprep.subr.mxu0 0.0
    %1677 = vmatpush1.msra.mxu0 0.0
    %1678 = vmatprep.subr.mxu0 0.0
    %1679 = vmatpush1.msra.mxu0 0.0
    %1680 = vmatprep.subr.mxu0 0.0
    %1681 = vmatpush1.msra.mxu0 0.0
    %1682 = vmatprep.subr.mxu0 0.0
    %1683 = vmatpush1.msra.mxu0 0.0
    %1684 = vmatprep.subr.mxu0 0.0
    %1685 = vmatpush1.msra.mxu0 0.0
    %1686 = vmatprep.subr.mxu0 0.0
    %1687 = vmatpush1.msra.mxu0 0.0
    %1688 = vmatprep.subr.mxu0 0.0
    %1689 = vmatpush1.msra.mxu0 0.0
    %1690 = vmatprep.subr.mxu0 0.0
    %1691 = vmatpush1.msra.mxu0 0.0
    %1692 = vmatprep.subr.mxu0 0.0
    %1693 = vmatpush1.msra.mxu0 0.0
    %1694 = vmatprep.subr.mxu0 0.0
    %1695 = vmatpush1.msra.mxu0 0.0
    %1696 = vmatprep.subr.mxu0 0.0
    %1697 = vmatpush1.msra.mxu0 0.0
    %1698 = vmatprep.subr.mxu0 0.0
    %1699 = vmatpush1.msra.mxu0 0.0
    %1700 = vmatprep.subr.mxu0 0.0
    %1701 = vmatpush1.msra.mxu0 0.0
    %1702 = vmatprep.subr.mxu0 0.0
    %1703 = vmatpush1.msra.mxu0 0.0
    %1704 = vmatprep.subr.mxu0 0.0
    %1705 = vmatpush1.msra.mxu0 0.0
    %1706 = vmatprep.subr.mxu0 0.0
    %1707 = vmatpush1.msra.mxu0 0.0
    %1708 = vmatprep.subr.mxu0 0.0
    %1709 = vmatpush1.msra.mxu0 0.0
    %1710 = vmatprep.subr.mxu0 0.0
    %1711 = vmatpush1.msra.mxu0 0.0
    %1712 = vmatprep.mubr.f32.mxu0 0.0
    %1713 = vmatmul.mubr.f32.gmra.mrb[0].mxu0 %v1643
    %v1714 = vpop.f32.mrb[0].mxu0
    %v1715 = vadd.f32 0.0, %v1714
    %v1716 = vpop.f32.mrb[0].mxu0
    %1717 = vmatprep.mubr.f32.mxu0 0.0
    %1718 = vmatmul.mubr.f32.gmra.mrb[0].mxu0 %v1646
    %v1719 = vpop.f32.mrb[0].mxu0
    %v1720 = vadd.f32 0.0, %v1719
    %v1721 = vpop.f32.mrb[0].mxu0
    %1722 = vdwg.mxu0
    %v1724 = vsel %vm1553, %v1636, 0
    %v1727 = vsel %vm1553, %v1637, 0
    %1729 = vmatprep.subr.mxu0 0.0
    %1730 = vmatpush1.msra.mxu0 %v1134
    %1731 = vmatprep.subr.mxu0 0.0
    %1732 = vmatpush1.msra.mxu0 %v1202
    %1733 = vmatprep.subr.mxu0 0.0
    %1734 = vmatpush1.msra.mxu0 0.0
    %1735 = vmatprep.subr.mxu0 0.0
    %1736 = vmatpush1.msra.mxu0 0.0
    %1737 = vmatprep.subr.mxu0 0.0
    %1738 = vmatpush1.msra.mxu0 0.0
    %1739 = vmatprep.subr.mxu0 0.0
    %1740 = vmatpush1.msra.mxu0 0.0
    %1741 = vmatprep.subr.mxu0 0.0
    %1742 = vmatpush1.msra.mxu0 0.0
    %1743 = vmatprep.subr.mxu0 0.0
    %1744 = vmatpush1.msra.mxu0 0.0
    %1745 = vmatprep.subr.mxu0 0.0
    %1746 = vmatpush1.msra.mxu0 0.0
    %1747 = vmatprep.subr.mxu0 0.0
    %1748 = vmatpush1.msra.mxu0 0.0
    %1749 = vmatprep.subr.mxu0 0.0
    %1750 = vmatpush1.msra.mxu0 0.0
    %1751 = vmatprep.subr.mxu0 0.0
    %1752 = vmatpush1.msra.mxu0 0.0
    %1753 = vmatprep.subr.mxu0 0.0
    %1754 = vmatpush1.msra.mxu0 0.0
    %1755 = vmatprep.subr.mxu0 0.0
    %1756 = vmatpush1.msra.mxu0 0.0
    %1757 = vmatprep.subr.mxu0 0.0
    %1758 = vmatpush1.msra.mxu0 0.0
    %1759 = vmatprep.subr.mxu0 0.0
    %1760 = vmatpush1.msra.mxu0 0.0
    %1761 = vmatprep.subr.mxu0 0.0
    %1762 = vmatpush1.msra.mxu0 0.0
    %1763 = vmatprep.subr.mxu0 0.0
    %1764 = vmatpush1.msra.mxu0 0.0
    %1765 = vmatprep.subr.mxu0 0.0
    %1766 = vmatpush1.msra.mxu0 0.0
    %1767 = vmatprep.subr.mxu0 0.0
    %1768 = vmatpush1.msra.mxu0 0.0
    %1769 = vmatprep.subr.mxu0 0.0
    %1770 = vmatpush1.msra.mxu0 0.0
    %1771 = vmatprep.subr.mxu0 0.0
    %1772 = vmatpush1.msra.mxu0 0.0
    %1773 = vmatprep.subr.mxu0 0.0
    %1774 = vmatpush1.msra.mxu0 0.0
    %1775 = vmatprep.subr.mxu0 0.0
    %1776 = vmatpush1.msra.mxu0 0.0
    %1777 = vmatprep.subr.mxu0 0.0
    %1778 = vmatpush1.msra.mxu0 0.0
    %1779 = vmatprep.subr.mxu0 0.0
    %1780 = vmatpush1.msra.mxu0 0.0
    %1781 = vmatprep.subr.mxu0 0.0
    %1782 = vmatpush1.msra.mxu0 0.0
    %1783 = vmatprep.subr.mxu0 0.0
    %1784 = vmatpush1.msra.mxu0 0.0
    %1785 = vmatprep.subr.mxu0 0.0
    %1786 = vmatpush1.msra.mxu0 0.0
    %1787 = vmatprep.subr.mxu0 0.0
    %1788 = vmatpush1.msra.mxu0 0.0
    %1789 = vmatprep.subr.mxu0 0.0
    %1790 = vmatpush1.msra.mxu0 0.0
    %1791 = vmatprep.subr.mxu0 0.0
    %1792 = vmatpush1.msra.mxu0 0.0
    %1793 = vmatprep.mubr.f32.mxu0 0.0
    %1794 = vmatmul.mubr.f32.gmra.mrb[0].mxu0 %v1724
    %v1795 = vpop.f32.mrb[0].mxu0
    %v1796 = vadd.f32 0.0, %v1795
    %v1797 = vpop.f32.mrb[0].mxu0
    %1798 = vmatprep.mubr.f32.mxu0 0.0
    %1799 = vmatmul.mubr.f32.gmra.mrb[0].mxu0 %v1727
    %v1800 = vpop.f32.mrb[0].mxu0
    %v1801 = vadd.f32 0.0, %v1800
    %v1802 = vpop.f32.mrb[0].mxu0
    %1803 = vdwg.mxu0
    %v1805 = vsel %vm1553, %v1638, 0
    %v1808 = vsel %vm1553, %v1639, 0
    %1810 = vmatprep.subr.mxu0 0.0
    %1811 = vmatpush1.msra.mxu0 %v1135
    %1812 = vmatprep.subr.mxu0 0.0
    %1813 = vmatpush1.msra.mxu0 %v1203
    %1814 = vmatprep.subr.mxu0 0.0
    %1815 = vmatpush1.msra.mxu0 0.0
    %1816 = vmatprep.subr.mxu0 0.0
    %1817 = vmatpush1.msra.mxu0 0.0
    %1818 = vmatprep.subr.mxu0 0.0
    %1819 = vmatpush1.msra.mxu0 0.0
    %1820 = vmatprep.subr.mxu0 0.0
    %1821 = vmatpush1.msra.mxu0 0.0
    %1822 = vmatprep.subr.mxu0 0.0
    %1823 = vmatpush1.msra.mxu0 0.0
    %1824 = vmatprep.subr.mxu0 0.0
    %1825 = vmatpush1.msra.mxu0 0.0
    %1826 = vmatprep.subr.mxu0 0.0
    %1827 = vmatpush1.msra.mxu0 0.0
    %1828 = vmatprep.subr.mxu0 0.0
    %1829 = vmatpush1.msra.mxu0 0.0
    %1830 = vmatprep.subr.mxu0 0.0
    %1831 = vmatpush1.msra.mxu0 0.0
    %1832 = vmatprep.subr.mxu0 0.0
    %1833 = vmatpush1.msra.mxu0 0.0
    %1834 = vmatprep.subr.mxu0 0.0
    %1835 = vmatpush1.msra.mxu0 0.0
    %1836 = vmatprep.subr.mxu0 0.0
    %1837 = vmatpush1.msra.mxu0 0.0
    %1838 = vmatprep.subr.mxu0 0.0
    %1839 = vmatpush1.msra.mxu0 0.0
    %1840 = vmatprep.subr.mxu0 0.0
    %1841 = vmatpush1.msra.mxu0 0.0
    %1842 = vmatprep.subr.mxu0 0.0
    %1843 = vmatpush1.msra.mxu0 0.0
    %1844 = vmatprep.subr.mxu0 0.0
    %1845 = vmatpush1.msra.mxu0 0.0
    %1846 = vmatprep.subr.mxu0 0.0
    %1847 = vmatpush1.msra.mxu0 0.0
    %1848 = vmatprep.subr.mxu0 0.0
    %1849 = vmatpush1.msra.mxu0 0.0
    %1850 = vmatprep.subr.mxu0 0.0
    %1851 = vmatpush1.msra.mxu0 0.0
    %1852 = vmatprep.subr.mxu0 0.0
    %1853 = vmatpush1.msra.mxu0 0.0
    %1854 = vmatprep.subr.mxu0 0.0
    %1855 = vmatpush1.msra.mxu0 0.0
    %1856 = vmatprep.subr.mxu0 0.0
    %1857 = vmatpush1.msra.mxu0 0.0
    %1858 = vmatprep.subr.mxu0 0.0
    %1859 = vmatpush1.msra.mxu0 0.0
    %1860 = vmatprep.subr.mxu0 0.0
    %1861 = vmatpush1.msra.mxu0 0.0
    %1862 = vmatprep.subr.mxu0 0.0
    %1863 = vmatpush1.msra.mxu0 0.0
    %1864 = vmatprep.subr.mxu0 0.0
    %1865 = vmatpush1.msra.mxu0 0.0
    %1866 = vmatprep.subr.mxu0 0.0
    %1867 = vmatpush1.msra.mxu0 0.0
    %1868 = vmatprep.subr.mxu0 0.0
    %1869 = vmatpush1.msra.mxu0 0.0
    %1870 = vmatprep.subr.mxu0 0.0
    %1871 = vmatpush1.msra.mxu0 0.0
    %1872 = vmatprep.subr.mxu0 0.0
    %1873 = vmatpush1.msra.mxu0 0.0
    %1874 = vmatprep.mubr.f32.mxu0 0.0
    %1875 = vmatmul.mubr.f32.gmra.mrb[0].mxu0 %v1805
    %v1876 = vpop.f32.mrb[0].mxu0
    %v1877 = vadd.f32 0.0, %v1876
    %v1878 = vpop.f32.mrb[0].mxu0
    %1879 = vmatprep.mubr.f32.mxu0 0.0
    %1880 = vmatmul.mubr.f32.gmra.mrb[0].mxu0 %v1808
    %v1881 = vpop.f32.mrb[0].mxu0
    %v1882 = vadd.f32 0.0, %v1881
    %v1883 = vpop.f32.mrb[0].mxu0
    %1884 = vdwg.mxu0
    %v1886 = vsel %vm1553, %v1640, 0
    %v1889 = vsel %vm1553, %v1641, 0
    %1891 = vmatprep.subr.mxu0 0.0
    %1892 = vmatpush1.msra.mxu0 %v1136
    %1893 = vmatprep.subr.mxu0 0.0
    %1894 = vmatpush1.msra.mxu0 %v1204
    %1895 = vmatprep.subr.mxu0 0.0
    %1896 = vmatpush1.msra.mxu0 0.0
    %1897 = vmatprep.subr.mxu0 0.0
    %1898 = vmatpush1.msra.mxu0 0.0
    %1899 = vmatprep.subr.mxu0 0.0
    %1900 = vmatpush1.msra.mxu0 0.0
    %1901 = vmatprep.subr.mxu0 0.0
    %1902 = vmatpush1.msra.mxu0 0.0
    %1903 = vmatprep.subr.mxu0 0.0
    %1904 = vmatpush1.msra.mxu0 0.0
    %1905 = vmatprep.subr.mxu0 0.0
    %1906 = vmatpush1.msra.mxu0 0.0
    %1907 = vmatprep.subr.mxu0 0.0
    %1908 = vmatpush1.msra.mxu0 0.0
    %1909 = vmatprep.subr.mxu0 0.0
    %1910 = vmatpush1.msra.mxu0 0.0
    %1911 = vmatprep.subr.mxu0 0.0
    %1912 = vmatpush1.msra.mxu0 0.0
    %1913 = vmatprep.subr.mxu0 0.0
    %1914 = vmatpush1.msra.mxu0 0.0
    %1915 = vmatprep.subr.mxu0 0.0
    %1916 = vmatpush1.msra.mxu0 0.0
    %1917 = vmatprep.subr.mxu0 0.0
    %1918 = vmatpush1.msra.mxu0 0.0
    %1919 = vmatprep.subr.mxu0 0.0
    %1920 = vmatpush1.msra.mxu0 0.0
    %1921 = vmatprep.subr.mxu0 0.0
    %1922 = vmatpush1.msra.mxu0 0.0
    %1923 = vmatprep.subr.mxu0 0.0
    %1924 = vmatpush1.msra.mxu0 0.0
    %1925 = vmatprep.subr.mxu0 0.0
    %1926 = vmatpush1.msra.mxu0 0.0
    %1927 = vmatprep.subr.mxu0 0.0
    %1928 = vmatpush1.msra.mxu0 0.0
    %1929 = vmatprep.subr.mxu0 0.0
    %1930 = vmatpush1.msra.mxu0 0.0
    %1931 = vmatprep.subr.mxu0 0.0
    %1932 = vmatpush1.msra.mxu0 0.0
    %1933 = vmatprep.subr.mxu0 0.0
    %1934 = vmatpush1.msra.mxu0 0.0
    %1935 = vmatprep.subr.mxu0 0.0
    %1936 = vmatpush1.msra.mxu0 0.0
    %1937 = vmatprep.subr.mxu0 0.0
    %1938 = vmatpush1.msra.mxu0 0.0
    %1939 = vmatprep.subr.mxu0 0.0
    %1940 = vmatpush1.msra.mxu0 0.0
    %1941 = vmatprep.subr.mxu0 0.0
    %1942 = vmatpush1.msra.mxu0 0.0
    %1943 = vmatprep.subr.mxu0 0.0
    %1944 = vmatpush1.msra.mxu0 0.0
    %1945 = vmatprep.subr.mxu0 0.0
    %1946 = vmatpush1.msra.mxu0 0.0
    %1947 = vmatprep.subr.mxu0 0.0
    %1948 = vmatpush1.msra.mxu0 0.0
    %1949 = vmatprep.subr.mxu0 0.0
    %1950 = vmatpush1.msra.mxu0 0.0
    %1951 = vmatprep.subr.mxu0 0.0
    %1952 = vmatpush1.msra.mxu0 0.0
    %1953 = vmatprep.subr.mxu0 0.0
    %1954 = vmatpush1.msra.mxu0 0.0
    %1955 = vmatprep.mubr.f32.mxu0 0.0
    %1956 = vmatmul.mubr.f32.gmra.mrb[0].mxu0 %v1886
    %v1957 = vpop.f32.mrb[0].mxu0
    %v1958 = vadd.f32 0.0, %v1957
    %v1959 = vpop.f32.mrb[0].mxu0
    %1960 = vmatprep.mubr.f32.mxu0 0.0
    %1961 = vmatmul.mubr.f32.gmra.mrb[0].mxu0 %v1889
    %v1962 = vpop.f32.mrb[0].mxu0
    %v1963 = vadd.f32 0.0, %v1962
    %v1964 = vpop.f32.mrb[0].mxu0
    %1965 = vdwg.mxu0
    %v1966 = vcombine.low %v1715, %v1877
    %v1967 = vcombine.high %v1715, %v1877
    %v1969 = vunpack.c.l.s4 1983009808
    %v1970 = vunpack.c.0.s8 %v1969
    %v1971 = vlaneseq
    %v1972 = vshrl.u32 %v1971, 7
    %v1973 = vsub.s32 %v1970, %v1972
    %v1974 = vrot.slane %v1966, %v1973
    %v1976 = vunpack.c.l.s4 1983009808
    %v1977 = vunpack.c.0.s8 %v1976
    %v1978 = vlaneseq
    %v1979 = vshrl.u32 %v1978, 7
    %v1980 = vsub.s32 %v1977, %v1979
    %v1981 = vrot.slane %v1967, %v1980
    %v1982 = vcombine.low %v1796, %v1958
    %v1983 = vcombine.high %v1796, %v1958
    %v1985 = vunpack.c.l.s4 1983009808
    %v1986 = vunpack.c.0.s8 %v1985
    %v1987 = vlaneseq
    %v1988 = vshrl.u32 %v1987, 7
    %v1989 = vsub.s32 %v1986, %v1988
    %v1990 = vrot.slane %v1982, %v1989
    %v1992 = vunpack.c.l.s4 1983009808
    %v1993 = vunpack.c.0.s8 %v1992
    %v1994 = vlaneseq
    %v1995 = vshrl.u32 %v1994, 7
    %v1996 = vsub.s32 %v1993, %v1995
    %v1997 = vrot.slane %v1983, %v1996
    %v1998 = vcombine.low %v1974, %v1990
    %v1999 = vcombine.high %v1974, %v1990
    %v2001 = vunpack.c.l.s4 1934713408
    %v2002 = vunpack.c.0.s8 %v2001
    %v2003 = vlaneseq
    %v2004 = vshrl.u32 %v2003, 7
    %v2005 = vsub.s32 %v2002, %v2004
    %v2006 = vrot.slane %v1998, %v2005
    %v2008 = vunpack.c.l.s4 1934713408
    %v2009 = vunpack.c.0.s8 %v2008
    %v2010 = vlaneseq
    %v2011 = vshrl.u32 %v2010, 7
    %v2012 = vsub.s32 %v2009, %v2011
    %v2013 = vrot.slane %v1999, %v2012
    %v2014 = vcombine.low %v1981, %v1997
    %v2015 = vcombine.high %v1981, %v1997
    %v2017 = vunpack.c.l.s4 1934713408
    %v2018 = vunpack.c.0.s8 %v2017
    %v2019 = vlaneseq
    %v2020 = vshrl.u32 %v2019, 7
    %v2021 = vsub.s32 %v2018, %v2020
    %v2022 = vrot.slane %v2014, %v2021
    %v2024 = vunpack.c.l.s4 1934713408
    %v2025 = vunpack.c.0.s8 %v2024
    %v2026 = vlaneseq
    %v2027 = vshrl.u32 %v2026, 7
    %v2028 = vsub.s32 %v2025, %v2027
    %v2029 = vrot.slane %v2015, %v2028
    %v2030 = vcombine.high %v2006, 0.0
    %v2031 = vcombine.high %v2013, 0.0
    %v2032 = vcombine.high %v2022, 0.0
    %v2033 = vcombine.high %v2029, 0.0
    %v2034 = vcombine.low %v1720, %v1882
    %v2035 = vcombine.high %v1720, %v1882
    %v2037 = vunpack.c.l.s4 1983009808
    %v2038 = vunpack.c.0.s8 %v2037
    %v2039 = vlaneseq
    %v2040 = vshrl.u32 %v2039, 7
    %v2041 = vsub.s32 %v2038, %v2040
    %v2042 = vrot.slane %v2034, %v2041
    %v2044 = vunpack.c.l.s4 1983009808
    %v2045 = vunpack.c.0.s8 %v2044
    %v2046 = vlaneseq
    %v2047 = vshrl.u32 %v2046, 7
    %v2048 = vsub.s32 %v2045, %v2047
    %v2049 = vrot.slane %v2035, %v2048
    %v2050 = vcombine.low %v1801, %v1963
    %v2051 = vcombine.high %v1801, %v1963
    %v2053 = vunpack.c.l.s4 1983009808
    %v2054 = vunpack.c.0.s8 %v2053
    %v2055 = vlaneseq
    %v2056 = vshrl.u32 %v2055, 7
    %v2057 = vsub.s32 %v2054, %v2056
    %v2058 = vrot.slane %v2050, %v2057
    %v2060 = vunpack.c.l.s4 1983009808
    %v2061 = vunpack.c.0.s8 %v2060
    %v2062 = vlaneseq
    %v2063 = vshrl.u32 %v2062, 7
    %v2064 = vsub.s32 %v2061, %v2063
    %v2065 = vrot.slane %v2051, %v2064
    %v2066 = vcombine.low %v2042, %v2058
    %v2067 = vcombine.high %v2042, %v2058
    %v2069 = vunpack.c.l.s4 1934713408
    %v2070 = vunpack.c.0.s8 %v2069
    %v2071 = vlaneseq
    %v2072 = vshrl.u32 %v2071, 7
    %v2073 = vsub.s32 %v2070, %v2072
    %v2074 = vrot.slane %v2066, %v2073
    %v2076 = vunpack.c.l.s4 1934713408
    %v2077 = vunpack.c.0.s8 %v2076
    %v2078 = vlaneseq
    %v2079 = vshrl.u32 %v2078, 7
    %v2080 = vsub.s32 %v2077, %v2079
    %v2081 = vrot.slane %v2067, %v2080
    %v2082 = vcombine.low %v2049, %v2065
    %v2083 = vcombine.high %v2049, %v2065
    %v2085 = vunpack.c.l.s4 1934713408
    %v2086 = vunpack.c.0.s8 %v2085
    %v2087 = vlaneseq
    %v2088 = vshrl.u32 %v2087, 7
    %v2089 = vsub.s32 %v2086, %v2088
    %v2090 = vrot.slane %v2082, %v2089
    %v2092 = vunpack.c.l.s4 1934713408
    %v2093 = vunpack.c.0.s8 %v2092
    %v2094 = vlaneseq
    %v2095 = vshrl.u32 %v2094, 7
    %v2096 = vsub.s32 %v2093, %v2095
    %v2097 = vrot.slane %v2083, %v2096
    %v2098 = vcombine.high %v2074, 0.0
    %v2099 = vcombine.high %v2081, 0.0
    %v2100 = vcombine.high %v2090, 0.0
    %v2101 = vcombine.high %v2097, 0.0
    %v2102 = vcombine.low %v2006, %v2013
    %v2104 = vunpack.c.l.s4 1983009808
    %v2105 = vunpack.c.0.s8 %v2104
    %v2106 = vlaneseq
    %v2107 = vshrl.u32 %v2106, 7
    %v2108 = vsub.s32 %v2105, %v2107
    %v2109 = vrot.slane %v2102, %v2108
    %v2110 = vcombine.low %v2030, %v2031
    %v2112 = vunpack.c.l.s4 1983009808
    %v2113 = vunpack.c.0.s8 %v2112
    %v2114 = vlaneseq
    %v2115 = vshrl.u32 %v2114, 7
    %v2116 = vsub.s32 %v2113, %v2115
    %v2117 = vrot.slane %v2110, %v2116
    %v2118 = vcombine.low %v2022, %v2029
    %v2120 = vunpack.c.l.s4 1983009808
    %v2121 = vunpack.c.0.s8 %v2120
    %v2122 = vlaneseq
    %v2123 = vshrl.u32 %v2122, 7
    %v2124 = vsub.s32 %v2121, %v2123
    %v2125 = vrot.slane %v2118, %v2124
    %v2126 = vcombine.low %v2032, %v2033
    %v2128 = vunpack.c.l.s4 1983009808
    %v2129 = vunpack.c.0.s8 %v2128
    %v2130 = vlaneseq
    %v2131 = vshrl.u32 %v2130, 7
    %v2132 = vsub.s32 %v2129, %v2131
    %v2133 = vrot.slane %v2126, %v2132
    %v2134 = vcombine.low %v2109, %v2117
    %v2135 = vcombine.high %v2109, %v2117
    %v2137 = vunpack.c.l.s4 1934713408
    %v2138 = vunpack.c.0.s8 %v2137
    %v2139 = vlaneseq
    %v2140 = vshrl.u32 %v2139, 7
    %v2141 = vsub.s32 %v2138, %v2140
    %v2142 = vrot.slane %v2134, %v2141
    %v2144 = vunpack.c.l.s4 1934713408
    %v2145 = vunpack.c.0.s8 %v2144
    %v2146 = vlaneseq
    %v2147 = vshrl.u32 %v2146, 7
    %v2148 = vsub.s32 %v2145, %v2147
    %v2149 = vrot.slane %v2135, %v2148
    %v2150 = vcombine.low %v2125, %v2133
    %v2151 = vcombine.high %v2125, %v2133
    %v2153 = vunpack.c.l.s4 1934713408
    %v2154 = vunpack.c.0.s8 %v2153
    %v2155 = vlaneseq
    %v2156 = vshrl.u32 %v2155, 7
    %v2157 = vsub.s32 %v2154, %v2156
    %v2158 = vrot.slane %v2150, %v2157
    %v2160 = vunpack.c.l.s4 1934713408
    %v2161 = vunpack.c.0.s8 %v2160
    %v2162 = vlaneseq
    %v2163 = vshrl.u32 %v2162, 7
    %v2164 = vsub.s32 %v2161, %v2163
    %v2165 = vrot.slane %v2151, %v2164
    %v2166 = vcombine.low %v2142, %v2158
    %v2167 = vcombine.high %v2142, %v2158
    %v2168 = vcombine.low %v2149, %v2165
    %v2169 = vcombine.high %v2149, %v2165
    %v2170 = vcombine.low %v2074, %v2081
    %v2172 = vunpack.c.l.s4 1983009808
    %v2173 = vunpack.c.0.s8 %v2172
    %v2174 = vlaneseq
    %v2175 = vshrl.u32 %v2174, 7
    %v2176 = vsub.s32 %v2173, %v2175
    %v2177 = vrot.slane %v2170, %v2176
    %v2178 = vcombine.low %v2098, %v2099
    %v2180 = vunpack.c.l.s4 1983009808
    %v2181 = vunpack.c.0.s8 %v2180
    %v2182 = vlaneseq
    %v2183 = vshrl.u32 %v2182, 7
    %v2184 = vsub.s32 %v2181, %v2183
    %v2185 = vrot.slane %v2178, %v2184
    %v2186 = vcombine.low %v2090, %v2097
    %v2188 = vunpack.c.l.s4 1983009808
    %v2189 = vunpack.c.0.s8 %v2188
    %v2190 = vlaneseq
    %v2191 = vshrl.u32 %v2190, 7
    %v2192 = vsub.s32 %v2189, %v2191
    %v2193 = vrot.slane %v2186, %v2192
    %v2194 = vcombine.low %v2100, %v2101
    %v2196 = vunpack.c.l.s4 1983009808
    %v2197 = vunpack.c.0.s8 %v2196
    %v2198 = vlaneseq
    %v2199 = vshrl.u32 %v2198, 7
    %v2200 = vsub.s32 %v2197, %v2199
    %v2201 = vrot.slane %v2194, %v2200
    %v2202 = vcombine.low %v2177, %v2185
    %v2203 = vcombine.high %v2177, %v2185
    %v2205 = vunpack.c.l.s4 1934713408
    %v2206 = vunpack.c.0.s8 %v2205
    %v2207 = vlaneseq
    %v2208 = vshrl.u32 %v2207, 7
    %v2209 = vsub.s32 %v2206, %v2208
    %v2210 = vrot.slane %v2202, %v2209
    %v2212 = vunpack.c.l.s4 1934713408
    %v2213 = vunpack.c.0.s8 %v2212
    %v2214 = vlaneseq
    %v2215 = vshrl.u32 %v2214, 7
    %v2216 = vsub.s32 %v2213, %v2215
    %v2217 = vrot.slane %v2203, %v2216
    %v2218 = vcombine.low %v2193, %v2201
    %v2219 = vcombine.high %v2193, %v2201
    %v2221 = vunpack.c.l.s4 1934713408
    %v2222 = vunpack.c.0.s8 %v2221
    %v2223 = vlaneseq
    %v2224 = vshrl.u32 %v2223, 7
    %v2225 = vsub.s32 %v2222, %v2224
    %v2226 = vrot.slane %v2218, %v2225
    %v2228 = vunpack.c.l.s4 1934713408
    %v2229 = vunpack.c.0.s8 %v2228
    %v2230 = vlaneseq
    %v2231 = vshrl.u32 %v2230, 7
    %v2232 = vsub.s32 %v2229, %v2231
    %v2233 = vrot.slane %v2219, %v2232
    %v2234 = vcombine.low %v2210, %v2226
    %v2235 = vcombine.high %v2210, %v2226
    %v2236 = vcombine.low %v2217, %v2233
    %v2237 = vcombine.high %v2217, %v2233
    %2240 = vrot.lane.b32.xlu0 %v2167, 8
    %v2241 = vpop.permute.xlu0 %2240
    %2242 = vrot.lane.b32.xlu0 %v2235, 8
    %v2243 = vpop.permute.xlu0 %2242
    %2248 = vrot.lane.b32.xlu0 %v2168, 16
    %v2249 = vpop.permute.xlu0 %2248
    %2250 = vrot.lane.b32.xlu0 %v2236, 16
    %v2251 = vpop.permute.xlu0 %2250
    %2256 = vrot.lane.b32.xlu0 %v2169, 24
    %v2257 = vpop.permute.xlu0 %2256
    %2258 = vrot.lane.b32.xlu0 %v2237, 24
    %v2259 = vpop.permute.xlu0 %2258
    %v2262 = vsel %vm67, %v2166, %v2241
    %v2263 = vsel %vm67, %v2234, %v2243
    %v2264 = vsel %vm1553, %v2262, %v2249
    %v2265 = vsel %vm1553, %v2263, %v2251
    %vm2266 = vcmask 195584
    %v2267 = vsel %vm2266, %v2264, %v2257
    %v2268 = vsel %vm2266, %v2265, %v2259
    %v2269 = vlaneseq
    %v2270 = vshrl.u32 %v2269, 7
    %v2271 = vsub.s32 3, %v2270
    %v2272 = vrot.slane %v184, %v2271
    %2277 = vrot.lane.b32.xlu0 %v176, 32
    %v2278 = vpop.permute.xlu0 %2277
    %2279 = vrot.lane.b32.xlu0 %v178, 32
    %v2280 = vpop.permute.xlu0 %2279
    %2281 = vrot.lane.b32.xlu0 %v180, 32
    %v2282 = vpop.permute.xlu0 %2281
    %2283 = vrot.lane.b32.xlu0 %v182, 32
    %v2284 = vpop.permute.xlu0 %2283
    %v2290 = vsel %vm94, %v2267, 0
    %v2293 = vsel %vm94, %v2268, 0
    %2295 = vmatprep.subr.mxu0 0.0
    %2296 = vmatpush1.msra.mxu0 %v2278
    %2297 = vmatprep.subr.mxu0 0.0
    %2298 = vmatpush1.msra.mxu0 %v2280
    %2299 = vmatprep.subr.mxu0 0.0
    %2300 = vmatpush1.msra.mxu0 %v2282
    %2301 = vmatprep.subr.mxu0 0.0
    %2302 = vmatpush1.msra.mxu0 %v2284
    %2303 = vmatprep.subr.mxu0 0.0
    %2304 = vmatpush1.msra.mxu0 0.0
    %2305 = vmatprep.subr.mxu0 0.0
    %2306 = vmatpush1.msra.mxu0 0.0
    %2307 = vmatprep.subr.mxu0 0.0
    %2308 = vmatpush1.msra.mxu0 0.0
    %2309 = vmatprep.subr.mxu0 0.0
    %2310 = vmatpush1.msra.mxu0 0.0
    %2311 = vmatprep.subr.mxu0 0.0
    %2312 = vmatpush1.msra.mxu0 0.0
    %2313 = vmatprep.subr.mxu0 0.0
    %2314 = vmatpush1.msra.mxu0 0.0
    %2315 = vmatprep.subr.mxu0 0.0
    %2316 = vmatpush1.msra.mxu0 0.0
    %2317 = vmatprep.subr.mxu0 0.0
    %2318 = vmatpush1.msra.mxu0 0.0
    %2319 = vmatprep.subr.mxu0 0.0
    %2320 = vmatpush1.msra.mxu0 0.0
    %2321 = vmatprep.subr.mxu0 0.0
    %2322 = vmatpush1.msra.mxu0 0.0
    %2323 = vmatprep.subr.mxu0 0.0
    %2324 = vmatpush1.msra.mxu0 0.0
    %2325 = vmatprep.subr.mxu0 0.0
    %2326 = vmatpush1.msra.mxu0 0.0
    %2327 = vmatprep.subr.mxu0 0.0
    %2328 = vmatpush1.msra.mxu0 0.0
    %2329 = vmatprep.subr.mxu0 0.0
    %2330 = vmatpush1.msra.mxu0 0.0
    %2331 = vmatprep.subr.mxu0 0.0
    %2332 = vmatpush1.msra.mxu0 0.0
    %2333 = vmatprep.subr.mxu0 0.0
    %2334 = vmatpush1.msra.mxu0 0.0
    %2335 = vmatprep.subr.mxu0 0.0
    %2336 = vmatpush1.msra.mxu0 0.0
    %2337 = vmatprep.subr.mxu0 0.0
    %2338 = vmatpush1.msra.mxu0 0.0
    %2339 = vmatprep.subr.mxu0 0.0
    %2340 = vmatpush1.msra.mxu0 0.0
    %2341 = vmatprep.subr.mxu0 0.0
    %2342 = vmatpush1.msra.mxu0 0.0
    %2343 = vmatprep.subr.mxu0 0.0
    %2344 = vmatpush1.msra.mxu0 0.0
    %2345 = vmatprep.subr.mxu0 0.0
    %2346 = vmatpush1.msra.mxu0 0.0
    %2347 = vmatprep.subr.mxu0 0.0
    %2348 = vmatpush1.msra.mxu0 0.0
    %2349 = vmatprep.subr.mxu0 0.0
    %2350 = vmatpush1.msra.mxu0 0.0
    %2351 = vmatprep.subr.mxu0 0.0
    %2352 = vmatpush1.msra.mxu0 0.0
    %2353 = vmatprep.subr.mxu0 0.0
    %2354 = vmatpush1.msra.mxu0 0.0
    %2355 = vmatprep.subr.mxu0 0.0
    %2356 = vmatpush1.msra.mxu0 0.0
    %2357 = vmatprep.subr.mxu0 0.0
    %2358 = vmatpush1.msra.mxu0 0.0
    %2359 = vmatprep.mubr.f32.mxu0 0.0
    %2360 = vmatmul.mubr.f32.gmra.mrb[0].mxu0 %v2290
    %v2361 = vpop.f32.mrb[0].mxu0
    %v2362 = vadd.f32 %v2272, %v2361
    %v2363 = vpop.f32.mrb[0].mxu0
    %2364 = vmatprep.mubr.f32.mxu0 0.0
    %2365 = vmatmul.mubr.f32.gmra.mrb[0].mxu0 %v2293
    %v2366 = vpop.f32.mrb[0].mxu0
    %v2367 = vadd.f32 %v2272, %v2366
    %v2368 = vpop.f32.mrb[0].mxu0
    %2369 = vdwg.mxu0
    %v2370 = vadd.f32 %v63, %v2362
    %v2371 = vadd.f32 %v64, %v2367
    %v2372 = vsel %vm94, %v2370, 0.0
    %2373 = vadd.xlane.f32.xlu0 %v2372
    %v2374 = vpop.xlane.xlu0 %2373
    %v2375 = vsel %vm94, %v2371, 0.0
    %2376 = vadd.xlane.f32.xlu0 %v2375
    %v2377 = vpop.xlane.xlu0 %2376
    %v2378 = vrcp.pop 32.0
    %v2379 = vmul.f32 %v2374, %v2378
    %v2380 = vmul.f32 %v2377, %v2378
    %v2381 = vsub.f32 %v2370, %v2379
    %v2382 = vsub.f32 %v2371, %v2380
    %v2383 = vmul.f32 %v2381, %v2381
    %v2384 = vmul.f32 %v2382, %v2382
    %v2385 = vsel %vm94, %v2383, 0.0
    %2386 = vadd.xlane.f32.xlu0 %v2385
    %v2387 = vpop.xlane.xlu0 %2386
    %v2388 = vsel %vm94, %v2384, 0.0
    %2389 = vadd.xlane.f32.xlu0 %v2388
    %v2390 = vpop.xlane.xlu0 %2389
    %v2391 = vmul.f32 %v2387, %v2378
    %v2392 = vmul.f32 %v2390, %v2378
    %v2393 = vadd.f32 %v2391, 1e-05
    %v2394 = vadd.f32 %v2392, 1e-05
    %v2395 = vrsqrt.pop %v2393
    %v2396 = vrsqrt.pop %v2394
    %v2397 = vmul.f32 %v2381, %v2395
    %v2398 = vmul.f32 %v2382, %v2396
    %v2399 = vlaneseq
    %v2400 = vshrl.u32 %v2399, 7
    %v2401 = vsub.s32 1, %v2400
    %v2402 = vrot.slane %v185, %v2401
    %v2403 = vmul.f32 %v2397, %v2402
    %v2404 = vmul.f32 %v2398, %v2402
    %v2405 = vlaneseq
    %v2406 = vshrl.u32 %v2405, 7
    %v2407 = vsub.s32 2, %v2406
    %v2408 = vrot.slane %v185, %v2407
    %v2409 = vadd.f32 %v2403, %v2408
    %v2410 = vadd.f32 %v2404, %v2408
    %v2411 = vlaneseq
    %v2412 = vshrl.u32 %v2411, 7
    %v2413 = vsub.s32 4, %v2412
    %v2414 = vrot.slane %v184, %v2413
    %v2416 = vsel %vm94, %v2409, 0
    %v2419 = vsel %vm94, %v2410, 0
    %2421 = vmatprep.subr.mxu0 0.0
    %2422 = vmatpush1.msra.mxu0 %v177
    %2423 = vmatprep.subr.mxu0 0.0
    %2424 = vmatpush1.msra.mxu0 %v179
    %2425 = vmatprep.subr.mxu0 0.0
    %2426 = vmatpush1.msra.mxu0 %v181
    %2427 = vmatprep.subr.mxu0 0.0
    %2428 = vmatpush1.msra.mxu0 %v183
    %2429 = vmatprep.subr.mxu0 0.0
    %2430 = vmatpush1.msra.mxu0 0.0
    %2431 = vmatprep.subr.mxu0 0.0
    %2432 = vmatpush1.msra.mxu0 0.0
    %2433 = vmatprep.subr.mxu0 0.0
    %2434 = vmatpush1.msra.mxu0 0.0
    %2435 = vmatprep.subr.mxu0 0.0
    %2436 = vmatpush1.msra.mxu0 0.0
    %2437 = vmatprep.subr.mxu0 0.0
    %2438 = vmatpush1.msra.mxu0 0.0
    %2439 = vmatprep.subr.mxu0 0.0
    %2440 = vmatpush1.msra.mxu0 0.0
    %2441 = vmatprep.subr.mxu0 0.0
    %2442 = vmatpush1.msra.mxu0 0.0
    %2443 = vmatprep.subr.mxu0 0.0
    %2444 = vmatpush1.msra.mxu0 0.0
    %2445 = vmatprep.subr.mxu0 0.0
    %2446 = vmatpush1.msra.mxu0 0.0
    %2447 = vmatprep.subr.mxu0 0.0
    %2448 = vmatpush1.msra.mxu0 0.0
    %2449 = vmatprep.subr.mxu0 0.0
    %2450 = vmatpush1.msra.mxu0 0.0
    %2451 = vmatprep.subr.mxu0 0.0
    %2452 = vmatpush1.msra.mxu0 0.0
    %2453 = vmatprep.subr.mxu0 0.0
    %2454 = vmatpush1.msra.mxu0 0.0
    %2455 = vmatprep.subr.mxu0 0.0
    %2456 = vmatpush1.msra.mxu0 0.0
    %2457 = vmatprep.subr.mxu0 0.0
    %2458 = vmatpush1.msra.mxu0 0.0
    %2459 = vmatprep.subr.mxu0 0.0
    %2460 = vmatpush1.msra.mxu0 0.0
    %2461 = vmatprep.subr.mxu0 0.0
    %2462 = vmatpush1.msra.mxu0 0.0
    %2463 = vmatprep.subr.mxu0 0.0
    %2464 = vmatpush1.msra.mxu0 0.0
    %2465 = vmatprep.subr.mxu0 0.0
    %2466 = vmatpush1.msra.mxu0 0.0
    %2467 = vmatprep.subr.mxu0 0.0
    %2468 = vmatpush1.msra.mxu0 0.0
    %2469 = vmatprep.subr.mxu0 0.0
    %2470 = vmatpush1.msra.mxu0 0.0
    %2471 = vmatprep.subr.mxu0 0.0
    %2472 = vmatpush1.msra.mxu0 0.0
    %2473 = vmatprep.subr.mxu0 0.0
    %2474 = vmatpush1.msra.mxu0 0.0
    %2475 = vmatprep.subr.mxu0 0.0
    %2476 = vmatpush1.msra.mxu0 0.0
    %2477 = vmatprep.subr.mxu0 0.0
    %2478 = vmatpush1.msra.mxu0 0.0
    %2479 = vmatprep.subr.mxu0 0.0
    %2480 = vmatpush1.msra.mxu0 0.0
    %2481 = vmatprep.subr.mxu0 0.0
    %2482 = vmatpush1.msra.mxu0 0.0
    %2483 = vmatprep.subr.mxu0 0.0
    %2484 = vmatpush1.msra.mxu0 0.0
    %2485 = vmatprep.mubr.f32.mxu0 0.0
    %2486 = vmatmul.mubr.f32.gmra.mrb[0].mxu0 %v2416
    %v2487 = vpop.f32.mrb[0].mxu0
    %v2488 = vadd.f32 %v2414, %v2487
    %v2489 = vpop.f32.mrb[0].mxu0
    %2490 = vmatprep.mubr.f32.mxu0 0.0
    %2491 = vmatmul.mubr.f32.gmra.mrb[0].mxu0 %v2419
    %v2492 = vpop.f32.mrb[0].mxu0
    %v2493 = vadd.f32 %v2414, %v2492
    %v2494 = vpop.f32.mrb[0].mxu0
    %2495 = vdwg.mxu0
    %v2496 = vlaneseq
    %v2497 = vshrl.u32 %v2496, 7
    %v2498 = vsub.s32 5, %v2497
    %v2499 = vrot.slane %v184, %v2498
    %v2500 = vadd.f32 %v168, %v2499
    %v2501 = vadd.f32 %v173, %v2499
    %v2502 = vlaneseq
    %v2503 = vshrl.u32 %v2502, 7
    %v2504 = vsub.s32 6, %v2503
    %v2505 = vrot.slane %v184, %v2504
    %2507 = vrot.lane.b32.xlu0 %v2505, 32
    %v2508 = vpop.permute.xlu0 %2507
    %v2510 = vadd.f32 %v168, %v2508
    %v2511 = vadd.f32 %v173, %v2508
    %2514 = vrot.lane.b32.xlu0 %v2488, 120
    %v2515 = vpop.permute.xlu0 %2514
    %2516 = vrot.lane.b32.xlu0 %v2493, 120
    %v2517 = vpop.permute.xlu0 %2516
    %2520 = vrot.lane.b32.xlu0 %v2488, 112
    %v2521 = vpop.permute.xlu0 %2520
    %2522 = vrot.lane.b32.xlu0 %v2493, 112
    %v2523 = vpop.permute.xlu0 %2522
    %2526 = vrot.lane.b32.xlu0 %v2488, 104
    %v2527 = vpop.permute.xlu0 %2526
    %2528 = vrot.lane.b32.xlu0 %v2493, 104
    %v2529 = vpop.permute.xlu0 %2528
    %v2532 = vcombine.low %v2488, %v2521
    %v2533 = vcombine.high %v2488, %v2521
    %v2535 = vunpack.c.l.s4 1983009808
    %v2536 = vunpack.c.0.s8 %v2535
    %v2537 = vlaneseq
    %v2538 = vshrl.u32 %v2537, 7
    %v2539 = vsub.s32 %v2536, %v2538
    %v2540 = vrot.slane %v2532, %v2539
    %v2542 = vunpack.c.l.s4 1983009808
    %v2543 = vunpack.c.0.s8 %v2542
    %v2544 = vlaneseq
    %v2545 = vshrl.u32 %v2544, 7
    %v2546 = vsub.s32 %v2543, %v2545
    %v2547 = vrot.slane %v2533, %v2546
    %v2548 = vcombine.low %v2515, %v2527
    %v2549 = vcombine.high %v2515, %v2527
    %v2551 = vunpack.c.l.s4 1983009808
    %v2552 = vunpack.c.0.s8 %v2551
    %v2553 = vlaneseq
    %v2554 = vshrl.u32 %v2553, 7
    %v2555 = vsub.s32 %v2552, %v2554
    %v2556 = vrot.slane %v2548, %v2555
    %v2558 = vunpack.c.l.s4 1983009808
    %v2559 = vunpack.c.0.s8 %v2558
    %v2560 = vlaneseq
    %v2561 = vshrl.u32 %v2560, 7
    %v2562 = vsub.s32 %v2559, %v2561
    %v2563 = vrot.slane %v2549, %v2562
    %v2564 = vcombine.low %v2540, %v2556
    %v2565 = vcombine.high %v2540, %v2556
    %v2567 = vunpack.c.l.s4 1934713408
    %v2568 = vunpack.c.0.s8 %v2567
    %v2569 = vlaneseq
    %v2570 = vshrl.u32 %v2569, 7
    %v2571 = vsub.s32 %v2568, %v2570
    %v2572 = vrot.slane %v2564, %v2571
    %v2574 = vunpack.c.l.s4 1934713408
    %v2575 = vunpack.c.0.s8 %v2574
    %v2576 = vlaneseq
    %v2577 = vshrl.u32 %v2576, 7
    %v2578 = vsub.s32 %v2575, %v2577
    %v2579 = vrot.slane %v2565, %v2578
    %v2580 = vcombine.low %v2547, %v2563
    %v2581 = vcombine.high %v2547, %v2563
    %v2583 = vunpack.c.l.s4 1934713408
    %v2584 = vunpack.c.0.s8 %v2583
    %v2585 = vlaneseq
    %v2586 = vshrl.u32 %v2585, 7
    %v2587 = vsub.s32 %v2584, %v2586
    %v2588 = vrot.slane %v2580, %v2587
    %v2590 = vunpack.c.l.s4 1934713408
    %v2591 = vunpack.c.0.s8 %v2590
    %v2592 = vlaneseq
    %v2593 = vshrl.u32 %v2592, 7
    %v2594 = vsub.s32 %v2591, %v2593
    %v2595 = vrot.slane %v2581, %v2594
    %v2596 = vcombine.high %v2572, 0.0
    %v2597 = vcombine.high %v2579, 0.0
    %v2598 = vcombine.high %v2588, 0.0
    %v2599 = vcombine.high %v2595, 0.0
    %v2600 = vcombine.low %v2493, %v2523
    %v2601 = vcombine.high %v2493, %v2523
    %v2603 = vunpack.c.l.s4 1983009808
    %v2604 = vunpack.c.0.s8 %v2603
    %v2605 = vlaneseq
    %v2606 = vshrl.u32 %v2605, 7
    %v2607 = vsub.s32 %v2604, %v2606
    %v2608 = vrot.slane %v2600, %v2607
    %v2610 = vunpack.c.l.s4 1983009808
    %v2611 = vunpack.c.0.s8 %v2610
    %v2612 = vlaneseq
    %v2613 = vshrl.u32 %v2612, 7
    %v2614 = vsub.s32 %v2611, %v2613
    %v2615 = vrot.slane %v2601, %v2614
    %v2616 = vcombine.low %v2517, %v2529
    %v2617 = vcombine.high %v2517, %v2529
    %v2619 = vunpack.c.l.s4 1983009808
    %v2620 = vunpack.c.0.s8 %v2619
    %v2621 = vlaneseq
    %v2622 = vshrl.u32 %v2621, 7
    %v2623 = vsub.s32 %v2620, %v2622
    %v2624 = vrot.slane %v2616, %v2623
    %v2626 = vunpack.c.l.s4 1983009808
    %v2627 = vunpack.c.0.s8 %v2626
    %v2628 = vlaneseq
    %v2629 = vshrl.u32 %v2628, 7
    %v2630 = vsub.s32 %v2627, %v2629
    %v2631 = vrot.slane %v2617, %v2630
    %v2632 = vcombine.low %v2608, %v2624
    %v2633 = vcombine.high %v2608, %v2624
    %v2635 = vunpack.c.l.s4 1934713408
    %v2636 = vunpack.c.0.s8 %v2635
    %v2637 = vlaneseq
    %v2638 = vshrl.u32 %v2637, 7
    %v2639 = vsub.s32 %v2636, %v2638
    %v2640 = vrot.slane %v2632, %v2639
    %v2642 = vunpack.c.l.s4 1934713408
    %v2643 = vunpack.c.0.s8 %v2642
    %v2644 = vlaneseq
    %v2645 = vshrl.u32 %v2644, 7
    %v2646 = vsub.s32 %v2643, %v2645
    %v2647 = vrot.slane %v2633, %v2646
    %v2648 = vcombine.low %v2615, %v2631
    %v2649 = vcombine.high %v2615, %v2631
    %v2651 = vunpack.c.l.s4 1934713408
    %v2652 = vunpack.c.0.s8 %v2651
    %v2653 = vlaneseq
    %v2654 = vshrl.u32 %v2653, 7
    %v2655 = vsub.s32 %v2652, %v2654
    %v2656 = vrot.slane %v2648, %v2655
    %v2658 = vunpack.c.l.s4 1934713408
    %v2659 = vunpack.c.0.s8 %v2658
    %v2660 = vlaneseq
    %v2661 = vshrl.u32 %v2660, 7
    %v2662 = vsub.s32 %v2659, %v2661
    %v2663 = vrot.slane %v2649, %v2662
    %v2664 = vcombine.high %v2640, 0.0
    %v2665 = vcombine.high %v2647, 0.0
    %v2666 = vcombine.high %v2656, 0.0
    %v2667 = vcombine.high %v2663, 0.0
    %v2668 = vcombine.low %v2572, %v2579
    %v2670 = vunpack.c.l.s4 1983009808
    %v2671 = vunpack.c.0.s8 %v2670
    %v2672 = vlaneseq
    %v2673 = vshrl.u32 %v2672, 7
    %v2674 = vsub.s32 %v2671, %v2673
    %v2675 = vrot.slane %v2668, %v2674
    %v2676 = vcombine.low %v2596, %v2597
    %v2678 = vunpack.c.l.s4 1983009808
    %v2679 = vunpack.c.0.s8 %v2678
    %v2680 = vlaneseq
    %v2681 = vshrl.u32 %v2680, 7
    %v2682 = vsub.s32 %v2679, %v2681
    %v2683 = vrot.slane %v2676, %v2682
    %v2684 = vcombine.low %v2588, %v2595
    %v2686 = vunpack.c.l.s4 1983009808
    %v2687 = vunpack.c.0.s8 %v2686
    %v2688 = vlaneseq
    %v2689 = vshrl.u32 %v2688, 7
    %v2690 = vsub.s32 %v2687, %v2689
    %v2691 = vrot.slane %v2684, %v2690
    %v2692 = vcombine.low %v2598, %v2599
    %v2694 = vunpack.c.l.s4 1983009808
    %v2695 = vunpack.c.0.s8 %v2694
    %v2696 = vlaneseq
    %v2697 = vshrl.u32 %v2696, 7
    %v2698 = vsub.s32 %v2695, %v2697
    %v2699 = vrot.slane %v2692, %v2698
    %v2700 = vcombine.low %v2675, %v2683
    %v2701 = vcombine.high %v2675, %v2683
    %v2703 = vunpack.c.l.s4 1934713408
    %v2704 = vunpack.c.0.s8 %v2703
    %v2705 = vlaneseq
    %v2706 = vshrl.u32 %v2705, 7
    %v2707 = vsub.s32 %v2704, %v2706
    %v2708 = vrot.slane %v2700, %v2707
    %v2710 = vunpack.c.l.s4 1934713408
    %v2711 = vunpack.c.0.s8 %v2710
    %v2712 = vlaneseq
    %v2713 = vshrl.u32 %v2712, 7
    %v2714 = vsub.s32 %v2711, %v2713
    %v2715 = vrot.slane %v2701, %v2714
    %v2716 = vcombine.low %v2691, %v2699
    %v2717 = vcombine.high %v2691, %v2699
    %v2719 = vunpack.c.l.s4 1934713408
    %v2720 = vunpack.c.0.s8 %v2719
    %v2721 = vlaneseq
    %v2722 = vshrl.u32 %v2721, 7
    %v2723 = vsub.s32 %v2720, %v2722
    %v2724 = vrot.slane %v2716, %v2723
    %v2726 = vunpack.c.l.s4 1934713408
    %v2727 = vunpack.c.0.s8 %v2726
    %v2728 = vlaneseq
    %v2729 = vshrl.u32 %v2728, 7
    %v2730 = vsub.s32 %v2727, %v2729
    %v2731 = vrot.slane %v2717, %v2730
    %v2732 = vcombine.low %v2708, %v2724
    %v2733 = vcombine.high %v2708, %v2724
    %v2734 = vcombine.low %v2715, %v2731
    %v2735 = vcombine.high %v2715, %v2731
    %v2736 = vcombine.low %v2640, %v2647
    %v2738 = vunpack.c.l.s4 1983009808
    %v2739 = vunpack.c.0.s8 %v2738
    %v2740 = vlaneseq
    %v2741 = vshrl.u32 %v2740, 7
    %v2742 = vsub.s32 %v2739, %v2741
    %v2743 = vrot.slane %v2736, %v2742
    %v2744 = vcombine.low %v2664, %v2665
    %v2746 = vunpack.c.l.s4 1983009808
    %v2747 = vunpack.c.0.s8 %v2746
    %v2748 = vlaneseq
    %v2749 = vshrl.u32 %v2748, 7
    %v2750 = vsub.s32 %v2747, %v2749
    %v2751 = vrot.slane %v2744, %v2750
    %v2752 = vcombine.low %v2656, %v2663
    %v2754 = vunpack.c.l.s4 1983009808
    %v2755 = vunpack.c.0.s8 %v2754
    %v2756 = vlaneseq
    %v2757 = vshrl.u32 %v2756, 7
    %v2758 = vsub.s32 %v2755, %v2757
    %v2759 = vrot.slane %v2752, %v2758
    %v2760 = vcombine.low %v2666, %v2667
    %v2762 = vunpack.c.l.s4 1983009808
    %v2763 = vunpack.c.0.s8 %v2762
    %v2764 = vlaneseq
    %v2765 = vshrl.u32 %v2764, 7
    %v2766 = vsub.s32 %v2763, %v2765
    %v2767 = vrot.slane %v2760, %v2766
    %v2768 = vcombine.low %v2743, %v2751
    %v2769 = vcombine.high %v2743, %v2751
    %v2771 = vunpack.c.l.s4 1934713408
    %v2772 = vunpack.c.0.s8 %v2771
    %v2773 = vlaneseq
    %v2774 = vshrl.u32 %v2773, 7
    %v2775 = vsub.s32 %v2772, %v2774
    %v2776 = vrot.slane %v2768, %v2775
    %v2778 = vunpack.c.l.s4 1934713408
    %v2779 = vunpack.c.0.s8 %v2778
    %v2780 = vlaneseq
    %v2781 = vshrl.u32 %v2780, 7
    %v2782 = vsub.s32 %v2779, %v2781
    %v2783 = vrot.slane %v2769, %v2782
    %v2784 = vcombine.low %v2759, %v2767
    %v2785 = vcombine.high %v2759, %v2767
    %v2787 = vunpack.c.l.s4 1934713408
    %v2788 = vunpack.c.0.s8 %v2787
    %v2789 = vlaneseq
    %v2790 = vshrl.u32 %v2789, 7
    %v2791 = vsub.s32 %v2788, %v2790
    %v2792 = vrot.slane %v2784, %v2791
    %v2794 = vunpack.c.l.s4 1934713408
    %v2795 = vunpack.c.0.s8 %v2794
    %v2796 = vlaneseq
    %v2797 = vshrl.u32 %v2796, 7
    %v2798 = vsub.s32 %v2795, %v2797
    %v2799 = vrot.slane %v2785, %v2798
    %v2800 = vcombine.low %v2776, %v2792
    %v2801 = vcombine.high %v2776, %v2792
    %v2802 = vcombine.low %v2783, %v2799
    %v2803 = vcombine.high %v2783, %v2799
    %2806 = vrot.lane.b32.xlu0 %v2500, 120
    %v2807 = vpop.permute.xlu0 %2806
    %2808 = vrot.lane.b32.xlu0 %v2501, 120
    %v2809 = vpop.permute.xlu0 %2808
    %2812 = vrot.lane.b32.xlu0 %v2500, 112
    %v2813 = vpop.permute.xlu0 %2812
    %2814 = vrot.lane.b32.xlu0 %v2501, 112
    %v2815 = vpop.permute.xlu0 %2814
    %2818 = vrot.lane.b32.xlu0 %v2500, 104
    %v2819 = vpop.permute.xlu0 %2818
    %2820 = vrot.lane.b32.xlu0 %v2501, 104
    %v2821 = vpop.permute.xlu0 %2820
    %v2824 = vcombine.low %v2500, %v2813
    %v2825 = vcombine.high %v2500, %v2813
    %v2827 = vunpack.c.l.s4 1983009808
    %v2828 = vunpack.c.0.s8 %v2827
    %v2829 = vlaneseq
    %v2830 = vshrl.u32 %v2829, 7
    %v2831 = vsub.s32 %v2828, %v2830
    %v2832 = vrot.slane %v2824, %v2831
    %v2834 = vunpack.c.l.s4 1983009808
    %v2835 = vunpack.c.0.s8 %v2834
    %v2836 = vlaneseq
    %v2837 = vshrl.u32 %v2836, 7
    %v2838 = vsub.s32 %v2835, %v2837
    %v2839 = vrot.slane %v2825, %v2838
    %v2840 = vcombine.low %v2807, %v2819
    %v2841 = vcombine.high %v2807, %v2819
    %v2843 = vunpack.c.l.s4 1983009808
    %v2844 = vunpack.c.0.s8 %v2843
    %v2845 = vlaneseq
    %v2846 = vshrl.u32 %v2845, 7
    %v2847 = vsub.s32 %v2844, %v2846
    %v2848 = vrot.slane %v2840, %v2847
    %v2850 = vunpack.c.l.s4 1983009808
    %v2851 = vunpack.c.0.s8 %v2850
    %v2852 = vlaneseq
    %v2853 = vshrl.u32 %v2852, 7
    %v2854 = vsub.s32 %v2851, %v2853
    %v2855 = vrot.slane %v2841, %v2854
    %v2856 = vcombine.low %v2832, %v2848
    %v2857 = vcombine.high %v2832, %v2848
    %v2859 = vunpack.c.l.s4 1934713408
    %v2860 = vunpack.c.0.s8 %v2859
    %v2861 = vlaneseq
    %v2862 = vshrl.u32 %v2861, 7
    %v2863 = vsub.s32 %v2860, %v2862
    %v2864 = vrot.slane %v2856, %v2863
    %v2866 = vunpack.c.l.s4 1934713408
    %v2867 = vunpack.c.0.s8 %v2866
    %v2868 = vlaneseq
    %v2869 = vshrl.u32 %v2868, 7
    %v2870 = vsub.s32 %v2867, %v2869
    %v2871 = vrot.slane %v2857, %v2870
    %v2872 = vcombine.low %v2839, %v2855
    %v2873 = vcombine.high %v2839, %v2855
    %v2875 = vunpack.c.l.s4 1934713408
    %v2876 = vunpack.c.0.s8 %v2875
    %v2877 = vlaneseq
    %v2878 = vshrl.u32 %v2877, 7
    %v2879 = vsub.s32 %v2876, %v2878
    %v2880 = vrot.slane %v2872, %v2879
    %v2882 = vunpack.c.l.s4 1934713408
    %v2883 = vunpack.c.0.s8 %v2882
    %v2884 = vlaneseq
    %v2885 = vshrl.u32 %v2884, 7
    %v2886 = vsub.s32 %v2883, %v2885
    %v2887 = vrot.slane %v2873, %v2886
    %v2888 = vcombine.high %v2864, 0.0
    %v2889 = vcombine.high %v2871, 0.0
    %v2890 = vcombine.high %v2880, 0.0
    %v2891 = vcombine.high %v2887, 0.0
    %v2892 = vcombine.low %v2501, %v2815
    %v2893 = vcombine.high %v2501, %v2815
    %v2895 = vunpack.c.l.s4 1983009808
    %v2896 = vunpack.c.0.s8 %v2895
    %v2897 = vlaneseq
    %v2898 = vshrl.u32 %v2897, 7
    %v2899 = vsub.s32 %v2896, %v2898
    %v2900 = vrot.slane %v2892, %v2899
    %v2902 = vunpack.c.l.s4 1983009808
    %v2903 = vunpack.c.0.s8 %v2902
    %v2904 = vlaneseq
    %v2905 = vshrl.u32 %v2904, 7
    %v2906 = vsub.s32 %v2903, %v2905
    %v2907 = vrot.slane %v2893, %v2906
    %v2908 = vcombine.low %v2809, %v2821
    %v2909 = vcombine.high %v2809, %v2821
    %v2911 = vunpack.c.l.s4 1983009808
    %v2912 = vunpack.c.0.s8 %v2911
    %v2913 = vlaneseq
    %v2914 = vshrl.u32 %v2913, 7
    %v2915 = vsub.s32 %v2912, %v2914
    %v2916 = vrot.slane %v2908, %v2915
    %v2918 = vunpack.c.l.s4 1983009808
    %v2919 = vunpack.c.0.s8 %v2918
    %v2920 = vlaneseq
    %v2921 = vshrl.u32 %v2920, 7
    %v2922 = vsub.s32 %v2919, %v2921
    %v2923 = vrot.slane %v2909, %v2922
    %v2924 = vcombine.low %v2900, %v2916
    %v2925 = vcombine.high %v2900, %v2916
    %v2927 = vunpack.c.l.s4 1934713408
    %v2928 = vunpack.c.0.s8 %v2927
    %v2929 = vlaneseq
    %v2930 = vshrl.u32 %v2929, 7
    %v2931 = vsub.s32 %v2928, %v2930
    %v2932 = vrot.slane %v2924, %v2931
    %v2934 = vunpack.c.l.s4 1934713408
    %v2935 = vunpack.c.0.s8 %v2934
    %v2936 = vlaneseq
    %v2937 = vshrl.u32 %v2936, 7
    %v2938 = vsub.s32 %v2935, %v2937
    %v2939 = vrot.slane %v2925, %v2938
    %v2940 = vcombine.low %v2907, %v2923
    %v2941 = vcombine.high %v2907, %v2923
    %v2943 = vunpack.c.l.s4 1934713408
    %v2944 = vunpack.c.0.s8 %v2943
    %v2945 = vlaneseq
    %v2946 = vshrl.u32 %v2945, 7
    %v2947 = vsub.s32 %v2944, %v2946
    %v2948 = vrot.slane %v2940, %v2947
    %v2950 = vunpack.c.l.s4 1934713408
    %v2951 = vunpack.c.0.s8 %v2950
    %v2952 = vlaneseq
    %v2953 = vshrl.u32 %v2952, 7
    %v2954 = vsub.s32 %v2951, %v2953
    %v2955 = vrot.slane %v2941, %v2954
    %v2956 = vcombine.high %v2932, 0.0
    %v2957 = vcombine.high %v2939, 0.0
    %v2958 = vcombine.high %v2948, 0.0
    %v2959 = vcombine.high %v2955, 0.0
    %v2960 = vcombine.low %v2864, %v2871
    %v2962 = vunpack.c.l.s4 1983009808
    %v2963 = vunpack.c.0.s8 %v2962
    %v2964 = vlaneseq
    %v2965 = vshrl.u32 %v2964, 7
    %v2966 = vsub.s32 %v2963, %v2965
    %v2967 = vrot.slane %v2960, %v2966
    %v2968 = vcombine.low %v2888, %v2889
    %v2970 = vunpack.c.l.s4 1983009808
    %v2971 = vunpack.c.0.s8 %v2970
    %v2972 = vlaneseq
    %v2973 = vshrl.u32 %v2972, 7
    %v2974 = vsub.s32 %v2971, %v2973
    %v2975 = vrot.slane %v2968, %v2974
    %v2976 = vcombine.low %v2880, %v2887
    %v2978 = vunpack.c.l.s4 1983009808
    %v2979 = vunpack.c.0.s8 %v2978
    %v2980 = vlaneseq
    %v2981 = vshrl.u32 %v2980, 7
    %v2982 = vsub.s32 %v2979, %v2981
    %v2983 = vrot.slane %v2976, %v2982
    %v2984 = vcombine.low %v2890, %v2891
    %v2986 = vunpack.c.l.s4 1983009808
    %v2987 = vunpack.c.0.s8 %v2986
    %v2988 = vlaneseq
    %v2989 = vshrl.u32 %v2988, 7
    %v2990 = vsub.s32 %v2987, %v2989
    %v2991 = vrot.slane %v2984, %v2990
    %v2992 = vcombine.low %v2967, %v2975
    %v2993 = vcombine.high %v2967, %v2975
    %v2995 = vunpack.c.l.s4 1934713408
    %v2996 = vunpack.c.0.s8 %v2995
    %v2997 = vlaneseq
    %v2998 = vshrl.u32 %v2997, 7
    %v2999 = vsub.s32 %v2996, %v2998
    %v3000 = vrot.slane %v2992, %v2999
    %v3002 = vunpack.c.l.s4 1934713408
    %v3003 = vunpack.c.0.s8 %v3002
    %v3004 = vlaneseq
    %v3005 = vshrl.u32 %v3004, 7
    %v3006 = vsub.s32 %v3003, %v3005
    %v3007 = vrot.slane %v2993, %v3006
    %v3008 = vcombine.low %v2983, %v2991
    %v3009 = vcombine.high %v2983, %v2991
    %v3011 = vunpack.c.l.s4 1934713408
    %v3012 = vunpack.c.0.s8 %v3011
    %v3013 = vlaneseq
    %v3014 = vshrl.u32 %v3013, 7
    %v3015 = vsub.s32 %v3012, %v3014
    %v3016 = vrot.slane %v3008, %v3015
    %v3018 = vunpack.c.l.s4 1934713408
    %v3019 = vunpack.c.0.s8 %v3018
    %v3020 = vlaneseq
    %v3021 = vshrl.u32 %v3020, 7
    %v3022 = vsub.s32 %v3019, %v3021
    %v3023 = vrot.slane %v3009, %v3022
    %v3024 = vcombine.low %v3000, %v3016
    %v3025 = vcombine.high %v3000, %v3016
    %v3026 = vcombine.low %v3007, %v3023
    %v3027 = vcombine.high %v3007, %v3023
    %v3028 = vcombine.low %v2932, %v2939
    %v3030 = vunpack.c.l.s4 1983009808
    %v3031 = vunpack.c.0.s8 %v3030
    %v3032 = vlaneseq
    %v3033 = vshrl.u32 %v3032, 7
    %v3034 = vsub.s32 %v3031, %v3033
    %v3035 = vrot.slane %v3028, %v3034
    %v3036 = vcombine.low %v2956, %v2957
    %v3038 = vunpack.c.l.s4 1983009808
    %v3039 = vunpack.c.0.s8 %v3038
    %v3040 = vlaneseq
    %v3041 = vshrl.u32 %v3040, 7
    %v3042 = vsub.s32 %v3039, %v3041
    %v3043 = vrot.slane %v3036, %v3042
    %v3044 = vcombine.low %v2948, %v2955
    %v3046 = vunpack.c.l.s4 1983009808
    %v3047 = vunpack.c.0.s8 %v3046
    %v3048 = vlaneseq
    %v3049 = vshrl.u32 %v3048, 7
    %v3050 = vsub.s32 %v3047, %v3049
    %v3051 = vrot.slane %v3044, %v3050
    %v3052 = vcombine.low %v2958, %v2959
    %v3054 = vunpack.c.l.s4 1983009808
    %v3055 = vunpack.c.0.s8 %v3054
    %v3056 = vlaneseq
    %v3057 = vshrl.u32 %v3056, 7
    %v3058 = vsub.s32 %v3055, %v3057
    %v3059 = vrot.slane %v3052, %v3058
    %v3060 = vcombine.low %v3035, %v3043
    %v3061 = vcombine.high %v3035, %v3043
    %v3063 = vunpack.c.l.s4 1934713408
    %v3064 = vunpack.c.0.s8 %v3063
    %v3065 = vlaneseq
    %v3066 = vshrl.u32 %v3065, 7
    %v3067 = vsub.s32 %v3064, %v3066
    %v3068 = vrot.slane %v3060, %v3067
    %v3070 = vunpack.c.l.s4 1934713408
    %v3071 = vunpack.c.0.s8 %v3070
    %v3072 = vlaneseq
    %v3073 = vshrl.u32 %v3072, 7
    %v3074 = vsub.s32 %v3071, %v3073
    %v3075 = vrot.slane %v3061, %v3074
    %v3076 = vcombine.low %v3051, %v3059
    %v3077 = vcombine.high %v3051, %v3059
    %v3079 = vunpack.c.l.s4 1934713408
    %v3080 = vunpack.c.0.s8 %v3079
    %v3081 = vlaneseq
    %v3082 = vshrl.u32 %v3081, 7
    %v3083 = vsub.s32 %v3080, %v3082
    %v3084 = vrot.slane %v3076, %v3083
    %v3086 = vunpack.c.l.s4 1934713408
    %v3087 = vunpack.c.0.s8 %v3086
    %v3088 = vlaneseq
    %v3089 = vshrl.u32 %v3088, 7
    %v3090 = vsub.s32 %v3087, %v3089
    %v3091 = vrot.slane %v3077, %v3090
    %v3092 = vcombine.low %v3068, %v3084
    %v3093 = vcombine.high %v3068, %v3084
    %v3094 = vcombine.low %v3075, %v3091
    %v3095 = vcombine.high %v3075, %v3091
    %3098 = vrot.lane.b32.xlu0 %v2510, 120
    %v3099 = vpop.permute.xlu0 %3098
    %3100 = vrot.lane.b32.xlu0 %v2511, 120
    %v3101 = vpop.permute.xlu0 %3100
    %3102 = vrot.lane.b32.xlu0 %v2510, 112
    %v3103 = vpop.permute.xlu0 %3102
    %3104 = vrot.lane.b32.xlu0 %v2511, 112
    %v3105 = vpop.permute.xlu0 %3104
    %3106 = vrot.lane.b32.xlu0 %v2510, 104
    %v3107 = vpop.permute.xlu0 %3106
    %3108 = vrot.lane.b32.xlu0 %v2511, 104
    %v3109 = vpop.permute.xlu0 %3108
    %3110 = vrot.lane.b32.xlu0 %v2510, 96
    %v3111 = vpop.permute.xlu0 %3110
    %3112 = vrot.lane.b32.xlu0 %v2511, 96
    %v3113 = vpop.permute.xlu0 %3112
    %3114 = vrot.lane.b32.xlu0 %v3099, 96
    %v3115 = vpop.permute.xlu0 %3114
    %3116 = vrot.lane.b32.xlu0 %v3101, 96
    %v3117 = vpop.permute.xlu0 %3116
    %3118 = vrot.lane.b32.xlu0 %v3103, 96
    %v3119 = vpop.permute.xlu0 %3118
    %3120 = vrot.lane.b32.xlu0 %v3105, 96
    %v3121 = vpop.permute.xlu0 %3120
    %3122 = vrot.lane.b32.xlu0 %v3107, 96
    %v3123 = vpop.permute.xlu0 %3122
    %3124 = vrot.lane.b32.xlu0 %v3109, 96
    %v3125 = vpop.permute.xlu0 %3124
    %v3134 = vcombine.low %v3111, %v3119
    %v3135 = vcombine.high %v3111, %v3119
    %v3137 = vunpack.c.l.s4 1983009808
    %v3138 = vunpack.c.0.s8 %v3137
    %v3139 = vlaneseq
    %v3140 = vshrl.u32 %v3139, 7
    %v3141 = vsub.s32 %v3138, %v3140
    %v3142 = vrot.slane %v3134, %v3141
    %v3144 = vunpack.c.l.s4 1983009808
    %v3145 = vunpack.c.0.s8 %v3144
    %v3146 = vlaneseq
    %v3147 = vshrl.u32 %v3146, 7
    %v3148 = vsub.s32 %v3145, %v3147
    %v3149 = vrot.slane %v3135, %v3148
    %v3150 = vcombine.low %v3115, %v3123
    %v3151 = vcombine.high %v3115, %v3123
    %v3153 = vunpack.c.l.s4 1983009808
    %v3154 = vunpack.c.0.s8 %v3153
    %v3155 = vlaneseq
    %v3156 = vshrl.u32 %v3155, 7
    %v3157 = vsub.s32 %v3154, %v3156
    %v3158 = vrot.slane %v3150, %v3157
    %v3160 = vunpack.c.l.s4 1983009808
    %v3161 = vunpack.c.0.s8 %v3160
    %v3162 = vlaneseq
    %v3163 = vshrl.u32 %v3162, 7
    %v3164 = vsub.s32 %v3161, %v3163
    %v3165 = vrot.slane %v3151, %v3164
    %v3166 = vcombine.low %v3142, %v3158
    %v3167 = vcombine.high %v3142, %v3158
    %v3169 = vunpack.c.l.s4 1934713408
    %v3170 = vunpack.c.0.s8 %v3169
    %v3171 = vlaneseq
    %v3172 = vshrl.u32 %v3171, 7
    %v3173 = vsub.s32 %v3170, %v3172
    %v3174 = vrot.slane %v3166, %v3173
    %v3176 = vunpack.c.l.s4 1934713408
    %v3177 = vunpack.c.0.s8 %v3176
    %v3178 = vlaneseq
    %v3179 = vshrl.u32 %v3178, 7
    %v3180 = vsub.s32 %v3177, %v3179
    %v3181 = vrot.slane %v3167, %v3180
    %v3182 = vcombine.low %v3149, %v3165
    %v3183 = vcombine.high %v3149, %v3165
    %v3185 = vunpack.c.l.s4 1934713408
    %v3186 = vunpack.c.0.s8 %v3185
    %v3187 = vlaneseq
    %v3188 = vshrl.u32 %v3187, 7
    %v3189 = vsub.s32 %v3186, %v3188
    %v3190 = vrot.slane %v3182, %v3189
    %v3192 = vunpack.c.l.s4 1934713408
    %v3193 = vunpack.c.0.s8 %v3192
    %v3194 = vlaneseq
    %v3195 = vshrl.u32 %v3194, 7
    %v3196 = vsub.s32 %v3193, %v3195
    %v3197 = vrot.slane %v3183, %v3196
    %v3198 = vcombine.high %v3174, 0.0
    %v3199 = vcombine.high %v3181, 0.0
    %v3200 = vcombine.high %v3190, 0.0
    %v3201 = vcombine.high %v3197, 0.0
    %v3202 = vcombine.low %v3113, %v3121
    %v3203 = vcombine.high %v3113, %v3121
    %v3205 = vunpack.c.l.s4 1983009808
    %v3206 = vunpack.c.0.s8 %v3205
    %v3207 = vlaneseq
    %v3208 = vshrl.u32 %v3207, 7
    %v3209 = vsub.s32 %v3206, %v3208
    %v3210 = vrot.slane %v3202, %v3209
    %v3212 = vunpack.c.l.s4 1983009808
    %v3213 = vunpack.c.0.s8 %v3212
    %v3214 = vlaneseq
    %v3215 = vshrl.u32 %v3214, 7
    %v3216 = vsub.s32 %v3213, %v3215
    %v3217 = vrot.slane %v3203, %v3216
    %v3218 = vcombine.low %v3117, %v3125
    %v3219 = vcombine.high %v3117, %v3125
    %v3221 = vunpack.c.l.s4 1983009808
    %v3222 = vunpack.c.0.s8 %v3221
    %v3223 = vlaneseq
    %v3224 = vshrl.u32 %v3223, 7
    %v3225 = vsub.s32 %v3222, %v3224
    %v3226 = vrot.slane %v3218, %v3225
    %v3228 = vunpack.c.l.s4 1983009808
    %v3229 = vunpack.c.0.s8 %v3228
    %v3230 = vlaneseq
    %v3231 = vshrl.u32 %v3230, 7
    %v3232 = vsub.s32 %v3229, %v3231
    %v3233 = vrot.slane %v3219, %v3232
    %v3234 = vcombine.low %v3210, %v3226
    %v3235 = vcombine.high %v3210, %v3226
    %v3237 = vunpack.c.l.s4 1934713408
    %v3238 = vunpack.c.0.s8 %v3237
    %v3239 = vlaneseq
    %v3240 = vshrl.u32 %v3239, 7
    %v3241 = vsub.s32 %v3238, %v3240
    %v3242 = vrot.slane %v3234, %v3241
    %v3244 = vunpack.c.l.s4 1934713408
    %v3245 = vunpack.c.0.s8 %v3244
    %v3246 = vlaneseq
    %v3247 = vshrl.u32 %v3246, 7
    %v3248 = vsub.s32 %v3245, %v3247
    %v3249 = vrot.slane %v3235, %v3248
    %v3250 = vcombine.low %v3217, %v3233
    %v3251 = vcombine.high %v3217, %v3233
    %v3253 = vunpack.c.l.s4 1934713408
    %v3254 = vunpack.c.0.s8 %v3253
    %v3255 = vlaneseq
    %v3256 = vshrl.u32 %v3255, 7
    %v3257 = vsub.s32 %v3254, %v3256
    %v3258 = vrot.slane %v3250, %v3257
    %v3260 = vunpack.c.l.s4 1934713408
    %v3261 = vunpack.c.0.s8 %v3260
    %v3262 = vlaneseq
    %v3263 = vshrl.u32 %v3262, 7
    %v3264 = vsub.s32 %v3261, %v3263
    %v3265 = vrot.slane %v3251, %v3264
    %v3266 = vcombine.high %v3242, 0.0
    %v3267 = vcombine.high %v3249, 0.0
    %v3268 = vcombine.high %v3258, 0.0
    %v3269 = vcombine.high %v3265, 0.0
    %v3270 = vcombine.low %v3174, %v3181
    %v3272 = vunpack.c.l.s4 1983009808
    %v3273 = vunpack.c.0.s8 %v3272
    %v3274 = vlaneseq
    %v3275 = vshrl.u32 %v3274, 7
    %v3276 = vsub.s32 %v3273, %v3275
    %v3277 = vrot.slane %v3270, %v3276
    %v3278 = vcombine.low %v3198, %v3199
    %v3280 = vunpack.c.l.s4 1983009808
    %v3281 = vunpack.c.0.s8 %v3280
    %v3282 = vlaneseq
    %v3283 = vshrl.u32 %v3282, 7
    %v3284 = vsub.s32 %v3281, %v3283
    %v3285 = vrot.slane %v3278, %v3284
    %v3286 = vcombine.low %v3190, %v3197
    %v3288 = vunpack.c.l.s4 1983009808
    %v3289 = vunpack.c.0.s8 %v3288
    %v3290 = vlaneseq
    %v3291 = vshrl.u32 %v3290, 7
    %v3292 = vsub.s32 %v3289, %v3291
    %v3293 = vrot.slane %v3286, %v3292
    %v3294 = vcombine.low %v3200, %v3201
    %v3296 = vunpack.c.l.s4 1983009808
    %v3297 = vunpack.c.0.s8 %v3296
    %v3298 = vlaneseq
    %v3299 = vshrl.u32 %v3298, 7
    %v3300 = vsub.s32 %v3297, %v3299
    %v3301 = vrot.slane %v3294, %v3300
    %v3302 = vcombine.low %v3277, %v3285
    %v3303 = vcombine.high %v3277, %v3285
    %v3305 = vunpack.c.l.s4 1934713408
    %v3306 = vunpack.c.0.s8 %v3305
    %v3307 = vlaneseq
    %v3308 = vshrl.u32 %v3307, 7
    %v3309 = vsub.s32 %v3306, %v3308
    %v3310 = vrot.slane %v3302, %v3309
    %v3312 = vunpack.c.l.s4 1934713408
    %v3313 = vunpack.c.0.s8 %v3312
    %v3314 = vlaneseq
    %v3315 = vshrl.u32 %v3314, 7
    %v3316 = vsub.s32 %v3313, %v3315
    %v3317 = vrot.slane %v3303, %v3316
    %v3318 = vcombine.low %v3293, %v3301
    %v3319 = vcombine.high %v3293, %v3301
    %v3321 = vunpack.c.l.s4 1934713408
    %v3322 = vunpack.c.0.s8 %v3321
    %v3323 = vlaneseq
    %v3324 = vshrl.u32 %v3323, 7
    %v3325 = vsub.s32 %v3322, %v3324
    %v3326 = vrot.slane %v3318, %v3325
    %v3328 = vunpack.c.l.s4 1934713408
    %v3329 = vunpack.c.0.s8 %v3328
    %v3330 = vlaneseq
    %v3331 = vshrl.u32 %v3330, 7
    %v3332 = vsub.s32 %v3329, %v3331
    %v3333 = vrot.slane %v3319, %v3332
    %v3334 = vcombine.low %v3310, %v3326
    %v3335 = vcombine.high %v3310, %v3326
    %v3336 = vcombine.low %v3317, %v3333
    %v3337 = vcombine.high %v3317, %v3333
    %v3338 = vcombine.low %v3242, %v3249
    %v3340 = vunpack.c.l.s4 1983009808
    %v3341 = vunpack.c.0.s8 %v3340
    %v3342 = vlaneseq
    %v3343 = vshrl.u32 %v3342, 7
    %v3344 = vsub.s32 %v3341, %v3343
    %v3345 = vrot.slane %v3338, %v3344
    %v3346 = vcombine.low %v3266, %v3267
    %v3348 = vunpack.c.l.s4 1983009808
    %v3349 = vunpack.c.0.s8 %v3348
    %v3350 = vlaneseq
    %v3351 = vshrl.u32 %v3350, 7
    %v3352 = vsub.s32 %v3349, %v3351
    %v3353 = vrot.slane %v3346, %v3352
    %v3354 = vcombine.low %v3258, %v3265
    %v3356 = vunpack.c.l.s4 1983009808
    %v3357 = vunpack.c.0.s8 %v3356
    %v3358 = vlaneseq
    %v3359 = vshrl.u32 %v3358, 7
    %v3360 = vsub.s32 %v3357, %v3359
    %v3361 = vrot.slane %v3354, %v3360
    %v3362 = vcombine.low %v3268, %v3269
    %v3364 = vunpack.c.l.s4 1983009808
    %v3365 = vunpack.c.0.s8 %v3364
    %v3366 = vlaneseq
    %v3367 = vshrl.u32 %v3366, 7
    %v3368 = vsub.s32 %v3365, %v3367
    %v3369 = vrot.slane %v3362, %v3368
    %v3370 = vcombine.low %v3345, %v3353
    %v3371 = vcombine.high %v3345, %v3353
    %v3373 = vunpack.c.l.s4 1934713408
    %v3374 = vunpack.c.0.s8 %v3373
    %v3375 = vlaneseq
    %v3376 = vshrl.u32 %v3375, 7
    %v3377 = vsub.s32 %v3374, %v3376
    %v3378 = vrot.slane %v3370, %v3377
    %v3380 = vunpack.c.l.s4 1934713408
    %v3381 = vunpack.c.0.s8 %v3380
    %v3382 = vlaneseq
    %v3383 = vshrl.u32 %v3382, 7
    %v3384 = vsub.s32 %v3381, %v3383
    %v3385 = vrot.slane %v3371, %v3384
    %v3386 = vcombine.low %v3361, %v3369
    %v3387 = vcombine.high %v3361, %v3369
    %v3389 = vunpack.c.l.s4 1934713408
    %v3390 = vunpack.c.0.s8 %v3389
    %v3391 = vlaneseq
    %v3392 = vshrl.u32 %v3391, 7
    %v3393 = vsub.s32 %v3390, %v3392
    %v3394 = vrot.slane %v3386, %v3393
    %v3396 = vunpack.c.l.s4 1934713408
    %v3397 = vunpack.c.0.s8 %v3396
    %v3398 = vlaneseq
    %v3399 = vshrl.u32 %v3398, 7
    %v3400 = vsub.s32 %v3397, %v3399
    %v3401 = vrot.slane %v3387, %v3400
    %v3402 = vcombine.low %v3378, %v3394
    %v3403 = vcombine.high %v3378, %v3394
    %v3404 = vcombine.low %v3385, %v3401
    %v3405 = vcombine.high %v3385, %v3401
    %v3407 = vsel %vm67, %v2732, 0
    %v3410 = vsel %vm67, %v2800, 0
    %v3413 = vsel %vm67, %v3024, 0
    %v3416 = vsel %vm67, %v3092, 0
    %3418 = vmatprep.subr.mxu0 0.0
    %3419 = vmatpush1.xpose.msra.mxu0 %v3413
    %3420 = vmatprep.subr.mxu0 0.0
    %3421 = vmatpush1.xpose.msra.mxu0 %v3416
    %3422 = vmatprep.subr.mxu0 0.0
    %3423 = vmatpush1.xpose.msra.mxu0 0.0
    %3424 = vmatprep.subr.mxu0 0.0
    %3425 = vmatpush1.xpose.msra.mxu0 0.0
    %3426 = vmatprep.subr.mxu0 0.0
    %3427 = vmatpush1.xpose.msra.mxu0 0.0
    %3428 = vmatprep.subr.mxu0 0.0
    %3429 = vmatpush1.xpose.msra.mxu0 0.0
    %3430 = vmatprep.subr.mxu0 0.0
    %3431 = vmatpush1.xpose.msra.mxu0 0.0
    %3432 = vmatprep.subr.mxu0 0.0
    %3433 = vmatpush1.xpose.msra.mxu0 0.0
    %3434 = vmatprep.subr.mxu0 0.0
    %3435 = vmatpush1.xpose.msra.mxu0 0.0
    %3436 = vmatprep.subr.mxu0 0.0
    %3437 = vmatpush1.xpose.msra.mxu0 0.0
    %3438 = vmatprep.subr.mxu0 0.0
    %3439 = vmatpush1.xpose.msra.mxu0 0.0
    %3440 = vmatprep.subr.mxu0 0.0
    %3441 = vmatpush1.xpose.msra.mxu0 0.0
    %3442 = vmatprep.subr.mxu0 0.0
    %3443 = vmatpush1.xpose.msra.mxu0 0.0
    %3444 = vmatprep.subr.mxu0 0.0
    %3445 = vmatpush1.xpose.msra.mxu0 0.0
    %3446 = vmatprep.subr.mxu0 0.0
    %3447 = vmatpush1.xpose.msra.mxu0 0.0
    %3448 = vmatprep.subr.mxu0 0.0
    %3449 = vmatpush1.xpose.msra.mxu0 0.0
    %3450 = vmatprep.subr.mxu0 0.0
    %3451 = vmatpush1.xpose.msra.mxu0 0.0
    %3452 = vmatprep.subr.mxu0 0.0
    %3453 = vmatpush1.xpose.msra.mxu0 0.0
    %3454 = vmatprep.subr.mxu0 0.0
    %3455 = vmatpush1.xpose.msra.mxu0 0.0
    %3456 = vmatprep.subr.mxu0 0.0
    %3457 = vmatpush1.xpose.msra.mxu0 0.0
    %3458 = vmatprep.subr.mxu0 0.0
    %3459 = vmatpush1.xpose.msra.mxu0 0.0
    %3460 = vmatprep.subr.mxu0 0.0
    %3461 = vmatpush1.xpose.msra.mxu0 0.0
    %3462 = vmatprep.subr.mxu0 0.0
    %3463 = vmatpush1.xpose.msra.mxu0 0.0
    %3464 = vmatprep.subr.mxu0 0.0
    %3465 = vmatpush1.xpose.msra.mxu0 0.0
    %3466 = vmatprep.subr.mxu0 0.0
    %3467 = vmatpush1.xpose.msra.mxu0 0.0
    %3468 = vmatprep.subr.mxu0 0.0
    %3469 = vmatpush1.xpose.msra.mxu0 0.0
    %3470 = vmatprep.subr.mxu0 0.0
    %3471 = vmatpush1.xpose.msra.mxu0 0.0
    %3472 = vmatprep.subr.mxu0 0.0
    %3473 = vmatpush1.xpose.msra.mxu0 0.0
    %3474 = vmatprep.subr.mxu0 0.0
    %3475 = vmatpush1.xpose.msra.mxu0 0.0
    %3476 = vmatprep.subr.mxu0 0.0
    %3477 = vmatpush1.xpose.msra.mxu0 0.0
    %3478 = vmatprep.subr.mxu0 0.0
    %3479 = vmatpush1.xpose.msra.mxu0 0.0
    %3480 = vmatprep.subr.mxu0 0.0
    %3481 = vmatpush1.xpose.msra.mxu0 0.0
    %3482 = vmatprep.mubr.f32.mxu0 0.0
    %3483 = vmatmul.mubr.f32.gmra.mrb[0].mxu0 %v3407
    %v3484 = vpop.f32.mrb[0].mxu0
    %v3485 = vadd.f32 %v88, %v3484
    %v3486 = vpop.f32.mrb[0].mxu0
    %3487 = vmatprep.mubr.f32.mxu0 0.0
    %3488 = vmatmul.mubr.f32.gmra.mrb[0].mxu0 %v3410
    %v3489 = vpop.f32.mrb[0].mxu0
    %v3490 = vadd.f32 %v89, %v3489
    %v3491 = vpop.f32.mrb[0].mxu0
    %3492 = vdwg.mxu0
    %v3494 = vsel %vm67, %v2733, 0
    %v3497 = vsel %vm67, %v2801, 0
    %v3500 = vsel %vm67, %v3025, 0
    %v3503 = vsel %vm67, %v3093, 0
    %3505 = vmatprep.subr.mxu0 0.0
    %3506 = vmatpush1.xpose.msra.mxu0 %v3500
    %3507 = vmatprep.subr.mxu0 0.0
    %3508 = vmatpush1.xpose.msra.mxu0 %v3503
    %3509 = vmatprep.subr.mxu0 0.0
    %3510 = vmatpush1.xpose.msra.mxu0 0.0
    %3511 = vmatprep.subr.mxu0 0.0
    %3512 = vmatpush1.xpose.msra.mxu0 0.0
    %3513 = vmatprep.subr.mxu0 0.0
    %3514 = vmatpush1.xpose.msra.mxu0 0.0
    %3515 = vmatprep.subr.mxu0 0.0
    %3516 = vmatpush1.xpose.msra.mxu0 0.0
    %3517 = vmatprep.subr.mxu0 0.0
    %3518 = vmatpush1.xpose.msra.mxu0 0.0
    %3519 = vmatprep.subr.mxu0 0.0
    %3520 = vmatpush1.xpose.msra.mxu0 0.0
    %3521 = vmatprep.subr.mxu0 0.0
    %3522 = vmatpush1.xpose.msra.mxu0 0.0
    %3523 = vmatprep.subr.mxu0 0.0
    %3524 = vmatpush1.xpose.msra.mxu0 0.0
    %3525 = vmatprep.subr.mxu0 0.0
    %3526 = vmatpush1.xpose.msra.mxu0 0.0
    %3527 = vmatprep.subr.mxu0 0.0
    %3528 = vmatpush1.xpose.msra.mxu0 0.0
    %3529 = vmatprep.subr.mxu0 0.0
    %3530 = vmatpush1.xpose.msra.mxu0 0.0
    %3531 = vmatprep.subr.mxu0 0.0
    %3532 = vmatpush1.xpose.msra.mxu0 0.0
    %3533 = vmatprep.subr.mxu0 0.0
    %3534 = vmatpush1.xpose.msra.mxu0 0.0
    %3535 = vmatprep.subr.mxu0 0.0
    %3536 = vmatpush1.xpose.msra.mxu0 0.0
    %3537 = vmatprep.subr.mxu0 0.0
    %3538 = vmatpush1.xpose.msra.mxu0 0.0
    %3539 = vmatprep.subr.mxu0 0.0
    %3540 = vmatpush1.xpose.msra.mxu0 0.0
    %3541 = vmatprep.subr.mxu0 0.0
    %3542 = vmatpush1.xpose.msra.mxu0 0.0
    %3543 = vmatprep.subr.mxu0 0.0
    %3544 = vmatpush1.xpose.msra.mxu0 0.0
    %3545 = vmatprep.subr.mxu0 0.0
    %3546 = vmatpush1.xpose.msra.mxu0 0.0
    %3547 = vmatprep.subr.mxu0 0.0
    %3548 = vmatpush1.xpose.msra.mxu0 0.0
    %3549 = vmatprep.subr.mxu0 0.0
    %3550 = vmatpush1.xpose.msra.mxu0 0.0
    %3551 = vmatprep.subr.mxu0 0.0
    %3552 = vmatpush1.xpose.msra.mxu0 0.0
    %3553 = vmatprep.subr.mxu0 0.0
    %3554 = vmatpush1.xpose.msra.mxu0 0.0
    %3555 = vmatprep.subr.mxu0 0.0
    %3556 = vmatpush1.xpose.msra.mxu0 0.0
    %3557 = vmatprep.subr.mxu0 0.0
    %3558 = vmatpush1.xpose.msra.mxu0 0.0
    %3559 = vmatprep.subr.mxu0 0.0
    %3560 = vmatpush1.xpose.msra.mxu0 0.0
    %3561 = vmatprep.subr.mxu0 0.0
    %3562 = vmatpush1.xpose.msra.mxu0 0.0
    %3563 = vmatprep.subr.mxu0 0.0
    %3564 = vmatpush1.xpose.msra.mxu0 0.0
    %3565 = vmatprep.subr.mxu0 0.0
    %3566 = vmatpush1.xpose.msra.mxu0 0.0
    %3567 = vmatprep.subr.mxu0 0.0
    %3568 = vmatpush1.xpose.msra.mxu0 0.0
    %3569 = vmatprep.mubr.f32.mxu0 0.0
    %3570 = vmatmul.mubr.f32.gmra.mrb[0].mxu0 %v3494
    %v3571 = vpop.f32.mrb[0].mxu0
    %v3572 = vadd.f32 %v88, %v3571
    %v3573 = vpop.f32.mrb[0].mxu0
    %3574 = vmatprep.mubr.f32.mxu0 0.0
    %3575 = vmatmul.mubr.f32.gmra.mrb[0].mxu0 %v3497
    %v3576 = vpop.f32.mrb[0].mxu0
    %v3577 = vadd.f32 %v89, %v3576
    %v3578 = vpop.f32.mrb[0].mxu0
    %3579 = vdwg.mxu0
    %v3581 = vsel %vm67, %v2734, 0
    %v3584 = vsel %vm67, %v2802, 0
    %v3587 = vsel %vm67, %v3026, 0
    %v3590 = vsel %vm67, %v3094, 0
    %3592 = vmatprep.subr.mxu0 0.0
    %3593 = vmatpush1.xpose.msra.mxu0 %v3587
    %3594 = vmatprep.subr.mxu0 0.0
    %3595 = vmatpush1.xpose.msra.mxu0 %v3590
    %3596 = vmatprep.subr.mxu0 0.0
    %3597 = vmatpush1.xpose.msra.mxu0 0.0
    %3598 = vmatprep.subr.mxu0 0.0
    %3599 = vmatpush1.xpose.msra.mxu0 0.0
    %3600 = vmatprep.subr.mxu0 0.0
    %3601 = vmatpush1.xpose.msra.mxu0 0.0
    %3602 = vmatprep.subr.mxu0 0.0
    %3603 = vmatpush1.xpose.msra.mxu0 0.0
    %3604 = vmatprep.subr.mxu0 0.0
    %3605 = vmatpush1.xpose.msra.mxu0 0.0
    %3606 = vmatprep.subr.mxu0 0.0
    %3607 = vmatpush1.xpose.msra.mxu0 0.0
    %3608 = vmatprep.subr.mxu0 0.0
    %3609 = vmatpush1.xpose.msra.mxu0 0.0
    %3610 = vmatprep.subr.mxu0 0.0
    %3611 = vmatpush1.xpose.msra.mxu0 0.0
    %3612 = vmatprep.subr.mxu0 0.0
    %3613 = vmatpush1.xpose.msra.mxu0 0.0
    %3614 = vmatprep.subr.mxu0 0.0
    %3615 = vmatpush1.xpose.msra.mxu0 0.0
    %3616 = vmatprep.subr.mxu0 0.0
    %3617 = vmatpush1.xpose.msra.mxu0 0.0
    %3618 = vmatprep.subr.mxu0 0.0
    %3619 = vmatpush1.xpose.msra.mxu0 0.0
    %3620 = vmatprep.subr.mxu0 0.0
    %3621 = vmatpush1.xpose.msra.mxu0 0.0
    %3622 = vmatprep.subr.mxu0 0.0
    %3623 = vmatpush1.xpose.msra.mxu0 0.0
    %3624 = vmatprep.subr.mxu0 0.0
    %3625 = vmatpush1.xpose.msra.mxu0 0.0
    %3626 = vmatprep.subr.mxu0 0.0
    %3627 = vmatpush1.xpose.msra.mxu0 0.0
    %3628 = vmatprep.subr.mxu0 0.0
    %3629 = vmatpush1.xpose.msra.mxu0 0.0
    %3630 = vmatprep.subr.mxu0 0.0
    %3631 = vmatpush1.xpose.msra.mxu0 0.0
    %3632 = vmatprep.subr.mxu0 0.0
    %3633 = vmatpush1.xpose.msra.mxu0 0.0
    %3634 = vmatprep.subr.mxu0 0.0
    %3635 = vmatpush1.xpose.msra.mxu0 0.0
    %3636 = vmatprep.subr.mxu0 0.0
    %3637 = vmatpush1.xpose.msra.mxu0 0.0
    %3638 = vmatprep.subr.mxu0 0.0
    %3639 = vmatpush1.xpose.msra.mxu0 0.0
    %3640 = vmatprep.subr.mxu0 0.0
    %3641 = vmatpush1.xpose.msra.mxu0 0.0
    %3642 = vmatprep.subr.mxu0 0.0
    %3643 = vmatpush1.xpose.msra.mxu0 0.0
    %3644 = vmatprep.subr.mxu0 0.0
    %3645 = vmatpush1.xpose.msra.mxu0 0.0
    %3646 = vmatprep.subr.mxu0 0.0
    %3647 = vmatpush1.xpose.msra.mxu0 0.0
    %3648 = vmatprep.subr.mxu0 0.0
    %3649 = vmatpush1.xpose.msra.mxu0 0.0
    %3650 = vmatprep.subr.mxu0 0.0
    %3651 = vmatpush1.xpose.msra.mxu0 0.0
    %3652 = vmatprep.subr.mxu0 0.0
    %3653 = vmatpush1.xpose.msra.mxu0 0.0
    %3654 = vmatprep.subr.mxu0 0.0
    %3655 = vmatpush1.xpose.msra.mxu0 0.0
    %3656 = vmatprep.mubr.f32.mxu0 0.0
    %3657 = vmatmul.mubr.f32.gmra.mrb[0].mxu0 %v3581
    %v3658 = vpop.f32.mrb[0].mxu0
    %v3659 = vadd.f32 %v88, %v3658
    %v3660 = vpop.f32.mrb[0].mxu0
    %3661 = vmatprep.mubr.f32.mxu0 0.0
    %3662 = vmatmul.mubr.f32.gmra.mrb[0].mxu0 %v3584
    %v3663 = vpop.f32.mrb[0].mxu0
    %v3664 = vadd.f32 %v89, %v3663
    %v3665 = vpop.f32.mrb[0].mxu0
    %3666 = vdwg.mxu0
    %v3668 = vsel %vm67, %v2735, 0
    %v3671 = vsel %vm67, %v2803, 0
    %v3674 = vsel %vm67, %v3027, 0
    %v3677 = vsel %vm67, %v3095, 0
    %3679 = vmatprep.subr.mxu0 0.0
    %3680 = vmatpush1.xpose.msra.mxu0 %v3674
    %3681 = vmatprep.subr.mxu0 0.0
    %3682 = vmatpush1.xpose.msra.mxu0 %v3677
    %3683 = vmatprep.subr.mxu0 0.0
    %3684 = vmatpush1.xpose.msra.mxu0 0.0
    %3685 = vmatprep.subr.mxu0 0.0
    %3686 = vmatpush1.xpose.msra.mxu0 0.0
    %3687 = vmatprep.subr.mxu0 0.0
    %3688 = vmatpush1.xpose.msra.mxu0 0.0
    %3689 = vmatprep.subr.mxu0 0.0
    %3690 = vmatpush1.xpose.msra.mxu0 0.0
    %3691 = vmatprep.subr.mxu0 0.0
    %3692 = vmatpush1.xpose.msra.mxu0 0.0
    %3693 = vmatprep.subr.mxu0 0.0
    %3694 = vmatpush1.xpose.msra.mxu0 0.0
    %3695 = vmatprep.subr.mxu0 0.0
    %3696 = vmatpush1.xpose.msra.mxu0 0.0
    %3697 = vmatprep.subr.mxu0 0.0
    %3698 = vmatpush1.xpose.msra.mxu0 0.0
    %3699 = vmatprep.subr.mxu0 0.0
    %3700 = vmatpush1.xpose.msra.mxu0 0.0
    %3701 = vmatprep.subr.mxu0 0.0
    %3702 = vmatpush1.xpose.msra.mxu0 0.0
    %3703 = vmatprep.subr.mxu0 0.0
    %3704 = vmatpush1.xpose.msra.mxu0 0.0
    %3705 = vmatprep.subr.mxu0 0.0
    %3706 = vmatpush1.xpose.msra.mxu0 0.0
    %3707 = vmatprep.subr.mxu0 0.0
    %3708 = vmatpush1.xpose.msra.mxu0 0.0
    %3709 = vmatprep.subr.mxu0 0.0
    %3710 = vmatpush1.xpose.msra.mxu0 0.0
    %3711 = vmatprep.subr.mxu0 0.0
    %3712 = vmatpush1.xpose.msra.mxu0 0.0
    %3713 = vmatprep.subr.mxu0 0.0
    %3714 = vmatpush1.xpose.msra.mxu0 0.0
    %3715 = vmatprep.subr.mxu0 0.0
    %3716 = vmatpush1.xpose.msra.mxu0 0.0
    %3717 = vmatprep.subr.mxu0 0.0
    %3718 = vmatpush1.xpose.msra.mxu0 0.0
    %3719 = vmatprep.subr.mxu0 0.0
    %3720 = vmatpush1.xpose.msra.mxu0 0.0
    %3721 = vmatprep.subr.mxu0 0.0
    %3722 = vmatpush1.xpose.msra.mxu0 0.0
    %3723 = vmatprep.subr.mxu0 0.0
    %3724 = vmatpush1.xpose.msra.mxu0 0.0
    %3725 = vmatprep.subr.mxu0 0.0
    %3726 = vmatpush1.xpose.msra.mxu0 0.0
    %3727 = vmatprep.subr.mxu0 0.0
    %3728 = vmatpush1.xpose.msra.mxu0 0.0
    %3729 = vmatprep.subr.mxu0 0.0
    %3730 = vmatpush1.xpose.msra.mxu0 0.0
    %3731 = vmatprep.subr.mxu0 0.0
    %3732 = vmatpush1.xpose.msra.mxu0 0.0
    %3733 = vmatprep.subr.mxu0 0.0
    %3734 = vmatpush1.xpose.msra.mxu0 0.0
    %3735 = vmatprep.subr.mxu0 0.0
    %3736 = vmatpush1.xpose.msra.mxu0 0.0
    %3737 = vmatprep.subr.mxu0 0.0
    %3738 = vmatpush1.xpose.msra.mxu0 0.0
    %3739 = vmatprep.subr.mxu0 0.0
    %3740 = vmatpush1.xpose.msra.mxu0 0.0
    %3741 = vmatprep.subr.mxu0 0.0
    %3742 = vmatpush1.xpose.msra.mxu0 0.0
    %3743 = vmatprep.mubr.f32.mxu0 0.0
    %3744 = vmatmul.mubr.f32.gmra.mrb[0].mxu0 %v3668
    %v3745 = vpop.f32.mrb[0].mxu0
    %v3746 = vadd.f32 %v88, %v3745
    %v3747 = vpop.f32.mrb[0].mxu0
    %3748 = vmatprep.mubr.f32.mxu0 0.0
    %3749 = vmatmul.mubr.f32.gmra.mrb[0].mxu0 %v3671
    %v3750 = vpop.f32.mrb[0].mxu0
    %v3751 = vadd.f32 %v89, %v3750
    %v3752 = vpop.f32.mrb[0].mxu0
    %3753 = vdwg.mxu0
    %v3754 = vsel %vm1553, %v3485, -inf
    %3755 = vmax.xlane.f32.xlu0 %v3754
    %v3756 = vpop.xlane.xlu0 %3755
    %v3757 = vsel %vm1553, %v3490, -inf
    %3758 = vmax.xlane.f32.xlu0 %v3757
    %v3759 = vpop.xlane.xlu0 %3758
    %v3760 = vsel %vm1553, %v3572, -inf
    %3761 = vmax.xlane.f32.xlu0 %v3760
    %v3762 = vpop.xlane.xlu0 %3761
    %v3763 = vsel %vm1553, %v3577, -inf
    %3764 = vmax.xlane.f32.xlu0 %v3763
    %v3765 = vpop.xlane.xlu0 %3764
    %v3766 = vsel %vm1553, %v3659, -inf
    %3767 = vmax.xlane.f32.xlu0 %v3766
    %v3768 = vpop.xlane.xlu0 %3767
    %v3769 = vsel %vm1553, %v3664, -inf
    %3770 = vmax.xlane.f32.xlu0 %v3769
    %v3771 = vpop.xlane.xlu0 %3770
    %v3772 = vsel %vm1553, %v3746, -inf
    %3773 = vmax.xlane.f32.xlu0 %v3772
    %v3774 = vpop.xlane.xlu0 %3773
    %v3775 = vsel %vm1553, %v3751, -inf
    %3776 = vmax.xlane.f32.xlu0 %v3775
    %v3777 = vpop.xlane.xlu0 %3776
    %v3778 = vsub.f32 %v3485, %v3756
    %v3779 = vsub.f32 %v3490, %v3759
    %v3780 = vsub.f32 %v3572, %v3762
    %v3781 = vsub.f32 %v3577, %v3765
    %v3782 = vsub.f32 %v3659, %v3768
    %v3783 = vsub.f32 %v3664, %v3771
    %v3784 = vsub.f32 %v3746, %v3774
    %v3785 = vsub.f32 %v3751, %v3777
    %v3786 = vmul.f32 %v3778, 1.442695
    %v3787 = vpow.pop %v3786
    %v3788 = vmul.f32 %v3779, 1.442695
    %v3789 = vpow.pop %v3788
    %v3790 = vmul.f32 %v3780, 1.442695
    %v3791 = vpow.pop %v3790
    %v3792 = vmul.f32 %v3781, 1.442695
    %v3793 = vpow.pop %v3792
    %v3794 = vmul.f32 %v3782, 1.442695
    %v3795 = vpow.pop %v3794
    %v3796 = vmul.f32 %v3783, 1.442695
    %v3797 = vpow.pop %v3796
    %v3798 = vmul.f32 %v3784, 1.442695
    %v3799 = vpow.pop %v3798
    %v3800 = vmul.f32 %v3785, 1.442695
    %v3801 = vpow.pop %v3800
    %v3802 = vsel %vm1553, %v3787, 0.0
    %3803 = vadd.xlane.f32.xlu0 %v3802
    %v3804 = vpop.xlane.xlu0 %3803
    %v3805 = vsel %vm1553, %v3789, 0.0
    %3806 = vadd.xlane.f32.xlu0 %v3805
    %v3807 = vpop.xlane.xlu0 %3806
    %v3808 = vsel %vm1553, %v3791, 0.0
    %3809 = vadd.xlane.f32.xlu0 %v3808
    %v3810 = vpop.xlane.xlu0 %3809
    %v3811 = vsel %vm1553, %v3793, 0.0
    %3812 = vadd.xlane.f32.xlu0 %v3811
    %v3813 = vpop.xlane.xlu0 %3812
    %v3814 = vsel %vm1553, %v3795, 0.0
    %3815 = vadd.xlane.f32.xlu0 %v3814
    %v3816 = vpop.xlane.xlu0 %3815
    %v3817 = vsel %vm1553, %v3797, 0.0
    %3818 = vadd.xlane.f32.xlu0 %v3817
    %v3819 = vpop.xlane.xlu0 %3818
    %v3820 = vsel %vm1553, %v3799, 0.0
    %3821 = vadd.xlane.f32.xlu0 %v3820
    %v3822 = vpop.xlane.xlu0 %3821
    %v3823 = vsel %vm1553, %v3801, 0.0
    %3824 = vadd.xlane.f32.xlu0 %v3823
    %v3825 = vpop.xlane.xlu0 %3824
    %v3826 = vrcp.pop %v3804
    %v3827 = vrcp.pop %v3807
    %v3828 = vrcp.pop %v3810
    %v3829 = vrcp.pop %v3813
    %v3830 = vrcp.pop %v3816
    %v3831 = vrcp.pop %v3819
    %v3832 = vrcp.pop %v3822
    %v3833 = vrcp.pop %v3825
    %v3834 = vmul.f32 %v3787, %v3826
    %v3835 = vmul.f32 %v3789, %v3827
    %v3836 = vmul.f32 %v3791, %v3828
    %v3837 = vmul.f32 %v3793, %v3829
    %v3838 = vmul.f32 %v3795, %v3830
    %v3839 = vmul.f32 %v3797, %v3831
    %v3840 = vmul.f32 %v3799, %v3832
    %v3841 = vmul.f32 %v3801, %v3833
    %v3843 = vsel %vm1553, %v3834, 0
    %v3846 = vsel %vm1553, %v3835, 0
    %3848 = vmatprep.subr.mxu0 0.0
    %3849 = vmatpush1.msra.mxu0 %v3334
    %3850 = vmatprep.subr.mxu0 0.0
    %3851 = vmatpush1.msra.mxu0 %v3402
    %3852 = vmatprep.subr.mxu0 0.0
    %3853 = vmatpush1.msra.mxu0 0.0
    %3854 = vmatprep.subr.mxu0 0.0
    %3855 = vmatpush1.msra.mxu0 0.0
    %3856 = vmatprep.subr.mxu0 0.0
    %3857 = vmatpush1.msra.mxu0 0.0
    %3858 = vmatprep.subr.mxu0 0.0
    %3859 = vmatpush1.msra.mxu0 0.0
    %3860 = vmatprep.subr.mxu0 0.0
    %3861 = vmatpush1.msra.mxu0 0.0
    %3862 = vmatprep.subr.mxu0 0.0
    %3863 = vmatpush1.msra.mxu0 0.0
    %3864 = vmatprep.subr.mxu0 0.0
    %3865 = vmatpush1.msra.mxu0 0.0
    %3866 = vmatprep.subr.mxu0 0.0
    %3867 = vmatpush1.msra.mxu0 0.0
    %3868 = vmatprep.subr.mxu0 0.0
    %3869 = vmatpush1.msra.mxu0 0.0
    %3870 = vmatprep.subr.mxu0 0.0
    %3871 = vmatpush1.msra.mxu0 0.0
    %3872 = vmatprep.subr.mxu0 0.0
    %3873 = vmatpush1.msra.mxu0 0.0
    %3874 = vmatprep.subr.mxu0 0.0
    %3875 = vmatpush1.msra.mxu0 0.0
    %3876 = vmatprep.subr.mxu0 0.0
    %3877 = vmatpush1.msra.mxu0 0.0
    %3878 = vmatprep.subr.mxu0 0.0
    %3879 = vmatpush1.msra.mxu0 0.0
    %3880 = vmatprep.subr.mxu0 0.0
    %3881 = vmatpush1.msra.mxu0 0.0
    %3882 = vmatprep.subr.mxu0 0.0
    %3883 = vmatpush1.msra.mxu0 0.0
    %3884 = vmatprep.subr.mxu0 0.0
    %3885 = vmatpush1.msra.mxu0 0.0
    %3886 = vmatprep.subr.mxu0 0.0
    %3887 = vmatpush1.msra.mxu0 0.0
    %3888 = vmatprep.subr.mxu0 0.0
    %3889 = vmatpush1.msra.mxu0 0.0
    %3890 = vmatprep.subr.mxu0 0.0
    %3891 = vmatpush1.msra.mxu0 0.0
    %3892 = vmatprep.subr.mxu0 0.0
    %3893 = vmatpush1.msra.mxu0 0.0
    %3894 = vmatprep.subr.mxu0 0.0
    %3895 = vmatpush1.msra.mxu0 0.0
    %3896 = vmatprep.subr.mxu0 0.0
    %3897 = vmatpush1.msra.mxu0 0.0
    %3898 = vmatprep.subr.mxu0 0.0
    %3899 = vmatpush1.msra.mxu0 0.0
    %3900 = vmatprep.subr.mxu0 0.0
    %3901 = vmatpush1.msra.mxu0 0.0
    %3902 = vmatprep.subr.mxu0 0.0
    %3903 = vmatpush1.msra.mxu0 0.0
    %3904 = vmatprep.subr.mxu0 0.0
    %3905 = vmatpush1.msra.mxu0 0.0
    %3906 = vmatprep.subr.mxu0 0.0
    %3907 = vmatpush1.msra.mxu0 0.0
    %3908 = vmatprep.subr.mxu0 0.0
    %3909 = vmatpush1.msra.mxu0 0.0
    %3910 = vmatprep.subr.mxu0 0.0
    %3911 = vmatpush1.msra.mxu0 0.0
    %3912 = vmatprep.mubr.f32.mxu0 0.0
    %3913 = vmatmul.mubr.f32.gmra.mrb[0].mxu0 %v3843
    %v3914 = vpop.f32.mrb[0].mxu0
    %v3915 = vadd.f32 0.0, %v3914
    %v3916 = vpop.f32.mrb[0].mxu0
    %3917 = vmatprep.mubr.f32.mxu0 0.0
    %3918 = vmatmul.mubr.f32.gmra.mrb[0].mxu0 %v3846
    %v3919 = vpop.f32.mrb[0].mxu0
    %v3920 = vadd.f32 0.0, %v3919
    %v3921 = vpop.f32.mrb[0].mxu0
    %3922 = vdwg.mxu0
    %v3924 = vsel %vm1553, %v3836, 0
    %v3927 = vsel %vm1553, %v3837, 0
    %3929 = vmatprep.subr.mxu0 0.0
    %3930 = vmatpush1.msra.mxu0 %v3335
    %3931 = vmatprep.subr.mxu0 0.0
    %3932 = vmatpush1.msra.mxu0 %v3403
    %3933 = vmatprep.subr.mxu0 0.0
    %3934 = vmatpush1.msra.mxu0 0.0
    %3935 = vmatprep.subr.mxu0 0.0
    %3936 = vmatpush1.msra.mxu0 0.0
    %3937 = vmatprep.subr.mxu0 0.0
    %3938 = vmatpush1.msra.mxu0 0.0
    %3939 = vmatprep.subr.mxu0 0.0
    %3940 = vmatpush1.msra.mxu0 0.0
    %3941 = vmatprep.subr.mxu0 0.0
    %3942 = vmatpush1.msra.mxu0 0.0
    %3943 = vmatprep.subr.mxu0 0.0
    %3944 = vmatpush1.msra.mxu0 0.0
    %3945 = vmatprep.subr.mxu0 0.0
    %3946 = vmatpush1.msra.mxu0 0.0
    %3947 = vmatprep.subr.mxu0 0.0
    %3948 = vmatpush1.msra.mxu0 0.0
    %3949 = vmatprep.subr.mxu0 0.0
    %3950 = vmatpush1.msra.mxu0 0.0
    %3951 = vmatprep.subr.mxu0 0.0
    %3952 = vmatpush1.msra.mxu0 0.0
    %3953 = vmatprep.subr.mxu0 0.0
    %3954 = vmatpush1.msra.mxu0 0.0
    %3955 = vmatprep.subr.mxu0 0.0
    %3956 = vmatpush1.msra.mxu0 0.0
    %3957 = vmatprep.subr.mxu0 0.0
    %3958 = vmatpush1.msra.mxu0 0.0
    %3959 = vmatprep.subr.mxu0 0.0
    %3960 = vmatpush1.msra.mxu0 0.0
    %3961 = vmatprep.subr.mxu0 0.0
    %3962 = vmatpush1.msra.mxu0 0.0
    %3963 = vmatprep.subr.mxu0 0.0
    %3964 = vmatpush1.msra.mxu0 0.0
    %3965 = vmatprep.subr.mxu0 0.0
    %3966 = vmatpush1.msra.mxu0 0.0
    %3967 = vmatprep.subr.mxu0 0.0
    %3968 = vmatpush1.msra.mxu0 0.0
    %3969 = vmatprep.subr.mxu0 0.0
    %3970 = vmatpush1.msra.mxu0 0.0
    %3971 = vmatprep.subr.mxu0 0.0
    %3972 = vmatpush1.msra.mxu0 0.0
    %3973 = vmatprep.subr.mxu0 0.0
    %3974 = vmatpush1.msra.mxu0 0.0
    %3975 = vmatprep.subr.mxu0 0.0
    %3976 = vmatpush1.msra.mxu0 0.0
    %3977 = vmatprep.subr.mxu0 0.0
    %3978 = vmatpush1.msra.mxu0 0.0
    %3979 = vmatprep.subr.mxu0 0.0
    %3980 = vmatpush1.msra.mxu0 0.0
    %3981 = vmatprep.subr.mxu0 0.0
    %3982 = vmatpush1.msra.mxu0 0.0
    %3983 = vmatprep.subr.mxu0 0.0
    %3984 = vmatpush1.msra.mxu0 0.0
    %3985 = vmatprep.subr.mxu0 0.0
    %3986 = vmatpush1.msra.mxu0 0.0
    %3987 = vmatprep.subr.mxu0 0.0
    %3988 = vmatpush1.msra.mxu0 0.0
    %3989 = vmatprep.subr.mxu0 0.0
    %3990 = vmatpush1.msra.mxu0 0.0
    %3991 = vmatprep.subr.mxu0 0.0
    %3992 = vmatpush1.msra.mxu0 0.0
    %3993 = vmatprep.mubr.f32.mxu0 0.0
    %3994 = vmatmul.mubr.f32.gmra.mrb[0].mxu0 %v3924
    %v3995 = vpop.f32.mrb[0].mxu0
    %v3996 = vadd.f32 0.0, %v3995
    %v3997 = vpop.f32.mrb[0].mxu0
    %3998 = vmatprep.mubr.f32.mxu0 0.0
    %3999 = vmatmul.mubr.f32.gmra.mrb[0].mxu0 %v3927
    %v4000 = vpop.f32.mrb[0].mxu0
    %v4001 = vadd.f32 0.0, %v4000
    %v4002 = vpop.f32.mrb[0].mxu0
    %4003 = vdwg.mxu0
    %v4005 = vsel %vm1553, %v3838, 0
    %v4008 = vsel %vm1553, %v3839, 0
    %4010 = vmatprep.subr.mxu0 0.0
    %4011 = vmatpush1.msra.mxu0 %v3336
    %4012 = vmatprep.subr.mxu0 0.0
    %4013 = vmatpush1.msra.mxu0 %v3404
    %4014 = vmatprep.subr.mxu0 0.0
    %4015 = vmatpush1.msra.mxu0 0.0
    %4016 = vmatprep.subr.mxu0 0.0
    %4017 = vmatpush1.msra.mxu0 0.0
    %4018 = vmatprep.subr.mxu0 0.0
    %4019 = vmatpush1.msra.mxu0 0.0
    %4020 = vmatprep.subr.mxu0 0.0
    %4021 = vmatpush1.msra.mxu0 0.0
    %4022 = vmatprep.subr.mxu0 0.0
    %4023 = vmatpush1.msra.mxu0 0.0
    %4024 = vmatprep.subr.mxu0 0.0
    %4025 = vmatpush1.msra.mxu0 0.0
    %4026 = vmatprep.subr.mxu0 0.0
    %4027 = vmatpush1.msra.mxu0 0.0
    %4028 = vmatprep.subr.mxu0 0.0
    %4029 = vmatpush1.msra.mxu0 0.0
    %4030 = vmatprep.subr.mxu0 0.0
    %4031 = vmatpush1.msra.mxu0 0.0
    %4032 = vmatprep.subr.mxu0 0.0
    %4033 = vmatpush1.msra.mxu0 0.0
    %4034 = vmatprep.subr.mxu0 0.0
    %4035 = vmatpush1.msra.mxu0 0.0
    %4036 = vmatprep.subr.mxu0 0.0
    %4037 = vmatpush1.msra.mxu0 0.0
    %4038 = vmatprep.subr.mxu0 0.0
    %4039 = vmatpush1.msra.mxu0 0.0
    %4040 = vmatprep.subr.mxu0 0.0
    %4041 = vmatpush1.msra.mxu0 0.0
    %4042 = vmatprep.subr.mxu0 0.0
    %4043 = vmatpush1.msra.mxu0 0.0
    %4044 = vmatprep.subr.mxu0 0.0
    %4045 = vmatpush1.msra.mxu0 0.0
    %4046 = vmatprep.subr.mxu0 0.0
    %4047 = vmatpush1.msra.mxu0 0.0
    %4048 = vmatprep.subr.mxu0 0.0
    %4049 = vmatpush1.msra.mxu0 0.0
    %4050 = vmatprep.subr.mxu0 0.0
    %4051 = vmatpush1.msra.mxu0 0.0
    %4052 = vmatprep.subr.mxu0 0.0
    %4053 = vmatpush1.msra.mxu0 0.0
    %4054 = vmatprep.subr.mxu0 0.0
    %4055 = vmatpush1.msra.mxu0 0.0
    %4056 = vmatprep.subr.mxu0 0.0
    %4057 = vmatpush1.msra.mxu0 0.0
    %4058 = vmatprep.subr.mxu0 0.0
    %4059 = vmatpush1.msra.mxu0 0.0
    %4060 = vmatprep.subr.mxu0 0.0
    %4061 = vmatpush1.msra.mxu0 0.0
    %4062 = vmatprep.subr.mxu0 0.0
    %4063 = vmatpush1.msra.mxu0 0.0
    %4064 = vmatprep.subr.mxu0 0.0
    %4065 = vmatpush1.msra.mxu0 0.0
    %4066 = vmatprep.subr.mxu0 0.0
    %4067 = vmatpush1.msra.mxu0 0.0
    %4068 = vmatprep.subr.mxu0 0.0
    %4069 = vmatpush1.msra.mxu0 0.0
    %4070 = vmatprep.subr.mxu0 0.0
    %4071 = vmatpush1.msra.mxu0 0.0
    %4072 = vmatprep.subr.mxu0 0.0
    %4073 = vmatpush1.msra.mxu0 0.0
    %4074 = vmatprep.mubr.f32.mxu0 0.0
    %4075 = vmatmul.mubr.f32.gmra.mrb[0].mxu0 %v4005
    %v4076 = vpop.f32.mrb[0].mxu0
    %v4077 = vadd.f32 0.0, %v4076
    %v4078 = vpop.f32.mrb[0].mxu0
    %4079 = vmatprep.mubr.f32.mxu0 0.0
    %4080 = vmatmul.mubr.f32.gmra.mrb[0].mxu0 %v4008
    %v4081 = vpop.f32.mrb[0].mxu0
    %v4082 = vadd.f32 0.0, %v4081
    %v4083 = vpop.f32.mrb[0].mxu0
    %4084 = vdwg.mxu0
    %v4086 = vsel %vm1553, %v3840, 0
    %v4089 = vsel %vm1553, %v3841, 0
    %4091 = vmatprep.subr.mxu0 0.0
    %4092 = vmatpush1.msra.mxu0 %v3337
    %4093 = vmatprep.subr.mxu0 0.0
    %4094 = vmatpush1.msra.mxu0 %v3405
    %4095 = vmatprep.subr.mxu0 0.0
    %4096 = vmatpush1.msra.mxu0 0.0
    %4097 = vmatprep.subr.mxu0 0.0
    %4098 = vmatpush1.msra.mxu0 0.0
    %4099 = vmatprep.subr.mxu0 0.0
    %4100 = vmatpush1.msra.mxu0 0.0
    %4101 = vmatprep.subr.mxu0 0.0
    %4102 = vmatpush1.msra.mxu0 0.0
    %4103 = vmatprep.subr.mxu0 0.0
    %4104 = vmatpush1.msra.mxu0 0.0
    %4105 = vmatprep.subr.mxu0 0.0
    %4106 = vmatpush1.msra.mxu0 0.0
    %4107 = vmatprep.subr.mxu0 0.0
    %4108 = vmatpush1.msra.mxu0 0.0
    %4109 = vmatprep.subr.mxu0 0.0
    %4110 = vmatpush1.msra.mxu0 0.0
    %4111 = vmatprep.subr.mxu0 0.0
    %4112 = vmatpush1.msra.mxu0 0.0
    %4113 = vmatprep.subr.mxu0 0.0
    %4114 = vmatpush1.msra.mxu0 0.0
    %4115 = vmatprep.subr.mxu0 0.0
    %4116 = vmatpush1.msra.mxu0 0.0
    %4117 = vmatprep.subr.mxu0 0.0
    %4118 = vmatpush1.msra.mxu0 0.0
    %4119 = vmatprep.subr.mxu0 0.0
    %4120 = vmatpush1.msra.mxu0 0.0
    %4121 = vmatprep.subr.mxu0 0.0
    %4122 = vmatpush1.msra.mxu0 0.0
    %4123 = vmatprep.subr.mxu0 0.0
    %4124 = vmatpush1.msra.mxu0 0.0
    %4125 = vmatprep.subr.mxu0 0.0
    %4126 = vmatpush1.msra.mxu0 0.0
    %4127 = vmatprep.subr.mxu0 0.0
    %4128 = vmatpush1.msra.mxu0 0.0
    %4129 = vmatprep.subr.mxu0 0.0
    %4130 = vmatpush1.msra.mxu0 0.0
    %4131 = vmatprep.subr.mxu0 0.0
    %4132 = vmatpush1.msra.mxu0 0.0
    %4133 = vmatprep.subr.mxu0 0.0
    %4134 = vmatpush1.msra.mxu0 0.0
    %4135 = vmatprep.subr.mxu0 0.0
    %4136 = vmatpush1.msra.mxu0 0.0
    %4137 = vmatprep.subr.mxu0 0.0
    %4138 = vmatpush1.msra.mxu0 0.0
    %4139 = vmatprep.subr.mxu0 0.0
    %4140 = vmatpush1.msra.mxu0 0.0
    %4141 = vmatprep.subr.mxu0 0.0
    %4142 = vmatpush1.msra.mxu0 0.0
    %4143 = vmatprep.subr.mxu0 0.0
    %4144 = vmatpush1.msra.mxu0 0.0
    %4145 = vmatprep.subr.mxu0 0.0
    %4146 = vmatpush1.msra.mxu0 0.0
    %4147 = vmatprep.subr.mxu0 0.0
    %4148 = vmatpush1.msra.mxu0 0.0
    %4149 = vmatprep.subr.mxu0 0.0
    %4150 = vmatpush1.msra.mxu0 0.0
    %4151 = vmatprep.subr.mxu0 0.0
    %4152 = vmatpush1.msra.mxu0 0.0
    %4153 = vmatprep.subr.mxu0 0.0
    %4154 = vmatpush1.msra.mxu0 0.0
    %4155 = vmatprep.mubr.f32.mxu0 0.0
    %4156 = vmatmul.mubr.f32.gmra.mrb[0].mxu0 %v4086
    %v4157 = vpop.f32.mrb[0].mxu0
    %v4158 = vadd.f32 0.0, %v4157
    %v4159 = vpop.f32.mrb[0].mxu0
    %4160 = vmatprep.mubr.f32.mxu0 0.0
    %4161 = vmatmul.mubr.f32.gmra.mrb[0].mxu0 %v4089
    %v4162 = vpop.f32.mrb[0].mxu0
    %v4163 = vadd.f32 0.0, %v4162
    %v4164 = vpop.f32.mrb[0].mxu0
    %4165 = vdwg.mxu0
    %v4166 = vcombine.low %v3915, %v4077
    %v4167 = vcombine.high %v3915, %v4077
    %v4169 = vunpack.c.l.s4 1983009808
    %v4170 = vunpack.c.0.s8 %v4169
    %v4171 = vlaneseq
    %v4172 = vshrl.u32 %v4171, 7
    %v4173 = vsub.s32 %v4170, %v4172
    %v4174 = vrot.slane %v4166, %v4173
    %v4176 = vunpack.c.l.s4 1983009808
    %v4177 = vunpack.c.0.s8 %v4176
    %v4178 = vlaneseq
    %v4179 = vshrl.u32 %v4178, 7
    %v4180 = vsub.s32 %v4177, %v4179
    %v4181 = vrot.slane %v4167, %v4180
    %v4182 = vcombine.low %v3996, %v4158
    %v4183 = vcombine.high %v3996, %v4158
    %v4185 = vunpack.c.l.s4 1983009808
    %v4186 = vunpack.c.0.s8 %v4185
    %v4187 = vlaneseq
    %v4188 = vshrl.u32 %v4187, 7
    %v4189 = vsub.s32 %v4186, %v4188
    %v4190 = vrot.slane %v4182, %v4189
    %v4192 = vunpack.c.l.s4 1983009808
    %v4193 = vunpack.c.0.s8 %v4192
    %v4194 = vlaneseq
    %v4195 = vshrl.u32 %v4194, 7
    %v4196 = vsub.s32 %v4193, %v4195
    %v4197 = vrot.slane %v4183, %v4196
    %v4198 = vcombine.low %v4174, %v4190
    %v4199 = vcombine.high %v4174, %v4190
    %v4201 = vunpack.c.l.s4 1934713408
    %v4202 = vunpack.c.0.s8 %v4201
    %v4203 = vlaneseq
    %v4204 = vshrl.u32 %v4203, 7
    %v4205 = vsub.s32 %v4202, %v4204
    %v4206 = vrot.slane %v4198, %v4205
    %v4208 = vunpack.c.l.s4 1934713408
    %v4209 = vunpack.c.0.s8 %v4208
    %v4210 = vlaneseq
    %v4211 = vshrl.u32 %v4210, 7
    %v4212 = vsub.s32 %v4209, %v4211
    %v4213 = vrot.slane %v4199, %v4212
    %v4214 = vcombine.low %v4181, %v4197
    %v4215 = vcombine.high %v4181, %v4197
    %v4217 = vunpack.c.l.s4 1934713408
    %v4218 = vunpack.c.0.s8 %v4217
    %v4219 = vlaneseq
    %v4220 = vshrl.u32 %v4219, 7
    %v4221 = vsub.s32 %v4218, %v4220
    %v4222 = vrot.slane %v4214, %v4221
    %v4224 = vunpack.c.l.s4 1934713408
    %v4225 = vunpack.c.0.s8 %v4224
    %v4226 = vlaneseq
    %v4227 = vshrl.u32 %v4226, 7
    %v4228 = vsub.s32 %v4225, %v4227
    %v4229 = vrot.slane %v4215, %v4228
    %v4230 = vcombine.high %v4206, 0.0
    %v4231 = vcombine.high %v4213, 0.0
    %v4232 = vcombine.high %v4222, 0.0
    %v4233 = vcombine.high %v4229, 0.0
    %v4234 = vcombine.low %v3920, %v4082
    %v4235 = vcombine.high %v3920, %v4082
    %v4237 = vunpack.c.l.s4 1983009808
    %v4238 = vunpack.c.0.s8 %v4237
    %v4239 = vlaneseq
    %v4240 = vshrl.u32 %v4239, 7
    %v4241 = vsub.s32 %v4238, %v4240
    %v4242 = vrot.slane %v4234, %v4241
    %v4244 = vunpack.c.l.s4 1983009808
    %v4245 = vunpack.c.0.s8 %v4244
    %v4246 = vlaneseq
    %v4247 = vshrl.u32 %v4246, 7
    %v4248 = vsub.s32 %v4245, %v4247
    %v4249 = vrot.slane %v4235, %v4248
    %v4250 = vcombine.low %v4001, %v4163
    %v4251 = vcombine.high %v4001, %v4163
    %v4253 = vunpack.c.l.s4 1983009808
    %v4254 = vunpack.c.0.s8 %v4253
    %v4255 = vlaneseq
    %v4256 = vshrl.u32 %v4255, 7
    %v4257 = vsub.s32 %v4254, %v4256
    %v4258 = vrot.slane %v4250, %v4257
    %v4260 = vunpack.c.l.s4 1983009808
    %v4261 = vunpack.c.0.s8 %v4260
    %v4262 = vlaneseq
    %v4263 = vshrl.u32 %v4262, 7
    %v4264 = vsub.s32 %v4261, %v4263
    %v4265 = vrot.slane %v4251, %v4264
    %v4266 = vcombine.low %v4242, %v4258
    %v4267 = vcombine.high %v4242, %v4258
    %v4269 = vunpack.c.l.s4 1934713408
    %v4270 = vunpack.c.0.s8 %v4269
    %v4271 = vlaneseq
    %v4272 = vshrl.u32 %v4271, 7
    %v4273 = vsub.s32 %v4270, %v4272
    %v4274 = vrot.slane %v4266, %v4273
    %v4276 = vunpack.c.l.s4 1934713408
    %v4277 = vunpack.c.0.s8 %v4276
    %v4278 = vlaneseq
    %v4279 = vshrl.u32 %v4278, 7
    %v4280 = vsub.s32 %v4277, %v4279
    %v4281 = vrot.slane %v4267, %v4280
    %v4282 = vcombine.low %v4249, %v4265
    %v4283 = vcombine.high %v4249, %v4265
    %v4285 = vunpack.c.l.s4 1934713408
    %v4286 = vunpack.c.0.s8 %v4285
    %v4287 = vlaneseq
    %v4288 = vshrl.u32 %v4287, 7
    %v4289 = vsub.s32 %v4286, %v4288
    %v4290 = vrot.slane %v4282, %v4289
    %v4292 = vunpack.c.l.s4 1934713408
    %v4293 = vunpack.c.0.s8 %v4292
    %v4294 = vlaneseq
    %v4295 = vshrl.u32 %v4294, 7
    %v4296 = vsub.s32 %v4293, %v4295
    %v4297 = vrot.slane %v4283, %v4296
    %v4298 = vcombine.high %v4274, 0.0
    %v4299 = vcombine.high %v4281, 0.0
    %v4300 = vcombine.high %v4290, 0.0
    %v4301 = vcombine.high %v4297, 0.0
    %v4302 = vcombine.low %v4206, %v4213
    %v4304 = vunpack.c.l.s4 1983009808
    %v4305 = vunpack.c.0.s8 %v4304
    %v4306 = vlaneseq
    %v4307 = vshrl.u32 %v4306, 7
    %v4308 = vsub.s32 %v4305, %v4307
    %v4309 = vrot.slane %v4302, %v4308
    %v4310 = vcombine.low %v4230, %v4231
    %v4312 = vunpack.c.l.s4 1983009808
    %v4313 = vunpack.c.0.s8 %v4312
    %v4314 = vlaneseq
    %v4315 = vshrl.u32 %v4314, 7
    %v4316 = vsub.s32 %v4313, %v4315
    %v4317 = vrot.slane %v4310, %v4316
    %v4318 = vcombine.low %v4222, %v4229
    %v4320 = vunpack.c.l.s4 1983009808
    %v4321 = vunpack.c.0.s8 %v4320
    %v4322 = vlaneseq
    %v4323 = vshrl.u32 %v4322, 7
    %v4324 = vsub.s32 %v4321, %v4323
    %v4325 = vrot.slane %v4318, %v4324
    %v4326 = vcombine.low %v4232, %v4233
    %v4328 = vunpack.c.l.s4 1983009808
    %v4329 = vunpack.c.0.s8 %v4328
    %v4330 = vlaneseq
    %v4331 = vshrl.u32 %v4330, 7
    %v4332 = vsub.s32 %v4329, %v4331
    %v4333 = vrot.slane %v4326, %v4332
    %v4334 = vcombine.low %v4309, %v4317
    %v4335 = vcombine.high %v4309, %v4317
    %v4337 = vunpack.c.l.s4 1934713408
    %v4338 = vunpack.c.0.s8 %v4337
    %v4339 = vlaneseq
    %v4340 = vshrl.u32 %v4339, 7
    %v4341 = vsub.s32 %v4338, %v4340
    %v4342 = vrot.slane %v4334, %v4341
    %v4344 = vunpack.c.l.s4 1934713408
    %v4345 = vunpack.c.0.s8 %v4344
    %v4346 = vlaneseq
    %v4347 = vshrl.u32 %v4346, 7
    %v4348 = vsub.s32 %v4345, %v4347
    %v4349 = vrot.slane %v4335, %v4348
    %v4350 = vcombine.low %v4325, %v4333
    %v4351 = vcombine.high %v4325, %v4333
    %v4353 = vunpack.c.l.s4 1934713408
    %v4354 = vunpack.c.0.s8 %v4353
    %v4355 = vlaneseq
    %v4356 = vshrl.u32 %v4355, 7
    %v4357 = vsub.s32 %v4354, %v4356
    %v4358 = vrot.slane %v4350, %v4357
    %v4360 = vunpack.c.l.s4 1934713408
    %v4361 = vunpack.c.0.s8 %v4360
    %v4362 = vlaneseq
    %v4363 = vshrl.u32 %v4362, 7
    %v4364 = vsub.s32 %v4361, %v4363
    %v4365 = vrot.slane %v4351, %v4364
    %v4366 = vcombine.low %v4342, %v4358
    %v4367 = vcombine.high %v4342, %v4358
    %v4368 = vcombine.low %v4349, %v4365
    %v4369 = vcombine.high %v4349, %v4365
    %v4370 = vcombine.low %v4274, %v4281
    %v4372 = vunpack.c.l.s4 1983009808
    %v4373 = vunpack.c.0.s8 %v4372
    %v4374 = vlaneseq
    %v4375 = vshrl.u32 %v4374, 7
    %v4376 = vsub.s32 %v4373, %v4375
    %v4377 = vrot.slane %v4370, %v4376
    %v4378 = vcombine.low %v4298, %v4299
    %v4380 = vunpack.c.l.s4 1983009808
    %v4381 = vunpack.c.0.s8 %v4380
    %v4382 = vlaneseq
    %v4383 = vshrl.u32 %v4382, 7
    %v4384 = vsub.s32 %v4381, %v4383
    %v4385 = vrot.slane %v4378, %v4384
    %v4386 = vcombine.low %v4290, %v4297
    %v4388 = vunpack.c.l.s4 1983009808
    %v4389 = vunpack.c.0.s8 %v4388
    %v4390 = vlaneseq
    %v4391 = vshrl.u32 %v4390, 7
    %v4392 = vsub.s32 %v4389, %v4391
    %v4393 = vrot.slane %v4386, %v4392
    %v4394 = vcombine.low %v4300, %v4301
    %v4396 = vunpack.c.l.s4 1983009808
    %v4397 = vunpack.c.0.s8 %v4396
    %v4398 = vlaneseq
    %v4399 = vshrl.u32 %v4398, 7
    %v4400 = vsub.s32 %v4397, %v4399
    %v4401 = vrot.slane %v4394, %v4400
    %v4402 = vcombine.low %v4377, %v4385
    %v4403 = vcombine.high %v4377, %v4385
    %v4405 = vunpack.c.l.s4 1934713408
    %v4406 = vunpack.c.0.s8 %v4405
    %v4407 = vlaneseq
    %v4408 = vshrl.u32 %v4407, 7
    %v4409 = vsub.s32 %v4406, %v4408
    %v4410 = vrot.slane %v4402, %v4409
    %v4412 = vunpack.c.l.s4 1934713408
    %v4413 = vunpack.c.0.s8 %v4412
    %v4414 = vlaneseq
    %v4415 = vshrl.u32 %v4414, 7
    %v4416 = vsub.s32 %v4413, %v4415
    %v4417 = vrot.slane %v4403, %v4416
    %v4418 = vcombine.low %v4393, %v4401
    %v4419 = vcombine.high %v4393, %v4401
    %v4421 = vunpack.c.l.s4 1934713408
    %v4422 = vunpack.c.0.s8 %v4421
    %v4423 = vlaneseq
    %v4424 = vshrl.u32 %v4423, 7
    %v4425 = vsub.s32 %v4422, %v4424
    %v4426 = vrot.slane %v4418, %v4425
    %v4428 = vunpack.c.l.s4 1934713408
    %v4429 = vunpack.c.0.s8 %v4428
    %v4430 = vlaneseq
    %v4431 = vshrl.u32 %v4430, 7
    %v4432 = vsub.s32 %v4429, %v4431
    %v4433 = vrot.slane %v4419, %v4432
    %v4434 = vcombine.low %v4410, %v4426
    %v4435 = vcombine.high %v4410, %v4426
    %v4436 = vcombine.low %v4417, %v4433
    %v4437 = vcombine.high %v4417, %v4433
    %4440 = vrot.lane.b32.xlu0 %v4367, 8
    %v4441 = vpop.permute.xlu0 %4440
    %4442 = vrot.lane.b32.xlu0 %v4435, 8
    %v4443 = vpop.permute.xlu0 %4442
    %4448 = vrot.lane.b32.xlu0 %v4368, 16
    %v4449 = vpop.permute.xlu0 %4448
    %4450 = vrot.lane.b32.xlu0 %v4436, 16
    %v4451 = vpop.permute.xlu0 %4450
    %4456 = vrot.lane.b32.xlu0 %v4369, 24
    %v4457 = vpop.permute.xlu0 %4456
    %4458 = vrot.lane.b32.xlu0 %v4437, 24
    %v4459 = vpop.permute.xlu0 %4458
    %v4462 = vsel %vm67, %v4366, %v4441
    %v4463 = vsel %vm67, %v4434, %v4443
    %v4464 = vsel %vm1553, %v4462, %v4449
    %v4465 = vsel %vm1553, %v4463, %v4451
    %v4466 = vsel %vm2266, %v4464, %v4457
    %v4467 = vsel %vm2266, %v4465, %v4459
    %v4468 = vlaneseq
    %v4469 = vshrl.u32 %v4468, 7
    %v4470 = vsub.s32 7, %v4469
    %v4471 = vrot.slane %v184, %v4470
    %4476 = vrot.lane.b32.xlu0 %v177, 96
    %v4477 = vpop.permute.xlu0 %4476
    %4478 = vrot.lane.b32.xlu0 %v179, 96
    %v4479 = vpop.permute.xlu0 %4478
    %4480 = vrot.lane.b32.xlu0 %v181, 96
    %v4481 = vpop.permute.xlu0 %4480
    %4482 = vrot.lane.b32.xlu0 %v183, 96
    %v4483 = vpop.permute.xlu0 %4482
    %v4489 = vsel %vm94, %v4466, 0
    %v4492 = vsel %vm94, %v4467, 0
    %4494 = vmatprep.subr.mxu0 0.0
    %4495 = vmatpush1.msra.mxu0 %v4477
    %4496 = vmatprep.subr.mxu0 0.0
    %4497 = vmatpush1.msra.mxu0 %v4479
    %4498 = vmatprep.subr.mxu0 0.0
    %4499 = vmatpush1.msra.mxu0 %v4481
    %4500 = vmatprep.subr.mxu0 0.0
    %4501 = vmatpush1.msra.mxu0 %v4483
    %4502 = vmatprep.subr.mxu0 0.0
    %4503 = vmatpush1.msra.mxu0 0.0
    %4504 = vmatprep.subr.mxu0 0.0
    %4505 = vmatpush1.msra.mxu0 0.0
    %4506 = vmatprep.subr.mxu0 0.0
    %4507 = vmatpush1.msra.mxu0 0.0
    %4508 = vmatprep.subr.mxu0 0.0
    %4509 = vmatpush1.msra.mxu0 0.0
    %4510 = vmatprep.subr.mxu0 0.0
    %4511 = vmatpush1.msra.mxu0 0.0
    %4512 = vmatprep.subr.mxu0 0.0
    %4513 = vmatpush1.msra.mxu0 0.0
    %4514 = vmatprep.subr.mxu0 0.0
    %4515 = vmatpush1.msra.mxu0 0.0
    %4516 = vmatprep.subr.mxu0 0.0
    %4517 = vmatpush1.msra.mxu0 0.0
    %4518 = vmatprep.subr.mxu0 0.0
    %4519 = vmatpush1.msra.mxu0 0.0
    %4520 = vmatprep.subr.mxu0 0.0
    %4521 = vmatpush1.msra.mxu0 0.0
    %4522 = vmatprep.subr.mxu0 0.0
    %4523 = vmatpush1.msra.mxu0 0.0
    %4524 = vmatprep.subr.mxu0 0.0
    %4525 = vmatpush1.msra.mxu0 0.0
    %4526 = vmatprep.subr.mxu0 0.0
    %4527 = vmatpush1.msra.mxu0 0.0
    %4528 = vmatprep.subr.mxu0 0.0
    %4529 = vmatpush1.msra.mxu0 0.0
    %4530 = vmatprep.subr.mxu0 0.0
    %4531 = vmatpush1.msra.mxu0 0.0
    %4532 = vmatprep.subr.mxu0 0.0
    %4533 = vmatpush1.msra.mxu0 0.0
    %4534 = vmatprep.subr.mxu0 0.0
    %4535 = vmatpush1.msra.mxu0 0.0
    %4536 = vmatprep.subr.mxu0 0.0
    %4537 = vmatpush1.msra.mxu0 0.0
    %4538 = vmatprep.subr.mxu0 0.0
    %4539 = vmatpush1.msra.mxu0 0.0
    %4540 = vmatprep.subr.mxu0 0.0
    %4541 = vmatpush1.msra.mxu0 0.0
    %4542 = vmatprep.subr.mxu0 0.0
    %4543 = vmatpush1.msra.mxu0 0.0
    %4544 = vmatprep.subr.mxu0 0.0
    %4545 = vmatpush1.msra.mxu0 0.0
    %4546 = vmatprep.subr.mxu0 0.0
    %4547 = vmatpush1.msra.mxu0 0.0
    %4548 = vmatprep.subr.mxu0 0.0
    %4549 = vmatpush1.msra.mxu0 0.0
    %4550 = vmatprep.subr.mxu0 0.0
    %4551 = vmatpush1.msra.mxu0 0.0
    %4552 = vmatprep.subr.mxu0 0.0
    %4553 = vmatpush1.msra.mxu0 0.0
    %4554 = vmatprep.subr.mxu0 0.0
    %4555 = vmatpush1.msra.mxu0 0.0
    %4556 = vmatprep.subr.mxu0 0.0
    %4557 = vmatpush1.msra.mxu0 0.0
    %4558 = vmatprep.mubr.f32.mxu0 0.0
    %4559 = vmatmul.mubr.f32.gmra.mrb[0].mxu0 %v4489
    %v4560 = vpop.f32.mrb[0].mxu0
    %v4561 = vadd.f32 %v4471, %v4560
    %v4562 = vpop.f32.mrb[0].mxu0
    %4563 = vmatprep.mubr.f32.mxu0 0.0
    %4564 = vmatmul.mubr.f32.gmra.mrb[0].mxu0 %v4492
    %v4565 = vpop.f32.mrb[0].mxu0
    %v4566 = vadd.f32 %v4471, %v4565
    %v4567 = vpop.f32.mrb[0].mxu0
    %4568 = vdwg.mxu0
    %v4569 = vadd.f32 %v2409, %v4561
    %v4570 = vadd.f32 %v2410, %v4566
    %v4571 = vsel %vm94, %v4569, 0.0
    %4572 = vadd.xlane.f32.xlu0 %v4571
    %v4573 = vpop.xlane.xlu0 %4572
    %v4574 = vsel %vm94, %v4570, 0.0
    %4575 = vadd.xlane.f32.xlu0 %v4574
    %v4576 = vpop.xlane.xlu0 %4575
    %v4577 = vmul.f32 %v4573, %v2378
    %v4578 = vmul.f32 %v4576, %v2378
    %v4579 = vsub.f32 %v4569, %v4577
    %v4580 = vsub.f32 %v4570, %v4578
    %v4581 = vmul.f32 %v4579, %v4579
    %v4582 = vmul.f32 %v4580, %v4580
    %v4583 = vsel %vm94, %v4581, 0.0
    %4584 = vadd.xlane.f32.xlu0 %v4583
    %v4585 = vpop.xlane.xlu0 %4584
    %v4586 = vsel %vm94, %v4582, 0.0
    %4587 = vadd.xlane.f32.xlu0 %v4586
    %v4588 = vpop.xlane.xlu0 %4587
    %v4589 = vmul.f32 %v4585, %v2378
    %v4590 = vmul.f32 %v4588, %v2378
    %v4591 = vadd.f32 %v4589, 1e-05
    %v4592 = vadd.f32 %v4590, 1e-05
    %v4593 = vrsqrt.pop %v4591
    %v4594 = vrsqrt.pop %v4592
    %v4595 = vmul.f32 %v4579, %v4593
    %v4596 = vmul.f32 %v4580, %v4594
    %v4597 = vlaneseq
    %v4598 = vshrl.u32 %v4597, 7
    %v4599 = vsub.s32 3, %v4598
    %v4600 = vrot.slane %v185, %v4599
    %v4601 = vmul.f32 %v4595, %v4600
    %v4602 = vmul.f32 %v4596, %v4600
    %v4603 = vlaneseq
    %v4604 = vshrl.u32 %v4603, 7
    %v4605 = vsub.s32 4, %v4604
    %v4606 = vrot.slane %v185, %v4605
    %v4607 = vadd.f32 %v4601, %v4606
    %v4608 = vadd.f32 %v4602, %v4606
    %v4609 = vld [vmem:[%s8] sm:$0x1]
    %v4611 = vlaneseq
    %v4612 = vshrl.u32 %v4611, 7
    %v4613 = vsub.s32 0, %v4612
    %v4614 = vrot.slane %v4609, %v4613
    %4616 = vrot.lane.b32.xlu0 %v177, 64
    %v4617 = vpop.permute.xlu0 %4616
    %4618 = vrot.lane.b32.xlu0 %v179, 64
    %v4619 = vpop.permute.xlu0 %4618
    %4620 = vrot.lane.b32.xlu0 %v181, 64
    %v4621 = vpop.permute.xlu0 %4620
    %4622 = vrot.lane.b32.xlu0 %v183, 64
    %v4623 = vpop.permute.xlu0 %4622
    %v4629 = vsel %vm94, %v4607, 0
    %v4632 = vsel %vm94, %v4608, 0
    %4634 = vmatprep.subr.mxu0 0.0
    %4635 = vmatpush1.msra.mxu0 %v4617
    %4636 = vmatprep.subr.mxu0 0.0
    %4637 = vmatpush1.msra.mxu0 %v4619
    %4638 = vmatprep.subr.mxu0 0.0
    %4639 = vmatpush1.msra.mxu0 %v4621
    %4640 = vmatprep.subr.mxu0 0.0
    %4641 = vmatpush1.msra.mxu0 %v4623
    %4642 = vmatprep.subr.mxu0 0.0
    %4643 = vmatpush1.msra.mxu0 0.0
    %4644 = vmatprep.subr.mxu0 0.0
    %4645 = vmatpush1.msra.mxu0 0.0
    %4646 = vmatprep.subr.mxu0 0.0
    %4647 = vmatpush1.msra.mxu0 0.0
    %4648 = vmatprep.subr.mxu0 0.0
    %4649 = vmatpush1.msra.mxu0 0.0
    %4650 = vmatprep.subr.mxu0 0.0
    %4651 = vmatpush1.msra.mxu0 0.0
    %4652 = vmatprep.subr.mxu0 0.0
    %4653 = vmatpush1.msra.mxu0 0.0
    %4654 = vmatprep.subr.mxu0 0.0
    %4655 = vmatpush1.msra.mxu0 0.0
    %4656 = vmatprep.subr.mxu0 0.0
    %4657 = vmatpush1.msra.mxu0 0.0
    %4658 = vmatprep.subr.mxu0 0.0
    %4659 = vmatpush1.msra.mxu0 0.0
    %4660 = vmatprep.subr.mxu0 0.0
    %4661 = vmatpush1.msra.mxu0 0.0
    %4662 = vmatprep.subr.mxu0 0.0
    %4663 = vmatpush1.msra.mxu0 0.0
    %4664 = vmatprep.subr.mxu0 0.0
    %4665 = vmatpush1.msra.mxu0 0.0
    %4666 = vmatprep.subr.mxu0 0.0
    %4667 = vmatpush1.msra.mxu0 0.0
    %4668 = vmatprep.subr.mxu0 0.0
    %4669 = vmatpush1.msra.mxu0 0.0
    %4670 = vmatprep.subr.mxu0 0.0
    %4671 = vmatpush1.msra.mxu0 0.0
    %4672 = vmatprep.subr.mxu0 0.0
    %4673 = vmatpush1.msra.mxu0 0.0
    %4674 = vmatprep.subr.mxu0 0.0
    %4675 = vmatpush1.msra.mxu0 0.0
    %4676 = vmatprep.subr.mxu0 0.0
    %4677 = vmatpush1.msra.mxu0 0.0
    %4678 = vmatprep.subr.mxu0 0.0
    %4679 = vmatpush1.msra.mxu0 0.0
    %4680 = vmatprep.subr.mxu0 0.0
    %4681 = vmatpush1.msra.mxu0 0.0
    %4682 = vmatprep.subr.mxu0 0.0
    %4683 = vmatpush1.msra.mxu0 0.0
    %4684 = vmatprep.subr.mxu0 0.0
    %4685 = vmatpush1.msra.mxu0 0.0
    %4686 = vmatprep.subr.mxu0 0.0
    %4687 = vmatpush1.msra.mxu0 0.0
    %4688 = vmatprep.subr.mxu0 0.0
    %4689 = vmatpush1.msra.mxu0 0.0
    %4690 = vmatprep.subr.mxu0 0.0
    %4691 = vmatpush1.msra.mxu0 0.0
    %4692 = vmatprep.subr.mxu0 0.0
    %4693 = vmatpush1.msra.mxu0 0.0
    %4694 = vmatprep.subr.mxu0 0.0
    %4695 = vmatpush1.msra.mxu0 0.0
    %4696 = vmatprep.subr.mxu0 0.0
    %4697 = vmatpush1.msra.mxu0 0.0
    %4698 = vmatprep.mubr.f32.mxu0 0.0
    %4699 = vmatmul.mubr.f32.gmra.mrb[0].mxu0 %v4629
    %v4700 = vpop.f32.mrb[0].mxu0
    %v4701 = vadd.f32 %v4614, %v4700
    %v4702 = vpop.f32.mrb[0].mxu0
    %4703 = vmatprep.mubr.f32.mxu0 0.0
    %4704 = vmatmul.mubr.f32.gmra.mrb[0].mxu0 %v4632
    %v4705 = vpop.f32.mrb[0].mxu0
    %v4706 = vadd.f32 %v4614, %v4705
    %v4707 = vpop.f32.mrb[0].mxu0
    %4708 = vdwg.mxu0
    %v4709 = vmax.f32 %v4701, 0.0
    %v4710 = vmax.f32 %v4706, 0.0
    %v4711 = vld [vmem:[%s6] sm:$0xff]
    %v4712 = vld [vmem:[%s6 + $0x8] sm:$0xff]
    %v4713 = vld [vmem:[%s6 + $0x10] sm:$0xff]
    %v4714 = vld [vmem:[%s6 + $0x18] sm:$0xff]
    %v4715 = vld [vmem:[%s6 + $0x20] sm:$0xff]
    %v4716 = vld [vmem:[%s6 + $0x28] sm:$0xff]
    %v4717 = vld [vmem:[%s6 + $0x30] sm:$0xff]
    %v4718 = vld [vmem:[%s6 + $0x38] sm:$0xff]
    %v4719 = vlaneseq
    %v4720 = vshrl.u32 %v4719, 7
    %v4721 = vsub.s32 0, %v4720
    %v4722 = vrot.slane %v185, %v4721
    %vm4723 = vcmask 523264
    %v4725 = vsel %vm4723, %v4709, 0
    %v4728 = vsel %vm4723, %v4710, 0
    %4730 = vmatprep.subr.mxu0 0.0
    %4731 = vmatpush1.msra.mxu0 %v4711
    %4732 = vmatprep.subr.mxu0 0.0
    %4733 = vmatpush1.msra.mxu0 %v4712
    %4734 = vmatprep.subr.mxu0 0.0
    %4735 = vmatpush1.msra.mxu0 %v4713
    %4736 = vmatprep.subr.mxu0 0.0
    %4737 = vmatpush1.msra.mxu0 %v4714
    %4738 = vmatprep.subr.mxu0 0.0
    %4739 = vmatpush1.msra.mxu0 %v4715
    %4740 = vmatprep.subr.mxu0 0.0
    %4741 = vmatpush1.msra.mxu0 %v4716
    %4742 = vmatprep.subr.mxu0 0.0
    %4743 = vmatpush1.msra.mxu0 %v4717
    %4744 = vmatprep.subr.mxu0 0.0
    %4745 = vmatpush1.msra.mxu0 %v4718
    %4746 = vmatprep.subr.mxu0 0.0
    %4747 = vmatpush1.msra.mxu0 0.0
    %4748 = vmatprep.subr.mxu0 0.0
    %4749 = vmatpush1.msra.mxu0 0.0
    %4750 = vmatprep.subr.mxu0 0.0
    %4751 = vmatpush1.msra.mxu0 0.0
    %4752 = vmatprep.subr.mxu0 0.0
    %4753 = vmatpush1.msra.mxu0 0.0
    %4754 = vmatprep.subr.mxu0 0.0
    %4755 = vmatpush1.msra.mxu0 0.0
    %4756 = vmatprep.subr.mxu0 0.0
    %4757 = vmatpush1.msra.mxu0 0.0
    %4758 = vmatprep.subr.mxu0 0.0
    %4759 = vmatpush1.msra.mxu0 0.0
    %4760 = vmatprep.subr.mxu0 0.0
    %4761 = vmatpush1.msra.mxu0 0.0
    %4762 = vmatprep.subr.mxu0 0.0
    %4763 = vmatpush1.msra.mxu0 0.0
    %4764 = vmatprep.subr.mxu0 0.0
    %4765 = vmatpush1.msra.mxu0 0.0
    %4766 = vmatprep.subr.mxu0 0.0
    %4767 = vmatpush1.msra.mxu0 0.0
    %4768 = vmatprep.subr.mxu0 0.0
    %4769 = vmatpush1.msra.mxu0 0.0
    %4770 = vmatprep.subr.mxu0 0.0
    %4771 = vmatpush1.msra.mxu0 0.0
    %4772 = vmatprep.subr.mxu0 0.0
    %4773 = vmatpush1.msra.mxu0 0.0
    %4774 = vmatprep.subr.mxu0 0.0
    %4775 = vmatpush1.msra.mxu0 0.0
    %4776 = vmatprep.subr.mxu0 0.0
    %4777 = vmatpush1.msra.mxu0 0.0
    %4778 = vmatprep.subr.mxu0 0.0
    %4779 = vmatpush1.msra.mxu0 0.0
    %4780 = vmatprep.subr.mxu0 0.0
    %4781 = vmatpush1.msra.mxu0 0.0
    %4782 = vmatprep.subr.mxu0 0.0
    %4783 = vmatpush1.msra.mxu0 0.0
    %4784 = vmatprep.subr.mxu0 0.0
    %4785 = vmatpush1.msra.mxu0 0.0
    %4786 = vmatprep.subr.mxu0 0.0
    %4787 = vmatpush1.msra.mxu0 0.0
    %4788 = vmatprep.subr.mxu0 0.0
    %4789 = vmatpush1.msra.mxu0 0.0
    %4790 = vmatprep.subr.mxu0 0.0
    %4791 = vmatpush1.msra.mxu0 0.0
    %4792 = vmatprep.subr.mxu0 0.0
    %4793 = vmatpush1.msra.mxu0 0.0
    %4794 = vmatprep.mubr.f32.mxu0 0.0
    %4795 = vmatmul.mubr.f32.gmra.mrb[0].mxu0 %v4725
    %v4796 = vpop.f32.mrb[0].mxu0
    %v4797 = vadd.f32 %v4722, %v4796
    %v4798 = vpop.f32.mrb[0].mxu0
    %4799 = vmatprep.mubr.f32.mxu0 0.0
    %4800 = vmatmul.mubr.f32.gmra.mrb[0].mxu0 %v4728
    %v4801 = vpop.f32.mrb[0].mxu0
    %v4802 = vadd.f32 %v4722, %v4801
    %v4803 = vpop.f32.mrb[0].mxu0
    %4804 = vdwg.mxu0
    %v4805 = vadd.f32 %v4607, %v4797
    %v4806 = vadd.f32 %v4608, %v4802
    %v4807 = vsel %vm94, %v4805, 0.0
    %4808 = vadd.xlane.f32.xlu0 %v4807
    %v4809 = vpop.xlane.xlu0 %4808
    %v4810 = vsel %vm94, %v4806, 0.0
    %4811 = vadd.xlane.f32.xlu0 %v4810
    %v4812 = vpop.xlane.xlu0 %4811
    %v4813 = vmul.f32 %v4809, %v2378
    %v4814 = vmul.f32 %v4812, %v2378
    %v4815 = vsub.f32 %v4805, %v4813
    %v4816 = vsub.f32 %v4806, %v4814
    %v4817 = vmul.f32 %v4815, %v4815
    %v4818 = vmul.f32 %v4816, %v4816
    %v4819 = vsel %vm94, %v4817, 0.0
    %4820 = vadd.xlane.f32.xlu0 %v4819
    %v4821 = vpop.xlane.xlu0 %4820
    %v4822 = vsel %vm94, %v4818, 0.0
    %4823 = vadd.xlane.f32.xlu0 %v4822
    %v4824 = vpop.xlane.xlu0 %4823
    %v4825 = vmul.f32 %v4821, %v2378
    %v4826 = vmul.f32 %v4824, %v2378
    %v4827 = vadd.f32 %v4825, 1e-05
    %v4828 = vadd.f32 %v4826, 1e-05
    %v4829 = vrsqrt.pop %v4827
    %v4830 = vrsqrt.pop %v4828
    %v4831 = vmul.f32 %v4815, %v4829
    %v4832 = vmul.f32 %v4816, %v4830
    %v4833 = vlaneseq
    %v4834 = vshrl.u32 %v4833, 7
    %v4835 = vsub.s32 5, %v4834
    %v4836 = vrot.slane %v185, %v4835
    %v4837 = vmul.f32 %v4831, %v4836
    %v4838 = vmul.f32 %v4832, %v4836
    %v4839 = vlaneseq
    %v4840 = vshrl.u32 %v4839, 7
    %v4841 = vsub.s32 6, %v4840
    %v4842 = vrot.slane %v185, %v4841
    %v4843 = vadd.f32 %v4837, %v4842
    %v4844 = vadd.f32 %v4838, %v4842
    %s4845 = scalar_lea.vmem %s4, 64
    %v4846 = vld [vmem:[%s4845] sm:$0xff]
    %v4847 = vld [vmem:[%s4845 + $0x8] sm:$0xff]
    %v4848 = vld [vmem:[%s4845 + $0x10] sm:$0xff]
    %v4849 = vld [vmem:[%s4845 + $0x18] sm:$0xff]
    %v4850 = vld [vmem:[%s4845 + $0x20] sm:$0xff]
    %v4851 = vld [vmem:[%s4845 + $0x28] sm:$0xff]
    %v4852 = vld [vmem:[%s4845 + $0x30] sm:$0xff]
    %v4853 = vld [vmem:[%s4845 + $0x38] sm:$0xff]
    %s4854 = scalar_lea.vmem %s7, 16
    %v4855 = vld [vmem:[%s4854] sm:$0xff]
    %v4856 = vld [vmem:[%s4854 + $0x8] sm:$0xff]
    %v4858 = vsel %vm94, %v4843, 0
    %v4861 = vsel %vm94, %v4844, 0
    %4863 = vmatprep.subr.mxu0 0.0
    %4864 = vmatpush1.msra.mxu0 %v4846
    %4865 = vmatprep.subr.mxu0 0.0
    %4866 = vmatpush1.msra.mxu0 %v4848
    %4867 = vmatprep.subr.mxu0 0.0
    %4868 = vmatpush1.msra.mxu0 %v4850
    %4869 = vmatprep.subr.mxu0 0.0
    %4870 = vmatpush1.msra.mxu0 %v4852
    %4871 = vmatprep.subr.mxu0 0.0
    %4872 = vmatpush1.msra.mxu0 0.0
    %4873 = vmatprep.subr.mxu0 0.0
    %4874 = vmatpush1.msra.mxu0 0.0
    %4875 = vmatprep.subr.mxu0 0.0
    %4876 = vmatpush1.msra.mxu0 0.0
    %4877 = vmatprep.subr.mxu0 0.0
    %4878 = vmatpush1.msra.mxu0 0.0
    %4879 = vmatprep.subr.mxu0 0.0
    %4880 = vmatpush1.msra.mxu0 0.0
    %4881 = vmatprep.subr.mxu0 0.0
    %4882 = vmatpush1.msra.mxu0 0.0
    %4883 = vmatprep.subr.mxu0 0.0
    %4884 = vmatpush1.msra.mxu0 0.0
    %4885 = vmatprep.subr.mxu0 0.0
    %4886 = vmatpush1.msra.mxu0 0.0
    %4887 = vmatprep.subr.mxu0 0.0
    %4888 = vmatpush1.msra.mxu0 0.0
    %4889 = vmatprep.subr.mxu0 0.0
    %4890 = vmatpush1.msra.mxu0 0.0
    %4891 = vmatprep.subr.mxu0 0.0
    %4892 = vmatpush1.msra.mxu0 0.0
    %4893 = vmatprep.subr.mxu0 0.0
    %4894 = vmatpush1.msra.mxu0 0.0
    %4895 = vmatprep.subr.mxu0 0.0
    %4896 = vmatpush1.msra.mxu0 0.0
    %4897 = vmatprep.subr.mxu0 0.0
    %4898 = vmatpush1.msra.mxu0 0.0
    %4899 = vmatprep.subr.mxu0 0.0
    %4900 = vmatpush1.msra.mxu0 0.0
    %4901 = vmatprep.subr.mxu0 0.0
    %4902 = vmatpush1.msra.mxu0 0.0
    %4903 = vmatprep.subr.mxu0 0.0
    %4904 = vmatpush1.msra.mxu0 0.0
    %4905 = vmatprep.subr.mxu0 0.0
    %4906 = vmatpush1.msra.mxu0 0.0
    %4907 = vmatprep.subr.mxu0 0.0
    %4908 = vmatpush1.msra.mxu0 0.0
    %4909 = vmatprep.subr.mxu0 0.0
    %4910 = vmatpush1.msra.mxu0 0.0
    %4911 = vmatprep.subr.mxu0 0.0
    %4912 = vmatpush1.msra.mxu0 0.0
    %4913 = vmatprep.subr.mxu0 0.0
    %4914 = vmatpush1.msra.mxu0 0.0
    %4915 = vmatprep.subr.mxu0 0.0
    %4916 = vmatpush1.msra.mxu0 0.0
    %4917 = vmatprep.subr.mxu0 0.0
    %4918 = vmatpush1.msra.mxu0 0.0
    %4919 = vmatprep.subr.mxu0 0.0
    %4920 = vmatpush1.msra.mxu0 0.0
    %4921 = vmatprep.subr.mxu0 0.0
    %4922 = vmatpush1.msra.mxu0 0.0
    %4923 = vmatprep.subr.mxu0 0.0
    %4924 = vmatpush1.msra.mxu0 0.0
    %4925 = vmatprep.subr.mxu0 0.0
    %4926 = vmatpush1.msra.mxu0 0.0
    %4927 = vmatprep.mubr.f32.mxu0 0.0
    %4928 = vmatmul.mubr.f32.gmra.mrb[0].mxu0 %v4858
    %v4929 = vpop.f32.mrb[0].mxu0
    %v4930 = vadd.f32 0.0, %v4929
    %v4931 = vpop.f32.mrb[0].mxu0
    %4932 = vmatprep.mubr.f32.mxu0 0.0
    %4933 = vmatmul.mubr.f32.gmra.mrb[0].mxu0 %v4861
    %v4934 = vpop.f32.mrb[0].mxu0
    %v4935 = vadd.f32 0.0, %v4934
    %v4936 = vpop.f32.mrb[0].mxu0
    %4937 = vdwg.mxu0
    %v4938 = vlaneseq
    %v4939 = vshrl.u32 %v4938, 7
    %v4940 = vsub.s32 0, %v4939
    %v4941 = vrot.slane %v4855, %v4940
    %v4942 = vadd.f32 %v4930, %v4941
    %v4943 = vadd.f32 %v4935, %v4941
    %v4944 = vlaneseq
    %v4945 = vshrl.u32 %v4944, 7
    %v4946 = vsub.s32 1, %v4945
    %v4947 = vrot.slane %v4855, %v4946
    %4949 = vrot.lane.b32.xlu0 %v4947, 32
    %v4950 = vpop.permute.xlu0 %4949
    %v4952 = vadd.f32 %v4930, %v4950
    %v4953 = vadd.f32 %v4935, %v4950
    %v4954 = vlaneseq
    %v4955 = vshrl.u32 %v4954, 7
    %v4956 = vsub.s32 2, %v4955
    %v4957 = vrot.slane %v4855, %v4956
    %4959 = vrot.lane.b32.xlu0 %v4957, 64
    %v4960 = vpop.permute.xlu0 %4959
    %v4962 = vadd.f32 %v4930, %v4960
    %v4963 = vadd.f32 %v4935, %v4960
    %4966 = vrot.lane.b32.xlu0 %v4942, 120
    %v4967 = vpop.permute.xlu0 %4966
    %4968 = vrot.lane.b32.xlu0 %v4943, 120
    %v4969 = vpop.permute.xlu0 %4968
    %4972 = vrot.lane.b32.xlu0 %v4942, 112
    %v4973 = vpop.permute.xlu0 %4972
    %4974 = vrot.lane.b32.xlu0 %v4943, 112
    %v4975 = vpop.permute.xlu0 %4974
    %4978 = vrot.lane.b32.xlu0 %v4942, 104
    %v4979 = vpop.permute.xlu0 %4978
    %4980 = vrot.lane.b32.xlu0 %v4943, 104
    %v4981 = vpop.permute.xlu0 %4980
    %v4984 = vcombine.low %v4942, %v4973
    %v4985 = vcombine.high %v4942, %v4973
    %v4987 = vunpack.c.l.s4 1983009808
    %v4988 = vunpack.c.0.s8 %v4987
    %v4989 = vlaneseq
    %v4990 = vshrl.u32 %v4989, 7
    %v4991 = vsub.s32 %v4988, %v4990
    %v4992 = vrot.slane %v4984, %v4991
    %v4994 = vunpack.c.l.s4 1983009808
    %v4995 = vunpack.c.0.s8 %v4994
    %v4996 = vlaneseq
    %v4997 = vshrl.u32 %v4996, 7
    %v4998 = vsub.s32 %v4995, %v4997
    %v4999 = vrot.slane %v4985, %v4998
    %v5000 = vcombine.low %v4967, %v4979
    %v5001 = vcombine.high %v4967, %v4979
    %v5003 = vunpack.c.l.s4 1983009808
    %v5004 = vunpack.c.0.s8 %v5003
    %v5005 = vlaneseq
    %v5006 = vshrl.u32 %v5005, 7
    %v5007 = vsub.s32 %v5004, %v5006
    %v5008 = vrot.slane %v5000, %v5007
    %v5010 = vunpack.c.l.s4 1983009808
    %v5011 = vunpack.c.0.s8 %v5010
    %v5012 = vlaneseq
    %v5013 = vshrl.u32 %v5012, 7
    %v5014 = vsub.s32 %v5011, %v5013
    %v5015 = vrot.slane %v5001, %v5014
    %v5016 = vcombine.low %v4992, %v5008
    %v5017 = vcombine.high %v4992, %v5008
    %v5019 = vunpack.c.l.s4 1934713408
    %v5020 = vunpack.c.0.s8 %v5019
    %v5021 = vlaneseq
    %v5022 = vshrl.u32 %v5021, 7
    %v5023 = vsub.s32 %v5020, %v5022
    %v5024 = vrot.slane %v5016, %v5023
    %v5026 = vunpack.c.l.s4 1934713408
    %v5027 = vunpack.c.0.s8 %v5026
    %v5028 = vlaneseq
    %v5029 = vshrl.u32 %v5028, 7
    %v5030 = vsub.s32 %v5027, %v5029
    %v5031 = vrot.slane %v5017, %v5030
    %v5032 = vcombine.low %v4999, %v5015
    %v5033 = vcombine.high %v4999, %v5015
    %v5035 = vunpack.c.l.s4 1934713408
    %v5036 = vunpack.c.0.s8 %v5035
    %v5037 = vlaneseq
    %v5038 = vshrl.u32 %v5037, 7
    %v5039 = vsub.s32 %v5036, %v5038
    %v5040 = vrot.slane %v5032, %v5039
    %v5042 = vunpack.c.l.s4 1934713408
    %v5043 = vunpack.c.0.s8 %v5042
    %v5044 = vlaneseq
    %v5045 = vshrl.u32 %v5044, 7
    %v5046 = vsub.s32 %v5043, %v5045
    %v5047 = vrot.slane %v5033, %v5046
    %v5048 = vcombine.high %v5024, 0.0
    %v5049 = vcombine.high %v5031, 0.0
    %v5050 = vcombine.high %v5040, 0.0
    %v5051 = vcombine.high %v5047, 0.0
    %v5052 = vcombine.low %v4943, %v4975
    %v5053 = vcombine.high %v4943, %v4975
    %v5055 = vunpack.c.l.s4 1983009808
    %v5056 = vunpack.c.0.s8 %v5055
    %v5057 = vlaneseq
    %v5058 = vshrl.u32 %v5057, 7
    %v5059 = vsub.s32 %v5056, %v5058
    %v5060 = vrot.slane %v5052, %v5059
    %v5062 = vunpack.c.l.s4 1983009808
    %v5063 = vunpack.c.0.s8 %v5062
    %v5064 = vlaneseq
    %v5065 = vshrl.u32 %v5064, 7
    %v5066 = vsub.s32 %v5063, %v5065
    %v5067 = vrot.slane %v5053, %v5066
    %v5068 = vcombine.low %v4969, %v4981
    %v5069 = vcombine.high %v4969, %v4981
    %v5071 = vunpack.c.l.s4 1983009808
    %v5072 = vunpack.c.0.s8 %v5071
    %v5073 = vlaneseq
    %v5074 = vshrl.u32 %v5073, 7
    %v5075 = vsub.s32 %v5072, %v5074
    %v5076 = vrot.slane %v5068, %v5075
    %v5078 = vunpack.c.l.s4 1983009808
    %v5079 = vunpack.c.0.s8 %v5078
    %v5080 = vlaneseq
    %v5081 = vshrl.u32 %v5080, 7
    %v5082 = vsub.s32 %v5079, %v5081
    %v5083 = vrot.slane %v5069, %v5082
    %v5084 = vcombine.low %v5060, %v5076
    %v5085 = vcombine.high %v5060, %v5076
    %v5087 = vunpack.c.l.s4 1934713408
    %v5088 = vunpack.c.0.s8 %v5087
    %v5089 = vlaneseq
    %v5090 = vshrl.u32 %v5089, 7
    %v5091 = vsub.s32 %v5088, %v5090
    %v5092 = vrot.slane %v5084, %v5091
    %v5094 = vunpack.c.l.s4 1934713408
    %v5095 = vunpack.c.0.s8 %v5094
    %v5096 = vlaneseq
    %v5097 = vshrl.u32 %v5096, 7
    %v5098 = vsub.s32 %v5095, %v5097
    %v5099 = vrot.slane %v5085, %v5098
    %v5100 = vcombine.low %v5067, %v5083
    %v5101 = vcombine.high %v5067, %v5083
    %v5103 = vunpack.c.l.s4 1934713408
    %v5104 = vunpack.c.0.s8 %v5103
    %v5105 = vlaneseq
    %v5106 = vshrl.u32 %v5105, 7
    %v5107 = vsub.s32 %v5104, %v5106
    %v5108 = vrot.slane %v5100, %v5107
    %v5110 = vunpack.c.l.s4 1934713408
    %v5111 = vunpack.c.0.s8 %v5110
    %v5112 = vlaneseq
    %v5113 = vshrl.u32 %v5112, 7
    %v5114 = vsub.s32 %v5111, %v5113
    %v5115 = vrot.slane %v5101, %v5114
    %v5116 = vcombine.high %v5092, 0.0
    %v5117 = vcombine.high %v5099, 0.0
    %v5118 = vcombine.high %v5108, 0.0
    %v5119 = vcombine.high %v5115, 0.0
    %v5120 = vcombine.low %v5024, %v5031
    %v5122 = vunpack.c.l.s4 1983009808
    %v5123 = vunpack.c.0.s8 %v5122
    %v5124 = vlaneseq
    %v5125 = vshrl.u32 %v5124, 7
    %v5126 = vsub.s32 %v5123, %v5125
    %v5127 = vrot.slane %v5120, %v5126
    %v5128 = vcombine.low %v5048, %v5049
    %v5130 = vunpack.c.l.s4 1983009808
    %v5131 = vunpack.c.0.s8 %v5130
    %v5132 = vlaneseq
    %v5133 = vshrl.u32 %v5132, 7
    %v5134 = vsub.s32 %v5131, %v5133
    %v5135 = vrot.slane %v5128, %v5134
    %v5136 = vcombine.low %v5040, %v5047
    %v5138 = vunpack.c.l.s4 1983009808
    %v5139 = vunpack.c.0.s8 %v5138
    %v5140 = vlaneseq
    %v5141 = vshrl.u32 %v5140, 7
    %v5142 = vsub.s32 %v5139, %v5141
    %v5143 = vrot.slane %v5136, %v5142
    %v5144 = vcombine.low %v5050, %v5051
    %v5146 = vunpack.c.l.s4 1983009808
    %v5147 = vunpack.c.0.s8 %v5146
    %v5148 = vlaneseq
    %v5149 = vshrl.u32 %v5148, 7
    %v5150 = vsub.s32 %v5147, %v5149
    %v5151 = vrot.slane %v5144, %v5150
    %v5152 = vcombine.low %v5127, %v5135
    %v5153 = vcombine.high %v5127, %v5135
    %v5155 = vunpack.c.l.s4 1934713408
    %v5156 = vunpack.c.0.s8 %v5155
    %v5157 = vlaneseq
    %v5158 = vshrl.u32 %v5157, 7
    %v5159 = vsub.s32 %v5156, %v5158
    %v5160 = vrot.slane %v5152, %v5159
    %v5162 = vunpack.c.l.s4 1934713408
    %v5163 = vunpack.c.0.s8 %v5162
    %v5164 = vlaneseq
    %v5165 = vshrl.u32 %v5164, 7
    %v5166 = vsub.s32 %v5163, %v5165
    %v5167 = vrot.slane %v5153, %v5166
    %v5168 = vcombine.low %v5143, %v5151
    %v5169 = vcombine.high %v5143, %v5151
    %v5171 = vunpack.c.l.s4 1934713408
    %v5172 = vunpack.c.0.s8 %v5171
    %v5173 = vlaneseq
    %v5174 = vshrl.u32 %v5173, 7
    %v5175 = vsub.s32 %v5172, %v5174
    %v5176 = vrot.slane %v5168, %v5175
    %v5178 = vunpack.c.l.s4 1934713408
    %v5179 = vunpack.c.0.s8 %v5178
    %v5180 = vlaneseq
    %v5181 = vshrl.u32 %v5180, 7
    %v5182 = vsub.s32 %v5179, %v5181
    %v5183 = vrot.slane %v5169, %v5182
    %v5184 = vcombine.low %v5160, %v5176
    %v5185 = vcombine.high %v5160, %v5176
    %v5186 = vcombine.low %v5167, %v5183
    %v5187 = vcombine.high %v5167, %v5183
    %v5188 = vcombine.low %v5092, %v5099
    %v5190 = vunpack.c.l.s4 1983009808
    %v5191 = vunpack.c.0.s8 %v5190
    %v5192 = vlaneseq
    %v5193 = vshrl.u32 %v5192, 7
    %v5194 = vsub.s32 %v5191, %v5193
    %v5195 = vrot.slane %v5188, %v5194
    %v5196 = vcombine.low %v5116, %v5117
    %v5198 = vunpack.c.l.s4 1983009808
    %v5199 = vunpack.c.0.s8 %v5198
    %v5200 = vlaneseq
    %v5201 = vshrl.u32 %v5200, 7
    %v5202 = vsub.s32 %v5199, %v5201
    %v5203 = vrot.slane %v5196, %v5202
    %v5204 = vcombine.low %v5108, %v5115
    %v5206 = vunpack.c.l.s4 1983009808
    %v5207 = vunpack.c.0.s8 %v5206
    %v5208 = vlaneseq
    %v5209 = vshrl.u32 %v5208, 7
    %v5210 = vsub.s32 %v5207, %v5209
    %v5211 = vrot.slane %v5204, %v5210
    %v5212 = vcombine.low %v5118, %v5119
    %v5214 = vunpack.c.l.s4 1983009808
    %v5215 = vunpack.c.0.s8 %v5214
    %v5216 = vlaneseq
    %v5217 = vshrl.u32 %v5216, 7
    %v5218 = vsub.s32 %v5215, %v5217
    %v5219 = vrot.slane %v5212, %v5218
    %v5220 = vcombine.low %v5195, %v5203
    %v5221 = vcombine.high %v5195, %v5203
    %v5223 = vunpack.c.l.s4 1934713408
    %v5224 = vunpack.c.0.s8 %v5223
    %v5225 = vlaneseq
    %v5226 = vshrl.u32 %v5225, 7
    %v5227 = vsub.s32 %v5224, %v5226
    %v5228 = vrot.slane %v5220, %v5227
    %v5230 = vunpack.c.l.s4 1934713408
    %v5231 = vunpack.c.0.s8 %v5230
    %v5232 = vlaneseq
    %v5233 = vshrl.u32 %v5232, 7
    %v5234 = vsub.s32 %v5231, %v5233
    %v5235 = vrot.slane %v5221, %v5234
    %v5236 = vcombine.low %v5211, %v5219
    %v5237 = vcombine.high %v5211, %v5219
    %v5239 = vunpack.c.l.s4 1934713408
    %v5240 = vunpack.c.0.s8 %v5239
    %v5241 = vlaneseq
    %v5242 = vshrl.u32 %v5241, 7
    %v5243 = vsub.s32 %v5240, %v5242
    %v5244 = vrot.slane %v5236, %v5243
    %v5246 = vunpack.c.l.s4 1934713408
    %v5247 = vunpack.c.0.s8 %v5246
    %v5248 = vlaneseq
    %v5249 = vshrl.u32 %v5248, 7
    %v5250 = vsub.s32 %v5247, %v5249
    %v5251 = vrot.slane %v5237, %v5250
    %v5252 = vcombine.low %v5228, %v5244
    %v5253 = vcombine.high %v5228, %v5244
    %v5254 = vcombine.low %v5235, %v5251
    %v5255 = vcombine.high %v5235, %v5251
    %5258 = vrot.lane.b32.xlu0 %v4952, 120
    %v5259 = vpop.permute.xlu0 %5258
    %5260 = vrot.lane.b32.xlu0 %v4953, 120
    %v5261 = vpop.permute.xlu0 %5260
    %5262 = vrot.lane.b32.xlu0 %v4952, 112
    %v5263 = vpop.permute.xlu0 %5262
    %5264 = vrot.lane.b32.xlu0 %v4953, 112
    %v5265 = vpop.permute.xlu0 %5264
    %5266 = vrot.lane.b32.xlu0 %v4952, 104
    %v5267 = vpop.permute.xlu0 %5266
    %5268 = vrot.lane.b32.xlu0 %v4953, 104
    %v5269 = vpop.permute.xlu0 %5268
    %5270 = vrot.lane.b32.xlu0 %v4952, 96
    %v5271 = vpop.permute.xlu0 %5270
    %5272 = vrot.lane.b32.xlu0 %v4953, 96
    %v5273 = vpop.permute.xlu0 %5272
    %5274 = vrot.lane.b32.xlu0 %v5259, 96
    %v5275 = vpop.permute.xlu0 %5274
    %5276 = vrot.lane.b32.xlu0 %v5261, 96
    %v5277 = vpop.permute.xlu0 %5276
    %5278 = vrot.lane.b32.xlu0 %v5263, 96
    %v5279 = vpop.permute.xlu0 %5278
    %5280 = vrot.lane.b32.xlu0 %v5265, 96
    %v5281 = vpop.permute.xlu0 %5280
    %5282 = vrot.lane.b32.xlu0 %v5267, 96
    %v5283 = vpop.permute.xlu0 %5282
    %5284 = vrot.lane.b32.xlu0 %v5269, 96
    %v5285 = vpop.permute.xlu0 %5284
    %v5294 = vcombine.low %v5271, %v5279
    %v5295 = vcombine.high %v5271, %v5279
    %v5297 = vunpack.c.l.s4 1983009808
    %v5298 = vunpack.c.0.s8 %v5297
    %v5299 = vlaneseq
    %v5300 = vshrl.u32 %v5299, 7
    %v5301 = vsub.s32 %v5298, %v5300
    %v5302 = vrot.slane %v5294, %v5301
    %v5304 = vunpack.c.l.s4 1983009808
    %v5305 = vunpack.c.0.s8 %v5304
    %v5306 = vlaneseq
    %v5307 = vshrl.u32 %v5306, 7
    %v5308 = vsub.s32 %v5305, %v5307
    %v5309 = vrot.slane %v5295, %v5308
    %v5310 = vcombine.low %v5275, %v5283
    %v5311 = vcombine.high %v5275, %v5283
    %v5313 = vunpack.c.l.s4 1983009808
    %v5314 = vunpack.c.0.s8 %v5313
    %v5315 = vlaneseq
    %v5316 = vshrl.u32 %v5315, 7
    %v5317 = vsub.s32 %v5314, %v5316
    %v5318 = vrot.slane %v5310, %v5317
    %v5320 = vunpack.c.l.s4 1983009808
    %v5321 = vunpack.c.0.s8 %v5320
    %v5322 = vlaneseq
    %v5323 = vshrl.u32 %v5322, 7
    %v5324 = vsub.s32 %v5321, %v5323
    %v5325 = vrot.slane %v5311, %v5324
    %v5326 = vcombine.low %v5302, %v5318
    %v5327 = vcombine.high %v5302, %v5318
    %v5329 = vunpack.c.l.s4 1934713408
    %v5330 = vunpack.c.0.s8 %v5329
    %v5331 = vlaneseq
    %v5332 = vshrl.u32 %v5331, 7
    %v5333 = vsub.s32 %v5330, %v5332
    %v5334 = vrot.slane %v5326, %v5333
    %v5336 = vunpack.c.l.s4 1934713408
    %v5337 = vunpack.c.0.s8 %v5336
    %v5338 = vlaneseq
    %v5339 = vshrl.u32 %v5338, 7
    %v5340 = vsub.s32 %v5337, %v5339
    %v5341 = vrot.slane %v5327, %v5340
    %v5342 = vcombine.low %v5309, %v5325
    %v5343 = vcombine.high %v5309, %v5325
    %v5345 = vunpack.c.l.s4 1934713408
    %v5346 = vunpack.c.0.s8 %v5345
    %v5347 = vlaneseq
    %v5348 = vshrl.u32 %v5347, 7
    %v5349 = vsub.s32 %v5346, %v5348
    %v5350 = vrot.slane %v5342, %v5349
    %v5352 = vunpack.c.l.s4 1934713408
    %v5353 = vunpack.c.0.s8 %v5352
    %v5354 = vlaneseq
    %v5355 = vshrl.u32 %v5354, 7
    %v5356 = vsub.s32 %v5353, %v5355
    %v5357 = vrot.slane %v5343, %v5356
    %v5358 = vcombine.high %v5334, 0.0
    %v5359 = vcombine.high %v5341, 0.0
    %v5360 = vcombine.high %v5350, 0.0
    %v5361 = vcombine.high %v5357, 0.0
    %v5362 = vcombine.low %v5273, %v5281
    %v5363 = vcombine.high %v5273, %v5281
    %v5365 = vunpack.c.l.s4 1983009808
    %v5366 = vunpack.c.0.s8 %v5365
    %v5367 = vlaneseq
    %v5368 = vshrl.u32 %v5367, 7
    %v5369 = vsub.s32 %v5366, %v5368
    %v5370 = vrot.slane %v5362, %v5369
    %v5372 = vunpack.c.l.s4 1983009808
    %v5373 = vunpack.c.0.s8 %v5372
    %v5374 = vlaneseq
    %v5375 = vshrl.u32 %v5374, 7
    %v5376 = vsub.s32 %v5373, %v5375
    %v5377 = vrot.slane %v5363, %v5376
    %v5378 = vcombine.low %v5277, %v5285
    %v5379 = vcombine.high %v5277, %v5285
    %v5381 = vunpack.c.l.s4 1983009808
    %v5382 = vunpack.c.0.s8 %v5381
    %v5383 = vlaneseq
    %v5384 = vshrl.u32 %v5383, 7
    %v5385 = vsub.s32 %v5382, %v5384
    %v5386 = vrot.slane %v5378, %v5385
    %v5388 = vunpack.c.l.s4 1983009808
    %v5389 = vunpack.c.0.s8 %v5388
    %v5390 = vlaneseq
    %v5391 = vshrl.u32 %v5390, 7
    %v5392 = vsub.s32 %v5389, %v5391
    %v5393 = vrot.slane %v5379, %v5392
    %v5394 = vcombine.low %v5370, %v5386
    %v5395 = vcombine.high %v5370, %v5386
    %v5397 = vunpack.c.l.s4 1934713408
    %v5398 = vunpack.c.0.s8 %v5397
    %v5399 = vlaneseq
    %v5400 = vshrl.u32 %v5399, 7
    %v5401 = vsub.s32 %v5398, %v5400
    %v5402 = vrot.slane %v5394, %v5401
    %v5404 = vunpack.c.l.s4 1934713408
    %v5405 = vunpack.c.0.s8 %v5404
    %v5406 = vlaneseq
    %v5407 = vshrl.u32 %v5406, 7
    %v5408 = vsub.s32 %v5405, %v5407
    %v5409 = vrot.slane %v5395, %v5408
    %v5410 = vcombine.low %v5377, %v5393
    %v5411 = vcombine.high %v5377, %v5393
    %v5413 = vunpack.c.l.s4 1934713408
    %v5414 = vunpack.c.0.s8 %v5413
    %v5415 = vlaneseq
    %v5416 = vshrl.u32 %v5415, 7
    %v5417 = vsub.s32 %v5414, %v5416
    %v5418 = vrot.slane %v5410, %v5417
    %v5420 = vunpack.c.l.s4 1934713408
    %v5421 = vunpack.c.0.s8 %v5420
    %v5422 = vlaneseq
    %v5423 = vshrl.u32 %v5422, 7
    %v5424 = vsub.s32 %v5421, %v5423
    %v5425 = vrot.slane %v5411, %v5424
    %v5426 = vcombine.high %v5402, 0.0
    %v5427 = vcombine.high %v5409, 0.0
    %v5428 = vcombine.high %v5418, 0.0
    %v5429 = vcombine.high %v5425, 0.0
    %v5430 = vcombine.low %v5334, %v5341
    %v5432 = vunpack.c.l.s4 1983009808
    %v5433 = vunpack.c.0.s8 %v5432
    %v5434 = vlaneseq
    %v5435 = vshrl.u32 %v5434, 7
    %v5436 = vsub.s32 %v5433, %v5435
    %v5437 = vrot.slane %v5430, %v5436
    %v5438 = vcombine.low %v5358, %v5359
    %v5440 = vunpack.c.l.s4 1983009808
    %v5441 = vunpack.c.0.s8 %v5440
    %v5442 = vlaneseq
    %v5443 = vshrl.u32 %v5442, 7
    %v5444 = vsub.s32 %v5441, %v5443
    %v5445 = vrot.slane %v5438, %v5444
    %v5446 = vcombine.low %v5350, %v5357
    %v5448 = vunpack.c.l.s4 1983009808
    %v5449 = vunpack.c.0.s8 %v5448
    %v5450 = vlaneseq
    %v5451 = vshrl.u32 %v5450, 7
    %v5452 = vsub.s32 %v5449, %v5451
    %v5453 = vrot.slane %v5446, %v5452
    %v5454 = vcombine.low %v5360, %v5361
    %v5456 = vunpack.c.l.s4 1983009808
    %v5457 = vunpack.c.0.s8 %v5456
    %v5458 = vlaneseq
    %v5459 = vshrl.u32 %v5458, 7
    %v5460 = vsub.s32 %v5457, %v5459
    %v5461 = vrot.slane %v5454, %v5460
    %v5462 = vcombine.low %v5437, %v5445
    %v5463 = vcombine.high %v5437, %v5445
    %v5465 = vunpack.c.l.s4 1934713408
    %v5466 = vunpack.c.0.s8 %v5465
    %v5467 = vlaneseq
    %v5468 = vshrl.u32 %v5467, 7
    %v5469 = vsub.s32 %v5466, %v5468
    %v5470 = vrot.slane %v5462, %v5469
    %v5472 = vunpack.c.l.s4 1934713408
    %v5473 = vunpack.c.0.s8 %v5472
    %v5474 = vlaneseq
    %v5475 = vshrl.u32 %v5474, 7
    %v5476 = vsub.s32 %v5473, %v5475
    %v5477 = vrot.slane %v5463, %v5476
    %v5478 = vcombine.low %v5453, %v5461
    %v5479 = vcombine.high %v5453, %v5461
    %v5481 = vunpack.c.l.s4 1934713408
    %v5482 = vunpack.c.0.s8 %v5481
    %v5483 = vlaneseq
    %v5484 = vshrl.u32 %v5483, 7
    %v5485 = vsub.s32 %v5482, %v5484
    %v5486 = vrot.slane %v5478, %v5485
    %v5488 = vunpack.c.l.s4 1934713408
    %v5489 = vunpack.c.0.s8 %v5488
    %v5490 = vlaneseq
    %v5491 = vshrl.u32 %v5490, 7
    %v5492 = vsub.s32 %v5489, %v5491
    %v5493 = vrot.slane %v5479, %v5492
    %v5494 = vcombine.low %v5470, %v5486
    %v5495 = vcombine.high %v5470, %v5486
    %v5496 = vcombine.low %v5477, %v5493
    %v5497 = vcombine.high %v5477, %v5493
    %v5498 = vcombine.low %v5402, %v5409
    %v5500 = vunpack.c.l.s4 1983009808
    %v5501 = vunpack.c.0.s8 %v5500
    %v5502 = vlaneseq
    %v5503 = vshrl.u32 %v5502, 7
    %v5504 = vsub.s32 %v5501, %v5503
    %v5505 = vrot.slane %v5498, %v5504
    %v5506 = vcombine.low %v5426, %v5427
    %v5508 = vunpack.c.l.s4 1983009808
    %v5509 = vunpack.c.0.s8 %v5508
    %v5510 = vlaneseq
    %v5511 = vshrl.u32 %v5510, 7
    %v5512 = vsub.s32 %v5509, %v5511
    %v5513 = vrot.slane %v5506, %v5512
    %v5514 = vcombine.low %v5418, %v5425
    %v5516 = vunpack.c.l.s4 1983009808
    %v5517 = vunpack.c.0.s8 %v5516
    %v5518 = vlaneseq
    %v5519 = vshrl.u32 %v5518, 7
    %v5520 = vsub.s32 %v5517, %v5519
    %v5521 = vrot.slane %v5514, %v5520
    %v5522 = vcombine.low %v5428, %v5429
    %v5524 = vunpack.c.l.s4 1983009808
    %v5525 = vunpack.c.0.s8 %v5524
    %v5526 = vlaneseq
    %v5527 = vshrl.u32 %v5526, 7
    %v5528 = vsub.s32 %v5525, %v5527
    %v5529 = vrot.slane %v5522, %v5528
    %v5530 = vcombine.low %v5505, %v5513
    %v5531 = vcombine.high %v5505, %v5513
    %v5533 = vunpack.c.l.s4 1934713408
    %v5534 = vunpack.c.0.s8 %v5533
    %v5535 = vlaneseq
    %v5536 = vshrl.u32 %v5535, 7
    %v5537 = vsub.s32 %v5534, %v5536
    %v5538 = vrot.slane %v5530, %v5537
    %v5540 = vunpack.c.l.s4 1934713408
    %v5541 = vunpack.c.0.s8 %v5540
    %v5542 = vlaneseq
    %v5543 = vshrl.u32 %v5542, 7
    %v5544 = vsub.s32 %v5541, %v5543
    %v5545 = vrot.slane %v5531, %v5544
    %v5546 = vcombine.low %v5521, %v5529
    %v5547 = vcombine.high %v5521, %v5529
    %v5549 = vunpack.c.l.s4 1934713408
    %v5550 = vunpack.c.0.s8 %v5549
    %v5551 = vlaneseq
    %v5552 = vshrl.u32 %v5551, 7
    %v5553 = vsub.s32 %v5550, %v5552
    %v5554 = vrot.slane %v5546, %v5553
    %v5556 = vunpack.c.l.s4 1934713408
    %v5557 = vunpack.c.0.s8 %v5556
    %v5558 = vlaneseq
    %v5559 = vshrl.u32 %v5558, 7
    %v5560 = vsub.s32 %v5557, %v5559
    %v5561 = vrot.slane %v5547, %v5560
    %v5562 = vcombine.low %v5538, %v5554
    %v5563 = vcombine.high %v5538, %v5554
    %v5564 = vcombine.low %v5545, %v5561
    %v5565 = vcombine.high %v5545, %v5561
    %5568 = vrot.lane.b32.xlu0 %v4962, 120
    %v5569 = vpop.permute.xlu0 %5568
    %5570 = vrot.lane.b32.xlu0 %v4963, 120
    %v5571 = vpop.permute.xlu0 %5570
    %5572 = vrot.lane.b32.xlu0 %v4962, 112
    %v5573 = vpop.permute.xlu0 %5572
    %5574 = vrot.lane.b32.xlu0 %v4963, 112
    %v5575 = vpop.permute.xlu0 %5574
    %5576 = vrot.lane.b32.xlu0 %v4962, 104
    %v5577 = vpop.permute.xlu0 %5576
    %5578 = vrot.lane.b32.xlu0 %v4963, 104
    %v5579 = vpop.permute.xlu0 %5578
    %5580 = vrot.lane.b32.xlu0 %v4962, 64
    %v5581 = vpop.permute.xlu0 %5580
    %5582 = vrot.lane.b32.xlu0 %v4963, 64
    %v5583 = vpop.permute.xlu0 %5582
    %5584 = vrot.lane.b32.xlu0 %v5569, 64
    %v5585 = vpop.permute.xlu0 %5584
    %5586 = vrot.lane.b32.xlu0 %v5571, 64
    %v5587 = vpop.permute.xlu0 %5586
    %5588 = vrot.lane.b32.xlu0 %v5573, 64
    %v5589 = vpop.permute.xlu0 %5588
    %5590 = vrot.lane.b32.xlu0 %v5575, 64
    %v5591 = vpop.permute.xlu0 %5590
    %5592 = vrot.lane.b32.xlu0 %v5577, 64
    %v5593 = vpop.permute.xlu0 %5592
    %5594 = vrot.lane.b32.xlu0 %v5579, 64
    %v5595 = vpop.permute.xlu0 %5594
    %v5604 = vcombine.low %v5581, %v5589
    %v5605 = vcombine.high %v5581, %v5589
    %v5607 = vunpack.c.l.s4 1983009808
    %v5608 = vunpack.c.0.s8 %v5607
    %v5609 = vlaneseq
    %v5610 = vshrl.u32 %v5609, 7
    %v5611 = vsub.s32 %v5608, %v5610
    %v5612 = vrot.slane %v5604, %v5611
    %v5614 = vunpack.c.l.s4 1983009808
    %v5615 = vunpack.c.0.s8 %v5614
    %v5616 = vlaneseq
    %v5617 = vshrl.u32 %v5616, 7
    %v5618 = vsub.s32 %v5615, %v5617
    %v5619 = vrot.slane %v5605, %v5618
    %v5620 = vcombine.low %v5585, %v5593
    %v5621 = vcombine.high %v5585, %v5593
    %v5623 = vunpack.c.l.s4 1983009808
    %v5624 = vunpack.c.0.s8 %v5623
    %v5625 = vlaneseq
    %v5626 = vshrl.u32 %v5625, 7
    %v5627 = vsub.s32 %v5624, %v5626
    %v5628 = vrot.slane %v5620, %v5627
    %v5630 = vunpack.c.l.s4 1983009808
    %v5631 = vunpack.c.0.s8 %v5630
    %v5632 = vlaneseq
    %v5633 = vshrl.u32 %v5632, 7
    %v5634 = vsub.s32 %v5631, %v5633
    %v5635 = vrot.slane %v5621, %v5634
    %v5636 = vcombine.low %v5612, %v5628
    %v5637 = vcombine.high %v5612, %v5628
    %v5639 = vunpack.c.l.s4 1934713408
    %v5640 = vunpack.c.0.s8 %v5639
    %v5641 = vlaneseq
    %v5642 = vshrl.u32 %v5641, 7
    %v5643 = vsub.s32 %v5640, %v5642
    %v5644 = vrot.slane %v5636, %v5643
    %v5646 = vunpack.c.l.s4 1934713408
    %v5647 = vunpack.c.0.s8 %v5646
    %v5648 = vlaneseq
    %v5649 = vshrl.u32 %v5648, 7
    %v5650 = vsub.s32 %v5647, %v5649
    %v5651 = vrot.slane %v5637, %v5650
    %v5652 = vcombine.low %v5619, %v5635
    %v5653 = vcombine.high %v5619, %v5635
    %v5655 = vunpack.c.l.s4 1934713408
    %v5656 = vunpack.c.0.s8 %v5655
    %v5657 = vlaneseq
    %v5658 = vshrl.u32 %v5657, 7
    %v5659 = vsub.s32 %v5656, %v5658
    %v5660 = vrot.slane %v5652, %v5659
    %v5662 = vunpack.c.l.s4 1934713408
    %v5663 = vunpack.c.0.s8 %v5662
    %v5664 = vlaneseq
    %v5665 = vshrl.u32 %v5664, 7
    %v5666 = vsub.s32 %v5663, %v5665
    %v5667 = vrot.slane %v5653, %v5666
    %v5668 = vcombine.high %v5644, 0.0
    %v5669 = vcombine.high %v5651, 0.0
    %v5670 = vcombine.high %v5660, 0.0
    %v5671 = vcombine.high %v5667, 0.0
    %v5672 = vcombine.low %v5583, %v5591
    %v5673 = vcombine.high %v5583, %v5591
    %v5675 = vunpack.c.l.s4 1983009808
    %v5676 = vunpack.c.0.s8 %v5675
    %v5677 = vlaneseq
    %v5678 = vshrl.u32 %v5677, 7
    %v5679 = vsub.s32 %v5676, %v5678
    %v5680 = vrot.slane %v5672, %v5679
    %v5682 = vunpack.c.l.s4 1983009808
    %v5683 = vunpack.c.0.s8 %v5682
    %v5684 = vlaneseq
    %v5685 = vshrl.u32 %v5684, 7
    %v5686 = vsub.s32 %v5683, %v5685
    %v5687 = vrot.slane %v5673, %v5686
    %v5688 = vcombine.low %v5587, %v5595
    %v5689 = vcombine.high %v5587, %v5595
    %v5691 = vunpack.c.l.s4 1983009808
    %v5692 = vunpack.c.0.s8 %v5691
    %v5693 = vlaneseq
    %v5694 = vshrl.u32 %v5693, 7
    %v5695 = vsub.s32 %v5692, %v5694
    %v5696 = vrot.slane %v5688, %v5695
    %v5698 = vunpack.c.l.s4 1983009808
    %v5699 = vunpack.c.0.s8 %v5698
    %v5700 = vlaneseq
    %v5701 = vshrl.u32 %v5700, 7
    %v5702 = vsub.s32 %v5699, %v5701
    %v5703 = vrot.slane %v5689, %v5702
    %v5704 = vcombine.low %v5680, %v5696
    %v5705 = vcombine.high %v5680, %v5696
    %v5707 = vunpack.c.l.s4 1934713408
    %v5708 = vunpack.c.0.s8 %v5707
    %v5709 = vlaneseq
    %v5710 = vshrl.u32 %v5709, 7
    %v5711 = vsub.s32 %v5708, %v5710
    %v5712 = vrot.slane %v5704, %v5711
    %v5714 = vunpack.c.l.s4 1934713408
    %v5715 = vunpack.c.0.s8 %v5714
    %v5716 = vlaneseq
    %v5717 = vshrl.u32 %v5716, 7
    %v5718 = vsub.s32 %v5715, %v5717
    %v5719 = vrot.slane %v5705, %v5718
    %v5720 = vcombine.low %v5687, %v5703
    %v5721 = vcombine.high %v5687, %v5703
    %v5723 = vunpack.c.l.s4 1934713408
    %v5724 = vunpack.c.0.s8 %v5723
    %v5725 = vlaneseq
    %v5726 = vshrl.u32 %v5725, 7
    %v5727 = vsub.s32 %v5724, %v5726
    %v5728 = vrot.slane %v5720, %v5727
    %v5730 = vunpack.c.l.s4 1934713408
    %v5731 = vunpack.c.0.s8 %v5730
    %v5732 = vlaneseq
    %v5733 = vshrl.u32 %v5732, 7
    %v5734 = vsub.s32 %v5731, %v5733
    %v5735 = vrot.slane %v5721, %v5734
    %v5736 = vcombine.high %v5712, 0.0
    %v5737 = vcombine.high %v5719, 0.0
    %v5738 = vcombine.high %v5728, 0.0
    %v5739 = vcombine.high %v5735, 0.0
    %v5740 = vcombine.low %v5644, %v5651
    %v5742 = vunpack.c.l.s4 1983009808
    %v5743 = vunpack.c.0.s8 %v5742
    %v5744 = vlaneseq
    %v5745 = vshrl.u32 %v5744, 7
    %v5746 = vsub.s32 %v5743, %v5745
    %v5747 = vrot.slane %v5740, %v5746
    %v5748 = vcombine.low %v5668, %v5669
    %v5750 = vunpack.c.l.s4 1983009808
    %v5751 = vunpack.c.0.s8 %v5750
    %v5752 = vlaneseq
    %v5753 = vshrl.u32 %v5752, 7
    %v5754 = vsub.s32 %v5751, %v5753
    %v5755 = vrot.slane %v5748, %v5754
    %v5756 = vcombine.low %v5660, %v5667
    %v5758 = vunpack.c.l.s4 1983009808
    %v5759 = vunpack.c.0.s8 %v5758
    %v5760 = vlaneseq
    %v5761 = vshrl.u32 %v5760, 7
    %v5762 = vsub.s32 %v5759, %v5761
    %v5763 = vrot.slane %v5756, %v5762
    %v5764 = vcombine.low %v5670, %v5671
    %v5766 = vunpack.c.l.s4 1983009808
    %v5767 = vunpack.c.0.s8 %v5766
    %v5768 = vlaneseq
    %v5769 = vshrl.u32 %v5768, 7
    %v5770 = vsub.s32 %v5767, %v5769
    %v5771 = vrot.slane %v5764, %v5770
    %v5772 = vcombine.low %v5747, %v5755
    %v5773 = vcombine.high %v5747, %v5755
    %v5775 = vunpack.c.l.s4 1934713408
    %v5776 = vunpack.c.0.s8 %v5775
    %v5777 = vlaneseq
    %v5778 = vshrl.u32 %v5777, 7
    %v5779 = vsub.s32 %v5776, %v5778
    %v5780 = vrot.slane %v5772, %v5779
    %v5782 = vunpack.c.l.s4 1934713408
    %v5783 = vunpack.c.0.s8 %v5782
    %v5784 = vlaneseq
    %v5785 = vshrl.u32 %v5784, 7
    %v5786 = vsub.s32 %v5783, %v5785
    %v5787 = vrot.slane %v5773, %v5786
    %v5788 = vcombine.low %v5763, %v5771
    %v5789 = vcombine.high %v5763, %v5771
    %v5791 = vunpack.c.l.s4 1934713408
    %v5792 = vunpack.c.0.s8 %v5791
    %v5793 = vlaneseq
    %v5794 = vshrl.u32 %v5793, 7
    %v5795 = vsub.s32 %v5792, %v5794
    %v5796 = vrot.slane %v5788, %v5795
    %v5798 = vunpack.c.l.s4 1934713408
    %v5799 = vunpack.c.0.s8 %v5798
    %v5800 = vlaneseq
    %v5801 = vshrl.u32 %v5800, 7
    %v5802 = vsub.s32 %v5799, %v5801
    %v5803 = vrot.slane %v5789, %v5802
    %v5804 = vcombine.low %v5780, %v5796
    %v5805 = vcombine.high %v5780, %v5796
    %v5806 = vcombine.low %v5787, %v5803
    %v5807 = vcombine.high %v5787, %v5803
    %v5808 = vcombine.low %v5712, %v5719
    %v5810 = vunpack.c.l.s4 1983009808
    %v5811 = vunpack.c.0.s8 %v5810
    %v5812 = vlaneseq
    %v5813 = vshrl.u32 %v5812, 7
    %v5814 = vsub.s32 %v5811, %v5813
    %v5815 = vrot.slane %v5808, %v5814
    %v5816 = vcombine.low %v5736, %v5737
    %v5818 = vunpack.c.l.s4 1983009808
    %v5819 = vunpack.c.0.s8 %v5818
    %v5820 = vlaneseq
    %v5821 = vshrl.u32 %v5820, 7
    %v5822 = vsub.s32 %v5819, %v5821
    %v5823 = vrot.slane %v5816, %v5822
    %v5824 = vcombine.low %v5728, %v5735
    %v5826 = vunpack.c.l.s4 1983009808
    %v5827 = vunpack.c.0.s8 %v5826
    %v5828 = vlaneseq
    %v5829 = vshrl.u32 %v5828, 7
    %v5830 = vsub.s32 %v5827, %v5829
    %v5831 = vrot.slane %v5824, %v5830
    %v5832 = vcombine.low %v5738, %v5739
    %v5834 = vunpack.c.l.s4 1983009808
    %v5835 = vunpack.c.0.s8 %v5834
    %v5836 = vlaneseq
    %v5837 = vshrl.u32 %v5836, 7
    %v5838 = vsub.s32 %v5835, %v5837
    %v5839 = vrot.slane %v5832, %v5838
    %v5840 = vcombine.low %v5815, %v5823
    %v5841 = vcombine.high %v5815, %v5823
    %v5843 = vunpack.c.l.s4 1934713408
    %v5844 = vunpack.c.0.s8 %v5843
    %v5845 = vlaneseq
    %v5846 = vshrl.u32 %v5845, 7
    %v5847 = vsub.s32 %v5844, %v5846
    %v5848 = vrot.slane %v5840, %v5847
    %v5850 = vunpack.c.l.s4 1934713408
    %v5851 = vunpack.c.0.s8 %v5850
    %v5852 = vlaneseq
    %v5853 = vshrl.u32 %v5852, 7
    %v5854 = vsub.s32 %v5851, %v5853
    %v5855 = vrot.slane %v5841, %v5854
    %v5856 = vcombine.low %v5831, %v5839
    %v5857 = vcombine.high %v5831, %v5839
    %v5859 = vunpack.c.l.s4 1934713408
    %v5860 = vunpack.c.0.s8 %v5859
    %v5861 = vlaneseq
    %v5862 = vshrl.u32 %v5861, 7
    %v5863 = vsub.s32 %v5860, %v5862
    %v5864 = vrot.slane %v5856, %v5863
    %v5866 = vunpack.c.l.s4 1934713408
    %v5867 = vunpack.c.0.s8 %v5866
    %v5868 = vlaneseq
    %v5869 = vshrl.u32 %v5868, 7
    %v5870 = vsub.s32 %v5867, %v5869
    %v5871 = vrot.slane %v5857, %v5870
    %v5872 = vcombine.low %v5848, %v5864
    %v5873 = vcombine.high %v5848, %v5864
    %v5874 = vcombine.low %v5855, %v5871
    %v5875 = vcombine.high %v5855, %v5871
    %v5877 = vsel %vm67, %v5184, 0
    %v5880 = vsel %vm67, %v5252, 0
    %v5883 = vsel %vm67, %v5494, 0
    %v5886 = vsel %vm67, %v5562, 0
    %5888 = vmatprep.subr.mxu0 0.0
    %5889 = vmatpush1.xpose.msra.mxu0 %v5883
    %5890 = vmatprep.subr.mxu0 0.0
    %5891 = vmatpush1.xpose.msra.mxu0 %v5886
    %5892 = vmatprep.subr.mxu0 0.0
    %5893 = vmatpush1.xpose.msra.mxu0 0.0
    %5894 = vmatprep.subr.mxu0 0.0
    %5895 = vmatpush1.xpose.msra.mxu0 0.0
    %5896 = vmatprep.subr.mxu0 0.0
    %5897 = vmatpush1.xpose.msra.mxu0 0.0
    %5898 = vmatprep.subr.mxu0 0.0
    %5899 = vmatpush1.xpose.msra.mxu0 0.0
    %5900 = vmatprep.subr.mxu0 0.0
    %5901 = vmatpush1.xpose.msra.mxu0 0.0
    %5902 = vmatprep.subr.mxu0 0.0
    %5903 = vmatpush1.xpose.msra.mxu0 0.0
    %5904 = vmatprep.subr.mxu0 0.0
    %5905 = vmatpush1.xpose.msra.mxu0 0.0
    %5906 = vmatprep.subr.mxu0 0.0
    %5907 = vmatpush1.xpose.msra.mxu0 0.0
    %5908 = vmatprep.subr.mxu0 0.0
    %5909 = vmatpush1.xpose.msra.mxu0 0.0
    %5910 = vmatprep.subr.mxu0 0.0
    %5911 = vmatpush1.xpose.msra.mxu0 0.0
    %5912 = vmatprep.subr.mxu0 0.0
    %5913 = vmatpush1.xpose.msra.mxu0 0.0
    %5914 = vmatprep.subr.mxu0 0.0
    %5915 = vmatpush1.xpose.msra.mxu0 0.0
    %5916 = vmatprep.subr.mxu0 0.0
    %5917 = vmatpush1.xpose.msra.mxu0 0.0
    %5918 = vmatprep.subr.mxu0 0.0
    %5919 = vmatpush1.xpose.msra.mxu0 0.0
    %5920 = vmatprep.subr.mxu0 0.0
    %5921 = vmatpush1.xpose.msra.mxu0 0.0
    %5922 = vmatprep.subr.mxu0 0.0
    %5923 = vmatpush1.xpose.msra.mxu0 0.0
    %5924 = vmatprep.subr.mxu0 0.0
    %5925 = vmatpush1.xpose.msra.mxu0 0.0
    %5926 = vmatprep.subr.mxu0 0.0
    %5927 = vmatpush1.xpose.msra.mxu0 0.0
    %5928 = vmatprep.subr.mxu0 0.0
    %5929 = vmatpush1.xpose.msra.mxu0 0.0
    %5930 = vmatprep.subr.mxu0 0.0
    %5931 = vmatpush1.xpose.msra.mxu0 0.0
    %5932 = vmatprep.subr.mxu0 0.0
    %5933 = vmatpush1.xpose.msra.mxu0 0.0
    %5934 = vmatprep.subr.mxu0 0.0
    %5935 = vmatpush1.xpose.msra.mxu0 0.0
    %5936 = vmatprep.subr.mxu0 0.0
    %5937 = vmatpush1.xpose.msra.mxu0 0.0
    %5938 = vmatprep.subr.mxu0 0.0
    %5939 = vmatpush1.xpose.msra.mxu0 0.0
    %5940 = vmatprep.subr.mxu0 0.0
    %5941 = vmatpush1.xpose.msra.mxu0 0.0
    %5942 = vmatprep.subr.mxu0 0.0
    %5943 = vmatpush1.xpose.msra.mxu0 0.0
    %5944 = vmatprep.subr.mxu0 0.0
    %5945 = vmatpush1.xpose.msra.mxu0 0.0
    %5946 = vmatprep.subr.mxu0 0.0
    %5947 = vmatpush1.xpose.msra.mxu0 0.0
    %5948 = vmatprep.subr.mxu0 0.0
    %5949 = vmatpush1.xpose.msra.mxu0 0.0
    %5950 = vmatprep.subr.mxu0 0.0
    %5951 = vmatpush1.xpose.msra.mxu0 0.0
    %5952 = vmatprep.mubr.f32.mxu0 0.0
    %5953 = vmatmul.mubr.f32.gmra.mrb[0].mxu0 %v5877
    %v5954 = vpop.f32.mrb[0].mxu0
    %v5955 = vadd.f32 %v76, %v5954
    %v5956 = vpop.f32.mrb[0].mxu0
    %5957 = vmatprep.mubr.f32.mxu0 0.0
    %5958 = vmatmul.mubr.f32.gmra.mrb[0].mxu0 %v5880
    %v5959 = vpop.f32.mrb[0].mxu0
    %v5960 = vadd.f32 %v77, %v5959
    %v5961 = vpop.f32.mrb[0].mxu0
    %5962 = vdwg.mxu0
    %v5964 = vsel %vm67, %v5185, 0
    %v5967 = vsel %vm67, %v5253, 0
    %v5970 = vsel %vm67, %v5495, 0
    %v5973 = vsel %vm67, %v5563, 0
    %5975 = vmatprep.subr.mxu0 0.0
    %5976 = vmatpush1.xpose.msra.mxu0 %v5970
    %5977 = vmatprep.subr.mxu0 0.0
    %5978 = vmatpush1.xpose.msra.mxu0 %v5973
    %5979 = vmatprep.subr.mxu0 0.0
    %5980 = vmatpush1.xpose.msra.mxu0 0.0
    %5981 = vmatprep.subr.mxu0 0.0
    %5982 = vmatpush1.xpose.msra.mxu0 0.0
    %5983 = vmatprep.subr.mxu0 0.0
    %5984 = vmatpush1.xpose.msra.mxu0 0.0
    %5985 = vmatprep.subr.mxu0 0.0
    %5986 = vmatpush1.xpose.msra.mxu0 0.0
    %5987 = vmatprep.subr.mxu0 0.0
    %5988 = vmatpush1.xpose.msra.mxu0 0.0
    %5989 = vmatprep.subr.mxu0 0.0
    %5990 = vmatpush1.xpose.msra.mxu0 0.0
    %5991 = vmatprep.subr.mxu0 0.0
    %5992 = vmatpush1.xpose.msra.mxu0 0.0
    %5993 = vmatprep.subr.mxu0 0.0
    %5994 = vmatpush1.xpose.msra.mxu0 0.0
    %5995 = vmatprep.subr.mxu0 0.0
    %5996 = vmatpush1.xpose.msra.mxu0 0.0
    %5997 = vmatprep.subr.mxu0 0.0
    %5998 = vmatpush1.xpose.msra.mxu0 0.0
    %5999 = vmatprep.subr.mxu0 0.0
    %6000 = vmatpush1.xpose.msra.mxu0 0.0
    %6001 = vmatprep.subr.mxu0 0.0
    %6002 = vmatpush1.xpose.msra.mxu0 0.0
    %6003 = vmatprep.subr.mxu0 0.0
    %6004 = vmatpush1.xpose.msra.mxu0 0.0
    %6005 = vmatprep.subr.mxu0 0.0
    %6006 = vmatpush1.xpose.msra.mxu0 0.0
    %6007 = vmatprep.subr.mxu0 0.0
    %6008 = vmatpush1.xpose.msra.mxu0 0.0
    %6009 = vmatprep.subr.mxu0 0.0
    %6010 = vmatpush1.xpose.msra.mxu0 0.0
    %6011 = vmatprep.subr.mxu0 0.0
    %6012 = vmatpush1.xpose.msra.mxu0 0.0
    %6013 = vmatprep.subr.mxu0 0.0
    %6014 = vmatpush1.xpose.msra.mxu0 0.0
    %6015 = vmatprep.subr.mxu0 0.0
    %6016 = vmatpush1.xpose.msra.mxu0 0.0
    %6017 = vmatprep.subr.mxu0 0.0
    %6018 = vmatpush1.xpose.msra.mxu0 0.0
    %6019 = vmatprep.subr.mxu0 0.0
    %6020 = vmatpush1.xpose.msra.mxu0 0.0
    %6021 = vmatprep.subr.mxu0 0.0
    %6022 = vmatpush1.xpose.msra.mxu0 0.0
    %6023 = vmatprep.subr.mxu0 0.0
    %6024 = vmatpush1.xpose.msra.mxu0 0.0
    %6025 = vmatprep.subr.mxu0 0.0
    %6026 = vmatpush1.xpose.msra.mxu0 0.0
    %6027 = vmatprep.subr.mxu0 0.0
    %6028 = vmatpush1.xpose.msra.mxu0 0.0
    %6029 = vmatprep.subr.mxu0 0.0
    %6030 = vmatpush1.xpose.msra.mxu0 0.0
    %6031 = vmatprep.subr.mxu0 0.0
    %6032 = vmatpush1.xpose.msra.mxu0 0.0
    %6033 = vmatprep.subr.mxu0 0.0
    %6034 = vmatpush1.xpose.msra.mxu0 0.0
    %6035 = vmatprep.subr.mxu0 0.0
    %6036 = vmatpush1.xpose.msra.mxu0 0.0
    %6037 = vmatprep.subr.mxu0 0.0
    %6038 = vmatpush1.xpose.msra.mxu0 0.0
    %6039 = vmatprep.mubr.f32.mxu0 0.0
    %6040 = vmatmul.mubr.f32.gmra.mrb[0].mxu0 %v5964
    %v6041 = vpop.f32.mrb[0].mxu0
    %v6042 = vadd.f32 %v76, %v6041
    %v6043 = vpop.f32.mrb[0].mxu0
    %6044 = vmatprep.mubr.f32.mxu0 0.0
    %6045 = vmatmul.mubr.f32.gmra.mrb[0].mxu0 %v5967
    %v6046 = vpop.f32.mrb[0].mxu0
    %v6047 = vadd.f32 %v77, %v6046
    %v6048 = vpop.f32.mrb[0].mxu0
    %6049 = vdwg.mxu0
    %v6051 = vsel %vm67, %v5186, 0
    %v6054 = vsel %vm67, %v5254, 0
    %v6057 = vsel %vm67, %v5496, 0
    %v6060 = vsel %vm67, %v5564, 0
    %6062 = vmatprep.subr.mxu0 0.0
    %6063 = vmatpush1.xpose.msra.mxu0 %v6057
    %6064 = vmatprep.subr.mxu0 0.0
    %6065 = vmatpush1.xpose.msra.mxu0 %v6060
    %6066 = vmatprep.subr.mxu0 0.0
    %6067 = vmatpush1.xpose.msra.mxu0 0.0
    %6068 = vmatprep.subr.mxu0 0.0
    %6069 = vmatpush1.xpose.msra.mxu0 0.0
    %6070 = vmatprep.subr.mxu0 0.0
    %6071 = vmatpush1.xpose.msra.mxu0 0.0
    %6072 = vmatprep.subr.mxu0 0.0
    %6073 = vmatpush1.xpose.msra.mxu0 0.0
    %6074 = vmatprep.subr.mxu0 0.0
    %6075 = vmatpush1.xpose.msra.mxu0 0.0
    %6076 = vmatprep.subr.mxu0 0.0
    %6077 = vmatpush1.xpose.msra.mxu0 0.0
    %6078 = vmatprep.subr.mxu0 0.0
    %6079 = vmatpush1.xpose.msra.mxu0 0.0
    %6080 = vmatprep.subr.mxu0 0.0
    %6081 = vmatpush1.xpose.msra.mxu0 0.0
    %6082 = vmatprep.subr.mxu0 0.0
    %6083 = vmatpush1.xpose.msra.mxu0 0.0
    %6084 = vmatprep.subr.mxu0 0.0
    %6085 = vmatpush1.xpose.msra.mxu0 0.0
    %6086 = vmatprep.subr.mxu0 0.0
    %6087 = vmatpush1.xpose.msra.mxu0 0.0
    %6088 = vmatprep.subr.mxu0 0.0
    %6089 = vmatpush1.xpose.msra.mxu0 0.0
    %6090 = vmatprep.subr.mxu0 0.0
    %6091 = vmatpush1.xpose.msra.mxu0 0.0
    %6092 = vmatprep.subr.mxu0 0.0
    %6093 = vmatpush1.xpose.msra.mxu0 0.0
    %6094 = vmatprep.subr.mxu0 0.0
    %6095 = vmatpush1.xpose.msra.mxu0 0.0
    %6096 = vmatprep.subr.mxu0 0.0
    %6097 = vmatpush1.xpose.msra.mxu0 0.0
    %6098 = vmatprep.subr.mxu0 0.0
    %6099 = vmatpush1.xpose.msra.mxu0 0.0
    %6100 = vmatprep.subr.mxu0 0.0
    %6101 = vmatpush1.xpose.msra.mxu0 0.0
    %6102 = vmatprep.subr.mxu0 0.0
    %6103 = vmatpush1.xpose.msra.mxu0 0.0
    %6104 = vmatprep.subr.mxu0 0.0
    %6105 = vmatpush1.xpose.msra.mxu0 0.0
    %6106 = vmatprep.subr.mxu0 0.0
    %6107 = vmatpush1.xpose.msra.mxu0 0.0
    %6108 = vmatprep.subr.mxu0 0.0
    %6109 = vmatpush1.xpose.msra.mxu0 0.0
    %6110 = vmatprep.subr.mxu0 0.0
    %6111 = vmatpush1.xpose.msra.mxu0 0.0
    %6112 = vmatprep.subr.mxu0 0.0
    %6113 = vmatpush1.xpose.msra.mxu0 0.0
    %6114 = vmatprep.subr.mxu0 0.0
    %6115 = vmatpush1.xpose.msra.mxu0 0.0
    %6116 = vmatprep.subr.mxu0 0.0
    %6117 = vmatpush1.xpose.msra.mxu0 0.0
    %6118 = vmatprep.subr.mxu0 0.0
    %6119 = vmatpush1.xpose.msra.mxu0 0.0
    %6120 = vmatprep.subr.mxu0 0.0
    %6121 = vmatpush1.xpose.msra.mxu0 0.0
    %6122 = vmatprep.subr.mxu0 0.0
    %6123 = vmatpush1.xpose.msra.mxu0 0.0
    %6124 = vmatprep.subr.mxu0 0.0
    %6125 = vmatpush1.xpose.msra.mxu0 0.0
    %6126 = vmatprep.mubr.f32.mxu0 0.0
    %6127 = vmatmul.mubr.f32.gmra.mrb[0].mxu0 %v6051
    %v6128 = vpop.f32.mrb[0].mxu0
    %v6129 = vadd.f32 %v76, %v6128
    %v6130 = vpop.f32.mrb[0].mxu0
    %6131 = vmatprep.mubr.f32.mxu0 0.0
    %6132 = vmatmul.mubr.f32.gmra.mrb[0].mxu0 %v6054
    %v6133 = vpop.f32.mrb[0].mxu0
    %v6134 = vadd.f32 %v77, %v6133
    %v6135 = vpop.f32.mrb[0].mxu0
    %6136 = vdwg.mxu0
    %v6138 = vsel %vm67, %v5187, 0
    %v6141 = vsel %vm67, %v5255, 0
    %v6144 = vsel %vm67, %v5497, 0
    %v6147 = vsel %vm67, %v5565, 0
    %6149 = vmatprep.subr.mxu0 0.0
    %6150 = vmatpush1.xpose.msra.mxu0 %v6144
    %6151 = vmatprep.subr.mxu0 0.0
    %6152 = vmatpush1.xpose.msra.mxu0 %v6147
    %6153 = vmatprep.subr.mxu0 0.0
    %6154 = vmatpush1.xpose.msra.mxu0 0.0
    %6155 = vmatprep.subr.mxu0 0.0
    %6156 = vmatpush1.xpose.msra.mxu0 0.0
    %6157 = vmatprep.subr.mxu0 0.0
    %6158 = vmatpush1.xpose.msra.mxu0 0.0
    %6159 = vmatprep.subr.mxu0 0.0
    %6160 = vmatpush1.xpose.msra.mxu0 0.0
    %6161 = vmatprep.subr.mxu0 0.0
    %6162 = vmatpush1.xpose.msra.mxu0 0.0
    %6163 = vmatprep.subr.mxu0 0.0
    %6164 = vmatpush1.xpose.msra.mxu0 0.0
    %6165 = vmatprep.subr.mxu0 0.0
    %6166 = vmatpush1.xpose.msra.mxu0 0.0
    %6167 = vmatprep.subr.mxu0 0.0
    %6168 = vmatpush1.xpose.msra.mxu0 0.0
    %6169 = vmatprep.subr.mxu0 0.0
    %6170 = vmatpush1.xpose.msra.mxu0 0.0
    %6171 = vmatprep.subr.mxu0 0.0
    %6172 = vmatpush1.xpose.msra.mxu0 0.0
    %6173 = vmatprep.subr.mxu0 0.0
    %6174 = vmatpush1.xpose.msra.mxu0 0.0
    %6175 = vmatprep.subr.mxu0 0.0
    %6176 = vmatpush1.xpose.msra.mxu0 0.0
    %6177 = vmatprep.subr.mxu0 0.0
    %6178 = vmatpush1.xpose.msra.mxu0 0.0
    %6179 = vmatprep.subr.mxu0 0.0
    %6180 = vmatpush1.xpose.msra.mxu0 0.0
    %6181 = vmatprep.subr.mxu0 0.0
    %6182 = vmatpush1.xpose.msra.mxu0 0.0
    %6183 = vmatprep.subr.mxu0 0.0
    %6184 = vmatpush1.xpose.msra.mxu0 0.0
    %6185 = vmatprep.subr.mxu0 0.0
    %6186 = vmatpush1.xpose.msra.mxu0 0.0
    %6187 = vmatprep.subr.mxu0 0.0
    %6188 = vmatpush1.xpose.msra.mxu0 0.0
    %6189 = vmatprep.subr.mxu0 0.0
    %6190 = vmatpush1.xpose.msra.mxu0 0.0
    %6191 = vmatprep.subr.mxu0 0.0
    %6192 = vmatpush1.xpose.msra.mxu0 0.0
    %6193 = vmatprep.subr.mxu0 0.0
    %6194 = vmatpush1.xpose.msra.mxu0 0.0
    %6195 = vmatprep.subr.mxu0 0.0
    %6196 = vmatpush1.xpose.msra.mxu0 0.0
    %6197 = vmatprep.subr.mxu0 0.0
    %6198 = vmatpush1.xpose.msra.mxu0 0.0
    %6199 = vmatprep.subr.mxu0 0.0
    %6200 = vmatpush1.xpose.msra.mxu0 0.0
    %6201 = vmatprep.subr.mxu0 0.0
    %6202 = vmatpush1.xpose.msra.mxu0 0.0
    %6203 = vmatprep.subr.mxu0 0.0
    %6204 = vmatpush1.xpose.msra.mxu0 0.0
    %6205 = vmatprep.subr.mxu0 0.0
    %6206 = vmatpush1.xpose.msra.mxu0 0.0
    %6207 = vmatprep.subr.mxu0 0.0
    %6208 = vmatpush1.xpose.msra.mxu0 0.0
    %6209 = vmatprep.subr.mxu0 0.0
    %6210 = vmatpush1.xpose.msra.mxu0 0.0
    %6211 = vmatprep.subr.mxu0 0.0
    %6212 = vmatpush1.xpose.msra.mxu0 0.0
    %6213 = vmatprep.mubr.f32.mxu0 0.0
    %6214 = vmatmul.mubr.f32.gmra.mrb[0].mxu0 %v6138
    %v6215 = vpop.f32.mrb[0].mxu0
    %v6216 = vadd.f32 %v76, %v6215
    %v6217 = vpop.f32.mrb[0].mxu0
    %6218 = vmatprep.mubr.f32.mxu0 0.0
    %6219 = vmatmul.mubr.f32.gmra.mrb[0].mxu0 %v6141
    %v6220 = vpop.f32.mrb[0].mxu0
    %v6221 = vadd.f32 %v77, %v6220
    %v6222 = vpop.f32.mrb[0].mxu0
    %6223 = vdwg.mxu0
    %v6224 = vsel %vm1553, %v5955, -inf
    %6225 = vmax.xlane.f32.xlu0 %v6224
    %v6226 = vpop.xlane.xlu0 %6225
    %v6227 = vsel %vm1553, %v5960, -inf
    %6228 = vmax.xlane.f32.xlu0 %v6227
    %v6229 = vpop.xlane.xlu0 %6228
    %v6230 = vsel %vm1553, %v6042, -inf
    %6231 = vmax.xlane.f32.xlu0 %v6230
    %v6232 = vpop.xlane.xlu0 %6231
    %v6233 = vsel %vm1553, %v6047, -inf
    %6234 = vmax.xlane.f32.xlu0 %v6233
    %v6235 = vpop.xlane.xlu0 %6234
    %v6236 = vsel %vm1553, %v6129, -inf
    %6237 = vmax.xlane.f32.xlu0 %v6236
    %v6238 = vpop.xlane.xlu0 %6237
    %v6239 = vsel %vm1553, %v6134, -inf
    %6240 = vmax.xlane.f32.xlu0 %v6239
    %v6241 = vpop.xlane.xlu0 %6240
    %v6242 = vsel %vm1553, %v6216, -inf
    %6243 = vmax.xlane.f32.xlu0 %v6242
    %v6244 = vpop.xlane.xlu0 %6243
    %v6245 = vsel %vm1553, %v6221, -inf
    %6246 = vmax.xlane.f32.xlu0 %v6245
    %v6247 = vpop.xlane.xlu0 %6246
    %v6248 = vsub.f32 %v5955, %v6226
    %v6249 = vsub.f32 %v5960, %v6229
    %v6250 = vsub.f32 %v6042, %v6232
    %v6251 = vsub.f32 %v6047, %v6235
    %v6252 = vsub.f32 %v6129, %v6238
    %v6253 = vsub.f32 %v6134, %v6241
    %v6254 = vsub.f32 %v6216, %v6244
    %v6255 = vsub.f32 %v6221, %v6247
    %v6256 = vmul.f32 %v6248, 1.442695
    %v6257 = vpow.pop %v6256
    %v6258 = vmul.f32 %v6249, 1.442695
    %v6259 = vpow.pop %v6258
    %v6260 = vmul.f32 %v6250, 1.442695
    %v6261 = vpow.pop %v6260
    %v6262 = vmul.f32 %v6251, 1.442695
    %v6263 = vpow.pop %v6262
    %v6264 = vmul.f32 %v6252, 1.442695
    %v6265 = vpow.pop %v6264
    %v6266 = vmul.f32 %v6253, 1.442695
    %v6267 = vpow.pop %v6266
    %v6268 = vmul.f32 %v6254, 1.442695
    %v6269 = vpow.pop %v6268
    %v6270 = vmul.f32 %v6255, 1.442695
    %v6271 = vpow.pop %v6270
    %v6272 = vsel %vm1553, %v6257, 0.0
    %6273 = vadd.xlane.f32.xlu0 %v6272
    %v6274 = vpop.xlane.xlu0 %6273
    %v6275 = vsel %vm1553, %v6259, 0.0
    %6276 = vadd.xlane.f32.xlu0 %v6275
    %v6277 = vpop.xlane.xlu0 %6276
    %v6278 = vsel %vm1553, %v6261, 0.0
    %6279 = vadd.xlane.f32.xlu0 %v6278
    %v6280 = vpop.xlane.xlu0 %6279
    %v6281 = vsel %vm1553, %v6263, 0.0
    %6282 = vadd.xlane.f32.xlu0 %v6281
    %v6283 = vpop.xlane.xlu0 %6282
    %v6284 = vsel %vm1553, %v6265, 0.0
    %6285 = vadd.xlane.f32.xlu0 %v6284
    %v6286 = vpop.xlane.xlu0 %6285
    %v6287 = vsel %vm1553, %v6267, 0.0
    %6288 = vadd.xlane.f32.xlu0 %v6287
    %v6289 = vpop.xlane.xlu0 %6288
    %v6290 = vsel %vm1553, %v6269, 0.0
    %6291 = vadd.xlane.f32.xlu0 %v6290
    %v6292 = vpop.xlane.xlu0 %6291
    %v6293 = vsel %vm1553, %v6271, 0.0
    %6294 = vadd.xlane.f32.xlu0 %v6293
    %v6295 = vpop.xlane.xlu0 %6294
    %v6296 = vrcp.pop %v6274
    %v6297 = vrcp.pop %v6277
    %v6298 = vrcp.pop %v6280
    %v6299 = vrcp.pop %v6283
    %v6300 = vrcp.pop %v6286
    %v6301 = vrcp.pop %v6289
    %v6302 = vrcp.pop %v6292
    %v6303 = vrcp.pop %v6295
    %v6304 = vmul.f32 %v6257, %v6296
    %v6305 = vmul.f32 %v6259, %v6297
    %v6306 = vmul.f32 %v6261, %v6298
    %v6307 = vmul.f32 %v6263, %v6299
    %v6308 = vmul.f32 %v6265, %v6300
    %v6309 = vmul.f32 %v6267, %v6301
    %v6310 = vmul.f32 %v6269, %v6302
    %v6311 = vmul.f32 %v6271, %v6303
    %v6313 = vsel %vm1553, %v6304, 0
    %v6316 = vsel %vm1553, %v6305, 0
    %6318 = vmatprep.subr.mxu0 0.0
    %6319 = vmatpush1.msra.mxu0 %v5804
    %6320 = vmatprep.subr.mxu0 0.0
    %6321 = vmatpush1.msra.mxu0 %v5872
    %6322 = vmatprep.subr.mxu0 0.0
    %6323 = vmatpush1.msra.mxu0 0.0
    %6324 = vmatprep.subr.mxu0 0.0
    %6325 = vmatpush1.msra.mxu0 0.0
    %6326 = vmatprep.subr.mxu0 0.0
    %6327 = vmatpush1.msra.mxu0 0.0
    %6328 = vmatprep.subr.mxu0 0.0
    %6329 = vmatpush1.msra.mxu0 0.0
    %6330 = vmatprep.subr.mxu0 0.0
    %6331 = vmatpush1.msra.mxu0 0.0
    %6332 = vmatprep.subr.mxu0 0.0
    %6333 = vmatpush1.msra.mxu0 0.0
    %6334 = vmatprep.subr.mxu0 0.0
    %6335 = vmatpush1.msra.mxu0 0.0
    %6336 = vmatprep.subr.mxu0 0.0
    %6337 = vmatpush1.msra.mxu0 0.0
    %6338 = vmatprep.subr.mxu0 0.0
    %6339 = vmatpush1.msra.mxu0 0.0
    %6340 = vmatprep.subr.mxu0 0.0
    %6341 = vmatpush1.msra.mxu0 0.0
    %6342 = vmatprep.subr.mxu0 0.0
    %6343 = vmatpush1.msra.mxu0 0.0
    %6344 = vmatprep.subr.mxu0 0.0
    %6345 = vmatpush1.msra.mxu0 0.0
    %6346 = vmatprep.subr.mxu0 0.0
    %6347 = vmatpush1.msra.mxu0 0.0
    %6348 = vmatprep.subr.mxu0 0.0
    %6349 = vmatpush1.msra.mxu0 0.0
    %6350 = vmatprep.subr.mxu0 0.0
    %6351 = vmatpush1.msra.mxu0 0.0
    %6352 = vmatprep.subr.mxu0 0.0
    %6353 = vmatpush1.msra.mxu0 0.0
    %6354 = vmatprep.subr.mxu0 0.0
    %6355 = vmatpush1.msra.mxu0 0.0
    %6356 = vmatprep.subr.mxu0 0.0
    %6357 = vmatpush1.msra.mxu0 0.0
    %6358 = vmatprep.subr.mxu0 0.0
    %6359 = vmatpush1.msra.mxu0 0.0
    %6360 = vmatprep.subr.mxu0 0.0
    %6361 = vmatpush1.msra.mxu0 0.0
    %6362 = vmatprep.subr.mxu0 0.0
    %6363 = vmatpush1.msra.mxu0 0.0
    %6364 = vmatprep.subr.mxu0 0.0
    %6365 = vmatpush1.msra.mxu0 0.0
    %6366 = vmatprep.subr.mxu0 0.0
    %6367 = vmatpush1.msra.mxu0 0.0
    %6368 = vmatprep.subr.mxu0 0.0
    %6369 = vmatpush1.msra.mxu0 0.0
    %6370 = vmatprep.subr.mxu0 0.0
    %6371 = vmatpush1.msra.mxu0 0.0
    %6372 = vmatprep.subr.mxu0 0.0
    %6373 = vmatpush1.msra.mxu0 0.0
    %6374 = vmatprep.subr.mxu0 0.0
    %6375 = vmatpush1.msra.mxu0 0.0
    %6376 = vmatprep.subr.mxu0 0.0
    %6377 = vmatpush1.msra.mxu0 0.0
    %6378 = vmatprep.subr.mxu0 0.0
    %6379 = vmatpush1.msra.mxu0 0.0
    %6380 = vmatprep.subr.mxu0 0.0
    %6381 = vmatpush1.msra.mxu0 0.0
    %6382 = vmatprep.mubr.f32.mxu0 0.0
    %6383 = vmatmul.mubr.f32.gmra.mrb[0].mxu0 %v6313
    %v6384 = vpop.f32.mrb[0].mxu0
    %v6385 = vadd.f32 0.0, %v6384
    %v6386 = vpop.f32.mrb[0].mxu0
    %6387 = vmatprep.mubr.f32.mxu0 0.0
    %6388 = vmatmul.mubr.f32.gmra.mrb[0].mxu0 %v6316
    %v6389 = vpop.f32.mrb[0].mxu0
    %v6390 = vadd.f32 0.0, %v6389
    %v6391 = vpop.f32.mrb[0].mxu0
    %6392 = vdwg.mxu0
    %v6394 = vsel %vm1553, %v6306, 0
    %v6397 = vsel %vm1553, %v6307, 0
    %6399 = vmatprep.subr.mxu0 0.0
    %6400 = vmatpush1.msra.mxu0 %v5805
    %6401 = vmatprep.subr.mxu0 0.0
    %6402 = vmatpush1.msra.mxu0 %v5873
    %6403 = vmatprep.subr.mxu0 0.0
    %6404 = vmatpush1.msra.mxu0 0.0
    %6405 = vmatprep.subr.mxu0 0.0
    %6406 = vmatpush1.msra.mxu0 0.0
    %6407 = vmatprep.subr.mxu0 0.0
    %6408 = vmatpush1.msra.mxu0 0.0
    %6409 = vmatprep.subr.mxu0 0.0
    %6410 = vmatpush1.msra.mxu0 0.0
    %6411 = vmatprep.subr.mxu0 0.0
    %6412 = vmatpush1.msra.mxu0 0.0
    %6413 = vmatprep.subr.mxu0 0.0
    %6414 = vmatpush1.msra.mxu0 0.0
    %6415 = vmatprep.subr.mxu0 0.0
    %6416 = vmatpush1.msra.mxu0 0.0
    %6417 = vmatprep.subr.mxu0 0.0
    %6418 = vmatpush1.msra.mxu0 0.0
    %6419 = vmatprep.subr.mxu0 0.0
    %6420 = vmatpush1.msra.mxu0 0.0
    %6421 = vmatprep.subr.mxu0 0.0
    %6422 = vmatpush1.msra.mxu0 0.0
    %6423 = vmatprep.subr.mxu0 0.0
    %6424 = vmatpush1.msra.mxu0 0.0
    %6425 = vmatprep.subr.mxu0 0.0
    %6426 = vmatpush1.msra.mxu0 0.0
    %6427 = vmatprep.subr.mxu0 0.0
    %6428 = vmatpush1.msra.mxu0 0.0
    %6429 = vmatprep.subr.mxu0 0.0
    %6430 = vmatpush1.msra.mxu0 0.0
    %6431 = vmatprep.subr.mxu0 0.0
    %6432 = vmatpush1.msra.mxu0 0.0
    %6433 = vmatprep.subr.mxu0 0.0
    %6434 = vmatpush1.msra.mxu0 0.0
    %6435 = vmatprep.subr.mxu0 0.0
    %6436 = vmatpush1.msra.mxu0 0.0
    %6437 = vmatprep.subr.mxu0 0.0
    %6438 = vmatpush1.msra.mxu0 0.0
    %6439 = vmatprep.subr.mxu0 0.0
    %6440 = vmatpush1.msra.mxu0 0.0
    %6441 = vmatprep.subr.mxu0 0.0
    %6442 = vmatpush1.msra.mxu0 0.0
    %6443 = vmatprep.subr.mxu0 0.0
    %6444 = vmatpush1.msra.mxu0 0.0
    %6445 = vmatprep.subr.mxu0 0.0
    %6446 = vmatpush1.msra.mxu0 0.0
    %6447 = vmatprep.subr.mxu0 0.0
    %6448 = vmatpush1.msra.mxu0 0.0
    %6449 = vmatprep.subr.mxu0 0.0
    %6450 = vmatpush1.msra.mxu0 0.0
    %6451 = vmatprep.subr.mxu0 0.0
    %6452 = vmatpush1.msra.mxu0 0.0
    %6453 = vmatprep.subr.mxu0 0.0
    %6454 = vmatpush1.msra.mxu0 0.0
    %6455 = vmatprep.subr.mxu0 0.0
    %6456 = vmatpush1.msra.mxu0 0.0
    %6457 = vmatprep.subr.mxu0 0.0
    %6458 = vmatpush1.msra.mxu0 0.0
    %6459 = vmatprep.subr.mxu0 0.0
    %6460 = vmatpush1.msra.mxu0 0.0
    %6461 = vmatprep.subr.mxu0 0.0
    %6462 = vmatpush1.msra.mxu0 0.0
    %6463 = vmatprep.mubr.f32.mxu0 0.0
    %6464 = vmatmul.mubr.f32.gmra.mrb[0].mxu0 %v6394
    %v6465 = vpop.f32.mrb[0].mxu0
    %v6466 = vadd.f32 0.0, %v6465
    %v6467 = vpop.f32.mrb[0].mxu0
    %6468 = vmatprep.mubr.f32.mxu0 0.0
    %6469 = vmatmul.mubr.f32.gmra.mrb[0].mxu0 %v6397
    %v6470 = vpop.f32.mrb[0].mxu0
    %v6471 = vadd.f32 0.0, %v6470
    %v6472 = vpop.f32.mrb[0].mxu0
    %6473 = vdwg.mxu0
    %v6475 = vsel %vm1553, %v6308, 0
    %v6478 = vsel %vm1553, %v6309, 0
    %6480 = vmatprep.subr.mxu0 0.0
    %6481 = vmatpush1.msra.mxu0 %v5806
    %6482 = vmatprep.subr.mxu0 0.0
    %6483 = vmatpush1.msra.mxu0 %v5874
    %6484 = vmatprep.subr.mxu0 0.0
    %6485 = vmatpush1.msra.mxu0 0.0
    %6486 = vmatprep.subr.mxu0 0.0
    %6487 = vmatpush1.msra.mxu0 0.0
    %6488 = vmatprep.subr.mxu0 0.0
    %6489 = vmatpush1.msra.mxu0 0.0
    %6490 = vmatprep.subr.mxu0 0.0
    %6491 = vmatpush1.msra.mxu0 0.0
    %6492 = vmatprep.subr.mxu0 0.0
    %6493 = vmatpush1.msra.mxu0 0.0
    %6494 = vmatprep.subr.mxu0 0.0
    %6495 = vmatpush1.msra.mxu0 0.0
    %6496 = vmatprep.subr.mxu0 0.0
    %6497 = vmatpush1.msra.mxu0 0.0
    %6498 = vmatprep.subr.mxu0 0.0
    %6499 = vmatpush1.msra.mxu0 0.0
    %6500 = vmatprep.subr.mxu0 0.0
    %6501 = vmatpush1.msra.mxu0 0.0
    %6502 = vmatprep.subr.mxu0 0.0
    %6503 = vmatpush1.msra.mxu0 0.0
    %6504 = vmatprep.subr.mxu0 0.0
    %6505 = vmatpush1.msra.mxu0 0.0
    %6506 = vmatprep.subr.mxu0 0.0
    %6507 = vmatpush1.msra.mxu0 0.0
    %6508 = vmatprep.subr.mxu0 0.0
    %6509 = vmatpush1.msra.mxu0 0.0
    %6510 = vmatprep.subr.mxu0 0.0
    %6511 = vmatpush1.msra.mxu0 0.0
    %6512 = vmatprep.subr.mxu0 0.0
    %6513 = vmatpush1.msra.mxu0 0.0
    %6514 = vmatprep.subr.mxu0 0.0
    %6515 = vmatpush1.msra.mxu0 0.0
    %6516 = vmatprep.subr.mxu0 0.0
    %6517 = vmatpush1.msra.mxu0 0.0
    %6518 = vmatprep.subr.mxu0 0.0
    %6519 = vmatpush1.msra.mxu0 0.0
    %6520 = vmatprep.subr.mxu0 0.0
    %6521 = vmatpush1.msra.mxu0 0.0
    %6522 = vmatprep.subr.mxu0 0.0
    %6523 = vmatpush1.msra.mxu0 0.0
    %6524 = vmatprep.subr.mxu0 0.0
    %6525 = vmatpush1.msra.mxu0 0.0
    %6526 = vmatprep.subr.mxu0 0.0
    %6527 = vmatpush1.msra.mxu0 0.0
    %6528 = vmatprep.subr.mxu0 0.0
    %6529 = vmatpush1.msra.mxu0 0.0
    %6530 = vmatprep.subr.mxu0 0.0
    %6531 = vmatpush1.msra.mxu0 0.0
    %6532 = vmatprep.subr.mxu0 0.0
    %6533 = vmatpush1.msra.mxu0 0.0
    %6534 = vmatprep.subr.mxu0 0.0
    %6535 = vmatpush1.msra.mxu0 0.0
    %6536 = vmatprep.subr.mxu0 0.0
    %6537 = vmatpush1.msra.mxu0 0.0
    %6538 = vmatprep.subr.mxu0 0.0
    %6539 = vmatpush1.msra.mxu0 0.0
    %6540 = vmatprep.subr.mxu0 0.0
    %6541 = vmatpush1.msra.mxu0 0.0
    %6542 = vmatprep.subr.mxu0 0.0
    %6543 = vmatpush1.msra.mxu0 0.0
    %6544 = vmatprep.mubr.f32.mxu0 0.0
    %6545 = vmatmul.mubr.f32.gmra.mrb[0].mxu0 %v6475
    %v6546 = vpop.f32.mrb[0].mxu0
    %v6547 = vadd.f32 0.0, %v6546
    %v6548 = vpop.f32.mrb[0].mxu0
    %6549 = vmatprep.mubr.f32.mxu0 0.0
    %6550 = vmatmul.mubr.f32.gmra.mrb[0].mxu0 %v6478
    %v6551 = vpop.f32.mrb[0].mxu0
    %v6552 = vadd.f32 0.0, %v6551
    %v6553 = vpop.f32.mrb[0].mxu0
    %6554 = vdwg.mxu0
    %v6556 = vsel %vm1553, %v6310, 0
    %v6559 = vsel %vm1553, %v6311, 0
    %6561 = vmatprep.subr.mxu0 0.0
    %6562 = vmatpush1.msra.mxu0 %v5807
    %6563 = vmatprep.subr.mxu0 0.0
    %6564 = vmatpush1.msra.mxu0 %v5875
    %6565 = vmatprep.subr.mxu0 0.0
    %6566 = vmatpush1.msra.mxu0 0.0
    %6567 = vmatprep.subr.mxu0 0.0
    %6568 = vmatpush1.msra.mxu0 0.0
    %6569 = vmatprep.subr.mxu0 0.0
    %6570 = vmatpush1.msra.mxu0 0.0
    %6571 = vmatprep.subr.mxu0 0.0
    %6572 = vmatpush1.msra.mxu0 0.0
    %6573 = vmatprep.subr.mxu0 0.0
    %6574 = vmatpush1.msra.mxu0 0.0
    %6575 = vmatprep.subr.mxu0 0.0
    %6576 = vmatpush1.msra.mxu0 0.0
    %6577 = vmatprep.subr.mxu0 0.0
    %6578 = vmatpush1.msra.mxu0 0.0
    %6579 = vmatprep.subr.mxu0 0.0
    %6580 = vmatpush1.msra.mxu0 0.0
    %6581 = vmatprep.subr.mxu0 0.0
    %6582 = vmatpush1.msra.mxu0 0.0
    %6583 = vmatprep.subr.mxu0 0.0
    %6584 = vmatpush1.msra.mxu0 0.0
    %6585 = vmatprep.subr.mxu0 0.0
    %6586 = vmatpush1.msra.mxu0 0.0
    %6587 = vmatprep.subr.mxu0 0.0
    %6588 = vmatpush1.msra.mxu0 0.0
    %6589 = vmatprep.subr.mxu0 0.0
    %6590 = vmatpush1.msra.mxu0 0.0
    %6591 = vmatprep.subr.mxu0 0.0
    %6592 = vmatpush1.msra.mxu0 0.0
    %6593 = vmatprep.subr.mxu0 0.0
    %6594 = vmatpush1.msra.mxu0 0.0
    %6595 = vmatprep.subr.mxu0 0.0
    %6596 = vmatpush1.msra.mxu0 0.0
    %6597 = vmatprep.subr.mxu0 0.0
    %6598 = vmatpush1.msra.mxu0 0.0
    %6599 = vmatprep.subr.mxu0 0.0
    %6600 = vmatpush1.msra.mxu0 0.0
    %6601 = vmatprep.subr.mxu0 0.0
    %6602 = vmatpush1.msra.mxu0 0.0
    %6603 = vmatprep.subr.mxu0 0.0
    %6604 = vmatpush1.msra.mxu0 0.0
    %6605 = vmatprep.subr.mxu0 0.0
    %6606 = vmatpush1.msra.mxu0 0.0
    %6607 = vmatprep.subr.mxu0 0.0
    %6608 = vmatpush1.msra.mxu0 0.0
    %6609 = vmatprep.subr.mxu0 0.0
    %6610 = vmatpush1.msra.mxu0 0.0
    %6611 = vmatprep.subr.mxu0 0.0
    %6612 = vmatpush1.msra.mxu0 0.0
    %6613 = vmatprep.subr.mxu0 0.0
    %6614 = vmatpush1.msra.mxu0 0.0
    %6615 = vmatprep.subr.mxu0 0.0
    %6616 = vmatpush1.msra.mxu0 0.0
    %6617 = vmatprep.subr.mxu0 0.0
    %6618 = vmatpush1.msra.mxu0 0.0
    %6619 = vmatprep.subr.mxu0 0.0
    %6620 = vmatpush1.msra.mxu0 0.0
    %6621 = vmatprep.subr.mxu0 0.0
    %6622 = vmatpush1.msra.mxu0 0.0
    %6623 = vmatprep.subr.mxu0 0.0
    %6624 = vmatpush1.msra.mxu0 0.0
    %6625 = vmatprep.mubr.f32.mxu0 0.0
    %6626 = vmatmul.mubr.f32.gmra.mrb[0].mxu0 %v6556
    %v6627 = vpop.f32.mrb[0].mxu0
    %v6628 = vadd.f32 0.0, %v6627
    %v6629 = vpop.f32.mrb[0].mxu0
    %6630 = vmatprep.mubr.f32.mxu0 0.0
    %6631 = vmatmul.mubr.f32.gmra.mrb[0].mxu0 %v6559
    %v6632 = vpop.f32.mrb[0].mxu0
    %v6633 = vadd.f32 0.0, %v6632
    %v6634 = vpop.f32.mrb[0].mxu0
    %6635 = vdwg.mxu0
    %v6636 = vcombine.low %v6385, %v6547
    %v6637 = vcombine.high %v6385, %v6547
    %v6639 = vunpack.c.l.s4 1983009808
    %v6640 = vunpack.c.0.s8 %v6639
    %v6641 = vlaneseq
    %v6642 = vshrl.u32 %v6641, 7
    %v6643 = vsub.s32 %v6640, %v6642
    %v6644 = vrot.slane %v6636, %v6643
    %v6646 = vunpack.c.l.s4 1983009808
    %v6647 = vunpack.c.0.s8 %v6646
    %v6648 = vlaneseq
    %v6649 = vshrl.u32 %v6648, 7
    %v6650 = vsub.s32 %v6647, %v6649
    %v6651 = vrot.slane %v6637, %v6650
    %v6652 = vcombine.low %v6466, %v6628
    %v6653 = vcombine.high %v6466, %v6628
    %v6655 = vunpack.c.l.s4 1983009808
    %v6656 = vunpack.c.0.s8 %v6655
    %v6657 = vlaneseq
    %v6658 = vshrl.u32 %v6657, 7
    %v6659 = vsub.s32 %v6656, %v6658
    %v6660 = vrot.slane %v6652, %v6659
    %v6662 = vunpack.c.l.s4 1983009808
    %v6663 = vunpack.c.0.s8 %v6662
    %v6664 = vlaneseq
    %v6665 = vshrl.u32 %v6664, 7
    %v6666 = vsub.s32 %v6663, %v6665
    %v6667 = vrot.slane %v6653, %v6666
    %v6668 = vcombine.low %v6644, %v6660
    %v6669 = vcombine.high %v6644, %v6660
    %v6671 = vunpack.c.l.s4 1934713408
    %v6672 = vunpack.c.0.s8 %v6671
    %v6673 = vlaneseq
    %v6674 = vshrl.u32 %v6673, 7
    %v6675 = vsub.s32 %v6672, %v6674
    %v6676 = vrot.slane %v6668, %v6675
    %v6678 = vunpack.c.l.s4 1934713408
    %v6679 = vunpack.c.0.s8 %v6678
    %v6680 = vlaneseq
    %v6681 = vshrl.u32 %v6680, 7
    %v6682 = vsub.s32 %v6679, %v6681
    %v6683 = vrot.slane %v6669, %v6682
    %v6684 = vcombine.low %v6651, %v6667
    %v6685 = vcombine.high %v6651, %v6667
    %v6687 = vunpack.c.l.s4 1934713408
    %v6688 = vunpack.c.0.s8 %v6687
    %v6689 = vlaneseq
    %v6690 = vshrl.u32 %v6689, 7
    %v6691 = vsub.s32 %v6688, %v6690
    %v6692 = vrot.slane %v6684, %v6691
    %v6694 = vunpack.c.l.s4 1934713408
    %v6695 = vunpack.c.0.s8 %v6694
    %v6696 = vlaneseq
    %v6697 = vshrl.u32 %v6696, 7
    %v6698 = vsub.s32 %v6695, %v6697
    %v6699 = vrot.slane %v6685, %v6698
    %v6700 = vcombine.high %v6676, 0.0
    %v6701 = vcombine.high %v6683, 0.0
    %v6702 = vcombine.high %v6692, 0.0
    %v6703 = vcombine.high %v6699, 0.0
    %v6704 = vcombine.low %v6390, %v6552
    %v6705 = vcombine.high %v6390, %v6552
    %v6707 = vunpack.c.l.s4 1983009808
    %v6708 = vunpack.c.0.s8 %v6707
    %v6709 = vlaneseq
    %v6710 = vshrl.u32 %v6709, 7
    %v6711 = vsub.s32 %v6708, %v6710
    %v6712 = vrot.slane %v6704, %v6711
    %v6714 = vunpack.c.l.s4 1983009808
    %v6715 = vunpack.c.0.s8 %v6714
    %v6716 = vlaneseq
    %v6717 = vshrl.u32 %v6716, 7
    %v6718 = vsub.s32 %v6715, %v6717
    %v6719 = vrot.slane %v6705, %v6718
    %v6720 = vcombine.low %v6471, %v6633
    %v6721 = vcombine.high %v6471, %v6633
    %v6723 = vunpack.c.l.s4 1983009808
    %v6724 = vunpack.c.0.s8 %v6723
    %v6725 = vlaneseq
    %v6726 = vshrl.u32 %v6725, 7
    %v6727 = vsub.s32 %v6724, %v6726
    %v6728 = vrot.slane %v6720, %v6727
    %v6730 = vunpack.c.l.s4 1983009808
    %v6731 = vunpack.c.0.s8 %v6730
    %v6732 = vlaneseq
    %v6733 = vshrl.u32 %v6732, 7
    %v6734 = vsub.s32 %v6731, %v6733
    %v6735 = vrot.slane %v6721, %v6734
    %v6736 = vcombine.low %v6712, %v6728
    %v6737 = vcombine.high %v6712, %v6728
    %v6739 = vunpack.c.l.s4 1934713408
    %v6740 = vunpack.c.0.s8 %v6739
    %v6741 = vlaneseq
    %v6742 = vshrl.u32 %v6741, 7
    %v6743 = vsub.s32 %v6740, %v6742
    %v6744 = vrot.slane %v6736, %v6743
    %v6746 = vunpack.c.l.s4 1934713408
    %v6747 = vunpack.c.0.s8 %v6746
    %v6748 = vlaneseq
    %v6749 = vshrl.u32 %v6748, 7
    %v6750 = vsub.s32 %v6747, %v6749
    %v6751 = vrot.slane %v6737, %v6750
    %v6752 = vcombine.low %v6719, %v6735
    %v6753 = vcombine.high %v6719, %v6735
    %v6755 = vunpack.c.l.s4 1934713408
    %v6756 = vunpack.c.0.s8 %v6755
    %v6757 = vlaneseq
    %v6758 = vshrl.u32 %v6757, 7
    %v6759 = vsub.s32 %v6756, %v6758
    %v6760 = vrot.slane %v6752, %v6759
    %v6762 = vunpack.c.l.s4 1934713408
    %v6763 = vunpack.c.0.s8 %v6762
    %v6764 = vlaneseq
    %v6765 = vshrl.u32 %v6764, 7
    %v6766 = vsub.s32 %v6763, %v6765
    %v6767 = vrot.slane %v6753, %v6766
    %v6768 = vcombine.high %v6744, 0.0
    %v6769 = vcombine.high %v6751, 0.0
    %v6770 = vcombine.high %v6760, 0.0
    %v6771 = vcombine.high %v6767, 0.0
    %v6772 = vcombine.low %v6676, %v6683
    %v6774 = vunpack.c.l.s4 1983009808
    %v6775 = vunpack.c.0.s8 %v6774
    %v6776 = vlaneseq
    %v6777 = vshrl.u32 %v6776, 7
    %v6778 = vsub.s32 %v6775, %v6777
    %v6779 = vrot.slane %v6772, %v6778
    %v6780 = vcombine.low %v6700, %v6701
    %v6782 = vunpack.c.l.s4 1983009808
    %v6783 = vunpack.c.0.s8 %v6782
    %v6784 = vlaneseq
    %v6785 = vshrl.u32 %v6784, 7
    %v6786 = vsub.s32 %v6783, %v6785
    %v6787 = vrot.slane %v6780, %v6786
    %v6788 = vcombine.low %v6692, %v6699
    %v6790 = vunpack.c.l.s4 1983009808
    %v6791 = vunpack.c.0.s8 %v6790
    %v6792 = vlaneseq
    %v6793 = vshrl.u32 %v6792, 7
    %v6794 = vsub.s32 %v6791, %v6793
    %v6795 = vrot.slane %v6788, %v6794
    %v6796 = vcombine.low %v6702, %v6703
    %v6798 = vunpack.c.l.s4 1983009808
    %v6799 = vunpack.c.0.s8 %v6798
    %v6800 = vlaneseq
    %v6801 = vshrl.u32 %v6800, 7
    %v6802 = vsub.s32 %v6799, %v6801
    %v6803 = vrot.slane %v6796, %v6802
    %v6804 = vcombine.low %v6779, %v6787
    %v6805 = vcombine.high %v6779, %v6787
    %v6807 = vunpack.c.l.s4 1934713408
    %v6808 = vunpack.c.0.s8 %v6807
    %v6809 = vlaneseq
    %v6810 = vshrl.u32 %v6809, 7
    %v6811 = vsub.s32 %v6808, %v6810
    %v6812 = vrot.slane %v6804, %v6811
    %v6814 = vunpack.c.l.s4 1934713408
    %v6815 = vunpack.c.0.s8 %v6814
    %v6816 = vlaneseq
    %v6817 = vshrl.u32 %v6816, 7
    %v6818 = vsub.s32 %v6815, %v6817
    %v6819 = vrot.slane %v6805, %v6818
    %v6820 = vcombine.low %v6795, %v6803
    %v6821 = vcombine.high %v6795, %v6803
    %v6823 = vunpack.c.l.s4 1934713408
    %v6824 = vunpack.c.0.s8 %v6823
    %v6825 = vlaneseq
    %v6826 = vshrl.u32 %v6825, 7
    %v6827 = vsub.s32 %v6824, %v6826
    %v6828 = vrot.slane %v6820, %v6827
    %v6830 = vunpack.c.l.s4 1934713408
    %v6831 = vunpack.c.0.s8 %v6830
    %v6832 = vlaneseq
    %v6833 = vshrl.u32 %v6832, 7
    %v6834 = vsub.s32 %v6831, %v6833
    %v6835 = vrot.slane %v6821, %v6834
    %v6836 = vcombine.low %v6812, %v6828
    %v6837 = vcombine.high %v6812, %v6828
    %v6838 = vcombine.low %v6819, %v6835
    %v6839 = vcombine.high %v6819, %v6835
    %v6840 = vcombine.low %v6744, %v6751
    %v6842 = vunpack.c.l.s4 1983009808
    %v6843 = vunpack.c.0.s8 %v6842
    %v6844 = vlaneseq
    %v6845 = vshrl.u32 %v6844, 7
    %v6846 = vsub.s32 %v6843, %v6845
    %v6847 = vrot.slane %v6840, %v6846
    %v6848 = vcombine.low %v6768, %v6769
    %v6850 = vunpack.c.l.s4 1983009808
    %v6851 = vunpack.c.0.s8 %v6850
    %v6852 = vlaneseq
    %v6853 = vshrl.u32 %v6852, 7
    %v6854 = vsub.s32 %v6851, %v6853
    %v6855 = vrot.slane %v6848, %v6854
    %v6856 = vcombine.low %v6760, %v6767
    %v6858 = vunpack.c.l.s4 1983009808
    %v6859 = vunpack.c.0.s8 %v6858
    %v6860 = vlaneseq
    %v6861 = vshrl.u32 %v6860, 7
    %v6862 = vsub.s32 %v6859, %v6861
    %v6863 = vrot.slane %v6856, %v6862
    %v6864 = vcombine.low %v6770, %v6771
    %v6866 = vunpack.c.l.s4 1983009808
    %v6867 = vunpack.c.0.s8 %v6866
    %v6868 = vlaneseq
    %v6869 = vshrl.u32 %v6868, 7
    %v6870 = vsub.s32 %v6867, %v6869
    %v6871 = vrot.slane %v6864, %v6870
    %v6872 = vcombine.low %v6847, %v6855
    %v6873 = vcombine.high %v6847, %v6855
    %v6875 = vunpack.c.l.s4 1934713408
    %v6876 = vunpack.c.0.s8 %v6875
    %v6877 = vlaneseq
    %v6878 = vshrl.u32 %v6877, 7
    %v6879 = vsub.s32 %v6876, %v6878
    %v6880 = vrot.slane %v6872, %v6879
    %v6882 = vunpack.c.l.s4 1934713408
    %v6883 = vunpack.c.0.s8 %v6882
    %v6884 = vlaneseq
    %v6885 = vshrl.u32 %v6884, 7
    %v6886 = vsub.s32 %v6883, %v6885
    %v6887 = vrot.slane %v6873, %v6886
    %v6888 = vcombine.low %v6863, %v6871
    %v6889 = vcombine.high %v6863, %v6871
    %v6891 = vunpack.c.l.s4 1934713408
    %v6892 = vunpack.c.0.s8 %v6891
    %v6893 = vlaneseq
    %v6894 = vshrl.u32 %v6893, 7
    %v6895 = vsub.s32 %v6892, %v6894
    %v6896 = vrot.slane %v6888, %v6895
    %v6898 = vunpack.c.l.s4 1934713408
    %v6899 = vunpack.c.0.s8 %v6898
    %v6900 = vlaneseq
    %v6901 = vshrl.u32 %v6900, 7
    %v6902 = vsub.s32 %v6899, %v6901
    %v6903 = vrot.slane %v6889, %v6902
    %v6904 = vcombine.low %v6880, %v6896
    %v6905 = vcombine.high %v6880, %v6896
    %v6906 = vcombine.low %v6887, %v6903
    %v6907 = vcombine.high %v6887, %v6903
    %6910 = vrot.lane.b32.xlu0 %v6837, 8
    %v6911 = vpop.permute.xlu0 %6910
    %6912 = vrot.lane.b32.xlu0 %v6905, 8
    %v6913 = vpop.permute.xlu0 %6912
    %6918 = vrot.lane.b32.xlu0 %v6838, 16
    %v6919 = vpop.permute.xlu0 %6918
    %6920 = vrot.lane.b32.xlu0 %v6906, 16
    %v6921 = vpop.permute.xlu0 %6920
    %6926 = vrot.lane.b32.xlu0 %v6839, 24
    %v6927 = vpop.permute.xlu0 %6926
    %6928 = vrot.lane.b32.xlu0 %v6907, 24
    %v6929 = vpop.permute.xlu0 %6928
    %v6932 = vsel %vm67, %v6836, %v6911
    %v6933 = vsel %vm67, %v6904, %v6913
    %v6934 = vsel %vm1553, %v6932, %v6919
    %v6935 = vsel %vm1553, %v6933, %v6921
    %v6936 = vsel %vm2266, %v6934, %v6927
    %v6937 = vsel %vm2266, %v6935, %v6929
    %v6938 = vlaneseq
    %v6939 = vshrl.u32 %v6938, 7
    %v6940 = vsub.s32 3, %v6939
    %v6941 = vrot.slane %v4855, %v6940
    %6946 = vrot.lane.b32.xlu0 %v4846, 32
    %v6947 = vpop.permute.xlu0 %6946
    %6948 = vrot.lane.b32.xlu0 %v4848, 32
    %v6949 = vpop.permute.xlu0 %6948
    %6950 = vrot.lane.b32.xlu0 %v4850, 32
    %v6951 = vpop.permute.xlu0 %6950
    %6952 = vrot.lane.b32.xlu0 %v4852, 32
    %v6953 = vpop.permute.xlu0 %6952
    %v6959 = vsel %vm94, %v6936, 0
    %v6962 = vsel %vm94, %v6937, 0
    %6964 = vmatprep.subr.mxu0 0.0
    %6965 = vmatpush1.msra.mxu0 %v6947
    %6966 = vmatprep.subr.mxu0 0.0
    %6967 = vmatpush1.msra.mxu0 %v6949
    %6968 = vmatprep.subr.mxu0 0.0
    %6969 = vmatpush1.msra.mxu0 %v6951
    %6970 = vmatprep.subr.mxu0 0.0
    %6971 = vmatpush1.msra.mxu0 %v6953
    %6972 = vmatprep.subr.mxu0 0.0
    %6973 = vmatpush1.msra.mxu0 0.0
    %6974 = vmatprep.subr.mxu0 0.0
    %6975 = vmatpush1.msra.mxu0 0.0
    %6976 = vmatprep.subr.mxu0 0.0
    %6977 = vmatpush1.msra.mxu0 0.0
    %6978 = vmatprep.subr.mxu0 0.0
    %6979 = vmatpush1.msra.mxu0 0.0
    %6980 = vmatprep.subr.mxu0 0.0
    %6981 = vmatpush1.msra.mxu0 0.0
    %6982 = vmatprep.subr.mxu0 0.0
    %6983 = vmatpush1.msra.mxu0 0.0
    %6984 = vmatprep.subr.mxu0 0.0
    %6985 = vmatpush1.msra.mxu0 0.0
    %6986 = vmatprep.subr.mxu0 0.0
    %6987 = vmatpush1.msra.mxu0 0.0
    %6988 = vmatprep.subr.mxu0 0.0
    %6989 = vmatpush1.msra.mxu0 0.0
    %6990 = vmatprep.subr.mxu0 0.0
    %6991 = vmatpush1.msra.mxu0 0.0
    %6992 = vmatprep.subr.mxu0 0.0
    %6993 = vmatpush1.msra.mxu0 0.0
    %6994 = vmatprep.subr.mxu0 0.0
    %6995 = vmatpush1.msra.mxu0 0.0
    %6996 = vmatprep.subr.mxu0 0.0
    %6997 = vmatpush1.msra.mxu0 0.0
    %6998 = vmatprep.subr.mxu0 0.0
    %6999 = vmatpush1.msra.mxu0 0.0
    %7000 = vmatprep.subr.mxu0 0.0
    %7001 = vmatpush1.msra.mxu0 0.0
    %7002 = vmatprep.subr.mxu0 0.0
    %7003 = vmatpush1.msra.mxu0 0.0
    %7004 = vmatprep.subr.mxu0 0.0
    %7005 = vmatpush1.msra.mxu0 0.0
    %7006 = vmatprep.subr.mxu0 0.0
    %7007 = vmatpush1.msra.mxu0 0.0
    %7008 = vmatprep.subr.mxu0 0.0
    %7009 = vmatpush1.msra.mxu0 0.0
    %7010 = vmatprep.subr.mxu0 0.0
    %7011 = vmatpush1.msra.mxu0 0.0
    %7012 = vmatprep.subr.mxu0 0.0
    %7013 = vmatpush1.msra.mxu0 0.0
    %7014 = vmatprep.subr.mxu0 0.0
    %7015 = vmatpush1.msra.mxu0 0.0
    %7016 = vmatprep.subr.mxu0 0.0
    %7017 = vmatpush1.msra.mxu0 0.0
    %7018 = vmatprep.subr.mxu0 0.0
    %7019 = vmatpush1.msra.mxu0 0.0
    %7020 = vmatprep.subr.mxu0 0.0
    %7021 = vmatpush1.msra.mxu0 0.0
    %7022 = vmatprep.subr.mxu0 0.0
    %7023 = vmatpush1.msra.mxu0 0.0
    %7024 = vmatprep.subr.mxu0 0.0
    %7025 = vmatpush1.msra.mxu0 0.0
    %7026 = vmatprep.subr.mxu0 0.0
    %7027 = vmatpush1.msra.mxu0 0.0
    %7028 = vmatprep.mubr.f32.mxu0 0.0
    %7029 = vmatmul.mubr.f32.gmra.mrb[0].mxu0 %v6959
    %v7030 = vpop.f32.mrb[0].mxu0
    %v7031 = vadd.f32 %v6941, %v7030
    %v7032 = vpop.f32.mrb[0].mxu0
    %7033 = vmatprep.mubr.f32.mxu0 0.0
    %7034 = vmatmul.mubr.f32.gmra.mrb[0].mxu0 %v6962
    %v7035 = vpop.f32.mrb[0].mxu0
    %v7036 = vadd.f32 %v6941, %v7035
    %v7037 = vpop.f32.mrb[0].mxu0
    %7038 = vdwg.mxu0
    %v7039 = vadd.f32 %v4843, %v7031
    %v7040 = vadd.f32 %v4844, %v7036
    %v7041 = vsel %vm94, %v7039, 0.0
    %7042 = vadd.xlane.f32.xlu0 %v7041
    %v7043 = vpop.xlane.xlu0 %7042
    %v7044 = vsel %vm94, %v7040, 0.0
    %7045 = vadd.xlane.f32.xlu0 %v7044
    %v7046 = vpop.xlane.xlu0 %7045
    %v7047 = vmul.f32 %v7043, %v2378
    %v7048 = vmul.f32 %v7046, %v2378
    %v7049 = vsub.f32 %v7039, %v7047
    %v7050 = vsub.f32 %v7040, %v7048
    %v7051 = vmul.f32 %v7049, %v7049
    %v7052 = vmul.f32 %v7050, %v7050
    %v7053 = vsel %vm94, %v7051, 0.0
    %7054 = vadd.xlane.f32.xlu0 %v7053
    %v7055 = vpop.xlane.xlu0 %7054
    %v7056 = vsel %vm94, %v7052, 0.0
    %7057 = vadd.xlane.f32.xlu0 %v7056
    %v7058 = vpop.xlane.xlu0 %7057
    %v7059 = vmul.f32 %v7055, %v2378
    %v7060 = vmul.f32 %v7058, %v2378
    %v7061 = vadd.f32 %v7059, 1e-05
    %v7062 = vadd.f32 %v7060, 1e-05
    %v7063 = vrsqrt.pop %v7061
    %v7064 = vrsqrt.pop %v7062
    %v7065 = vmul.f32 %v7049, %v7063
    %v7066 = vmul.f32 %v7050, %v7064
    %v7067 = vlaneseq
    %v7068 = vshrl.u32 %v7067, 7
    %v7069 = vsub.s32 1, %v7068
    %v7070 = vrot.slane %v4856, %v7069
    %v7071 = vmul.f32 %v7065, %v7070
    %v7072 = vmul.f32 %v7066, %v7070
    %v7073 = vlaneseq
    %v7074 = vshrl.u32 %v7073, 7
    %v7075 = vsub.s32 2, %v7074
    %v7076 = vrot.slane %v4856, %v7075
    %v7077 = vadd.f32 %v7071, %v7076
    %v7078 = vadd.f32 %v7072, %v7076
    %v7079 = vlaneseq
    %v7080 = vshrl.u32 %v7079, 7
    %v7081 = vsub.s32 4, %v7080
    %v7082 = vrot.slane %v4855, %v7081
    %v7084 = vsel %vm94, %v7077, 0
    %v7087 = vsel %vm94, %v7078, 0
    %7089 = vmatprep.subr.mxu0 0.0
    %7090 = vmatpush1.msra.mxu0 %v4847
    %7091 = vmatprep.subr.mxu0 0.0
    %7092 = vmatpush1.msra.mxu0 %v4849
    %7093 = vmatprep.subr.mxu0 0.0
    %7094 = vmatpush1.msra.mxu0 %v4851
    %7095 = vmatprep.subr.mxu0 0.0
    %7096 = vmatpush1.msra.mxu0 %v4853
    %7097 = vmatprep.subr.mxu0 0.0
    %7098 = vmatpush1.msra.mxu0 0.0
    %7099 = vmatprep.subr.mxu0 0.0
    %7100 = vmatpush1.msra.mxu0 0.0
    %7101 = vmatprep.subr.mxu0 0.0
    %7102 = vmatpush1.msra.mxu0 0.0
    %7103 = vmatprep.subr.mxu0 0.0
    %7104 = vmatpush1.msra.mxu0 0.0
    %7105 = vmatprep.subr.mxu0 0.0
    %7106 = vmatpush1.msra.mxu0 0.0
    %7107 = vmatprep.subr.mxu0 0.0
    %7108 = vmatpush1.msra.mxu0 0.0
    %7109 = vmatprep.subr.mxu0 0.0
    %7110 = vmatpush1.msra.mxu0 0.0
    %7111 = vmatprep.subr.mxu0 0.0
    %7112 = vmatpush1.msra.mxu0 0.0
    %7113 = vmatprep.subr.mxu0 0.0
    %7114 = vmatpush1.msra.mxu0 0.0
    %7115 = vmatprep.subr.mxu0 0.0
    %7116 = vmatpush1.msra.mxu0 0.0
    %7117 = vmatprep.subr.mxu0 0.0
    %7118 = vmatpush1.msra.mxu0 0.0
    %7119 = vmatprep.subr.mxu0 0.0
    %7120 = vmatpush1.msra.mxu0 0.0
    %7121 = vmatprep.subr.mxu0 0.0
    %7122 = vmatpush1.msra.mxu0 0.0
    %7123 = vmatprep.subr.mxu0 0.0
    %7124 = vmatpush1.msra.mxu0 0.0
    %7125 = vmatprep.subr.mxu0 0.0
    %7126 = vmatpush1.msra.mxu0 0.0
    %7127 = vmatprep.subr.mxu0 0.0
    %7128 = vmatpush1.msra.mxu0 0.0
    %7129 = vmatprep.subr.mxu0 0.0
    %7130 = vmatpush1.msra.mxu0 0.0
    %7131 = vmatprep.subr.mxu0 0.0
    %7132 = vmatpush1.msra.mxu0 0.0
    %7133 = vmatprep.subr.mxu0 0.0
    %7134 = vmatpush1.msra.mxu0 0.0
    %7135 = vmatprep.subr.mxu0 0.0
    %7136 = vmatpush1.msra.mxu0 0.0
    %7137 = vmatprep.subr.mxu0 0.0
    %7138 = vmatpush1.msra.mxu0 0.0
    %7139 = vmatprep.subr.mxu0 0.0
    %7140 = vmatpush1.msra.mxu0 0.0
    %7141 = vmatprep.subr.mxu0 0.0
    %7142 = vmatpush1.msra.mxu0 0.0
    %7143 = vmatprep.subr.mxu0 0.0
    %7144 = vmatpush1.msra.mxu0 0.0
    %7145 = vmatprep.subr.mxu0 0.0
    %7146 = vmatpush1.msra.mxu0 0.0
    %7147 = vmatprep.subr.mxu0 0.0
    %7148 = vmatpush1.msra.mxu0 0.0
    %7149 = vmatprep.subr.mxu0 0.0
    %7150 = vmatpush1.msra.mxu0 0.0
    %7151 = vmatprep.subr.mxu0 0.0
    %7152 = vmatpush1.msra.mxu0 0.0
    %7153 = vmatprep.mubr.f32.mxu0 0.0
    %7154 = vmatmul.mubr.f32.gmra.mrb[0].mxu0 %v7084
    %v7155 = vpop.f32.mrb[0].mxu0
    %v7156 = vadd.f32 %v7082, %v7155
    %v7157 = vpop.f32.mrb[0].mxu0
    %7158 = vmatprep.mubr.f32.mxu0 0.0
    %7159 = vmatmul.mubr.f32.gmra.mrb[0].mxu0 %v7087
    %v7160 = vpop.f32.mrb[0].mxu0
    %v7161 = vadd.f32 %v7082, %v7160
    %v7162 = vpop.f32.mrb[0].mxu0
    %7163 = vdwg.mxu0
    %v7164 = vlaneseq
    %v7165 = vshrl.u32 %v7164, 7
    %v7166 = vsub.s32 5, %v7165
    %v7167 = vrot.slane %v4855, %v7166
    %7169 = vrot.lane.b32.xlu0 %v7167, 64
    %v7170 = vpop.permute.xlu0 %7169
    %v7172 = vadd.f32 %v168, %v7170
    %v7173 = vadd.f32 %v173, %v7170
    %v7174 = vlaneseq
    %v7175 = vshrl.u32 %v7174, 7
    %v7176 = vsub.s32 6, %v7175
    %v7177 = vrot.slane %v4855, %v7176
    %7179 = vrot.lane.b32.xlu0 %v7177, 96
    %v7180 = vpop.permute.xlu0 %7179
    %v7182 = vadd.f32 %v168, %v7180
    %v7183 = vadd.f32 %v173, %v7180
    %7186 = vrot.lane.b32.xlu0 %v7156, 120
    %v7187 = vpop.permute.xlu0 %7186
    %7188 = vrot.lane.b32.xlu0 %v7161, 120
    %v7189 = vpop.permute.xlu0 %7188
    %7192 = vrot.lane.b32.xlu0 %v7156, 112
    %v7193 = vpop.permute.xlu0 %7192
    %7194 = vrot.lane.b32.xlu0 %v7161, 112
    %v7195 = vpop.permute.xlu0 %7194
    %7198 = vrot.lane.b32.xlu0 %v7156, 104
    %v7199 = vpop.permute.xlu0 %7198
    %7200 = vrot.lane.b32.xlu0 %v7161, 104
    %v7201 = vpop.permute.xlu0 %7200
    %v7204 = vcombine.low %v7156, %v7193
    %v7205 = vcombine.high %v7156, %v7193
    %v7207 = vunpack.c.l.s4 1983009808
    %v7208 = vunpack.c.0.s8 %v7207
    %v7209 = vlaneseq
    %v7210 = vshrl.u32 %v7209, 7
    %v7211 = vsub.s32 %v7208, %v7210
    %v7212 = vrot.slane %v7204, %v7211
    %v7214 = vunpack.c.l.s4 1983009808
    %v7215 = vunpack.c.0.s8 %v7214
    %v7216 = vlaneseq
    %v7217 = vshrl.u32 %v7216, 7
    %v7218 = vsub.s32 %v7215, %v7217
    %v7219 = vrot.slane %v7205, %v7218
    %v7220 = vcombine.low %v7187, %v7199
    %v7221 = vcombine.high %v7187, %v7199
    %v7223 = vunpack.c.l.s4 1983009808
    %v7224 = vunpack.c.0.s8 %v7223
    %v7225 = vlaneseq
    %v7226 = vshrl.u32 %v7225, 7
    %v7227 = vsub.s32 %v7224, %v7226
    %v7228 = vrot.slane %v7220, %v7227
    %v7230 = vunpack.c.l.s4 1983009808
    %v7231 = vunpack.c.0.s8 %v7230
    %v7232 = vlaneseq
    %v7233 = vshrl.u32 %v7232, 7
    %v7234 = vsub.s32 %v7231, %v7233
    %v7235 = vrot.slane %v7221, %v7234
    %v7236 = vcombine.low %v7212, %v7228
    %v7237 = vcombine.high %v7212, %v7228
    %v7239 = vunpack.c.l.s4 1934713408
    %v7240 = vunpack.c.0.s8 %v7239
    %v7241 = vlaneseq
    %v7242 = vshrl.u32 %v7241, 7
    %v7243 = vsub.s32 %v7240, %v7242
    %v7244 = vrot.slane %v7236, %v7243
    %v7246 = vunpack.c.l.s4 1934713408
    %v7247 = vunpack.c.0.s8 %v7246
    %v7248 = vlaneseq
    %v7249 = vshrl.u32 %v7248, 7
    %v7250 = vsub.s32 %v7247, %v7249
    %v7251 = vrot.slane %v7237, %v7250
    %v7252 = vcombine.low %v7219, %v7235
    %v7253 = vcombine.high %v7219, %v7235
    %v7255 = vunpack.c.l.s4 1934713408
    %v7256 = vunpack.c.0.s8 %v7255
    %v7257 = vlaneseq
    %v7258 = vshrl.u32 %v7257, 7
    %v7259 = vsub.s32 %v7256, %v7258
    %v7260 = vrot.slane %v7252, %v7259
    %v7262 = vunpack.c.l.s4 1934713408
    %v7263 = vunpack.c.0.s8 %v7262
    %v7264 = vlaneseq
    %v7265 = vshrl.u32 %v7264, 7
    %v7266 = vsub.s32 %v7263, %v7265
    %v7267 = vrot.slane %v7253, %v7266
    %v7268 = vcombine.high %v7244, 0.0
    %v7269 = vcombine.high %v7251, 0.0
    %v7270 = vcombine.high %v7260, 0.0
    %v7271 = vcombine.high %v7267, 0.0
    %v7272 = vcombine.low %v7161, %v7195
    %v7273 = vcombine.high %v7161, %v7195
    %v7275 = vunpack.c.l.s4 1983009808
    %v7276 = vunpack.c.0.s8 %v7275
    %v7277 = vlaneseq
    %v7278 = vshrl.u32 %v7277, 7
    %v7279 = vsub.s32 %v7276, %v7278
    %v7280 = vrot.slane %v7272, %v7279
    %v7282 = vunpack.c.l.s4 1983009808
    %v7283 = vunpack.c.0.s8 %v7282
    %v7284 = vlaneseq
    %v7285 = vshrl.u32 %v7284, 7
    %v7286 = vsub.s32 %v7283, %v7285
    %v7287 = vrot.slane %v7273, %v7286
    %v7288 = vcombine.low %v7189, %v7201
    %v7289 = vcombine.high %v7189, %v7201
    %v7291 = vunpack.c.l.s4 1983009808
    %v7292 = vunpack.c.0.s8 %v7291
    %v7293 = vlaneseq
    %v7294 = vshrl.u32 %v7293, 7
    %v7295 = vsub.s32 %v7292, %v7294
    %v7296 = vrot.slane %v7288, %v7295
    %v7298 = vunpack.c.l.s4 1983009808
    %v7299 = vunpack.c.0.s8 %v7298
    %v7300 = vlaneseq
    %v7301 = vshrl.u32 %v7300, 7
    %v7302 = vsub.s32 %v7299, %v7301
    %v7303 = vrot.slane %v7289, %v7302
    %v7304 = vcombine.low %v7280, %v7296
    %v7305 = vcombine.high %v7280, %v7296
    %v7307 = vunpack.c.l.s4 1934713408
    %v7308 = vunpack.c.0.s8 %v7307
    %v7309 = vlaneseq
    %v7310 = vshrl.u32 %v7309, 7
    %v7311 = vsub.s32 %v7308, %v7310
    %v7312 = vrot.slane %v7304, %v7311
    %v7314 = vunpack.c.l.s4 1934713408
    %v7315 = vunpack.c.0.s8 %v7314
    %v7316 = vlaneseq
    %v7317 = vshrl.u32 %v7316, 7
    %v7318 = vsub.s32 %v7315, %v7317
    %v7319 = vrot.slane %v7305, %v7318
    %v7320 = vcombine.low %v7287, %v7303
    %v7321 = vcombine.high %v7287, %v7303
    %v7323 = vunpack.c.l.s4 1934713408
    %v7324 = vunpack.c.0.s8 %v7323
    %v7325 = vlaneseq
    %v7326 = vshrl.u32 %v7325, 7
    %v7327 = vsub.s32 %v7324, %v7326
    %v7328 = vrot.slane %v7320, %v7327
    %v7330 = vunpack.c.l.s4 1934713408
    %v7331 = vunpack.c.0.s8 %v7330
    %v7332 = vlaneseq
    %v7333 = vshrl.u32 %v7332, 7
    %v7334 = vsub.s32 %v7331, %v7333
    %v7335 = vrot.slane %v7321, %v7334
    %v7336 = vcombine.high %v7312, 0.0
    %v7337 = vcombine.high %v7319, 0.0
    %v7338 = vcombine.high %v7328, 0.0
    %v7339 = vcombine.high %v7335, 0.0
    %v7340 = vcombine.low %v7244, %v7251
    %v7342 = vunpack.c.l.s4 1983009808
    %v7343 = vunpack.c.0.s8 %v7342
    %v7344 = vlaneseq
    %v7345 = vshrl.u32 %v7344, 7
    %v7346 = vsub.s32 %v7343, %v7345
    %v7347 = vrot.slane %v7340, %v7346
    %v7348 = vcombine.low %v7268, %v7269
    %v7350 = vunpack.c.l.s4 1983009808
    %v7351 = vunpack.c.0.s8 %v7350
    %v7352 = vlaneseq
    %v7353 = vshrl.u32 %v7352, 7
    %v7354 = vsub.s32 %v7351, %v7353
    %v7355 = vrot.slane %v7348, %v7354
    %v7356 = vcombine.low %v7260, %v7267
    %v7358 = vunpack.c.l.s4 1983009808
    %v7359 = vunpack.c.0.s8 %v7358
    %v7360 = vlaneseq
    %v7361 = vshrl.u32 %v7360, 7
    %v7362 = vsub.s32 %v7359, %v7361
    %v7363 = vrot.slane %v7356, %v7362
    %v7364 = vcombine.low %v7270, %v7271
    %v7366 = vunpack.c.l.s4 1983009808
    %v7367 = vunpack.c.0.s8 %v7366
    %v7368 = vlaneseq
    %v7369 = vshrl.u32 %v7368, 7
    %v7370 = vsub.s32 %v7367, %v7369
    %v7371 = vrot.slane %v7364, %v7370
    %v7372 = vcombine.low %v7347, %v7355
    %v7373 = vcombine.high %v7347, %v7355
    %v7375 = vunpack.c.l.s4 1934713408
    %v7376 = vunpack.c.0.s8 %v7375
    %v7377 = vlaneseq
    %v7378 = vshrl.u32 %v7377, 7
    %v7379 = vsub.s32 %v7376, %v7378
    %v7380 = vrot.slane %v7372, %v7379
    %v7382 = vunpack.c.l.s4 1934713408
    %v7383 = vunpack.c.0.s8 %v7382
    %v7384 = vlaneseq
    %v7385 = vshrl.u32 %v7384, 7
    %v7386 = vsub.s32 %v7383, %v7385
    %v7387 = vrot.slane %v7373, %v7386
    %v7388 = vcombine.low %v7363, %v7371
    %v7389 = vcombine.high %v7363, %v7371
    %v7391 = vunpack.c.l.s4 1934713408
    %v7392 = vunpack.c.0.s8 %v7391
    %v7393 = vlaneseq
    %v7394 = vshrl.u32 %v7393, 7
    %v7395 = vsub.s32 %v7392, %v7394
    %v7396 = vrot.slane %v7388, %v7395
    %v7398 = vunpack.c.l.s4 1934713408
    %v7399 = vunpack.c.0.s8 %v7398
    %v7400 = vlaneseq
    %v7401 = vshrl.u32 %v7400, 7
    %v7402 = vsub.s32 %v7399, %v7401
    %v7403 = vrot.slane %v7389, %v7402
    %v7404 = vcombine.low %v7380, %v7396
    %v7405 = vcombine.high %v7380, %v7396
    %v7406 = vcombine.low %v7387, %v7403
    %v7407 = vcombine.high %v7387, %v7403
    %v7408 = vcombine.low %v7312, %v7319
    %v7410 = vunpack.c.l.s4 1983009808
    %v7411 = vunpack.c.0.s8 %v7410
    %v7412 = vlaneseq
    %v7413 = vshrl.u32 %v7412, 7
    %v7414 = vsub.s32 %v7411, %v7413
    %v7415 = vrot.slane %v7408, %v7414
    %v7416 = vcombine.low %v7336, %v7337
    %v7418 = vunpack.c.l.s4 1983009808
    %v7419 = vunpack.c.0.s8 %v7418
    %v7420 = vlaneseq
    %v7421 = vshrl.u32 %v7420, 7
    %v7422 = vsub.s32 %v7419, %v7421
    %v7423 = vrot.slane %v7416, %v7422
    %v7424 = vcombine.low %v7328, %v7335
    %v7426 = vunpack.c.l.s4 1983009808
    %v7427 = vunpack.c.0.s8 %v7426
    %v7428 = vlaneseq
    %v7429 = vshrl.u32 %v7428, 7
    %v7430 = vsub.s32 %v7427, %v7429
    %v7431 = vrot.slane %v7424, %v7430
    %v7432 = vcombine.low %v7338, %v7339
    %v7434 = vunpack.c.l.s4 1983009808
    %v7435 = vunpack.c.0.s8 %v7434
    %v7436 = vlaneseq
    %v7437 = vshrl.u32 %v7436, 7
    %v7438 = vsub.s32 %v7435, %v7437
    %v7439 = vrot.slane %v7432, %v7438
    %v7440 = vcombine.low %v7415, %v7423
    %v7441 = vcombine.high %v7415, %v7423
    %v7443 = vunpack.c.l.s4 1934713408
    %v7444 = vunpack.c.0.s8 %v7443
    %v7445 = vlaneseq
    %v7446 = vshrl.u32 %v7445, 7
    %v7447 = vsub.s32 %v7444, %v7446
    %v7448 = vrot.slane %v7440, %v7447
    %v7450 = vunpack.c.l.s4 1934713408
    %v7451 = vunpack.c.0.s8 %v7450
    %v7452 = vlaneseq
    %v7453 = vshrl.u32 %v7452, 7
    %v7454 = vsub.s32 %v7451, %v7453
    %v7455 = vrot.slane %v7441, %v7454
    %v7456 = vcombine.low %v7431, %v7439
    %v7457 = vcombine.high %v7431, %v7439
    %v7459 = vunpack.c.l.s4 1934713408
    %v7460 = vunpack.c.0.s8 %v7459
    %v7461 = vlaneseq
    %v7462 = vshrl.u32 %v7461, 7
    %v7463 = vsub.s32 %v7460, %v7462
    %v7464 = vrot.slane %v7456, %v7463
    %v7466 = vunpack.c.l.s4 1934713408
    %v7467 = vunpack.c.0.s8 %v7466
    %v7468 = vlaneseq
    %v7469 = vshrl.u32 %v7468, 7
    %v7470 = vsub.s32 %v7467, %v7469
    %v7471 = vrot.slane %v7457, %v7470
    %v7472 = vcombine.low %v7448, %v7464
    %v7473 = vcombine.high %v7448, %v7464
    %v7474 = vcombine.low %v7455, %v7471
    %v7475 = vcombine.high %v7455, %v7471
    %7478 = vrot.lane.b32.xlu0 %v7172, 120
    %v7479 = vpop.permute.xlu0 %7478
    %7480 = vrot.lane.b32.xlu0 %v7173, 120
    %v7481 = vpop.permute.xlu0 %7480
    %7482 = vrot.lane.b32.xlu0 %v7172, 112
    %v7483 = vpop.permute.xlu0 %7482
    %7484 = vrot.lane.b32.xlu0 %v7173, 112
    %v7485 = vpop.permute.xlu0 %7484
    %7486 = vrot.lane.b32.xlu0 %v7172, 104
    %v7487 = vpop.permute.xlu0 %7486
    %7488 = vrot.lane.b32.xlu0 %v7173, 104
    %v7489 = vpop.permute.xlu0 %7488
    %7490 = vrot.lane.b32.xlu0 %v7172, 64
    %v7491 = vpop.permute.xlu0 %7490
    %7492 = vrot.lane.b32.xlu0 %v7173, 64
    %v7493 = vpop.permute.xlu0 %7492
    %7494 = vrot.lane.b32.xlu0 %v7479, 64
    %v7495 = vpop.permute.xlu0 %7494
    %7496 = vrot.lane.b32.xlu0 %v7481, 64
    %v7497 = vpop.permute.xlu0 %7496
    %7498 = vrot.lane.b32.xlu0 %v7483, 64
    %v7499 = vpop.permute.xlu0 %7498
    %7500 = vrot.lane.b32.xlu0 %v7485, 64
    %v7501 = vpop.permute.xlu0 %7500
    %7502 = vrot.lane.b32.xlu0 %v7487, 64
    %v7503 = vpop.permute.xlu0 %7502
    %7504 = vrot.lane.b32.xlu0 %v7489, 64
    %v7505 = vpop.permute.xlu0 %7504
    %v7514 = vcombine.low %v7491, %v7499
    %v7515 = vcombine.high %v7491, %v7499
    %v7517 = vunpack.c.l.s4 1983009808
    %v7518 = vunpack.c.0.s8 %v7517
    %v7519 = vlaneseq
    %v7520 = vshrl.u32 %v7519, 7
    %v7521 = vsub.s32 %v7518, %v7520
    %v7522 = vrot.slane %v7514, %v7521
    %v7524 = vunpack.c.l.s4 1983009808
    %v7525 = vunpack.c.0.s8 %v7524
    %v7526 = vlaneseq
    %v7527 = vshrl.u32 %v7526, 7
    %v7528 = vsub.s32 %v7525, %v7527
    %v7529 = vrot.slane %v7515, %v7528
    %v7530 = vcombine.low %v7495, %v7503
    %v7531 = vcombine.high %v7495, %v7503
    %v7533 = vunpack.c.l.s4 1983009808
    %v7534 = vunpack.c.0.s8 %v7533
    %v7535 = vlaneseq
    %v7536 = vshrl.u32 %v7535, 7
    %v7537 = vsub.s32 %v7534, %v7536
    %v7538 = vrot.slane %v7530, %v7537
    %v7540 = vunpack.c.l.s4 1983009808
    %v7541 = vunpack.c.0.s8 %v7540
    %v7542 = vlaneseq
    %v7543 = vshrl.u32 %v7542, 7
    %v7544 = vsub.s32 %v7541, %v7543
    %v7545 = vrot.slane %v7531, %v7544
    %v7546 = vcombine.low %v7522, %v7538
    %v7547 = vcombine.high %v7522, %v7538
    %v7549 = vunpack.c.l.s4 1934713408
    %v7550 = vunpack.c.0.s8 %v7549
    %v7551 = vlaneseq
    %v7552 = vshrl.u32 %v7551, 7
    %v7553 = vsub.s32 %v7550, %v7552
    %v7554 = vrot.slane %v7546, %v7553
    %v7556 = vunpack.c.l.s4 1934713408
    %v7557 = vunpack.c.0.s8 %v7556
    %v7558 = vlaneseq
    %v7559 = vshrl.u32 %v7558, 7
    %v7560 = vsub.s32 %v7557, %v7559
    %v7561 = vrot.slane %v7547, %v7560
    %v7562 = vcombine.low %v7529, %v7545
    %v7563 = vcombine.high %v7529, %v7545
    %v7565 = vunpack.c.l.s4 1934713408
    %v7566 = vunpack.c.0.s8 %v7565
    %v7567 = vlaneseq
    %v7568 = vshrl.u32 %v7567, 7
    %v7569 = vsub.s32 %v7566, %v7568
    %v7570 = vrot.slane %v7562, %v7569
    %v7572 = vunpack.c.l.s4 1934713408
    %v7573 = vunpack.c.0.s8 %v7572
    %v7574 = vlaneseq
    %v7575 = vshrl.u32 %v7574, 7
    %v7576 = vsub.s32 %v7573, %v7575
    %v7577 = vrot.slane %v7563, %v7576
    %v7578 = vcombine.high %v7554, 0.0
    %v7579 = vcombine.high %v7561, 0.0
    %v7580 = vcombine.high %v7570, 0.0
    %v7581 = vcombine.high %v7577, 0.0
    %v7582 = vcombine.low %v7493, %v7501
    %v7583 = vcombine.high %v7493, %v7501
    %v7585 = vunpack.c.l.s4 1983009808
    %v7586 = vunpack.c.0.s8 %v7585
    %v7587 = vlaneseq
    %v7588 = vshrl.u32 %v7587, 7
    %v7589 = vsub.s32 %v7586, %v7588
    %v7590 = vrot.slane %v7582, %v7589
    %v7592 = vunpack.c.l.s4 1983009808
    %v7593 = vunpack.c.0.s8 %v7592
    %v7594 = vlaneseq
    %v7595 = vshrl.u32 %v7594, 7
    %v7596 = vsub.s32 %v7593, %v7595
    %v7597 = vrot.slane %v7583, %v7596
    %v7598 = vcombine.low %v7497, %v7505
    %v7599 = vcombine.high %v7497, %v7505
    %v7601 = vunpack.c.l.s4 1983009808
    %v7602 = vunpack.c.0.s8 %v7601
    %v7603 = vlaneseq
    %v7604 = vshrl.u32 %v7603, 7
    %v7605 = vsub.s32 %v7602, %v7604
    %v7606 = vrot.slane %v7598, %v7605
    %v7608 = vunpack.c.l.s4 1983009808
    %v7609 = vunpack.c.0.s8 %v7608
    %v7610 = vlaneseq
    %v7611 = vshrl.u32 %v7610, 7
    %v7612 = vsub.s32 %v7609, %v7611
    %v7613 = vrot.slane %v7599, %v7612
    %v7614 = vcombine.low %v7590, %v7606
    %v7615 = vcombine.high %v7590, %v7606
    %v7617 = vunpack.c.l.s4 1934713408
    %v7618 = vunpack.c.0.s8 %v7617
    %v7619 = vlaneseq
    %v7620 = vshrl.u32 %v7619, 7
    %v7621 = vsub.s32 %v7618, %v7620
    %v7622 = vrot.slane %v7614, %v7621
    %v7624 = vunpack.c.l.s4 1934713408
    %v7625 = vunpack.c.0.s8 %v7624
    %v7626 = vlaneseq
    %v7627 = vshrl.u32 %v7626, 7
    %v7628 = vsub.s32 %v7625, %v7627
    %v7629 = vrot.slane %v7615, %v7628
    %v7630 = vcombine.low %v7597, %v7613
    %v7631 = vcombine.high %v7597, %v7613
    %v7633 = vunpack.c.l.s4 1934713408
    %v7634 = vunpack.c.0.s8 %v7633
    %v7635 = vlaneseq
    %v7636 = vshrl.u32 %v7635, 7
    %v7637 = vsub.s32 %v7634, %v7636
    %v7638 = vrot.slane %v7630, %v7637
    %v7640 = vunpack.c.l.s4 1934713408
    %v7641 = vunpack.c.0.s8 %v7640
    %v7642 = vlaneseq
    %v7643 = vshrl.u32 %v7642, 7
    %v7644 = vsub.s32 %v7641, %v7643
    %v7645 = vrot.slane %v7631, %v7644
    %v7646 = vcombine.high %v7622, 0.0
    %v7647 = vcombine.high %v7629, 0.0
    %v7648 = vcombine.high %v7638, 0.0
    %v7649 = vcombine.high %v7645, 0.0
    %v7650 = vcombine.low %v7554, %v7561
    %v7652 = vunpack.c.l.s4 1983009808
    %v7653 = vunpack.c.0.s8 %v7652
    %v7654 = vlaneseq
    %v7655 = vshrl.u32 %v7654, 7
    %v7656 = vsub.s32 %v7653, %v7655
    %v7657 = vrot.slane %v7650, %v7656
    %v7658 = vcombine.low %v7578, %v7579
    %v7660 = vunpack.c.l.s4 1983009808
    %v7661 = vunpack.c.0.s8 %v7660
    %v7662 = vlaneseq
    %v7663 = vshrl.u32 %v7662, 7
    %v7664 = vsub.s32 %v7661, %v7663
    %v7665 = vrot.slane %v7658, %v7664
    %v7666 = vcombine.low %v7570, %v7577
    %v7668 = vunpack.c.l.s4 1983009808
    %v7669 = vunpack.c.0.s8 %v7668
    %v7670 = vlaneseq
    %v7671 = vshrl.u32 %v7670, 7
    %v7672 = vsub.s32 %v7669, %v7671
    %v7673 = vrot.slane %v7666, %v7672
    %v7674 = vcombine.low %v7580, %v7581
    %v7676 = vunpack.c.l.s4 1983009808
    %v7677 = vunpack.c.0.s8 %v7676
    %v7678 = vlaneseq
    %v7679 = vshrl.u32 %v7678, 7
    %v7680 = vsub.s32 %v7677, %v7679
    %v7681 = vrot.slane %v7674, %v7680
    %v7682 = vcombine.low %v7657, %v7665
    %v7683 = vcombine.high %v7657, %v7665
    %v7685 = vunpack.c.l.s4 1934713408
    %v7686 = vunpack.c.0.s8 %v7685
    %v7687 = vlaneseq
    %v7688 = vshrl.u32 %v7687, 7
    %v7689 = vsub.s32 %v7686, %v7688
    %v7690 = vrot.slane %v7682, %v7689
    %v7692 = vunpack.c.l.s4 1934713408
    %v7693 = vunpack.c.0.s8 %v7692
    %v7694 = vlaneseq
    %v7695 = vshrl.u32 %v7694, 7
    %v7696 = vsub.s32 %v7693, %v7695
    %v7697 = vrot.slane %v7683, %v7696
    %v7698 = vcombine.low %v7673, %v7681
    %v7699 = vcombine.high %v7673, %v7681
    %v7701 = vunpack.c.l.s4 1934713408
    %v7702 = vunpack.c.0.s8 %v7701
    %v7703 = vlaneseq
    %v7704 = vshrl.u32 %v7703, 7
    %v7705 = vsub.s32 %v7702, %v7704
    %v7706 = vrot.slane %v7698, %v7705
    %v7708 = vunpack.c.l.s4 1934713408
    %v7709 = vunpack.c.0.s8 %v7708
    %v7710 = vlaneseq
    %v7711 = vshrl.u32 %v7710, 7
    %v7712 = vsub.s32 %v7709, %v7711
    %v7713 = vrot.slane %v7699, %v7712
    %v7714 = vcombine.low %v7690, %v7706
    %v7715 = vcombine.high %v7690, %v7706
    %v7716 = vcombine.low %v7697, %v7713
    %v7717 = vcombine.high %v7697, %v7713
    %v7718 = vcombine.low %v7622, %v7629
    %v7720 = vunpack.c.l.s4 1983009808
    %v7721 = vunpack.c.0.s8 %v7720
    %v7722 = vlaneseq
    %v7723 = vshrl.u32 %v7722, 7
    %v7724 = vsub.s32 %v7721, %v7723
    %v7725 = vrot.slane %v7718, %v7724
    %v7726 = vcombine.low %v7646, %v7647
    %v7728 = vunpack.c.l.s4 1983009808
    %v7729 = vunpack.c.0.s8 %v7728
    %v7730 = vlaneseq
    %v7731 = vshrl.u32 %v7730, 7
    %v7732 = vsub.s32 %v7729, %v7731
    %v7733 = vrot.slane %v7726, %v7732
    %v7734 = vcombine.low %v7638, %v7645
    %v7736 = vunpack.c.l.s4 1983009808
    %v7737 = vunpack.c.0.s8 %v7736
    %v7738 = vlaneseq
    %v7739 = vshrl.u32 %v7738, 7
    %v7740 = vsub.s32 %v7737, %v7739
    %v7741 = vrot.slane %v7734, %v7740
    %v7742 = vcombine.low %v7648, %v7649
    %v7744 = vunpack.c.l.s4 1983009808
    %v7745 = vunpack.c.0.s8 %v7744
    %v7746 = vlaneseq
    %v7747 = vshrl.u32 %v7746, 7
    %v7748 = vsub.s32 %v7745, %v7747
    %v7749 = vrot.slane %v7742, %v7748
    %v7750 = vcombine.low %v7725, %v7733
    %v7751 = vcombine.high %v7725, %v7733
    %v7753 = vunpack.c.l.s4 1934713408
    %v7754 = vunpack.c.0.s8 %v7753
    %v7755 = vlaneseq
    %v7756 = vshrl.u32 %v7755, 7
    %v7757 = vsub.s32 %v7754, %v7756
    %v7758 = vrot.slane %v7750, %v7757
    %v7760 = vunpack.c.l.s4 1934713408
    %v7761 = vunpack.c.0.s8 %v7760
    %v7762 = vlaneseq
    %v7763 = vshrl.u32 %v7762, 7
    %v7764 = vsub.s32 %v7761, %v7763
    %v7765 = vrot.slane %v7751, %v7764
    %v7766 = vcombine.low %v7741, %v7749
    %v7767 = vcombine.high %v7741, %v7749
    %v7769 = vunpack.c.l.s4 1934713408
    %v7770 = vunpack.c.0.s8 %v7769
    %v7771 = vlaneseq
    %v7772 = vshrl.u32 %v7771, 7
    %v7773 = vsub.s32 %v7770, %v7772
    %v7774 = vrot.slane %v7766, %v7773
    %v7776 = vunpack.c.l.s4 1934713408
    %v7777 = vunpack.c.0.s8 %v7776
    %v7778 = vlaneseq
    %v7779 = vshrl.u32 %v7778, 7
    %v7780 = vsub.s32 %v7777, %v7779
    %v7781 = vrot.slane %v7767, %v7780
    %v7782 = vcombine.low %v7758, %v7774
    %v7783 = vcombine.high %v7758, %v7774
    %v7784 = vcombine.low %v7765, %v7781
    %v7785 = vcombine.high %v7765, %v7781
    %7788 = vrot.lane.b32.xlu0 %v7182, 120
    %v7789 = vpop.permute.xlu0 %7788
    %7790 = vrot.lane.b32.xlu0 %v7183, 120
    %v7791 = vpop.permute.xlu0 %7790
    %7792 = vrot.lane.b32.xlu0 %v7182, 112
    %v7793 = vpop.permute.xlu0 %7792
    %7794 = vrot.lane.b32.xlu0 %v7183, 112
    %v7795 = vpop.permute.xlu0 %7794
    %7796 = vrot.lane.b32.xlu0 %v7182, 104
    %v7797 = vpop.permute.xlu0 %7796
    %7798 = vrot.lane.b32.xlu0 %v7183, 104
    %v7799 = vpop.permute.xlu0 %7798
    %7800 = vrot.lane.b32.xlu0 %v7182, 32
    %v7801 = vpop.permute.xlu0 %7800
    %7802 = vrot.lane.b32.xlu0 %v7183, 32
    %v7803 = vpop.permute.xlu0 %7802
    %7804 = vrot.lane.b32.xlu0 %v7789, 32
    %v7805 = vpop.permute.xlu0 %7804
    %7806 = vrot.lane.b32.xlu0 %v7791, 32
    %v7807 = vpop.permute.xlu0 %7806
    %7808 = vrot.lane.b32.xlu0 %v7793, 32
    %v7809 = vpop.permute.xlu0 %7808
    %7810 = vrot.lane.b32.xlu0 %v7795, 32
    %v7811 = vpop.permute.xlu0 %7810
    %7812 = vrot.lane.b32.xlu0 %v7797, 32
    %v7813 = vpop.permute.xlu0 %7812
    %7814 = vrot.lane.b32.xlu0 %v7799, 32
    %v7815 = vpop.permute.xlu0 %7814
    %v7824 = vcombine.low %v7801, %v7809
    %v7825 = vcombine.high %v7801, %v7809
    %v7827 = vunpack.c.l.s4 1983009808
    %v7828 = vunpack.c.0.s8 %v7827
    %v7829 = vlaneseq
    %v7830 = vshrl.u32 %v7829, 7
    %v7831 = vsub.s32 %v7828, %v7830
    %v7832 = vrot.slane %v7824, %v7831
    %v7834 = vunpack.c.l.s4 1983009808
    %v7835 = vunpack.c.0.s8 %v7834
    %v7836 = vlaneseq
    %v7837 = vshrl.u32 %v7836, 7
    %v7838 = vsub.s32 %v7835, %v7837
    %v7839 = vrot.slane %v7825, %v7838
    %v7840 = vcombine.low %v7805, %v7813
    %v7841 = vcombine.high %v7805, %v7813
    %v7843 = vunpack.c.l.s4 1983009808
    %v7844 = vunpack.c.0.s8 %v7843
    %v7845 = vlaneseq
    %v7846 = vshrl.u32 %v7845, 7
    %v7847 = vsub.s32 %v7844, %v7846
    %v7848 = vrot.slane %v7840, %v7847
    %v7850 = vunpack.c.l.s4 1983009808
    %v7851 = vunpack.c.0.s8 %v7850
    %v7852 = vlaneseq
    %v7853 = vshrl.u32 %v7852, 7
    %v7854 = vsub.s32 %v7851, %v7853
    %v7855 = vrot.slane %v7841, %v7854
    %v7856 = vcombine.low %v7832, %v7848
    %v7857 = vcombine.high %v7832, %v7848
    %v7859 = vunpack.c.l.s4 1934713408
    %v7860 = vunpack.c.0.s8 %v7859
    %v7861 = vlaneseq
    %v7862 = vshrl.u32 %v7861, 7
    %v7863 = vsub.s32 %v7860, %v7862
    %v7864 = vrot.slane %v7856, %v7863
    %v7866 = vunpack.c.l.s4 1934713408
    %v7867 = vunpack.c.0.s8 %v7866
    %v7868 = vlaneseq
    %v7869 = vshrl.u32 %v7868, 7
    %v7870 = vsub.s32 %v7867, %v7869
    %v7871 = vrot.slane %v7857, %v7870
    %v7872 = vcombine.low %v7839, %v7855
    %v7873 = vcombine.high %v7839, %v7855
    %v7875 = vunpack.c.l.s4 1934713408
    %v7876 = vunpack.c.0.s8 %v7875
    %v7877 = vlaneseq
    %v7878 = vshrl.u32 %v7877, 7
    %v7879 = vsub.s32 %v7876, %v7878
    %v7880 = vrot.slane %v7872, %v7879
    %v7882 = vunpack.c.l.s4 1934713408
    %v7883 = vunpack.c.0.s8 %v7882
    %v7884 = vlaneseq
    %v7885 = vshrl.u32 %v7884, 7
    %v7886 = vsub.s32 %v7883, %v7885
    %v7887 = vrot.slane %v7873, %v7886
    %v7888 = vcombine.high %v7864, 0.0
    %v7889 = vcombine.high %v7871, 0.0
    %v7890 = vcombine.high %v7880, 0.0
    %v7891 = vcombine.high %v7887, 0.0
    %v7892 = vcombine.low %v7803, %v7811
    %v7893 = vcombine.high %v7803, %v7811
    %v7895 = vunpack.c.l.s4 1983009808
    %v7896 = vunpack.c.0.s8 %v7895
    %v7897 = vlaneseq
    %v7898 = vshrl.u32 %v7897, 7
    %v7899 = vsub.s32 %v7896, %v7898
    %v7900 = vrot.slane %v7892, %v7899
    %v7902 = vunpack.c.l.s4 1983009808
    %v7903 = vunpack.c.0.s8 %v7902
    %v7904 = vlaneseq
    %v7905 = vshrl.u32 %v7904, 7
    %v7906 = vsub.s32 %v7903, %v7905
    %v7907 = vrot.slane %v7893, %v7906
    %v7908 = vcombine.low %v7807, %v7815
    %v7909 = vcombine.high %v7807, %v7815
    %v7911 = vunpack.c.l.s4 1983009808
    %v7912 = vunpack.c.0.s8 %v7911
    %v7913 = vlaneseq
    %v7914 = vshrl.u32 %v7913, 7
    %v7915 = vsub.s32 %v7912, %v7914
    %v7916 = vrot.slane %v7908, %v7915
    %v7918 = vunpack.c.l.s4 1983009808
    %v7919 = vunpack.c.0.s8 %v7918
    %v7920 = vlaneseq
    %v7921 = vshrl.u32 %v7920, 7
    %v7922 = vsub.s32 %v7919, %v7921
    %v7923 = vrot.slane %v7909, %v7922
    %v7924 = vcombine.low %v7900, %v7916
    %v7925 = vcombine.high %v7900, %v7916
    %v7927 = vunpack.c.l.s4 1934713408
    %v7928 = vunpack.c.0.s8 %v7927
    %v7929 = vlaneseq
    %v7930 = vshrl.u32 %v7929, 7
    %v7931 = vsub.s32 %v7928, %v7930
    %v7932 = vrot.slane %v7924, %v7931
    %v7934 = vunpack.c.l.s4 1934713408
    %v7935 = vunpack.c.0.s8 %v7934
    %v7936 = vlaneseq
    %v7937 = vshrl.u32 %v7936, 7
    %v7938 = vsub.s32 %v7935, %v7937
    %v7939 = vrot.slane %v7925, %v7938
    %v7940 = vcombine.low %v7907, %v7923
    %v7941 = vcombine.high %v7907, %v7923
    %v7943 = vunpack.c.l.s4 1934713408
    %v7944 = vunpack.c.0.s8 %v7943
    %v7945 = vlaneseq
    %v7946 = vshrl.u32 %v7945, 7
    %v7947 = vsub.s32 %v7944, %v7946
    %v7948 = vrot.slane %v7940, %v7947
    %v7950 = vunpack.c.l.s4 1934713408
    %v7951 = vunpack.c.0.s8 %v7950
    %v7952 = vlaneseq
    %v7953 = vshrl.u32 %v7952, 7
    %v7954 = vsub.s32 %v7951, %v7953
    %v7955 = vrot.slane %v7941, %v7954
    %v7956 = vcombine.high %v7932, 0.0
    %v7957 = vcombine.high %v7939, 0.0
    %v7958 = vcombine.high %v7948, 0.0
    %v7959 = vcombine.high %v7955, 0.0
    %v7960 = vcombine.low %v7864, %v7871
    %v7962 = vunpack.c.l.s4 1983009808
    %v7963 = vunpack.c.0.s8 %v7962
    %v7964 = vlaneseq
    %v7965 = vshrl.u32 %v7964, 7
    %v7966 = vsub.s32 %v7963, %v7965
    %v7967 = vrot.slane %v7960, %v7966
    %v7968 = vcombine.low %v7888, %v7889
    %v7970 = vunpack.c.l.s4 1983009808
    %v7971 = vunpack.c.0.s8 %v7970
    %v7972 = vlaneseq
    %v7973 = vshrl.u32 %v7972, 7
    %v7974 = vsub.s32 %v7971, %v7973
    %v7975 = vrot.slane %v7968, %v7974
    %v7976 = vcombine.low %v7880, %v7887
    %v7978 = vunpack.c.l.s4 1983009808
    %v7979 = vunpack.c.0.s8 %v7978
    %v7980 = vlaneseq
    %v7981 = vshrl.u32 %v7980, 7
    %v7982 = vsub.s32 %v7979, %v7981
    %v7983 = vrot.slane %v7976, %v7982
    %v7984 = vcombine.low %v7890, %v7891
    %v7986 = vunpack.c.l.s4 1983009808
    %v7987 = vunpack.c.0.s8 %v7986
    %v7988 = vlaneseq
    %v7989 = vshrl.u32 %v7988, 7
    %v7990 = vsub.s32 %v7987, %v7989
    %v7991 = vrot.slane %v7984, %v7990
    %v7992 = vcombine.low %v7967, %v7975
    %v7993 = vcombine.high %v7967, %v7975
    %v7995 = vunpack.c.l.s4 1934713408
    %v7996 = vunpack.c.0.s8 %v7995
    %v7997 = vlaneseq
    %v7998 = vshrl.u32 %v7997, 7
    %v7999 = vsub.s32 %v7996, %v7998
    %v8000 = vrot.slane %v7992, %v7999
    %v8002 = vunpack.c.l.s4 1934713408
    %v8003 = vunpack.c.0.s8 %v8002
    %v8004 = vlaneseq
    %v8005 = vshrl.u32 %v8004, 7
    %v8006 = vsub.s32 %v8003, %v8005
    %v8007 = vrot.slane %v7993, %v8006
    %v8008 = vcombine.low %v7983, %v7991
    %v8009 = vcombine.high %v7983, %v7991
    %v8011 = vunpack.c.l.s4 1934713408
    %v8012 = vunpack.c.0.s8 %v8011
    %v8013 = vlaneseq
    %v8014 = vshrl.u32 %v8013, 7
    %v8015 = vsub.s32 %v8012, %v8014
    %v8016 = vrot.slane %v8008, %v8015
    %v8018 = vunpack.c.l.s4 1934713408
    %v8019 = vunpack.c.0.s8 %v8018
    %v8020 = vlaneseq
    %v8021 = vshrl.u32 %v8020, 7
    %v8022 = vsub.s32 %v8019, %v8021
    %v8023 = vrot.slane %v8009, %v8022
    %v8024 = vcombine.low %v8000, %v8016
    %v8025 = vcombine.high %v8000, %v8016
    %v8026 = vcombine.low %v8007, %v8023
    %v8027 = vcombine.high %v8007, %v8023
    %v8028 = vcombine.low %v7932, %v7939
    %v8030 = vunpack.c.l.s4 1983009808
    %v8031 = vunpack.c.0.s8 %v8030
    %v8032 = vlaneseq
    %v8033 = vshrl.u32 %v8032, 7
    %v8034 = vsub.s32 %v8031, %v8033
    %v8035 = vrot.slane %v8028, %v8034
    %v8036 = vcombine.low %v7956, %v7957
    %v8038 = vunpack.c.l.s4 1983009808
    %v8039 = vunpack.c.0.s8 %v8038
    %v8040 = vlaneseq
    %v8041 = vshrl.u32 %v8040, 7
    %v8042 = vsub.s32 %v8039, %v8041
    %v8043 = vrot.slane %v8036, %v8042
    %v8044 = vcombine.low %v7948, %v7955
    %v8046 = vunpack.c.l.s4 1983009808
    %v8047 = vunpack.c.0.s8 %v8046
    %v8048 = vlaneseq
    %v8049 = vshrl.u32 %v8048, 7
    %v8050 = vsub.s32 %v8047, %v8049
    %v8051 = vrot.slane %v8044, %v8050
    %v8052 = vcombine.low %v7958, %v7959
    %v8054 = vunpack.c.l.s4 1983009808
    %v8055 = vunpack.c.0.s8 %v8054
    %v8056 = vlaneseq
    %v8057 = vshrl.u32 %v8056, 7
    %v8058 = vsub.s32 %v8055, %v8057
    %v8059 = vrot.slane %v8052, %v8058
    %v8060 = vcombine.low %v8035, %v8043
    %v8061 = vcombine.high %v8035, %v8043
    %v8063 = vunpack.c.l.s4 1934713408
    %v8064 = vunpack.c.0.s8 %v8063
    %v8065 = vlaneseq
    %v8066 = vshrl.u32 %v8065, 7
    %v8067 = vsub.s32 %v8064, %v8066
    %v8068 = vrot.slane %v8060, %v8067
    %v8070 = vunpack.c.l.s4 1934713408
    %v8071 = vunpack.c.0.s8 %v8070
    %v8072 = vlaneseq
    %v8073 = vshrl.u32 %v8072, 7
    %v8074 = vsub.s32 %v8071, %v8073
    %v8075 = vrot.slane %v8061, %v8074
    %v8076 = vcombine.low %v8051, %v8059
    %v8077 = vcombine.high %v8051, %v8059
    %v8079 = vunpack.c.l.s4 1934713408
    %v8080 = vunpack.c.0.s8 %v8079
    %v8081 = vlaneseq
    %v8082 = vshrl.u32 %v8081, 7
    %v8083 = vsub.s32 %v8080, %v8082
    %v8084 = vrot.slane %v8076, %v8083
    %v8086 = vunpack.c.l.s4 1934713408
    %v8087 = vunpack.c.0.s8 %v8086
    %v8088 = vlaneseq
    %v8089 = vshrl.u32 %v8088, 7
    %v8090 = vsub.s32 %v8087, %v8089
    %v8091 = vrot.slane %v8077, %v8090
    %v8092 = vcombine.low %v8068, %v8084
    %v8093 = vcombine.high %v8068, %v8084
    %v8094 = vcombine.low %v8075, %v8091
    %v8095 = vcombine.high %v8075, %v8091
    %v8097 = vsel %vm67, %v7404, 0
    %v8100 = vsel %vm67, %v7472, 0
    %v8103 = vsel %vm67, %v7714, 0
    %v8106 = vsel %vm67, %v7782, 0
    %8108 = vmatprep.subr.mxu0 0.0
    %8109 = vmatpush1.xpose.msra.mxu0 %v8103
    %8110 = vmatprep.subr.mxu0 0.0
    %8111 = vmatpush1.xpose.msra.mxu0 %v8106
    %8112 = vmatprep.subr.mxu0 0.0
    %8113 = vmatpush1.xpose.msra.mxu0 0.0
    %8114 = vmatprep.subr.mxu0 0.0
    %8115 = vmatpush1.xpose.msra.mxu0 0.0
    %8116 = vmatprep.subr.mxu0 0.0
    %8117 = vmatpush1.xpose.msra.mxu0 0.0
    %8118 = vmatprep.subr.mxu0 0.0
    %8119 = vmatpush1.xpose.msra.mxu0 0.0
    %8120 = vmatprep.subr.mxu0 0.0
    %8121 = vmatpush1.xpose.msra.mxu0 0.0
    %8122 = vmatprep.subr.mxu0 0.0
    %8123 = vmatpush1.xpose.msra.mxu0 0.0
    %8124 = vmatprep.subr.mxu0 0.0
    %8125 = vmatpush1.xpose.msra.mxu0 0.0
    %8126 = vmatprep.subr.mxu0 0.0
    %8127 = vmatpush1.xpose.msra.mxu0 0.0
    %8128 = vmatprep.subr.mxu0 0.0
    %8129 = vmatpush1.xpose.msra.mxu0 0.0
    %8130 = vmatprep.subr.mxu0 0.0
    %8131 = vmatpush1.xpose.msra.mxu0 0.0
    %8132 = vmatprep.subr.mxu0 0.0
    %8133 = vmatpush1.xpose.msra.mxu0 0.0
    %8134 = vmatprep.subr.mxu0 0.0
    %8135 = vmatpush1.xpose.msra.mxu0 0.0
    %8136 = vmatprep.subr.mxu0 0.0
    %8137 = vmatpush1.xpose.msra.mxu0 0.0
    %8138 = vmatprep.subr.mxu0 0.0
    %8139 = vmatpush1.xpose.msra.mxu0 0.0
    %8140 = vmatprep.subr.mxu0 0.0
    %8141 = vmatpush1.xpose.msra.mxu0 0.0
    %8142 = vmatprep.subr.mxu0 0.0
    %8143 = vmatpush1.xpose.msra.mxu0 0.0
    %8144 = vmatprep.subr.mxu0 0.0
    %8145 = vmatpush1.xpose.msra.mxu0 0.0
    %8146 = vmatprep.subr.mxu0 0.0
    %8147 = vmatpush1.xpose.msra.mxu0 0.0
    %8148 = vmatprep.subr.mxu0 0.0
    %8149 = vmatpush1.xpose.msra.mxu0 0.0
    %8150 = vmatprep.subr.mxu0 0.0
    %8151 = vmatpush1.xpose.msra.mxu0 0.0
    %8152 = vmatprep.subr.mxu0 0.0
    %8153 = vmatpush1.xpose.msra.mxu0 0.0
    %8154 = vmatprep.subr.mxu0 0.0
    %8155 = vmatpush1.xpose.msra.mxu0 0.0
    %8156 = vmatprep.subr.mxu0 0.0
    %8157 = vmatpush1.xpose.msra.mxu0 0.0
    %8158 = vmatprep.subr.mxu0 0.0
    %8159 = vmatpush1.xpose.msra.mxu0 0.0
    %8160 = vmatprep.subr.mxu0 0.0
    %8161 = vmatpush1.xpose.msra.mxu0 0.0
    %8162 = vmatprep.subr.mxu0 0.0
    %8163 = vmatpush1.xpose.msra.mxu0 0.0
    %8164 = vmatprep.subr.mxu0 0.0
    %8165 = vmatpush1.xpose.msra.mxu0 0.0
    %8166 = vmatprep.subr.mxu0 0.0
    %8167 = vmatpush1.xpose.msra.mxu0 0.0
    %8168 = vmatprep.subr.mxu0 0.0
    %8169 = vmatpush1.xpose.msra.mxu0 0.0
    %8170 = vmatprep.subr.mxu0 0.0
    %8171 = vmatpush1.xpose.msra.mxu0 0.0
    %8172 = vmatprep.mubr.f32.mxu0 0.0
    %8173 = vmatmul.mubr.f32.gmra.mrb[0].mxu0 %v8097
    %v8174 = vpop.f32.mrb[0].mxu0
    %v8175 = vadd.f32 %v88, %v8174
    %v8176 = vpop.f32.mrb[0].mxu0
    %8177 = vmatprep.mubr.f32.mxu0 0.0
    %8178 = vmatmul.mubr.f32.gmra.mrb[0].mxu0 %v8100
    %v8179 = vpop.f32.mrb[0].mxu0
    %v8180 = vadd.f32 %v89, %v8179
    %v8181 = vpop.f32.mrb[0].mxu0
    %8182 = vdwg.mxu0
    %v8184 = vsel %vm67, %v7405, 0
    %v8187 = vsel %vm67, %v7473, 0
    %v8190 = vsel %vm67, %v7715, 0
    %v8193 = vsel %vm67, %v7783, 0
    %8195 = vmatprep.subr.mxu0 0.0
    %8196 = vmatpush1.xpose.msra.mxu0 %v8190
    %8197 = vmatprep.subr.mxu0 0.0
    %8198 = vmatpush1.xpose.msra.mxu0 %v8193
    %8199 = vmatprep.subr.mxu0 0.0
    %8200 = vmatpush1.xpose.msra.mxu0 0.0
    %8201 = vmatprep.subr.mxu0 0.0
    %8202 = vmatpush1.xpose.msra.mxu0 0.0
    %8203 = vmatprep.subr.mxu0 0.0
    %8204 = vmatpush1.xpose.msra.mxu0 0.0
    %8205 = vmatprep.subr.mxu0 0.0
    %8206 = vmatpush1.xpose.msra.mxu0 0.0
    %8207 = vmatprep.subr.mxu0 0.0
    %8208 = vmatpush1.xpose.msra.mxu0 0.0
    %8209 = vmatprep.subr.mxu0 0.0
    %8210 = vmatpush1.xpose.msra.mxu0 0.0
    %8211 = vmatprep.subr.mxu0 0.0
    %8212 = vmatpush1.xpose.msra.mxu0 0.0
    %8213 = vmatprep.subr.mxu0 0.0
    %8214 = vmatpush1.xpose.msra.mxu0 0.0
    %8215 = vmatprep.subr.mxu0 0.0
    %8216 = vmatpush1.xpose.msra.mxu0 0.0
    %8217 = vmatprep.subr.mxu0 0.0
    %8218 = vmatpush1.xpose.msra.mxu0 0.0
    %8219 = vmatprep.subr.mxu0 0.0
    %8220 = vmatpush1.xpose.msra.mxu0 0.0
    %8221 = vmatprep.subr.mxu0 0.0
    %8222 = vmatpush1.xpose.msra.mxu0 0.0
    %8223 = vmatprep.subr.mxu0 0.0
    %8224 = vmatpush1.xpose.msra.mxu0 0.0
    %8225 = vmatprep.subr.mxu0 0.0
    %8226 = vmatpush1.xpose.msra.mxu0 0.0
    %8227 = vmatprep.subr.mxu0 0.0
    %8228 = vmatpush1.xpose.msra.mxu0 0.0
    %8229 = vmatprep.subr.mxu0 0.0
    %8230 = vmatpush1.xpose.msra.mxu0 0.0
    %8231 = vmatprep.subr.mxu0 0.0
    %8232 = vmatpush1.xpose.msra.mxu0 0.0
    %8233 = vmatprep.subr.mxu0 0.0
    %8234 = vmatpush1.xpose.msra.mxu0 0.0
    %8235 = vmatprep.subr.mxu0 0.0
    %8236 = vmatpush1.xpose.msra.mxu0 0.0
    %8237 = vmatprep.subr.mxu0 0.0
    %8238 = vmatpush1.xpose.msra.mxu0 0.0
    %8239 = vmatprep.subr.mxu0 0.0
    %8240 = vmatpush1.xpose.msra.mxu0 0.0
    %8241 = vmatprep.subr.mxu0 0.0
    %8242 = vmatpush1.xpose.msra.mxu0 0.0
    %8243 = vmatprep.subr.mxu0 0.0
    %8244 = vmatpush1.xpose.msra.mxu0 0.0
    %8245 = vmatprep.subr.mxu0 0.0
    %8246 = vmatpush1.xpose.msra.mxu0 0.0
    %8247 = vmatprep.subr.mxu0 0.0
    %8248 = vmatpush1.xpose.msra.mxu0 0.0
    %8249 = vmatprep.subr.mxu0 0.0
    %8250 = vmatpush1.xpose.msra.mxu0 0.0
    %8251 = vmatprep.subr.mxu0 0.0
    %8252 = vmatpush1.xpose.msra.mxu0 0.0
    %8253 = vmatprep.subr.mxu0 0.0
    %8254 = vmatpush1.xpose.msra.mxu0 0.0
    %8255 = vmatprep.subr.mxu0 0.0
    %8256 = vmatpush1.xpose.msra.mxu0 0.0
    %8257 = vmatprep.subr.mxu0 0.0
    %8258 = vmatpush1.xpose.msra.mxu0 0.0
    %8259 = vmatprep.mubr.f32.mxu0 0.0
    %8260 = vmatmul.mubr.f32.gmra.mrb[0].mxu0 %v8184
    %v8261 = vpop.f32.mrb[0].mxu0
    %v8262 = vadd.f32 %v88, %v8261
    %v8263 = vpop.f32.mrb[0].mxu0
    %8264 = vmatprep.mubr.f32.mxu0 0.0
    %8265 = vmatmul.mubr.f32.gmra.mrb[0].mxu0 %v8187
    %v8266 = vpop.f32.mrb[0].mxu0
    %v8267 = vadd.f32 %v89, %v8266
    %v8268 = vpop.f32.mrb[0].mxu0
    %8269 = vdwg.mxu0
    %v8271 = vsel %vm67, %v7406, 0
    %v8274 = vsel %vm67, %v7474, 0
    %v8277 = vsel %vm67, %v7716, 0
    %v8280 = vsel %vm67, %v7784, 0
    %8282 = vmatprep.subr.mxu0 0.0
    %8283 = vmatpush1.xpose.msra.mxu0 %v8277
    %8284 = vmatprep.subr.mxu0 0.0
    %8285 = vmatpush1.xpose.msra.mxu0 %v8280
    %8286 = vmatprep.subr.mxu0 0.0
    %8287 = vmatpush1.xpose.msra.mxu0 0.0
    %8288 = vmatprep.subr.mxu0 0.0
    %8289 = vmatpush1.xpose.msra.mxu0 0.0
    %8290 = vmatprep.subr.mxu0 0.0
    %8291 = vmatpush1.xpose.msra.mxu0 0.0
    %8292 = vmatprep.subr.mxu0 0.0
    %8293 = vmatpush1.xpose.msra.mxu0 0.0
    %8294 = vmatprep.subr.mxu0 0.0
    %8295 = vmatpush1.xpose.msra.mxu0 0.0
    %8296 = vmatprep.subr.mxu0 0.0
    %8297 = vmatpush1.xpose.msra.mxu0 0.0
    %8298 = vmatprep.subr.mxu0 0.0
    %8299 = vmatpush1.xpose.msra.mxu0 0.0
    %8300 = vmatprep.subr.mxu0 0.0
    %8301 = vmatpush1.xpose.msra.mxu0 0.0
    %8302 = vmatprep.subr.mxu0 0.0
    %8303 = vmatpush1.xpose.msra.mxu0 0.0
    %8304 = vmatprep.subr.mxu0 0.0
    %8305 = vmatpush1.xpose.msra.mxu0 0.0
    %8306 = vmatprep.subr.mxu0 0.0
    %8307 = vmatpush1.xpose.msra.mxu0 0.0
    %8308 = vmatprep.subr.mxu0 0.0
    %8309 = vmatpush1.xpose.msra.mxu0 0.0
    %8310 = vmatprep.subr.mxu0 0.0
    %8311 = vmatpush1.xpose.msra.mxu0 0.0
    %8312 = vmatprep.subr.mxu0 0.0
    %8313 = vmatpush1.xpose.msra.mxu0 0.0
    %8314 = vmatprep.subr.mxu0 0.0
    %8315 = vmatpush1.xpose.msra.mxu0 0.0
    %8316 = vmatprep.subr.mxu0 0.0
    %8317 = vmatpush1.xpose.msra.mxu0 0.0
    %8318 = vmatprep.subr.mxu0 0.0
    %8319 = vmatpush1.xpose.msra.mxu0 0.0
    %8320 = vmatprep.subr.mxu0 0.0
    %8321 = vmatpush1.xpose.msra.mxu0 0.0
    %8322 = vmatprep.subr.mxu0 0.0
    %8323 = vmatpush1.xpose.msra.mxu0 0.0
    %8324 = vmatprep.subr.mxu0 0.0
    %8325 = vmatpush1.xpose.msra.mxu0 0.0
    %8326 = vmatprep.subr.mxu0 0.0
    %8327 = vmatpush1.xpose.msra.mxu0 0.0
    %8328 = vmatprep.subr.mxu0 0.0
    %8329 = vmatpush1.xpose.msra.mxu0 0.0
    %8330 = vmatprep.subr.mxu0 0.0
    %8331 = vmatpush1.xpose.msra.mxu0 0.0
    %8332 = vmatprep.subr.mxu0 0.0
    %8333 = vmatpush1.xpose.msra.mxu0 0.0
    %8334 = vmatprep.subr.mxu0 0.0
    %8335 = vmatpush1.xpose.msra.mxu0 0.0
    %8336 = vmatprep.subr.mxu0 0.0
    %8337 = vmatpush1.xpose.msra.mxu0 0.0
    %8338 = vmatprep.subr.mxu0 0.0
    %8339 = vmatpush1.xpose.msra.mxu0 0.0
    %8340 = vmatprep.subr.mxu0 0.0
    %8341 = vmatpush1.xpose.msra.mxu0 0.0
    %8342 = vmatprep.subr.mxu0 0.0
    %8343 = vmatpush1.xpose.msra.mxu0 0.0
    %8344 = vmatprep.subr.mxu0 0.0
    %8345 = vmatpush1.xpose.msra.mxu0 0.0
    %8346 = vmatprep.mubr.f32.mxu0 0.0
    %8347 = vmatmul.mubr.f32.gmra.mrb[0].mxu0 %v8271
    %v8348 = vpop.f32.mrb[0].mxu0
    %v8349 = vadd.f32 %v88, %v8348
    %v8350 = vpop.f32.mrb[0].mxu0
    %8351 = vmatprep.mubr.f32.mxu0 0.0
    %8352 = vmatmul.mubr.f32.gmra.mrb[0].mxu0 %v8274
    %v8353 = vpop.f32.mrb[0].mxu0
    %v8354 = vadd.f32 %v89, %v8353
    %v8355 = vpop.f32.mrb[0].mxu0
    %8356 = vdwg.mxu0
    %v8358 = vsel %vm67, %v7407, 0
    %v8361 = vsel %vm67, %v7475, 0
    %v8364 = vsel %vm67, %v7717, 0
    %v8367 = vsel %vm67, %v7785, 0
    %8369 = vmatprep.subr.mxu0 0.0
    %8370 = vmatpush1.xpose.msra.mxu0 %v8364
    %8371 = vmatprep.subr.mxu0 0.0
    %8372 = vmatpush1.xpose.msra.mxu0 %v8367
    %8373 = vmatprep.subr.mxu0 0.0
    %8374 = vmatpush1.xpose.msra.mxu0 0.0
    %8375 = vmatprep.subr.mxu0 0.0
    %8376 = vmatpush1.xpose.msra.mxu0 0.0
    %8377 = vmatprep.subr.mxu0 0.0
    %8378 = vmatpush1.xpose.msra.mxu0 0.0
    %8379 = vmatprep.subr.mxu0 0.0
    %8380 = vmatpush1.xpose.msra.mxu0 0.0
    %8381 = vmatprep.subr.mxu0 0.0
    %8382 = vmatpush1.xpose.msra.mxu0 0.0
    %8383 = vmatprep.subr.mxu0 0.0
    %8384 = vmatpush1.xpose.msra.mxu0 0.0
    %8385 = vmatprep.subr.mxu0 0.0
    %8386 = vmatpush1.xpose.msra.mxu0 0.0
    %8387 = vmatprep.subr.mxu0 0.0
    %8388 = vmatpush1.xpose.msra.mxu0 0.0
    %8389 = vmatprep.subr.mxu0 0.0
    %8390 = vmatpush1.xpose.msra.mxu0 0.0
    %8391 = vmatprep.subr.mxu0 0.0
    %8392 = vmatpush1.xpose.msra.mxu0 0.0
    %8393 = vmatprep.subr.mxu0 0.0
    %8394 = vmatpush1.xpose.msra.mxu0 0.0
    %8395 = vmatprep.subr.mxu0 0.0
    %8396 = vmatpush1.xpose.msra.mxu0 0.0
    %8397 = vmatprep.subr.mxu0 0.0
    %8398 = vmatpush1.xpose.msra.mxu0 0.0
    %8399 = vmatprep.subr.mxu0 0.0
    %8400 = vmatpush1.xpose.msra.mxu0 0.0
    %8401 = vmatprep.subr.mxu0 0.0
    %8402 = vmatpush1.xpose.msra.mxu0 0.0
    %8403 = vmatprep.subr.mxu0 0.0
    %8404 = vmatpush1.xpose.msra.mxu0 0.0
    %8405 = vmatprep.subr.mxu0 0.0
    %8406 = vmatpush1.xpose.msra.mxu0 0.0
    %8407 = vmatprep.subr.mxu0 0.0
    %8408 = vmatpush1.xpose.msra.mxu0 0.0
    %8409 = vmatprep.subr.mxu0 0.0
    %8410 = vmatpush1.xpose.msra.mxu0 0.0
    %8411 = vmatprep.subr.mxu0 0.0
    %8412 = vmatpush1.xpose.msra.mxu0 0.0
    %8413 = vmatprep.subr.mxu0 0.0
    %8414 = vmatpush1.xpose.msra.mxu0 0.0
    %8415 = vmatprep.subr.mxu0 0.0
    %8416 = vmatpush1.xpose.msra.mxu0 0.0
    %8417 = vmatprep.subr.mxu0 0.0
    %8418 = vmatpush1.xpose.msra.mxu0 0.0
    %8419 = vmatprep.subr.mxu0 0.0
    %8420 = vmatpush1.xpose.msra.mxu0 0.0
    %8421 = vmatprep.subr.mxu0 0.0
    %8422 = vmatpush1.xpose.msra.mxu0 0.0
    %8423 = vmatprep.subr.mxu0 0.0
    %8424 = vmatpush1.xpose.msra.mxu0 0.0
    %8425 = vmatprep.subr.mxu0 0.0
    %8426 = vmatpush1.xpose.msra.mxu0 0.0
    %8427 = vmatprep.subr.mxu0 0.0
    %8428 = vmatpush1.xpose.msra.mxu0 0.0
    %8429 = vmatprep.subr.mxu0 0.0
    %8430 = vmatpush1.xpose.msra.mxu0 0.0
    %8431 = vmatprep.subr.mxu0 0.0
    %8432 = vmatpush1.xpose.msra.mxu0 0.0
    %8433 = vmatprep.mubr.f32.mxu0 0.0
    %8434 = vmatmul.mubr.f32.gmra.mrb[0].mxu0 %v8358
    %v8435 = vpop.f32.mrb[0].mxu0
    %v8436 = vadd.f32 %v88, %v8435
    %v8437 = vpop.f32.mrb[0].mxu0
    %8438 = vmatprep.mubr.f32.mxu0 0.0
    %8439 = vmatmul.mubr.f32.gmra.mrb[0].mxu0 %v8361
    %v8440 = vpop.f32.mrb[0].mxu0
    %v8441 = vadd.f32 %v89, %v8440
    %v8442 = vpop.f32.mrb[0].mxu0
    %8443 = vdwg.mxu0
    %v8444 = vsel %vm1553, %v8175, -inf
    %8445 = vmax.xlane.f32.xlu0 %v8444
    %v8446 = vpop.xlane.xlu0 %8445
    %v8447 = vsel %vm1553, %v8180, -inf
    %8448 = vmax.xlane.f32.xlu0 %v8447
    %v8449 = vpop.xlane.xlu0 %8448
    %v8450 = vsel %vm1553, %v8262, -inf
    %8451 = vmax.xlane.f32.xlu0 %v8450
    %v8452 = vpop.xlane.xlu0 %8451
    %v8453 = vsel %vm1553, %v8267, -inf
    %8454 = vmax.xlane.f32.xlu0 %v8453
    %v8455 = vpop.xlane.xlu0 %8454
    %v8456 = vsel %vm1553, %v8349, -inf
    %8457 = vmax.xlane.f32.xlu0 %v8456
    %v8458 = vpop.xlane.xlu0 %8457
    %v8459 = vsel %vm1553, %v8354, -inf
    %8460 = vmax.xlane.f32.xlu0 %v8459
    %v8461 = vpop.xlane.xlu0 %8460
    %v8462 = vsel %vm1553, %v8436, -inf
    %8463 = vmax.xlane.f32.xlu0 %v8462
    %v8464 = vpop.xlane.xlu0 %8463
    %v8465 = vsel %vm1553, %v8441, -inf
    %8466 = vmax.xlane.f32.xlu0 %v8465
    %v8467 = vpop.xlane.xlu0 %8466
    %v8468 = vsub.f32 %v8175, %v8446
    %v8469 = vsub.f32 %v8180, %v8449
    %v8470 = vsub.f32 %v8262, %v8452
    %v8471 = vsub.f32 %v8267, %v8455
    %v8472 = vsub.f32 %v8349, %v8458
    %v8473 = vsub.f32 %v8354, %v8461
    %v8474 = vsub.f32 %v8436, %v8464
    %v8475 = vsub.f32 %v8441, %v8467
    %v8476 = vmul.f32 %v8468, 1.442695
    %v8477 = vpow.pop %v8476
    %v8478 = vmul.f32 %v8469, 1.442695
    %v8479 = vpow.pop %v8478
    %v8480 = vmul.f32 %v8470, 1.442695
    %v8481 = vpow.pop %v8480
    %v8482 = vmul.f32 %v8471, 1.442695
    %v8483 = vpow.pop %v8482
    %v8484 = vmul.f32 %v8472, 1.442695
    %v8485 = vpow.pop %v8484
    %v8486 = vmul.f32 %v8473, 1.442695
    %v8487 = vpow.pop %v8486
    %v8488 = vmul.f32 %v8474, 1.442695
    %v8489 = vpow.pop %v8488
    %v8490 = vmul.f32 %v8475, 1.442695
    %v8491 = vpow.pop %v8490
    %v8492 = vsel %vm1553, %v8477, 0.0
    %8493 = vadd.xlane.f32.xlu0 %v8492
    %v8494 = vpop.xlane.xlu0 %8493
    %v8495 = vsel %vm1553, %v8479, 0.0
    %8496 = vadd.xlane.f32.xlu0 %v8495
    %v8497 = vpop.xlane.xlu0 %8496
    %v8498 = vsel %vm1553, %v8481, 0.0
    %8499 = vadd.xlane.f32.xlu0 %v8498
    %v8500 = vpop.xlane.xlu0 %8499
    %v8501 = vsel %vm1553, %v8483, 0.0
    %8502 = vadd.xlane.f32.xlu0 %v8501
    %v8503 = vpop.xlane.xlu0 %8502
    %v8504 = vsel %vm1553, %v8485, 0.0
    %8505 = vadd.xlane.f32.xlu0 %v8504
    %v8506 = vpop.xlane.xlu0 %8505
    %v8507 = vsel %vm1553, %v8487, 0.0
    %8508 = vadd.xlane.f32.xlu0 %v8507
    %v8509 = vpop.xlane.xlu0 %8508
    %v8510 = vsel %vm1553, %v8489, 0.0
    %8511 = vadd.xlane.f32.xlu0 %v8510
    %v8512 = vpop.xlane.xlu0 %8511
    %v8513 = vsel %vm1553, %v8491, 0.0
    %8514 = vadd.xlane.f32.xlu0 %v8513
    %v8515 = vpop.xlane.xlu0 %8514
    %v8516 = vrcp.pop %v8494
    %v8517 = vrcp.pop %v8497
    %v8518 = vrcp.pop %v8500
    %v8519 = vrcp.pop %v8503
    %v8520 = vrcp.pop %v8506
    %v8521 = vrcp.pop %v8509
    %v8522 = vrcp.pop %v8512
    %v8523 = vrcp.pop %v8515
    %v8524 = vmul.f32 %v8477, %v8516
    %v8525 = vmul.f32 %v8479, %v8517
    %v8526 = vmul.f32 %v8481, %v8518
    %v8527 = vmul.f32 %v8483, %v8519
    %v8528 = vmul.f32 %v8485, %v8520
    %v8529 = vmul.f32 %v8487, %v8521
    %v8530 = vmul.f32 %v8489, %v8522
    %v8531 = vmul.f32 %v8491, %v8523
    %v8533 = vsel %vm1553, %v8524, 0
    %v8536 = vsel %vm1553, %v8525, 0
    %8538 = vmatprep.subr.mxu0 0.0
    %8539 = vmatpush1.msra.mxu0 %v8024
    %8540 = vmatprep.subr.mxu0 0.0
    %8541 = vmatpush1.msra.mxu0 %v8092
    %8542 = vmatprep.subr.mxu0 0.0
    %8543 = vmatpush1.msra.mxu0 0.0
    %8544 = vmatprep.subr.mxu0 0.0
    %8545 = vmatpush1.msra.mxu0 0.0
    %8546 = vmatprep.subr.mxu0 0.0
    %8547 = vmatpush1.msra.mxu0 0.0
    %8548 = vmatprep.subr.mxu0 0.0
    %8549 = vmatpush1.msra.mxu0 0.0
    %8550 = vmatprep.subr.mxu0 0.0
    %8551 = vmatpush1.msra.mxu0 0.0
    %8552 = vmatprep.subr.mxu0 0.0
    %8553 = vmatpush1.msra.mxu0 0.0
    %8554 = vmatprep.subr.mxu0 0.0
    %8555 = vmatpush1.msra.mxu0 0.0
    %8556 = vmatprep.subr.mxu0 0.0
    %8557 = vmatpush1.msra.mxu0 0.0
    %8558 = vmatprep.subr.mxu0 0.0
    %8559 = vmatpush1.msra.mxu0 0.0
    %8560 = vmatprep.subr.mxu0 0.0
    %8561 = vmatpush1.msra.mxu0 0.0
    %8562 = vmatprep.subr.mxu0 0.0
    %8563 = vmatpush1.msra.mxu0 0.0
    %8564 = vmatprep.subr.mxu0 0.0
    %8565 = vmatpush1.msra.mxu0 0.0
    %8566 = vmatprep.subr.mxu0 0.0
    %8567 = vmatpush1.msra.mxu0 0.0
    %8568 = vmatprep.subr.mxu0 0.0
    %8569 = vmatpush1.msra.mxu0 0.0
    %8570 = vmatprep.subr.mxu0 0.0
    %8571 = vmatpush1.msra.mxu0 0.0
    %8572 = vmatprep.subr.mxu0 0.0
    %8573 = vmatpush1.msra.mxu0 0.0
    %8574 = vmatprep.subr.mxu0 0.0
    %8575 = vmatpush1.msra.mxu0 0.0
    %8576 = vmatprep.subr.mxu0 0.0
    %8577 = vmatpush1.msra.mxu0 0.0
    %8578 = vmatprep.subr.mxu0 0.0
    %8579 = vmatpush1.msra.mxu0 0.0
    %8580 = vmatprep.subr.mxu0 0.0
    %8581 = vmatpush1.msra.mxu0 0.0
    %8582 = vmatprep.subr.mxu0 0.0
    %8583 = vmatpush1.msra.mxu0 0.0
    %8584 = vmatprep.subr.mxu0 0.0
    %8585 = vmatpush1.msra.mxu0 0.0
    %8586 = vmatprep.subr.mxu0 0.0
    %8587 = vmatpush1.msra.mxu0 0.0
    %8588 = vmatprep.subr.mxu0 0.0
    %8589 = vmatpush1.msra.mxu0 0.0
    %8590 = vmatprep.subr.mxu0 0.0
    %8591 = vmatpush1.msra.mxu0 0.0
    %8592 = vmatprep.subr.mxu0 0.0
    %8593 = vmatpush1.msra.mxu0 0.0
    %8594 = vmatprep.subr.mxu0 0.0
    %8595 = vmatpush1.msra.mxu0 0.0
    %8596 = vmatprep.subr.mxu0 0.0
    %8597 = vmatpush1.msra.mxu0 0.0
    %8598 = vmatprep.subr.mxu0 0.0
    %8599 = vmatpush1.msra.mxu0 0.0
    %8600 = vmatprep.subr.mxu0 0.0
    %8601 = vmatpush1.msra.mxu0 0.0
    %8602 = vmatprep.mubr.f32.mxu0 0.0
    %8603 = vmatmul.mubr.f32.gmra.mrb[0].mxu0 %v8533
    %v8604 = vpop.f32.mrb[0].mxu0
    %v8605 = vadd.f32 0.0, %v8604
    %v8606 = vpop.f32.mrb[0].mxu0
    %8607 = vmatprep.mubr.f32.mxu0 0.0
    %8608 = vmatmul.mubr.f32.gmra.mrb[0].mxu0 %v8536
    %v8609 = vpop.f32.mrb[0].mxu0
    %v8610 = vadd.f32 0.0, %v8609
    %v8611 = vpop.f32.mrb[0].mxu0
    %8612 = vdwg.mxu0
    %v8614 = vsel %vm1553, %v8526, 0
    %v8617 = vsel %vm1553, %v8527, 0
    %8619 = vmatprep.subr.mxu0 0.0
    %8620 = vmatpush1.msra.mxu0 %v8025
    %8621 = vmatprep.subr.mxu0 0.0
    %8622 = vmatpush1.msra.mxu0 %v8093
    %8623 = vmatprep.subr.mxu0 0.0
    %8624 = vmatpush1.msra.mxu0 0.0
    %8625 = vmatprep.subr.mxu0 0.0
    %8626 = vmatpush1.msra.mxu0 0.0
    %8627 = vmatprep.subr.mxu0 0.0
    %8628 = vmatpush1.msra.mxu0 0.0
    %8629 = vmatprep.subr.mxu0 0.0
    %8630 = vmatpush1.msra.mxu0 0.0
    %8631 = vmatprep.subr.mxu0 0.0
    %8632 = vmatpush1.msra.mxu0 0.0
    %8633 = vmatprep.subr.mxu0 0.0
    %8634 = vmatpush1.msra.mxu0 0.0
    %8635 = vmatprep.subr.mxu0 0.0
    %8636 = vmatpush1.msra.mxu0 0.0
    %8637 = vmatprep.subr.mxu0 0.0
    %8638 = vmatpush1.msra.mxu0 0.0
    %8639 = vmatprep.subr.mxu0 0.0
    %8640 = vmatpush1.msra.mxu0 0.0
    %8641 = vmatprep.subr.mxu0 0.0
    %8642 = vmatpush1.msra.mxu0 0.0
    %8643 = vmatprep.subr.mxu0 0.0
    %8644 = vmatpush1.msra.mxu0 0.0
    %8645 = vmatprep.subr.mxu0 0.0
    %8646 = vmatpush1.msra.mxu0 0.0
    %8647 = vmatprep.subr.mxu0 0.0
    %8648 = vmatpush1.msra.mxu0 0.0
    %8649 = vmatprep.subr.mxu0 0.0
    %8650 = vmatpush1.msra.mxu0 0.0
    %8651 = vmatprep.subr.mxu0 0.0
    %8652 = vmatpush1.msra.mxu0 0.0
    %8653 = vmatprep.subr.mxu0 0.0
    %8654 = vmatpush1.msra.mxu0 0.0
    %8655 = vmatprep.subr.mxu0 0.0
    %8656 = vmatpush1.msra.mxu0 0.0
    %8657 = vmatprep.subr.mxu0 0.0
    %8658 = vmatpush1.msra.mxu0 0.0
    %8659 = vmatprep.subr.mxu0 0.0
    %8660 = vmatpush1.msra.mxu0 0.0
    %8661 = vmatprep.subr.mxu0 0.0
    %8662 = vmatpush1.msra.mxu0 0.0
    %8663 = vmatprep.subr.mxu0 0.0
    %8664 = vmatpush1.msra.mxu0 0.0
    %8665 = vmatprep.subr.mxu0 0.0
    %8666 = vmatpush1.msra.mxu0 0.0
    %8667 = vmatprep.subr.mxu0 0.0
    %8668 = vmatpush1.msra.mxu0 0.0
    %8669 = vmatprep.subr.mxu0 0.0
    %8670 = vmatpush1.msra.mxu0 0.0
    %8671 = vmatprep.subr.mxu0 0.0
    %8672 = vmatpush1.msra.mxu0 0.0
    %8673 = vmatprep.subr.mxu0 0.0
    %8674 = vmatpush1.msra.mxu0 0.0
    %8675 = vmatprep.subr.mxu0 0.0
    %8676 = vmatpush1.msra.mxu0 0.0
    %8677 = vmatprep.subr.mxu0 0.0
    %8678 = vmatpush1.msra.mxu0 0.0
    %8679 = vmatprep.subr.mxu0 0.0
    %8680 = vmatpush1.msra.mxu0 0.0
    %8681 = vmatprep.subr.mxu0 0.0
    %8682 = vmatpush1.msra.mxu0 0.0
    %8683 = vmatprep.mubr.f32.mxu0 0.0
    %8684 = vmatmul.mubr.f32.gmra.mrb[0].mxu0 %v8614
    %v8685 = vpop.f32.mrb[0].mxu0
    %v8686 = vadd.f32 0.0, %v8685
    %v8687 = vpop.f32.mrb[0].mxu0
    %8688 = vmatprep.mubr.f32.mxu0 0.0
    %8689 = vmatmul.mubr.f32.gmra.mrb[0].mxu0 %v8617
    %v8690 = vpop.f32.mrb[0].mxu0
    %v8691 = vadd.f32 0.0, %v8690
    %v8692 = vpop.f32.mrb[0].mxu0
    %8693 = vdwg.mxu0
    %v8695 = vsel %vm1553, %v8528, 0
    %v8698 = vsel %vm1553, %v8529, 0
    %8700 = vmatprep.subr.mxu0 0.0
    %8701 = vmatpush1.msra.mxu0 %v8026
    %8702 = vmatprep.subr.mxu0 0.0
    %8703 = vmatpush1.msra.mxu0 %v8094
    %8704 = vmatprep.subr.mxu0 0.0
    %8705 = vmatpush1.msra.mxu0 0.0
    %8706 = vmatprep.subr.mxu0 0.0
    %8707 = vmatpush1.msra.mxu0 0.0
    %8708 = vmatprep.subr.mxu0 0.0
    %8709 = vmatpush1.msra.mxu0 0.0
    %8710 = vmatprep.subr.mxu0 0.0
    %8711 = vmatpush1.msra.mxu0 0.0
    %8712 = vmatprep.subr.mxu0 0.0
    %8713 = vmatpush1.msra.mxu0 0.0
    %8714 = vmatprep.subr.mxu0 0.0
    %8715 = vmatpush1.msra.mxu0 0.0
    %8716 = vmatprep.subr.mxu0 0.0
    %8717 = vmatpush1.msra.mxu0 0.0
    %8718 = vmatprep.subr.mxu0 0.0
    %8719 = vmatpush1.msra.mxu0 0.0
    %8720 = vmatprep.subr.mxu0 0.0
    %8721 = vmatpush1.msra.mxu0 0.0
    %8722 = vmatprep.subr.mxu0 0.0
    %8723 = vmatpush1.msra.mxu0 0.0
    %8724 = vmatprep.subr.mxu0 0.0
    %8725 = vmatpush1.msra.mxu0 0.0
    %8726 = vmatprep.subr.mxu0 0.0
    %8727 = vmatpush1.msra.mxu0 0.0
    %8728 = vmatprep.subr.mxu0 0.0
    %8729 = vmatpush1.msra.mxu0 0.0
    %8730 = vmatprep.subr.mxu0 0.0
    %8731 = vmatpush1.msra.mxu0 0.0
    %8732 = vmatprep.subr.mxu0 0.0
    %8733 = vmatpush1.msra.mxu0 0.0
    %8734 = vmatprep.subr.mxu0 0.0
    %8735 = vmatpush1.msra.mxu0 0.0
    %8736 = vmatprep.subr.mxu0 0.0
    %8737 = vmatpush1.msra.mxu0 0.0
    %8738 = vmatprep.subr.mxu0 0.0
    %8739 = vmatpush1.msra.mxu0 0.0
    %8740 = vmatprep.subr.mxu0 0.0
    %8741 = vmatpush1.msra.mxu0 0.0
    %8742 = vmatprep.subr.mxu0 0.0
    %8743 = vmatpush1.msra.mxu0 0.0
    %8744 = vmatprep.subr.mxu0 0.0
    %8745 = vmatpush1.msra.mxu0 0.0
    %8746 = vmatprep.subr.mxu0 0.0
    %8747 = vmatpush1.msra.mxu0 0.0
    %8748 = vmatprep.subr.mxu0 0.0
    %8749 = vmatpush1.msra.mxu0 0.0
    %8750 = vmatprep.subr.mxu0 0.0
    %8751 = vmatpush1.msra.mxu0 0.0
    %8752 = vmatprep.subr.mxu0 0.0
    %8753 = vmatpush1.msra.mxu0 0.0
    %8754 = vmatprep.subr.mxu0 0.0
    %8755 = vmatpush1.msra.mxu0 0.0
    %8756 = vmatprep.subr.mxu0 0.0
    %8757 = vmatpush1.msra.mxu0 0.0
    %8758 = vmatprep.subr.mxu0 0.0
    %8759 = vmatpush1.msra.mxu0 0.0
    %8760 = vmatprep.subr.mxu0 0.0
    %8761 = vmatpush1.msra.mxu0 0.0
    %8762 = vmatprep.subr.mxu0 0.0
    %8763 = vmatpush1.msra.mxu0 0.0
    %8764 = vmatprep.mubr.f32.mxu0 0.0
    %8765 = vmatmul.mubr.f32.gmra.mrb[0].mxu0 %v8695
    %v8766 = vpop.f32.mrb[0].mxu0
    %v8767 = vadd.f32 0.0, %v8766
    %v8768 = vpop.f32.mrb[0].mxu0
    %8769 = vmatprep.mubr.f32.mxu0 0.0
    %8770 = vmatmul.mubr.f32.gmra.mrb[0].mxu0 %v8698
    %v8771 = vpop.f32.mrb[0].mxu0
    %v8772 = vadd.f32 0.0, %v8771
    %v8773 = vpop.f32.mrb[0].mxu0
    %8774 = vdwg.mxu0
    %v8776 = vsel %vm1553, %v8530, 0
    %v8779 = vsel %vm1553, %v8531, 0
    %8781 = vmatprep.subr.mxu0 0.0
    %8782 = vmatpush1.msra.mxu0 %v8027
    %8783 = vmatprep.subr.mxu0 0.0
    %8784 = vmatpush1.msra.mxu0 %v8095
    %8785 = vmatprep.subr.mxu0 0.0
    %8786 = vmatpush1.msra.mxu0 0.0
    %8787 = vmatprep.subr.mxu0 0.0
    %8788 = vmatpush1.msra.mxu0 0.0
    %8789 = vmatprep.subr.mxu0 0.0
    %8790 = vmatpush1.msra.mxu0 0.0
    %8791 = vmatprep.subr.mxu0 0.0
    %8792 = vmatpush1.msra.mxu0 0.0
    %8793 = vmatprep.subr.mxu0 0.0
    %8794 = vmatpush1.msra.mxu0 0.0
    %8795 = vmatprep.subr.mxu0 0.0
    %8796 = vmatpush1.msra.mxu0 0.0
    %8797 = vmatprep.subr.mxu0 0.0
    %8798 = vmatpush1.msra.mxu0 0.0
    %8799 = vmatprep.subr.mxu0 0.0
    %8800 = vmatpush1.msra.mxu0 0.0
    %8801 = vmatprep.subr.mxu0 0.0
    %8802 = vmatpush1.msra.mxu0 0.0
    %8803 = vmatprep.subr.mxu0 0.0
    %8804 = vmatpush1.msra.mxu0 0.0
    %8805 = vmatprep.subr.mxu0 0.0
    %8806 = vmatpush1.msra.mxu0 0.0
    %8807 = vmatprep.subr.mxu0 0.0
    %8808 = vmatpush1.msra.mxu0 0.0
    %8809 = vmatprep.subr.mxu0 0.0
    %8810 = vmatpush1.msra.mxu0 0.0
    %8811 = vmatprep.subr.mxu0 0.0
    %8812 = vmatpush1.msra.mxu0 0.0
    %8813 = vmatprep.subr.mxu0 0.0
    %8814 = vmatpush1.msra.mxu0 0.0
    %8815 = vmatprep.subr.mxu0 0.0
    %8816 = vmatpush1.msra.mxu0 0.0
    %8817 = vmatprep.subr.mxu0 0.0
    %8818 = vmatpush1.msra.mxu0 0.0
    %8819 = vmatprep.subr.mxu0 0.0
    %8820 = vmatpush1.msra.mxu0 0.0
    %8821 = vmatprep.subr.mxu0 0.0
    %8822 = vmatpush1.msra.mxu0 0.0
    %8823 = vmatprep.subr.mxu0 0.0
    %8824 = vmatpush1.msra.mxu0 0.0
    %8825 = vmatprep.subr.mxu0 0.0
    %8826 = vmatpush1.msra.mxu0 0.0
    %8827 = vmatprep.subr.mxu0 0.0
    %8828 = vmatpush1.msra.mxu0 0.0
    %8829 = vmatprep.subr.mxu0 0.0
    %8830 = vmatpush1.msra.mxu0 0.0
    %8831 = vmatprep.subr.mxu0 0.0
    %8832 = vmatpush1.msra.mxu0 0.0
    %8833 = vmatprep.subr.mxu0 0.0
    %8834 = vmatpush1.msra.mxu0 0.0
    %8835 = vmatprep.subr.mxu0 0.0
    %8836 = vmatpush1.msra.mxu0 0.0
    %8837 = vmatprep.subr.mxu0 0.0
    %8838 = vmatpush1.msra.mxu0 0.0
    %8839 = vmatprep.subr.mxu0 0.0
    %8840 = vmatpush1.msra.mxu0 0.0
    %8841 = vmatprep.subr.mxu0 0.0
    %8842 = vmatpush1.msra.mxu0 0.0
    %8843 = vmatprep.subr.mxu0 0.0
    %8844 = vmatpush1.msra.mxu0 0.0
    %8845 = vmatprep.mubr.f32.mxu0 0.0
    %8846 = vmatmul.mubr.f32.gmra.mrb[0].mxu0 %v8776
    %v8847 = vpop.f32.mrb[0].mxu0
    %v8848 = vadd.f32 0.0, %v8847
    %v8849 = vpop.f32.mrb[0].mxu0
    %8850 = vmatprep.mubr.f32.mxu0 0.0
    %8851 = vmatmul.mubr.f32.gmra.mrb[0].mxu0 %v8779
    %v8852 = vpop.f32.mrb[0].mxu0
    %v8853 = vadd.f32 0.0, %v8852
    %v8854 = vpop.f32.mrb[0].mxu0
    %8855 = vdwg.mxu0
    %v8856 = vcombine.low %v8605, %v8767
    %v8857 = vcombine.high %v8605, %v8767
    %v8859 = vunpack.c.l.s4 1983009808
    %v8860 = vunpack.c.0.s8 %v8859
    %v8861 = vlaneseq
    %v8862 = vshrl.u32 %v8861, 7
    %v8863 = vsub.s32 %v8860, %v8862
    %v8864 = vrot.slane %v8856, %v8863
    %v8866 = vunpack.c.l.s4 1983009808
    %v8867 = vunpack.c.0.s8 %v8866
    %v8868 = vlaneseq
    %v8869 = vshrl.u32 %v8868, 7
    %v8870 = vsub.s32 %v8867, %v8869
    %v8871 = vrot.slane %v8857, %v8870
    %v8872 = vcombine.low %v8686, %v8848
    %v8873 = vcombine.high %v8686, %v8848
    %v8875 = vunpack.c.l.s4 1983009808
    %v8876 = vunpack.c.0.s8 %v8875
    %v8877 = vlaneseq
    %v8878 = vshrl.u32 %v8877, 7
    %v8879 = vsub.s32 %v8876, %v8878
    %v8880 = vrot.slane %v8872, %v8879
    %v8882 = vunpack.c.l.s4 1983009808
    %v8883 = vunpack.c.0.s8 %v8882
    %v8884 = vlaneseq
    %v8885 = vshrl.u32 %v8884, 7
    %v8886 = vsub.s32 %v8883, %v8885
    %v8887 = vrot.slane %v8873, %v8886
    %v8888 = vcombine.low %v8864, %v8880
    %v8889 = vcombine.high %v8864, %v8880
    %v8891 = vunpack.c.l.s4 1934713408
    %v8892 = vunpack.c.0.s8 %v8891
    %v8893 = vlaneseq
    %v8894 = vshrl.u32 %v8893, 7
    %v8895 = vsub.s32 %v8892, %v8894
    %v8896 = vrot.slane %v8888, %v8895
    %v8898 = vunpack.c.l.s4 1934713408
    %v8899 = vunpack.c.0.s8 %v8898
    %v8900 = vlaneseq
    %v8901 = vshrl.u32 %v8900, 7
    %v8902 = vsub.s32 %v8899, %v8901
    %v8903 = vrot.slane %v8889, %v8902
    %v8904 = vcombine.low %v8871, %v8887
    %v8905 = vcombine.high %v8871, %v8887
    %v8907 = vunpack.c.l.s4 1934713408
    %v8908 = vunpack.c.0.s8 %v8907
    %v8909 = vlaneseq
    %v8910 = vshrl.u32 %v8909, 7
    %v8911 = vsub.s32 %v8908, %v8910
    %v8912 = vrot.slane %v8904, %v8911
    %v8914 = vunpack.c.l.s4 1934713408
    %v8915 = vunpack.c.0.s8 %v8914
    %v8916 = vlaneseq
    %v8917 = vshrl.u32 %v8916, 7
    %v8918 = vsub.s32 %v8915, %v8917
    %v8919 = vrot.slane %v8905, %v8918
    %v8920 = vcombine.high %v8896, 0.0
    %v8921 = vcombine.high %v8903, 0.0
    %v8922 = vcombine.high %v8912, 0.0
    %v8923 = vcombine.high %v8919, 0.0
    %v8924 = vcombine.low %v8610, %v8772
    %v8925 = vcombine.high %v8610, %v8772
    %v8927 = vunpack.c.l.s4 1983009808
    %v8928 = vunpack.c.0.s8 %v8927
    %v8929 = vlaneseq
    %v8930 = vshrl.u32 %v8929, 7
    %v8931 = vsub.s32 %v8928, %v8930
    %v8932 = vrot.slane %v8924, %v8931
    %v8934 = vunpack.c.l.s4 1983009808
    %v8935 = vunpack.c.0.s8 %v8934
    %v8936 = vlaneseq
    %v8937 = vshrl.u32 %v8936, 7
    %v8938 = vsub.s32 %v8935, %v8937
    %v8939 = vrot.slane %v8925, %v8938
    %v8940 = vcombine.low %v8691, %v8853
    %v8941 = vcombine.high %v8691, %v8853
    %v8943 = vunpack.c.l.s4 1983009808
    %v8944 = vunpack.c.0.s8 %v8943
    %v8945 = vlaneseq
    %v8946 = vshrl.u32 %v8945, 7
    %v8947 = vsub.s32 %v8944, %v8946
    %v8948 = vrot.slane %v8940, %v8947
    %v8950 = vunpack.c.l.s4 1983009808
    %v8951 = vunpack.c.0.s8 %v8950
    %v8952 = vlaneseq
    %v8953 = vshrl.u32 %v8952, 7
    %v8954 = vsub.s32 %v8951, %v8953
    %v8955 = vrot.slane %v8941, %v8954
    %v8956 = vcombine.low %v8932, %v8948
    %v8957 = vcombine.high %v8932, %v8948
    %v8959 = vunpack.c.l.s4 1934713408
    %v8960 = vunpack.c.0.s8 %v8959
    %v8961 = vlaneseq
    %v8962 = vshrl.u32 %v8961, 7
    %v8963 = vsub.s32 %v8960, %v8962
    %v8964 = vrot.slane %v8956, %v8963
    %v8966 = vunpack.c.l.s4 1934713408
    %v8967 = vunpack.c.0.s8 %v8966
    %v8968 = vlaneseq
    %v8969 = vshrl.u32 %v8968, 7
    %v8970 = vsub.s32 %v8967, %v8969
    %v8971 = vrot.slane %v8957, %v8970
    %v8972 = vcombine.low %v8939, %v8955
    %v8973 = vcombine.high %v8939, %v8955
    %v8975 = vunpack.c.l.s4 1934713408
    %v8976 = vunpack.c.0.s8 %v8975
    %v8977 = vlaneseq
    %v8978 = vshrl.u32 %v8977, 7
    %v8979 = vsub.s32 %v8976, %v8978
    %v8980 = vrot.slane %v8972, %v8979
    %v8982 = vunpack.c.l.s4 1934713408
    %v8983 = vunpack.c.0.s8 %v8982
    %v8984 = vlaneseq
    %v8985 = vshrl.u32 %v8984, 7
    %v8986 = vsub.s32 %v8983, %v8985
    %v8987 = vrot.slane %v8973, %v8986
    %v8988 = vcombine.high %v8964, 0.0
    %v8989 = vcombine.high %v8971, 0.0
    %v8990 = vcombine.high %v8980, 0.0
    %v8991 = vcombine.high %v8987, 0.0
    %v8992 = vcombine.low %v8896, %v8903
    %v8994 = vunpack.c.l.s4 1983009808
    %v8995 = vunpack.c.0.s8 %v8994
    %v8996 = vlaneseq
    %v8997 = vshrl.u32 %v8996, 7
    %v8998 = vsub.s32 %v8995, %v8997
    %v8999 = vrot.slane %v8992, %v8998
    %v9000 = vcombine.low %v8920, %v8921
    %v9002 = vunpack.c.l.s4 1983009808
    %v9003 = vunpack.c.0.s8 %v9002
    %v9004 = vlaneseq
    %v9005 = vshrl.u32 %v9004, 7
    %v9006 = vsub.s32 %v9003, %v9005
    %v9007 = vrot.slane %v9000, %v9006
    %v9008 = vcombine.low %v8912, %v8919
    %v9010 = vunpack.c.l.s4 1983009808
    %v9011 = vunpack.c.0.s8 %v9010
    %v9012 = vlaneseq
    %v9013 = vshrl.u32 %v9012, 7
    %v9014 = vsub.s32 %v9011, %v9013
    %v9015 = vrot.slane %v9008, %v9014
    %v9016 = vcombine.low %v8922, %v8923
    %v9018 = vunpack.c.l.s4 1983009808
    %v9019 = vunpack.c.0.s8 %v9018
    %v9020 = vlaneseq
    %v9021 = vshrl.u32 %v9020, 7
    %v9022 = vsub.s32 %v9019, %v9021
    %v9023 = vrot.slane %v9016, %v9022
    %v9024 = vcombine.low %v8999, %v9007
    %v9025 = vcombine.high %v8999, %v9007
    %v9027 = vunpack.c.l.s4 1934713408
    %v9028 = vunpack.c.0.s8 %v9027
    %v9029 = vlaneseq
    %v9030 = vshrl.u32 %v9029, 7
    %v9031 = vsub.s32 %v9028, %v9030
    %v9032 = vrot.slane %v9024, %v9031
    %v9034 = vunpack.c.l.s4 1934713408
    %v9035 = vunpack.c.0.s8 %v9034
    %v9036 = vlaneseq
    %v9037 = vshrl.u32 %v9036, 7
    %v9038 = vsub.s32 %v9035, %v9037
    %v9039 = vrot.slane %v9025, %v9038
    %v9040 = vcombine.low %v9015, %v9023
    %v9041 = vcombine.high %v9015, %v9023
    %v9043 = vunpack.c.l.s4 1934713408
    %v9044 = vunpack.c.0.s8 %v9043
    %v9045 = vlaneseq
    %v9046 = vshrl.u32 %v9045, 7
    %v9047 = vsub.s32 %v9044, %v9046
    %v9048 = vrot.slane %v9040, %v9047
    %v9050 = vunpack.c.l.s4 1934713408
    %v9051 = vunpack.c.0.s8 %v9050
    %v9052 = vlaneseq
    %v9053 = vshrl.u32 %v9052, 7
    %v9054 = vsub.s32 %v9051, %v9053
    %v9055 = vrot.slane %v9041, %v9054
    %v9056 = vcombine.low %v9032, %v9048
    %v9057 = vcombine.high %v9032, %v9048
    %v9058 = vcombine.low %v9039, %v9055
    %v9059 = vcombine.high %v9039, %v9055
    %v9060 = vcombine.low %v8964, %v8971
    %v9062 = vunpack.c.l.s4 1983009808
    %v9063 = vunpack.c.0.s8 %v9062
    %v9064 = vlaneseq
    %v9065 = vshrl.u32 %v9064, 7
    %v9066 = vsub.s32 %v9063, %v9065
    %v9067 = vrot.slane %v9060, %v9066
    %v9068 = vcombine.low %v8988, %v8989
    %v9070 = vunpack.c.l.s4 1983009808
    %v9071 = vunpack.c.0.s8 %v9070
    %v9072 = vlaneseq
    %v9073 = vshrl.u32 %v9072, 7
    %v9074 = vsub.s32 %v9071, %v9073
    %v9075 = vrot.slane %v9068, %v9074
    %v9076 = vcombine.low %v8980, %v8987
    %v9078 = vunpack.c.l.s4 1983009808
    %v9079 = vunpack.c.0.s8 %v9078
    %v9080 = vlaneseq
    %v9081 = vshrl.u32 %v9080, 7
    %v9082 = vsub.s32 %v9079, %v9081
    %v9083 = vrot.slane %v9076, %v9082
    %v9084 = vcombine.low %v8990, %v8991
    %v9086 = vunpack.c.l.s4 1983009808
    %v9087 = vunpack.c.0.s8 %v9086
    %v9088 = vlaneseq
    %v9089 = vshrl.u32 %v9088, 7
    %v9090 = vsub.s32 %v9087, %v9089
    %v9091 = vrot.slane %v9084, %v9090
    %v9092 = vcombine.low %v9067, %v9075
    %v9093 = vcombine.high %v9067, %v9075
    %v9095 = vunpack.c.l.s4 1934713408
    %v9096 = vunpack.c.0.s8 %v9095
    %v9097 = vlaneseq
    %v9098 = vshrl.u32 %v9097, 7
    %v9099 = vsub.s32 %v9096, %v9098
    %v9100 = vrot.slane %v9092, %v9099
    %v9102 = vunpack.c.l.s4 1934713408
    %v9103 = vunpack.c.0.s8 %v9102
    %v9104 = vlaneseq
    %v9105 = vshrl.u32 %v9104, 7
    %v9106 = vsub.s32 %v9103, %v9105
    %v9107 = vrot.slane %v9093, %v9106
    %v9108 = vcombine.low %v9083, %v9091
    %v9109 = vcombine.high %v9083, %v9091
    %v9111 = vunpack.c.l.s4 1934713408
    %v9112 = vunpack.c.0.s8 %v9111
    %v9113 = vlaneseq
    %v9114 = vshrl.u32 %v9113, 7
    %v9115 = vsub.s32 %v9112, %v9114
    %v9116 = vrot.slane %v9108, %v9115
    %v9118 = vunpack.c.l.s4 1934713408
    %v9119 = vunpack.c.0.s8 %v9118
    %v9120 = vlaneseq
    %v9121 = vshrl.u32 %v9120, 7
    %v9122 = vsub.s32 %v9119, %v9121
    %v9123 = vrot.slane %v9109, %v9122
    %v9124 = vcombine.low %v9100, %v9116
    %v9125 = vcombine.high %v9100, %v9116
    %v9126 = vcombine.low %v9107, %v9123
    %v9127 = vcombine.high %v9107, %v9123
    %9130 = vrot.lane.b32.xlu0 %v9057, 8
    %v9131 = vpop.permute.xlu0 %9130
    %9132 = vrot.lane.b32.xlu0 %v9125, 8
    %v9133 = vpop.permute.xlu0 %9132
    %9138 = vrot.lane.b32.xlu0 %v9058, 16
    %v9139 = vpop.permute.xlu0 %9138
    %9140 = vrot.lane.b32.xlu0 %v9126, 16
    %v9141 = vpop.permute.xlu0 %9140
    %9146 = vrot.lane.b32.xlu0 %v9059, 24
    %v9147 = vpop.permute.xlu0 %9146
    %9148 = vrot.lane.b32.xlu0 %v9127, 24
    %v9149 = vpop.permute.xlu0 %9148
    %v9152 = vsel %vm67, %v9056, %v9131
    %v9153 = vsel %vm67, %v9124, %v9133
    %v9154 = vsel %vm1553, %v9152, %v9139
    %v9155 = vsel %vm1553, %v9153, %v9141
    %v9156 = vsel %vm2266, %v9154, %v9147
    %v9157 = vsel %vm2266, %v9155, %v9149
    %v9158 = vlaneseq
    %v9159 = vshrl.u32 %v9158, 7
    %v9160 = vsub.s32 7, %v9159
    %v9161 = vrot.slane %v4855, %v9160
    %9166 = vrot.lane.b32.xlu0 %v4847, 96
    %v9167 = vpop.permute.xlu0 %9166
    %9168 = vrot.lane.b32.xlu0 %v4849, 96
    %v9169 = vpop.permute.xlu0 %9168
    %9170 = vrot.lane.b32.xlu0 %v4851, 96
    %v9171 = vpop.permute.xlu0 %9170
    %9172 = vrot.lane.b32.xlu0 %v4853, 96
    %v9173 = vpop.permute.xlu0 %9172
    %v9179 = vsel %vm94, %v9156, 0
    %v9182 = vsel %vm94, %v9157, 0
    %9184 = vmatprep.subr.mxu0 0.0
    %9185 = vmatpush1.msra.mxu0 %v9167
    %9186 = vmatprep.subr.mxu0 0.0
    %9187 = vmatpush1.msra.mxu0 %v9169
    %9188 = vmatprep.subr.mxu0 0.0
    %9189 = vmatpush1.msra.mxu0 %v9171
    %9190 = vmatprep.subr.mxu0 0.0
    %9191 = vmatpush1.msra.mxu0 %v9173
    %9192 = vmatprep.subr.mxu0 0.0
    %9193 = vmatpush1.msra.mxu0 0.0
    %9194 = vmatprep.subr.mxu0 0.0
    %9195 = vmatpush1.msra.mxu0 0.0
    %9196 = vmatprep.subr.mxu0 0.0
    %9197 = vmatpush1.msra.mxu0 0.0
    %9198 = vmatprep.subr.mxu0 0.0
    %9199 = vmatpush1.msra.mxu0 0.0
    %9200 = vmatprep.subr.mxu0 0.0
    %9201 = vmatpush1.msra.mxu0 0.0
    %9202 = vmatprep.subr.mxu0 0.0
    %9203 = vmatpush1.msra.mxu0 0.0
    %9204 = vmatprep.subr.mxu0 0.0
    %9205 = vmatpush1.msra.mxu0 0.0
    %9206 = vmatprep.subr.mxu0 0.0
    %9207 = vmatpush1.msra.mxu0 0.0
    %9208 = vmatprep.subr.mxu0 0.0
    %9209 = vmatpush1.msra.mxu0 0.0
    %9210 = vmatprep.subr.mxu0 0.0
    %9211 = vmatpush1.msra.mxu0 0.0
    %9212 = vmatprep.subr.mxu0 0.0
    %9213 = vmatpush1.msra.mxu0 0.0
    %9214 = vmatprep.subr.mxu0 0.0
    %9215 = vmatpush1.msra.mxu0 0.0
    %9216 = vmatprep.subr.mxu0 0.0
    %9217 = vmatpush1.msra.mxu0 0.0
    %9218 = vmatprep.subr.mxu0 0.0
    %9219 = vmatpush1.msra.mxu0 0.0
    %9220 = vmatprep.subr.mxu0 0.0
    %9221 = vmatpush1.msra.mxu0 0.0
    %9222 = vmatprep.subr.mxu0 0.0
    %9223 = vmatpush1.msra.mxu0 0.0
    %9224 = vmatprep.subr.mxu0 0.0
    %9225 = vmatpush1.msra.mxu0 0.0
    %9226 = vmatprep.subr.mxu0 0.0
    %9227 = vmatpush1.msra.mxu0 0.0
    %9228 = vmatprep.subr.mxu0 0.0
    %9229 = vmatpush1.msra.mxu0 0.0
    %9230 = vmatprep.subr.mxu0 0.0
    %9231 = vmatpush1.msra.mxu0 0.0
    %9232 = vmatprep.subr.mxu0 0.0
    %9233 = vmatpush1.msra.mxu0 0.0
    %9234 = vmatprep.subr.mxu0 0.0
    %9235 = vmatpush1.msra.mxu0 0.0
    %9236 = vmatprep.subr.mxu0 0.0
    %9237 = vmatpush1.msra.mxu0 0.0
    %9238 = vmatprep.subr.mxu0 0.0
    %9239 = vmatpush1.msra.mxu0 0.0
    %9240 = vmatprep.subr.mxu0 0.0
    %9241 = vmatpush1.msra.mxu0 0.0
    %9242 = vmatprep.subr.mxu0 0.0
    %9243 = vmatpush1.msra.mxu0 0.0
    %9244 = vmatprep.subr.mxu0 0.0
    %9245 = vmatpush1.msra.mxu0 0.0
    %9246 = vmatprep.subr.mxu0 0.0
    %9247 = vmatpush1.msra.mxu0 0.0
    %9248 = vmatprep.mubr.f32.mxu0 0.0
    %9249 = vmatmul.mubr.f32.gmra.mrb[0].mxu0 %v9179
    %v9250 = vpop.f32.mrb[0].mxu0
    %v9251 = vadd.f32 %v9161, %v9250
    %v9252 = vpop.f32.mrb[0].mxu0
    %9253 = vmatprep.mubr.f32.mxu0 0.0
    %9254 = vmatmul.mubr.f32.gmra.mrb[0].mxu0 %v9182
    %v9255 = vpop.f32.mrb[0].mxu0
    %v9256 = vadd.f32 %v9161, %v9255
    %v9257 = vpop.f32.mrb[0].mxu0
    %9258 = vdwg.mxu0
    %v9259 = vadd.f32 %v7077, %v9251
    %v9260 = vadd.f32 %v7078, %v9256
    %v9261 = vsel %vm94, %v9259, 0.0
    %9262 = vadd.xlane.f32.xlu0 %v9261
    %v9263 = vpop.xlane.xlu0 %9262
    %v9264 = vsel %vm94, %v9260, 0.0
    %9265 = vadd.xlane.f32.xlu0 %v9264
    %v9266 = vpop.xlane.xlu0 %9265
    %v9267 = vmul.f32 %v9263, %v2378
    %v9268 = vmul.f32 %v9266, %v2378
    %v9269 = vsub.f32 %v9259, %v9267
    %v9270 = vsub.f32 %v9260, %v9268
    %v9271 = vmul.f32 %v9269, %v9269
    %v9272 = vmul.f32 %v9270, %v9270
    %v9273 = vsel %vm94, %v9271, 0.0
    %9274 = vadd.xlane.f32.xlu0 %v9273
    %v9275 = vpop.xlane.xlu0 %9274
    %v9276 = vsel %vm94, %v9272, 0.0
    %9277 = vadd.xlane.f32.xlu0 %v9276
    %v9278 = vpop.xlane.xlu0 %9277
    %v9279 = vmul.f32 %v9275, %v2378
    %v9280 = vmul.f32 %v9278, %v2378
    %v9281 = vadd.f32 %v9279, 1e-05
    %v9282 = vadd.f32 %v9280, 1e-05
    %v9283 = vrsqrt.pop %v9281
    %v9284 = vrsqrt.pop %v9282
    %v9285 = vmul.f32 %v9269, %v9283
    %v9286 = vmul.f32 %v9270, %v9284
    %v9287 = vlaneseq
    %v9288 = vshrl.u32 %v9287, 7
    %v9289 = vsub.s32 3, %v9288
    %v9290 = vrot.slane %v4856, %v9289
    %v9291 = vmul.f32 %v9285, %v9290
    %v9292 = vmul.f32 %v9286, %v9290
    %v9293 = vlaneseq
    %v9294 = vshrl.u32 %v9293, 7
    %v9295 = vsub.s32 4, %v9294
    %v9296 = vrot.slane %v4856, %v9295
    %v9297 = vadd.f32 %v9291, %v9296
    %v9298 = vadd.f32 %v9292, %v9296
    %s9299 = scalar_lea.vmem %s8, 1
    %v9300 = vld [vmem:[%s9299] sm:$0x1]
    %v9302 = vlaneseq
    %v9303 = vshrl.u32 %v9302, 7
    %v9304 = vsub.s32 0, %v9303
    %v9305 = vrot.slane %v9300, %v9304
    %9307 = vrot.lane.b32.xlu0 %v4847, 64
    %v9308 = vpop.permute.xlu0 %9307
    %9309 = vrot.lane.b32.xlu0 %v4849, 64
    %v9310 = vpop.permute.xlu0 %9309
    %9311 = vrot.lane.b32.xlu0 %v4851, 64
    %v9312 = vpop.permute.xlu0 %9311
    %9313 = vrot.lane.b32.xlu0 %v4853, 64
    %v9314 = vpop.permute.xlu0 %9313
    %v9320 = vsel %vm94, %v9297, 0
    %v9323 = vsel %vm94, %v9298, 0
    %9325 = vmatprep.subr.mxu0 0.0
    %9326 = vmatpush1.msra.mxu0 %v9308
    %9327 = vmatprep.subr.mxu0 0.0
    %9328 = vmatpush1.msra.mxu0 %v9310
    %9329 = vmatprep.subr.mxu0 0.0
    %9330 = vmatpush1.msra.mxu0 %v9312
    %9331 = vmatprep.subr.mxu0 0.0
    %9332 = vmatpush1.msra.mxu0 %v9314
    %9333 = vmatprep.subr.mxu0 0.0
    %9334 = vmatpush1.msra.mxu0 0.0
    %9335 = vmatprep.subr.mxu0 0.0
    %9336 = vmatpush1.msra.mxu0 0.0
    %9337 = vmatprep.subr.mxu0 0.0
    %9338 = vmatpush1.msra.mxu0 0.0
    %9339 = vmatprep.subr.mxu0 0.0
    %9340 = vmatpush1.msra.mxu0 0.0
    %9341 = vmatprep.subr.mxu0 0.0
    %9342 = vmatpush1.msra.mxu0 0.0
    %9343 = vmatprep.subr.mxu0 0.0
    %9344 = vmatpush1.msra.mxu0 0.0
    %9345 = vmatprep.subr.mxu0 0.0
    %9346 = vmatpush1.msra.mxu0 0.0
    %9347 = vmatprep.subr.mxu0 0.0
    %9348 = vmatpush1.msra.mxu0 0.0
    %9349 = vmatprep.subr.mxu0 0.0
    %9350 = vmatpush1.msra.mxu0 0.0
    %9351 = vmatprep.subr.mxu0 0.0
    %9352 = vmatpush1.msra.mxu0 0.0
    %9353 = vmatprep.subr.mxu0 0.0
    %9354 = vmatpush1.msra.mxu0 0.0
    %9355 = vmatprep.subr.mxu0 0.0
    %9356 = vmatpush1.msra.mxu0 0.0
    %9357 = vmatprep.subr.mxu0 0.0
    %9358 = vmatpush1.msra.mxu0 0.0
    %9359 = vmatprep.subr.mxu0 0.0
    %9360 = vmatpush1.msra.mxu0 0.0
    %9361 = vmatprep.subr.mxu0 0.0
    %9362 = vmatpush1.msra.mxu0 0.0
    %9363 = vmatprep.subr.mxu0 0.0
    %9364 = vmatpush1.msra.mxu0 0.0
    %9365 = vmatprep.subr.mxu0 0.0
    %9366 = vmatpush1.msra.mxu0 0.0
    %9367 = vmatprep.subr.mxu0 0.0
    %9368 = vmatpush1.msra.mxu0 0.0
    %9369 = vmatprep.subr.mxu0 0.0
    %9370 = vmatpush1.msra.mxu0 0.0
    %9371 = vmatprep.subr.mxu0 0.0
    %9372 = vmatpush1.msra.mxu0 0.0
    %9373 = vmatprep.subr.mxu0 0.0
    %9374 = vmatpush1.msra.mxu0 0.0
    %9375 = vmatprep.subr.mxu0 0.0
    %9376 = vmatpush1.msra.mxu0 0.0
    %9377 = vmatprep.subr.mxu0 0.0
    %9378 = vmatpush1.msra.mxu0 0.0
    %9379 = vmatprep.subr.mxu0 0.0
    %9380 = vmatpush1.msra.mxu0 0.0
    %9381 = vmatprep.subr.mxu0 0.0
    %9382 = vmatpush1.msra.mxu0 0.0
    %9383 = vmatprep.subr.mxu0 0.0
    %9384 = vmatpush1.msra.mxu0 0.0
    %9385 = vmatprep.subr.mxu0 0.0
    %9386 = vmatpush1.msra.mxu0 0.0
    %9387 = vmatprep.subr.mxu0 0.0
    %9388 = vmatpush1.msra.mxu0 0.0
    %9389 = vmatprep.mubr.f32.mxu0 0.0
    %9390 = vmatmul.mubr.f32.gmra.mrb[0].mxu0 %v9320
    %v9391 = vpop.f32.mrb[0].mxu0
    %v9392 = vadd.f32 %v9305, %v9391
    %v9393 = vpop.f32.mrb[0].mxu0
    %9394 = vmatprep.mubr.f32.mxu0 0.0
    %9395 = vmatmul.mubr.f32.gmra.mrb[0].mxu0 %v9323
    %v9396 = vpop.f32.mrb[0].mxu0
    %v9397 = vadd.f32 %v9305, %v9396
    %v9398 = vpop.f32.mrb[0].mxu0
    %9399 = vdwg.mxu0
    %v9400 = vmax.f32 %v9392, 0.0
    %v9401 = vmax.f32 %v9397, 0.0
    %s9402 = scalar_lea.vmem %s6, 64
    %v9403 = vld [vmem:[%s9402] sm:$0xff]
    %v9404 = vld [vmem:[%s9402 + $0x8] sm:$0xff]
    %v9405 = vld [vmem:[%s9402 + $0x10] sm:$0xff]
    %v9406 = vld [vmem:[%s9402 + $0x18] sm:$0xff]
    %v9407 = vld [vmem:[%s9402 + $0x20] sm:$0xff]
    %v9408 = vld [vmem:[%s9402 + $0x28] sm:$0xff]
    %v9409 = vld [vmem:[%s9402 + $0x30] sm:$0xff]
    %v9410 = vld [vmem:[%s9402 + $0x38] sm:$0xff]
    %v9411 = vlaneseq
    %v9412 = vshrl.u32 %v9411, 7
    %v9413 = vsub.s32 0, %v9412
    %v9414 = vrot.slane %v4856, %v9413
    %v9416 = vsel %vm4723, %v9400, 0
    %v9419 = vsel %vm4723, %v9401, 0
    %9421 = vmatprep.subr.mxu0 0.0
    %9422 = vmatpush1.msra.mxu0 %v9403
    %9423 = vmatprep.subr.mxu0 0.0
    %9424 = vmatpush1.msra.mxu0 %v9404
    %9425 = vmatprep.subr.mxu0 0.0
    %9426 = vmatpush1.msra.mxu0 %v9405
    %9427 = vmatprep.subr.mxu0 0.0
    %9428 = vmatpush1.msra.mxu0 %v9406
    %9429 = vmatprep.subr.mxu0 0.0
    %9430 = vmatpush1.msra.mxu0 %v9407
    %9431 = vmatprep.subr.mxu0 0.0
    %9432 = vmatpush1.msra.mxu0 %v9408
    %9433 = vmatprep.subr.mxu0 0.0
    %9434 = vmatpush1.msra.mxu0 %v9409
    %9435 = vmatprep.subr.mxu0 0.0
    %9436 = vmatpush1.msra.mxu0 %v9410
    %9437 = vmatprep.subr.mxu0 0.0
    %9438 = vmatpush1.msra.mxu0 0.0
    %9439 = vmatprep.subr.mxu0 0.0
    %9440 = vmatpush1.msra.mxu0 0.0
    %9441 = vmatprep.subr.mxu0 0.0
    %9442 = vmatpush1.msra.mxu0 0.0
    %9443 = vmatprep.subr.mxu0 0.0
    %9444 = vmatpush1.msra.mxu0 0.0
    %9445 = vmatprep.subr.mxu0 0.0
    %9446 = vmatpush1.msra.mxu0 0.0
    %9447 = vmatprep.subr.mxu0 0.0
    %9448 = vmatpush1.msra.mxu0 0.0
    %9449 = vmatprep.subr.mxu0 0.0
    %9450 = vmatpush1.msra.mxu0 0.0
    %9451 = vmatprep.subr.mxu0 0.0
    %9452 = vmatpush1.msra.mxu0 0.0
    %9453 = vmatprep.subr.mxu0 0.0
    %9454 = vmatpush1.msra.mxu0 0.0
    %9455 = vmatprep.subr.mxu0 0.0
    %9456 = vmatpush1.msra.mxu0 0.0
    %9457 = vmatprep.subr.mxu0 0.0
    %9458 = vmatpush1.msra.mxu0 0.0
    %9459 = vmatprep.subr.mxu0 0.0
    %9460 = vmatpush1.msra.mxu0 0.0
    %9461 = vmatprep.subr.mxu0 0.0
    %9462 = vmatpush1.msra.mxu0 0.0
    %9463 = vmatprep.subr.mxu0 0.0
    %9464 = vmatpush1.msra.mxu0 0.0
    %9465 = vmatprep.subr.mxu0 0.0
    %9466 = vmatpush1.msra.mxu0 0.0
    %9467 = vmatprep.subr.mxu0 0.0
    %9468 = vmatpush1.msra.mxu0 0.0
    %9469 = vmatprep.subr.mxu0 0.0
    %9470 = vmatpush1.msra.mxu0 0.0
    %9471 = vmatprep.subr.mxu0 0.0
    %9472 = vmatpush1.msra.mxu0 0.0
    %9473 = vmatprep.subr.mxu0 0.0
    %9474 = vmatpush1.msra.mxu0 0.0
    %9475 = vmatprep.subr.mxu0 0.0
    %9476 = vmatpush1.msra.mxu0 0.0
    %9477 = vmatprep.subr.mxu0 0.0
    %9478 = vmatpush1.msra.mxu0 0.0
    %9479 = vmatprep.subr.mxu0 0.0
    %9480 = vmatpush1.msra.mxu0 0.0
    %9481 = vmatprep.subr.mxu0 0.0
    %9482 = vmatpush1.msra.mxu0 0.0
    %9483 = vmatprep.subr.mxu0 0.0
    %9484 = vmatpush1.msra.mxu0 0.0
    %9485 = vmatprep.mubr.f32.mxu0 0.0
    %9486 = vmatmul.mubr.f32.gmra.mrb[0].mxu0 %v9416
    %v9487 = vpop.f32.mrb[0].mxu0
    %v9488 = vadd.f32 %v9414, %v9487
    %v9489 = vpop.f32.mrb[0].mxu0
    %9490 = vmatprep.mubr.f32.mxu0 0.0
    %9491 = vmatmul.mubr.f32.gmra.mrb[0].mxu0 %v9419
    %v9492 = vpop.f32.mrb[0].mxu0
    %v9493 = vadd.f32 %v9414, %v9492
    %v9494 = vpop.f32.mrb[0].mxu0
    %9495 = vdwg.mxu0
    %v9496 = vadd.f32 %v9297, %v9488
    %v9497 = vadd.f32 %v9298, %v9493
    %v9498 = vsel %vm94, %v9496, 0.0
    %9499 = vadd.xlane.f32.xlu0 %v9498
    %v9500 = vpop.xlane.xlu0 %9499
    %v9501 = vsel %vm94, %v9497, 0.0
    %9502 = vadd.xlane.f32.xlu0 %v9501
    %v9503 = vpop.xlane.xlu0 %9502
    %v9504 = vmul.f32 %v9500, %v2378
    %v9505 = vmul.f32 %v9503, %v2378
    %v9506 = vsub.f32 %v9496, %v9504
    %v9507 = vsub.f32 %v9497, %v9505
    %v9508 = vmul.f32 %v9506, %v9506
    %v9509 = vmul.f32 %v9507, %v9507
    %v9510 = vsel %vm94, %v9508, 0.0
    %9511 = vadd.xlane.f32.xlu0 %v9510
    %v9512 = vpop.xlane.xlu0 %9511
    %v9513 = vsel %vm94, %v9509, 0.0
    %9514 = vadd.xlane.f32.xlu0 %v9513
    %v9515 = vpop.xlane.xlu0 %9514
    %v9516 = vmul.f32 %v9512, %v2378
    %v9517 = vmul.f32 %v9515, %v2378
    %v9518 = vadd.f32 %v9516, 1e-05
    %v9519 = vadd.f32 %v9517, 1e-05
    %v9520 = vrsqrt.pop %v9518
    %v9521 = vrsqrt.pop %v9519
    %v9522 = vmul.f32 %v9506, %v9520
    %v9523 = vmul.f32 %v9507, %v9521
    %v9524 = vlaneseq
    %v9525 = vshrl.u32 %v9524, 7
    %v9526 = vsub.s32 5, %v9525
    %v9527 = vrot.slane %v4856, %v9526
    %v9528 = vmul.f32 %v9522, %v9527
    %v9529 = vmul.f32 %v9523, %v9527
    %v9530 = vlaneseq
    %v9531 = vshrl.u32 %v9530, 7
    %v9532 = vsub.s32 6, %v9531
    %v9533 = vrot.slane %v4856, %v9532
    %v9534 = vadd.f32 %v9528, %v9533
    %v9535 = vadd.f32 %v9529, %v9533
    %9536 = vst.msk [vmem:[#allocation7] sm:$0xff] %vm94, %v9534
    %9537 = vst.msk [vmem:[#allocation7 + $0x8] sm:$0xff] %vm94, %v9535
    // Predicated region
    $region46: #{decoder_forward.1} parent=1 // pred_check
      _
    $region47: #{decoder_forward.1} parent=1 // pred_check_branch
      %9539 = sbr.rel (0) target = $region49
    $region48: #{decoder_forward.1} parent=1 // pred_region
      %s9541 = ssub.s32 256, 256
      %9542 = vsyncadd [#allocation4], %s9541
      %s9543 = sshll.u32 [#allocation7], 4
      %s9544 = int_to_ptr.vmem [resolvable:$true] %s9543
      %9549 = dma.vmem_to_hbm [thread:$0]  %s9544, 256, %s9, [#allocation4], 128, 128, 8
    $region49: #{decoder_forward.1} parent=1 // pred_fallthru
      _
    // Predicated region
    $region50: #{decoder_forward.1} parent=1 // pred_check
      _
    $region51: #{decoder_forward.1} parent=1 // pred_check_branch
      %9551 = sbr.rel (0) target = $region53
    $region52: #{decoder_forward.1} parent=1 // pred_region
      %9552 = dma.done [#allocation4], 256
    $region53: #{decoder_forward.1} parent=1 // pred_fallthru
      _
    %9553 = vsyncpa [#allocation3], 1
    %9554 = vsyncpa [#allocation6], 1
    %9555 = vsyncpa [#allocation4], 1

</llo_original>
